<compile_context>
chip_gen: v7x
topology: tpu7x:2x2x1
jax: 0.10.0
libtpu: 0.0.40
codegen_flags: <defaults>
</compile_context>

<pallas_src>
import jax
import jax.numpy as jnp
from jax.experimental import pallas as pl
from jax.experimental.pallas import tpu as pltpu

F_IN = 31236
H1, H2, H3, H4 = 45, 23, 12, 1


def mlp_kernel(x_ref, w1_ref, b1_ref, w2_ref, b2_ref,
               w3_ref, b3_ref, w4_ref, b4_ref, o_ref):
    x = x_ref[...]                                       # (TB, F_IN)
    # fc1 + ReLU.  w1 is (H1, F_IN); contract both K axes directly (no
    # (F_IN, H1) materialization in VMEM).
    h = jax.lax.dot_general(
        x, w1_ref[...],
        dimension_numbers=(((1,), (1,)), ((), ())),
        preferred_element_type=jnp.float32)              # (TB, H1)
    h = jnp.maximum(h + b1_ref[...], 0.0)
    # fc2 + ReLU
    h = jnp.maximum(
        jnp.dot(h, w2_ref[...], preferred_element_type=jnp.float32)
        + b2_ref[...], 0.0)
    # fc3 + ReLU
    h = jnp.maximum(
        jnp.dot(h, w3_ref[...], preferred_element_type=jnp.float32)
        + b3_ref[...], 0.0)
    # fc4 + ReLU
    h = jnp.maximum(
        jnp.dot(h, w4_ref[...], preferred_element_type=jnp.float32)
        + b4_ref[...], 0.0)
    o_ref[...] = h.astype(o_ref.dtype)


def _round_up(n, m):
    return (n + m - 1) // m * m


def _tile_and_vmem_limit():
    """Per-generation batch tile & VMEM budget, with a safe fallback."""
    try:
        kind = jax.devices()[0].device_kind.lower()
    except Exception:
        kind = ""
    if "v5" in kind or "v6" in kind:
        # 128 MiB physical VMEM: large tiles to amortize per-step overhead
        # and keep DMA chunks near the HBM roofline.
        return 256, 96 << 20
    # Conservative default; also valid for v7x's 64 MiB physical VMEM.
    return 128, 60 << 20


def directors_ffnn_forward(x, params, *, tb=None):
    """x: (B, 31236) f32.

    params: w1 (45, 31236) [PyTorch (out, in) layout], w2..w4 (in, out),
            b1..b4 (1, out).
    """
    B = x.shape[0]
    default_tb, vmem_limit = _tile_and_vmem_limit()
    if tb is None:
        tb = default_tb
    # Don't over-tile tiny batches; keep the sublane dim a multiple of 8.
    tb = min(tb, _round_up(B, 8))
    Bp = _round_up(B, tb)
    if Bp != B:
        x = jnp.pad(x, ((0, Bp - B), (0, 0)))

    const2 = lambda i: (0, 0)
    out = pl.pallas_call(
        mlp_kernel,
        out_shape=jax.ShapeDtypeStruct((Bp, H4), jnp.float32),
        grid=(Bp // tb,),
        in_specs=[
            pl.BlockSpec((tb, F_IN), lambda i: (i, 0)),   # x: streamed batch tiles
            pl.BlockSpec((H1, F_IN), const2),             # w1 (resident)
            pl.BlockSpec((1, H1), const2),                # b1
            pl.BlockSpec((H1, H2), const2),               # w2
            pl.BlockSpec((1, H2), const2),                # b2
            pl.BlockSpec((H2, H3), const2),               # w3
            pl.BlockSpec((1, H3), const2),                # b3
            pl.BlockSpec((H3, H4), const2),               # w4
            pl.BlockSpec((1, H4), const2),                # b4
        ],
        out_specs=pl.BlockSpec((tb, H4), lambda i: (i, 0)),
        compiler_params=pltpu.CompilerParams(
            dimension_semantics=("parallel",),            # v7x: shard batch over 2 TCs
            vmem_limit_bytes=vmem_limit,
        ),
    )(x,
      params["w1"], params["b1"],
      params["w2"], params["b2"],
      params["w3"], params["b3"],
      params["w4"], params["b4"])
    return out[:B]


def init_params(key):
    """Deterministic init mimicking nn.Linear default U[-1/sqrt(fan_in), +]."""
    dims = [(F_IN, H1), (H1, H2), (H2, H3), (H3, H4)]
    params = {}
    for i, (fan_in, fan_out) in enumerate(dims, start=1):
        key, kw, kb = jax.random.split(key, 3)
        bound = 1.0 / jnp.sqrt(fan_in)
        if i == 1:
            # (out, in) layout: long dim on lanes -> ~6 MiB padded VMEM
            # instead of ~16 MiB for a (31236, 45) tile.
            w = jax.random.uniform(kw, (fan_out, fan_in), jnp.float32,
                                   -bound, bound)
        else:
            w = jax.random.uniform(kw, (fan_in, fan_out), jnp.float32,
                                   -bound, bound)
        params[f"w{i}"] = w
        params[f"b{i}"] = jax.random.uniform(kb, (1, fan_out), jnp.float32,
                                             -bound, bound)
    return params


def reference_forward(x, params):
    h = jnp.maximum(jnp.einsum("bk,nk->bn", x, params["w1"]) + params["b1"], 0.0)
    for i in range(2, 5):
        h = jnp.maximum(h @ params[f"w{i}"] + params[f"b{i}"], 0.0)
    return h


if __name__ == "__main__":
    key = jax.random.PRNGKey(0)
    key, kx = jax.random.split(key)
    batch = 2
    x = jax.random.normal(kx, (batch, F_IN), jnp.float32)
    params = init_params(key)

    out = directors_ffnn_forward(x, params)
    out = jax.block_until_ready(out)

    ref = reference_forward(x, params)
    assert out.shape == (batch, H4), out.shape
    assert jnp.allclose(out, ref, atol=1e-4, rtol=1e-4), (out, ref)

    print("KERNEL_OK")
</pallas_src>

<mosaic_0001>
module attributes {stable_mosaic.version = 11 : i64} {
  func.func @mlp_kernel(%arg0: i32, %arg1: memref<8x31236xf32, #tpu.memory_space<vmem>>, %arg2: memref<45x31236xf32, #tpu.memory_space<vmem>>, %arg3: memref<1x45xf32, #tpu.memory_space<vmem>>, %arg4: memref<45x23xf32, #tpu.memory_space<vmem>>, %arg5: memref<1x23xf32, #tpu.memory_space<vmem>>, %arg6: memref<23x12xf32, #tpu.memory_space<vmem>>, %arg7: memref<1x12xf32, #tpu.memory_space<vmem>>, %arg8: memref<12x1xf32, #tpu.memory_space<vmem>>, %arg9: memref<1x1xf32, #tpu.memory_space<vmem>>, %arg10: memref<8x1xf32, #tpu.memory_space<vmem>>) attributes {dimension_semantics = [#tpu.dimension_semantics<parallel>], iteration_bounds = array<i64: 1>, scalar_prefetch = 0 : i64, scratch_operands = 0 : i64, tpu.core_type = #tpu.core_type<tc>, window_params = [{transform_indices = @transform_0, window_bounds = array<i64: 8, 31236>}, {pipeline_mode = #tpu.pipeline_mode<synchronous>, transform_indices = @transform_1, window_bounds = array<i64: 45, 31236>}, {pipeline_mode = #tpu.pipeline_mode<synchronous>, transform_indices = @transform_2, window_bounds = array<i64: 1, 45>}, {pipeline_mode = #tpu.pipeline_mode<synchronous>, transform_indices = @transform_3, window_bounds = array<i64: 45, 23>}, {pipeline_mode = #tpu.pipeline_mode<synchronous>, transform_indices = @transform_4, window_bounds = array<i64: 1, 23>}, {pipeline_mode = #tpu.pipeline_mode<synchronous>, transform_indices = @transform_5, window_bounds = array<i64: 23, 12>}, {pipeline_mode = #tpu.pipeline_mode<synchronous>, transform_indices = @transform_6, window_bounds = array<i64: 1, 12>}, {pipeline_mode = #tpu.pipeline_mode<synchronous>, transform_indices = @transform_7, window_bounds = array<i64: 12, 1>}, {pipeline_mode = #tpu.pipeline_mode<synchronous>, transform_indices = @transform_8, window_bounds = array<i64: 1, 1>}, {transform_indices = @transform_9, window_bounds = array<i64: 8, 1>}]} {
    %c0 = arith.constant 0 : index
    %c0_0 = arith.constant 0 : index
    %0 = vector.load %arg1[%c0, %c0_0] : memref<8x31236xf32, #tpu.memory_space<vmem>>, vector<8x31236xf32>
    %c0_1 = arith.constant 0 : index
    %c0_2 = arith.constant 0 : index
    %1 = vector.load %arg2[%c0_1, %c0_2] : memref<45x31236xf32, #tpu.memory_space<vmem>>, vector<45x31236xf32>
    %cst = arith.constant dense<0.000000e+00> : vector<8x45xf32>
    %2 = tpu.matmul %0, %1, %cst {dimension_numbers = #tpu.dot_dimension_numbers<[1], [1], [0], [0], [0, 0, 1, 0], [], []>} : vector<8x31236xf32>, vector<45x31236xf32>, vector<8x45xf32> -> vector<8x45xf32>
    %c0_3 = arith.constant 0 : index
    %c0_4 = arith.constant 0 : index
    %3 = vector.load %arg3[%c0_3, %c0_4] : memref<1x45xf32, #tpu.memory_space<vmem>>, vector<1x45xf32>
    %4 = vector.broadcast %3 : vector<1x45xf32> to vector<8x45xf32>
    %5 = arith.addf %2, %4 : vector<8x45xf32>
    %cst_5 = arith.constant 0.000000e+00 : f32
    %6 = vector.broadcast %cst_5 : f32 to vector<8x45xf32>
    %7 = arith.maximumf %5, %6 : vector<8x45xf32>
    %c0_6 = arith.constant 0 : index
    %c0_7 = arith.constant 0 : index
    %8 = vector.load %arg4[%c0_6, %c0_7] : memref<45x23xf32, #tpu.memory_space<vmem>>, vector<45x23xf32>
    %cst_8 = arith.constant dense<0.000000e+00> : vector<8x23xf32>
    %9 = tpu.matmul %7, %8, %cst_8 {dimension_numbers = #tpu.dot_dimension_numbers<[1], [0], [0], [1], [0, 0, 1, 1], [], []>} : vector<8x45xf32>, vector<45x23xf32>, vector<8x23xf32> -> vector<8x23xf32>
    %c0_9 = arith.constant 0 : index
    %c0_10 = arith.constant 0 : index
    %10 = vector.load %arg5[%c0_9, %c0_10] : memref<1x23xf32, #tpu.memory_space<vmem>>, vector<1x23xf32>
    %11 = vector.broadcast %10 : vector<1x23xf32> to vector<8x23xf32>
    %12 = arith.addf %9, %11 : vector<8x23xf32>
    %cst_11 = arith.constant 0.000000e+00 : f32
    %13 = vector.broadcast %cst_11 : f32 to vector<8x23xf32>
    %14 = arith.maximumf %12, %13 : vector<8x23xf32>
    %c0_12 = arith.constant 0 : index
    %c0_13 = arith.constant 0 : index
    %15 = vector.load %arg6[%c0_12, %c0_13] : memref<23x12xf32, #tpu.memory_space<vmem>>, vector<23x12xf32>
    %cst_14 = arith.constant dense<0.000000e+00> : vector<8x12xf32>
    %16 = tpu.matmul %14, %15, %cst_14 {dimension_numbers = #tpu.dot_dimension_numbers<[1], [0], [0], [1], [0, 0, 1, 1], [], []>} : vector<8x23xf32>, vector<23x12xf32>, vector<8x12xf32> -> vector<8x12xf32>
    %c0_15 = arith.constant 0 : index
    %c0_16 = arith.constant 0 : index
    %17 = vector.load %arg7[%c0_15, %c0_16] : memref<1x12xf32, #tpu.memory_space<vmem>>, vector<1x12xf32>
    %18 = vector.broadcast %17 : vector<1x12xf32> to vector<8x12xf32>
    %19 = arith.addf %16, %18 : vector<8x12xf32>
    %cst_17 = arith.constant 0.000000e+00 : f32
    %20 = vector.broadcast %cst_17 : f32 to vector<8x12xf32>
    %21 = arith.maximumf %19, %20 : vector<8x12xf32>
    %c0_18 = arith.constant 0 : index
    %c0_19 = arith.constant 0 : index
    %22 = vector.load %arg8[%c0_18, %c0_19] : memref<12x1xf32, #tpu.memory_space<vmem>>, vector<12x1xf32>
    %cst_20 = arith.constant dense<0.000000e+00> : vector<8x1xf32>
    %23 = tpu.matmul %21, %22, %cst_20 {dimension_numbers = #tpu.dot_dimension_numbers<[1], [0], [0], [1], [0, 0, 1, 1], [], []>} : vector<8x12xf32>, vector<12x1xf32>, vector<8x1xf32> -> vector<8x1xf32>
    %c0_21 = arith.constant 0 : index
    %c0_22 = arith.constant 0 : index
    %24 = vector.load %arg9[%c0_21, %c0_22] : memref<1x1xf32, #tpu.memory_space<vmem>>, vector<1x1xf32>
    %25 = vector.broadcast %24 : vector<1x1xf32> to vector<8x1xf32>
    %26 = arith.addf %23, %25 : vector<8x1xf32>
    %cst_23 = arith.constant 0.000000e+00 : f32
    %27 = vector.broadcast %cst_23 : f32 to vector<8x1xf32>
    %28 = arith.maximumf %26, %27 : vector<8x1xf32>
    %c0_24 = arith.constant 0 : index
    %c0_25 = arith.constant 0 : index
    %29 = vector.load %arg10[%c0_24, %c0_25] : memref<8x1xf32, #tpu.memory_space<vmem>>, vector<8x1xf32>
    tpu.vector_store %arg10[%c0_24, %c0_25], %28 {strides = array<i32>} : memref<8x1xf32, #tpu.memory_space<vmem>>, vector<8x1xf32>,
    return
  }
  func.func @transform_0(%arg0: i32) -> (i32, i32) {
    %c0_i32 = arith.constant 0 : i32
    %c0_i32_0 = arith.constant 0 : i32
    return %arg0, %c0_i32 : i32, i32
  }
  func.func @transform_1(%arg0: i32) -> (i32, i32) {
    %c0_i32 = arith.constant 0 : i32
    %c0_i32_0 = arith.constant 0 : i32
    %c0_i32_1 = arith.constant 0 : i32
    return %c0_i32, %c0_i32_0 : i32, i32
  }
  func.func @transform_2(%arg0: i32) -> (i32, i32) {
    %c0_i32 = arith.constant 0 : i32
    %c0_i32_0 = arith.constant 0 : i32
    %c0_i32_1 = arith.constant 0 : i32
    return %c0_i32, %c0_i32_0 : i32, i32
  }
  func.func @transform_3(%arg0: i32) -> (i32, i32) {
    %c0_i32 = arith.constant 0 : i32
    %c0_i32_0 = arith.constant 0 : i32
    %c0_i32_1 = arith.constant 0 : i32
    return %c0_i32, %c0_i32_0 : i32, i32
  }
  func.func @transform_4(%arg0: i32) -> (i32, i32) {
    %c0_i32 = arith.constant 0 : i32
    %c0_i32_0 = arith.constant 0 : i32
    %c0_i32_1 = arith.constant 0 : i32
    return %c0_i32, %c0_i32_0 : i32, i32
  }
  func.func @transform_5(%arg0: i32) -> (i32, i32) {
    %c0_i32 = arith.constant 0 : i32
    %c0_i32_0 = arith.constant 0 : i32
    %c0_i32_1 = arith.constant 0 : i32
    return %c0_i32, %c0_i32_0 : i32, i32
  }
  func.func @transform_6(%arg0: i32) -> (i32, i32) {
    %c0_i32 = arith.constant 0 : i32
    %c0_i32_0 = arith.constant 0 : i32
    %c0_i32_1 = arith.constant 0 : i32
    return %c0_i32, %c0_i32_0 : i32, i32
  }
  func.func @transform_7(%arg0: i32) -> (i32, i32) {
    %c0_i32 = arith.constant 0 : i32
    %c0_i32_0 = arith.constant 0 : i32
    %c0_i32_1 = arith.constant 0 : i32
    return %c0_i32, %c0_i32_0 : i32, i32
  }
  func.func @transform_8(%arg0: i32) -> (i32, i32) {
    %c0_i32 = arith.constant 0 : i32
    %c0_i32_0 = arith.constant 0 : i32
    %c0_i32_1 = arith.constant 0 : i32
    return %c0_i32, %c0_i32_0 : i32, i32
  }
  func.func @transform_9(%arg0: i32) -> (i32, i32) {
    %c0_i32 = arith.constant 0 : i32
    %c0_i32_0 = arith.constant 0 : i32
    return %arg0, %c0_i32 : i32, i32
  }
}

</mosaic_0001>

<llo_original>
// kernel: tpu_custom_call.1
$region0: #{tpu_custom_call.1}
  #allocation0 [shape = 'u32[]', space=smem, size = 0x4, offset = 0x4, fixed_abs, tag = 'smem constant byte address 0x4 - core index']
  #allocation1 [shape = 'u32[144,128]{1,0:T(1,128)}', space=vmem, size = 0x12000, scoped, tag = 'internal scratch']
  #allocation2 [shape = 'f32[1,1]{1,0:T(1,128)S(1)}', space=vmem, size = 0x200, scoped, tag = 'scoped memory for tpu_custom_call.1']
  %s0 = inlined_call_operand.hbm [shape: f32[8,31236], index: 0, kind: input, shape index: {}]
  %s1 = inlined_call_operand.hbm [shape: f32[45,31236], index: 1, kind: input, shape index: {}]
  %s2 = inlined_call_operand.hbm [shape: f32[1,45], index: 2, kind: input, shape index: {}]
  %s3 = inlined_call_operand.vmem [shape: f32[45,23], index: 3, kind: input, shape index: {}]
  %s4 = inlined_call_operand.hbm [shape: f32[1,23], index: 4, kind: input, shape index: {}]
  %s5 = inlined_call_operand.vmem [shape: f32[23,12], index: 5, kind: input, shape index: {}]
  %s6 = inlined_call_operand.hbm [shape: f32[1,12], index: 6, kind: input, shape index: {}]
  %s7 = inlined_call_operand.vmem [shape: f32[12,1], index: 7, kind: input, shape index: {}]
  %s8 = inlined_call_operand.<no memory space> [shape: f32[1,1], index: 8, kind: input, shape index: {}]
  %s9 = inlined_call_operand.vmem [shape: f32[8,1], index: 9, kind: output, shape index: {}]
  %s10 = sld [smem:[#allocation0]]
  $region66: #{tpu_custom_call.1} parent=0
    _
  %s12 = ssub.s32 1, %s10
  %s13 = scalar_select 0, %s12, %s10
  %v14 = vstv %s8
  %15 = vst [vmem:[#allocation2] sm:$0x1] %v14
  $region1: #{tpu_custom_call.1} parent=0
    #allocation3 [shape = 'u8[1003520]{0}', space=vmem, size = 0xf5000, scoped, tag = 'input window, operand 0, single buffered']
    #allocation4 [shape = 's32[1]{0}', space=sflag, size = 0x4, scoped, tag = 'scoped memory for tpu_custom_call.1']
    #allocation5 [shape = 'u8[6021120]{0}', space=vmem, size = 0x5be000, scoped, tag = 'input window, operand 1, single buffered']
    #allocation6 [shape = 's32[1]{0}', space=sflag, size = 0x4, scoped, tag = 'scoped memory for tpu_custom_call.1']
    #allocation7 [shape = 'u8[512]{0}', space=vmem, size = 0x400, scoped, tag = 'input window, operand 2, single buffered']
    #allocation8 [shape = 'u8[512]{0}', space=vmem, size = 0x400, scoped, tag = 'input window, operand 4, single buffered']
    #allocation9 [shape = 's32[1]{0}', space=sflag, size = 0x4, scoped, tag = 'scoped memory for tpu_custom_call.1']
    #allocation10 [shape = 'u8[512]{0}', space=vmem, size = 0x400, scoped, tag = 'input window, operand 6, single buffered']
    %16 = vsyncpa [#allocation4], 0
    %17 = vsyncpa [#allocation6], 0
    %18 = vsyncpa [#allocation9], 0
    // Predicated region
    $region2: #{tpu_custom_call.1} parent=1 // pred_check
      _
    $region3: #{tpu_custom_call.1} parent=1 // pred_check_branch
      %20 = sbr.rel (0) target = $region5
    $region4: #{tpu_custom_call.1} parent=1 // pred_region
      %s22 = ssub.s32 31360, 31360
      %23 = vsyncadd [#allocation4], %s22
      %s25 = sshll.u32 [#allocation3], 4
      %s26 = int_to_ptr.vmem [resolvable:$true] %s25
      %28 = dma.hbm_to_vmem [thread:$0]  %s0, 31360, %s26, [#allocation4]
    $region5: #{tpu_custom_call.1} parent=1 // pred_fallthru
      _
    // Predicated region
    $region6: #{tpu_custom_call.1} parent=1 // pred_check
      _
    $region7: #{tpu_custom_call.1} parent=1 // pred_check_branch
      %30 = sbr.rel (0) target = $region9
    $region8: #{tpu_custom_call.1} parent=1 // pred_region
      %s32 = ssub.s32 188160, 188160
      %33 = vsyncadd [#allocation6], %s32
      %s34 = sshll.u32 [#allocation5], 4
      %s35 = int_to_ptr.vmem [resolvable:$true] %s34
      %40 = dma.hbm_to_vmem [thread:$0]  %s1, 188160, %s35, [#allocation6], 31360, 31360, 1960
    $region9: #{tpu_custom_call.1} parent=1 // pred_fallthru
      _
    // Predicated region
    $region10: #{tpu_custom_call.1} parent=1 // pred_check
      _
    $region11: #{tpu_custom_call.1} parent=1 // pred_check_branch
      %42 = sbr.rel (0) target = $region13
    $region12: #{tpu_custom_call.1} parent=1 // pred_region
      %s44 = ssub.s32 16, 16
      %45 = vsyncadd [#allocation6], %s44
      %s47 = sshll.u32 [#allocation7], 4
      %s48 = int_to_ptr.vmem [resolvable:$true] %s47
      %50 = dma.hbm_to_vmem [thread:$0]  %s2, 16, %s48, [#allocation6]
    $region13: #{tpu_custom_call.1} parent=1 // pred_fallthru
      _
    // Predicated region
    $region14: #{tpu_custom_call.1} parent=1 // pred_check
      _
    $region15: #{tpu_custom_call.1} parent=1 // pred_check_branch
      %52 = sbr.rel (0) target = $region17
    $region16: #{tpu_custom_call.1} parent=1 // pred_region
      _
    $region17: #{tpu_custom_call.1} parent=1 // pred_fallthru
      _
    // Predicated region
    $region18: #{tpu_custom_call.1} parent=1 // pred_check
      _
    $region19: #{tpu_custom_call.1} parent=1 // pred_check_branch
      %54 = sbr.rel (0) target = $region21
    $region20: #{tpu_custom_call.1} parent=1 // pred_region
      %s56 = ssub.s32 16, 16
      %57 = vsyncadd [#allocation9], %s56
      %s59 = sshll.u32 [#allocation8], 4
      %s60 = int_to_ptr.vmem [resolvable:$true] %s59
      %62 = dma.hbm_to_vmem [thread:$0]  %s4, 16, %s60, [#allocation9]
    $region21: #{tpu_custom_call.1} parent=1 // pred_fallthru
      _
    // Predicated region
    $region22: #{tpu_custom_call.1} parent=1 // pred_check
      _
    $region23: #{tpu_custom_call.1} parent=1 // pred_check_branch
      %64 = sbr.rel (0) target = $region25
    $region24: #{tpu_custom_call.1} parent=1 // pred_region
      _
    $region25: #{tpu_custom_call.1} parent=1 // pred_fallthru
      _
    // Predicated region
    $region26: #{tpu_custom_call.1} parent=1 // pred_check
      _
    $region27: #{tpu_custom_call.1} parent=1 // pred_check_branch
      %66 = sbr.rel (0) target = $region29
    $region28: #{tpu_custom_call.1} parent=1 // pred_region
      %s68 = ssub.s32 16, 16
      %69 = vsyncadd [#allocation9], %s68
      %s71 = sshll.u32 [#allocation10], 4
      %s72 = int_to_ptr.vmem [resolvable:$true] %s71
      %74 = dma.hbm_to_vmem [thread:$0]  %s6, 16, %s72, [#allocation9]
    $region29: #{tpu_custom_call.1} parent=1 // pred_fallthru
      _
    // Predicated region
    $region30: #{tpu_custom_call.1} parent=1 // pred_check
      _
    $region31: #{tpu_custom_call.1} parent=1 // pred_check_branch
      %76 = sbr.rel (0) target = $region33
    $region32: #{tpu_custom_call.1} parent=1 // pred_region
      _
    $region33: #{tpu_custom_call.1} parent=1 // pred_fallthru
      _
    // Predicated region
    $region34: #{tpu_custom_call.1} parent=1 // pred_check
      _
    $region35: #{tpu_custom_call.1} parent=1 // pred_check_branch
      %78 = sbr.rel (0) target = $region37
    $region36: #{tpu_custom_call.1} parent=1 // pred_region
      _
    $region37: #{tpu_custom_call.1} parent=1 // pred_fallthru
      _
    // Predicated region
    $region38: #{tpu_custom_call.1} parent=1 // pred_check
      _
    $region39: #{tpu_custom_call.1} parent=1 // pred_check_branch
      %80 = sbr.rel (0) target = $region41
    $region40: #{tpu_custom_call.1} parent=1 // pred_region
      %81 = dma.done [#allocation4], 31360
    $region41: #{tpu_custom_call.1} parent=1 // pred_fallthru
      _
    // Predicated region
    $region42: #{tpu_custom_call.1} parent=1 // pred_check
      _
    $region43: #{tpu_custom_call.1} parent=1 // pred_check_branch
      %83 = sbr.rel (0) target = $region45
    $region44: #{tpu_custom_call.1} parent=1 // pred_region
      %84 = dma.done [#allocation6], 188160
    $region45: #{tpu_custom_call.1} parent=1 // pred_fallthru
      _
    // Predicated region
    $region46: #{tpu_custom_call.1} parent=1 // pred_check
      _
    $region47: #{tpu_custom_call.1} parent=1 // pred_check_branch
      %86 = sbr.rel (0) target = $region49
    $region48: #{tpu_custom_call.1} parent=1 // pred_region
      %87 = dma.done [#allocation6], 16
    $region49: #{tpu_custom_call.1} parent=1 // pred_fallthru
      _
    // Predicated region
    $region50: #{tpu_custom_call.1} parent=1 // pred_check
      _
    $region51: #{tpu_custom_call.1} parent=1 // pred_check_branch
      %89 = sbr.rel (0) target = $region53
    $region52: #{tpu_custom_call.1} parent=1 // pred_region
      %90 = dma.done [#allocation9], 16
    $region53: #{tpu_custom_call.1} parent=1 // pred_fallthru
      _
    // Predicated region
    $region54: #{tpu_custom_call.1} parent=1 // pred_check
      _
    $region55: #{tpu_custom_call.1} parent=1 // pred_check_branch
      %92 = sbr.rel (0) target = $region57
    $region56: #{tpu_custom_call.1} parent=1 // pred_region
      %93 = dma.done [#allocation9], 16
    $region57: #{tpu_custom_call.1} parent=1 // pred_fallthru
      _
    %v94 = vld [vmem:[#allocation3] sm:$0xff]
    %v95 = vld [vmem:[#allocation3 + $0x8] sm:$0xff]
    %v96 = vld [vmem:[#allocation3 + $0x10] sm:$0xff]
    %v97 = vld [vmem:[#allocation3 + $0x18] sm:$0xff]
    %v98 = vld [vmem:[#allocation3 + $0x20] sm:$0xff]
    %v99 = vld [vmem:[#allocation3 + $0x28] sm:$0xff]
    %v100 = vld [vmem:[#allocation3 + $0x30] sm:$0xff]
    %v101 = vld [vmem:[#allocation3 + $0x38] sm:$0xff]
    %v102 = vld [vmem:[#allocation3 + $0x40] sm:$0xff]
    %v103 = vld [vmem:[#allocation3 + $0x48] sm:$0xff]
    %v104 = vld [vmem:[#allocation3 + $0x50] sm:$0xff]
    %v105 = vld [vmem:[#allocation3 + $0x58] sm:$0xff]
    %v106 = vld [vmem:[#allocation3 + $0x60] sm:$0xff]
    %v107 = vld [vmem:[#allocation3 + $0x68] sm:$0xff]
    %v108 = vld [vmem:[#allocation3 + $0x70] sm:$0xff]
    %v109 = vld [vmem:[#allocation3 + $0x78] sm:$0xff]
    %v110 = vld [vmem:[#allocation3 + $0x80] sm:$0xff]
    %v111 = vld [vmem:[#allocation3 + $0x88] sm:$0xff]
    %v112 = vld [vmem:[#allocation3 + $0x90] sm:$0xff]
    %v113 = vld [vmem:[#allocation3 + $0x98] sm:$0xff]
    %v114 = vld [vmem:[#allocation3 + $0xa0] sm:$0xff]
    %v115 = vld [vmem:[#allocation3 + $0xa8] sm:$0xff]
    %v116 = vld [vmem:[#allocation3 + $0xb0] sm:$0xff]
    %v117 = vld [vmem:[#allocation3 + $0xb8] sm:$0xff]
    %v118 = vld [vmem:[#allocation3 + $0xc0] sm:$0xff]
    %v119 = vld [vmem:[#allocation3 + $0xc8] sm:$0xff]
    %v120 = vld [vmem:[#allocation3 + $0xd0] sm:$0xff]
    %v121 = vld [vmem:[#allocation3 + $0xd8] sm:$0xff]
    %v122 = vld [vmem:[#allocation3 + $0xe0] sm:$0xff]
    %v123 = vld [vmem:[#allocation3 + $0xe8] sm:$0xff]
    %v124 = vld [vmem:[#allocation3 + $0xf0] sm:$0xff]
    %v125 = vld [vmem:[#allocation3 + $0xf8] sm:$0xff]
    %v126 = vld [vmem:[#allocation3 + $0x100] sm:$0xff]
    %v127 = vld [vmem:[#allocation3 + $0x108] sm:$0xff]
    %v128 = vld [vmem:[#allocation3 + $0x110] sm:$0xff]
    %v129 = vld [vmem:[#allocation3 + $0x118] sm:$0xff]
    %v130 = vld [vmem:[#allocation3 + $0x120] sm:$0xff]
    %v131 = vld [vmem:[#allocation3 + $0x128] sm:$0xff]
    %v132 = vld [vmem:[#allocation3 + $0x130] sm:$0xff]
    %v133 = vld [vmem:[#allocation3 + $0x138] sm:$0xff]
    %v134 = vld [vmem:[#allocation3 + $0x140] sm:$0xff]
    %v135 = vld [vmem:[#allocation3 + $0x148] sm:$0xff]
    %v136 = vld [vmem:[#allocation3 + $0x150] sm:$0xff]
    %v137 = vld [vmem:[#allocation3 + $0x158] sm:$0xff]
    %v138 = vld [vmem:[#allocation3 + $0x160] sm:$0xff]
    %v139 = vld [vmem:[#allocation3 + $0x168] sm:$0xff]
    %v140 = vld [vmem:[#allocation3 + $0x170] sm:$0xff]
    %v141 = vld [vmem:[#allocation3 + $0x178] sm:$0xff]
    %v142 = vld [vmem:[#allocation3 + $0x180] sm:$0xff]
    %v143 = vld [vmem:[#allocation3 + $0x188] sm:$0xff]
    %v144 = vld [vmem:[#allocation3 + $0x190] sm:$0xff]
    %v145 = vld [vmem:[#allocation3 + $0x198] sm:$0xff]
    %v146 = vld [vmem:[#allocation3 + $0x1a0] sm:$0xff]
    %v147 = vld [vmem:[#allocation3 + $0x1a8] sm:$0xff]
    %v148 = vld [vmem:[#allocation3 + $0x1b0] sm:$0xff]
    %v149 = vld [vmem:[#allocation3 + $0x1b8] sm:$0xff]
    %v150 = vld [vmem:[#allocation3 + $0x1c0] sm:$0xff]
    %v151 = vld [vmem:[#allocation3 + $0x1c8] sm:$0xff]
    %v152 = vld [vmem:[#allocation3 + $0x1d0] sm:$0xff]
    %v153 = vld [vmem:[#allocation3 + $0x1d8] sm:$0xff]
    %v154 = vld [vmem:[#allocation3 + $0x1e0] sm:$0xff]
    %v155 = vld [vmem:[#allocation3 + $0x1e8] sm:$0xff]
    %v156 = vld [vmem:[#allocation3 + $0x1f0] sm:$0xff]
    %v157 = vld [vmem:[#allocation3 + $0x1f8] sm:$0xff]
    %v158 = vld [vmem:[#allocation3 + $0x200] sm:$0xff]
    %v159 = vld [vmem:[#allocation3 + $0x208] sm:$0xff]
    %v160 = vld [vmem:[#allocation3 + $0x210] sm:$0xff]
    %v161 = vld [vmem:[#allocation3 + $0x218] sm:$0xff]
    %v162 = vld [vmem:[#allocation3 + $0x220] sm:$0xff]
    %v163 = vld [vmem:[#allocation3 + $0x228] sm:$0xff]
    %v164 = vld [vmem:[#allocation3 + $0x230] sm:$0xff]
    %v165 = vld [vmem:[#allocation3 + $0x238] sm:$0xff]
    %v166 = vld [vmem:[#allocation3 + $0x240] sm:$0xff]
    %v167 = vld [vmem:[#allocation3 + $0x248] sm:$0xff]
    %v168 = vld [vmem:[#allocation3 + $0x250] sm:$0xff]
    %v169 = vld [vmem:[#allocation3 + $0x258] sm:$0xff]
    %v170 = vld [vmem:[#allocation3 + $0x260] sm:$0xff]
    %v171 = vld [vmem:[#allocation3 + $0x268] sm:$0xff]
    %v172 = vld [vmem:[#allocation3 + $0x270] sm:$0xff]
    %v173 = vld [vmem:[#allocation3 + $0x278] sm:$0xff]
    %v174 = vld [vmem:[#allocation3 + $0x280] sm:$0xff]
    %v175 = vld [vmem:[#allocation3 + $0x288] sm:$0xff]
    %v176 = vld [vmem:[#allocation3 + $0x290] sm:$0xff]
    %v177 = vld [vmem:[#allocation3 + $0x298] sm:$0xff]
    %v178 = vld [vmem:[#allocation3 + $0x2a0] sm:$0xff]
    %v179 = vld [vmem:[#allocation3 + $0x2a8] sm:$0xff]
    %v180 = vld [vmem:[#allocation3 + $0x2b0] sm:$0xff]
    %v181 = vld [vmem:[#allocation3 + $0x2b8] sm:$0xff]
    %v182 = vld [vmem:[#allocation3 + $0x2c0] sm:$0xff]
    %v183 = vld [vmem:[#allocation3 + $0x2c8] sm:$0xff]
    %v184 = vld [vmem:[#allocation3 + $0x2d0] sm:$0xff]
    %v185 = vld [vmem:[#allocation3 + $0x2d8] sm:$0xff]
    %v186 = vld [vmem:[#allocation3 + $0x2e0] sm:$0xff]
    %v187 = vld [vmem:[#allocation3 + $0x2e8] sm:$0xff]
    %v188 = vld [vmem:[#allocation3 + $0x2f0] sm:$0xff]
    %v189 = vld [vmem:[#allocation3 + $0x2f8] sm:$0xff]
    %v190 = vld [vmem:[#allocation3 + $0x300] sm:$0xff]
    %v191 = vld [vmem:[#allocation3 + $0x308] sm:$0xff]
    %v192 = vld [vmem:[#allocation3 + $0x310] sm:$0xff]
    %v193 = vld [vmem:[#allocation3 + $0x318] sm:$0xff]
    %v194 = vld [vmem:[#allocation3 + $0x320] sm:$0xff]
    %v195 = vld [vmem:[#allocation3 + $0x328] sm:$0xff]
    %v196 = vld [vmem:[#allocation3 + $0x330] sm:$0xff]
    %v197 = vld [vmem:[#allocation3 + $0x338] sm:$0xff]
    %v198 = vld [vmem:[#allocation3 + $0x340] sm:$0xff]
    %v199 = vld [vmem:[#allocation3 + $0x348] sm:$0xff]
    %v200 = vld [vmem:[#allocation3 + $0x350] sm:$0xff]
    %v201 = vld [vmem:[#allocation3 + $0x358] sm:$0xff]
    %v202 = vld [vmem:[#allocation3 + $0x360] sm:$0xff]
    %v203 = vld [vmem:[#allocation3 + $0x368] sm:$0xff]
    %v204 = vld [vmem:[#allocation3 + $0x370] sm:$0xff]
    %v205 = vld [vmem:[#allocation3 + $0x378] sm:$0xff]
    %v206 = vld [vmem:[#allocation3 + $0x380] sm:$0xff]
    %v207 = vld [vmem:[#allocation3 + $0x388] sm:$0xff]
    %v208 = vld [vmem:[#allocation3 + $0x390] sm:$0xff]
    %v209 = vld [vmem:[#allocation3 + $0x398] sm:$0xff]
    %v210 = vld [vmem:[#allocation3 + $0x3a0] sm:$0xff]
    %v211 = vld [vmem:[#allocation3 + $0x3a8] sm:$0xff]
    %v212 = vld [vmem:[#allocation3 + $0x3b0] sm:$0xff]
    %v213 = vld [vmem:[#allocation3 + $0x3b8] sm:$0xff]
    %v214 = vld [vmem:[#allocation3 + $0x3c0] sm:$0xff]
    %v215 = vld [vmem:[#allocation3 + $0x3c8] sm:$0xff]
    %v216 = vld [vmem:[#allocation3 + $0x3d0] sm:$0xff]
    %v217 = vld [vmem:[#allocation3 + $0x3d8] sm:$0xff]
    %v218 = vld [vmem:[#allocation3 + $0x3e0] sm:$0xff]
    %v219 = vld [vmem:[#allocation3 + $0x3e8] sm:$0xff]
    %v220 = vld [vmem:[#allocation3 + $0x3f0] sm:$0xff]
    %v221 = vld [vmem:[#allocation3 + $0x3f8] sm:$0xff]
    %v222 = vld [vmem:[#allocation3 + $0x400] sm:$0xff]
    %v223 = vld [vmem:[#allocation3 + $0x408] sm:$0xff]
    %v224 = vld [vmem:[#allocation3 + $0x410] sm:$0xff]
    %v225 = vld [vmem:[#allocation3 + $0x418] sm:$0xff]
    %v226 = vld [vmem:[#allocation3 + $0x420] sm:$0xff]
    %v227 = vld [vmem:[#allocation3 + $0x428] sm:$0xff]
    %v228 = vld [vmem:[#allocation3 + $0x430] sm:$0xff]
    %v229 = vld [vmem:[#allocation3 + $0x438] sm:$0xff]
    %v230 = vld [vmem:[#allocation3 + $0x440] sm:$0xff]
    %v231 = vld [vmem:[#allocation3 + $0x448] sm:$0xff]
    %v232 = vld [vmem:[#allocation3 + $0x450] sm:$0xff]
    %v233 = vld [vmem:[#allocation3 + $0x458] sm:$0xff]
    %v234 = vld [vmem:[#allocation3 + $0x460] sm:$0xff]
    %v235 = vld [vmem:[#allocation3 + $0x468] sm:$0xff]
    %v236 = vld [vmem:[#allocation3 + $0x470] sm:$0xff]
    %v237 = vld [vmem:[#allocation3 + $0x478] sm:$0xff]
    %v238 = vld [vmem:[#allocation3 + $0x480] sm:$0xff]
    %v239 = vld [vmem:[#allocation3 + $0x488] sm:$0xff]
    %v240 = vld [vmem:[#allocation3 + $0x490] sm:$0xff]
    %v241 = vld [vmem:[#allocation3 + $0x498] sm:$0xff]
    %v242 = vld [vmem:[#allocation3 + $0x4a0] sm:$0xff]
    %v243 = vld [vmem:[#allocation3 + $0x4a8] sm:$0xff]
    %v244 = vld [vmem:[#allocation3 + $0x4b0] sm:$0xff]
    %v245 = vld [vmem:[#allocation3 + $0x4b8] sm:$0xff]
    %v246 = vld [vmem:[#allocation3 + $0x4c0] sm:$0xff]
    %v247 = vld [vmem:[#allocation3 + $0x4c8] sm:$0xff]
    %v248 = vld [vmem:[#allocation3 + $0x4d0] sm:$0xff]
    %v249 = vld [vmem:[#allocation3 + $0x4d8] sm:$0xff]
    %v250 = vld [vmem:[#allocation3 + $0x4e0] sm:$0xff]
    %v251 = vld [vmem:[#allocation3 + $0x4e8] sm:$0xff]
    %v252 = vld [vmem:[#allocation3 + $0x4f0] sm:$0xff]
    %v253 = vld [vmem:[#allocation3 + $0x4f8] sm:$0xff]
    %v254 = vld [vmem:[#allocation3 + $0x500] sm:$0xff]
    %v255 = vld [vmem:[#allocation3 + $0x508] sm:$0xff]
    %v256 = vld [vmem:[#allocation3 + $0x510] sm:$0xff]
    %v257 = vld [vmem:[#allocation3 + $0x518] sm:$0xff]
    %v258 = vld [vmem:[#allocation3 + $0x520] sm:$0xff]
    %v259 = vld [vmem:[#allocation3 + $0x528] sm:$0xff]
    %v260 = vld [vmem:[#allocation3 + $0x530] sm:$0xff]
    %v261 = vld [vmem:[#allocation3 + $0x538] sm:$0xff]
    %v262 = vld [vmem:[#allocation3 + $0x540] sm:$0xff]
    %v263 = vld [vmem:[#allocation3 + $0x548] sm:$0xff]
    %v264 = vld [vmem:[#allocation3 + $0x550] sm:$0xff]
    %v265 = vld [vmem:[#allocation3 + $0x558] sm:$0xff]
    %v266 = vld [vmem:[#allocation3 + $0x560] sm:$0xff]
    %v267 = vld [vmem:[#allocation3 + $0x568] sm:$0xff]
    %v268 = vld [vmem:[#allocation3 + $0x570] sm:$0xff]
    %v269 = vld [vmem:[#allocation3 + $0x578] sm:$0xff]
    %v270 = vld [vmem:[#allocation3 + $0x580] sm:$0xff]
    %v271 = vld [vmem:[#allocation3 + $0x588] sm:$0xff]
    %v272 = vld [vmem:[#allocation3 + $0x590] sm:$0xff]
    %v273 = vld [vmem:[#allocation3 + $0x598] sm:$0xff]
    %v274 = vld [vmem:[#allocation3 + $0x5a0] sm:$0xff]
    %v275 = vld [vmem:[#allocation3 + $0x5a8] sm:$0xff]
    %v276 = vld [vmem:[#allocation3 + $0x5b0] sm:$0xff]
    %v277 = vld [vmem:[#allocation3 + $0x5b8] sm:$0xff]
    %v278 = vld [vmem:[#allocation3 + $0x5c0] sm:$0xff]
    %v279 = vld [vmem:[#allocation3 + $0x5c8] sm:$0xff]
    %v280 = vld [vmem:[#allocation3 + $0x5d0] sm:$0xff]
    %v281 = vld [vmem:[#allocation3 + $0x5d8] sm:$0xff]
    %v282 = vld [vmem:[#allocation3 + $0x5e0] sm:$0xff]
    %v283 = vld [vmem:[#allocation3 + $0x5e8] sm:$0xff]
    %v284 = vld [vmem:[#allocation3 + $0x5f0] sm:$0xff]
    %v285 = vld [vmem:[#allocation3 + $0x5f8] sm:$0xff]
    %v286 = vld [vmem:[#allocation3 + $0x600] sm:$0xff]
    %v287 = vld [vmem:[#allocation3 + $0x608] sm:$0xff]
    %v288 = vld [vmem:[#allocation3 + $0x610] sm:$0xff]
    %v289 = vld [vmem:[#allocation3 + $0x618] sm:$0xff]
    %v290 = vld [vmem:[#allocation3 + $0x620] sm:$0xff]
    %v291 = vld [vmem:[#allocation3 + $0x628] sm:$0xff]
    %v292 = vld [vmem:[#allocation3 + $0x630] sm:$0xff]
    %v293 = vld [vmem:[#allocation3 + $0x638] sm:$0xff]
    %v294 = vld [vmem:[#allocation3 + $0x640] sm:$0xff]
    %v295 = vld [vmem:[#allocation3 + $0x648] sm:$0xff]
    %v296 = vld [vmem:[#allocation3 + $0x650] sm:$0xff]
    %v297 = vld [vmem:[#allocation3 + $0x658] sm:$0xff]
    %v298 = vld [vmem:[#allocation3 + $0x660] sm:$0xff]
    %v299 = vld [vmem:[#allocation3 + $0x668] sm:$0xff]
    %v300 = vld [vmem:[#allocation3 + $0x670] sm:$0xff]
    %v301 = vld [vmem:[#allocation3 + $0x678] sm:$0xff]
    %v302 = vld [vmem:[#allocation3 + $0x680] sm:$0xff]
    %v303 = vld [vmem:[#allocation3 + $0x688] sm:$0xff]
    %v304 = vld [vmem:[#allocation3 + $0x690] sm:$0xff]
    %v305 = vld [vmem:[#allocation3 + $0x698] sm:$0xff]
    %v306 = vld [vmem:[#allocation3 + $0x6a0] sm:$0xff]
    %v307 = vld [vmem:[#allocation3 + $0x6a8] sm:$0xff]
    %v308 = vld [vmem:[#allocation3 + $0x6b0] sm:$0xff]
    %v309 = vld [vmem:[#allocation3 + $0x6b8] sm:$0xff]
    %v310 = vld [vmem:[#allocation3 + $0x6c0] sm:$0xff]
    %v311 = vld [vmem:[#allocation3 + $0x6c8] sm:$0xff]
    %v312 = vld [vmem:[#allocation3 + $0x6d0] sm:$0xff]
    %v313 = vld [vmem:[#allocation3 + $0x6d8] sm:$0xff]
    %v314 = vld [vmem:[#allocation3 + $0x6e0] sm:$0xff]
    %v315 = vld [vmem:[#allocation3 + $0x6e8] sm:$0xff]
    %v316 = vld [vmem:[#allocation3 + $0x6f0] sm:$0xff]
    %v317 = vld [vmem:[#allocation3 + $0x6f8] sm:$0xff]
    %v318 = vld [vmem:[#allocation3 + $0x700] sm:$0xff]
    %v319 = vld [vmem:[#allocation3 + $0x708] sm:$0xff]
    %v320 = vld [vmem:[#allocation3 + $0x710] sm:$0xff]
    %v321 = vld [vmem:[#allocation3 + $0x718] sm:$0xff]
    %v322 = vld [vmem:[#allocation3 + $0x720] sm:$0xff]
    %v323 = vld [vmem:[#allocation3 + $0x728] sm:$0xff]
    %v324 = vld [vmem:[#allocation3 + $0x730] sm:$0xff]
    %v325 = vld [vmem:[#allocation3 + $0x738] sm:$0xff]
    %v326 = vld [vmem:[#allocation3 + $0x740] sm:$0xff]
    %v327 = vld [vmem:[#allocation3 + $0x748] sm:$0xff]
    %v328 = vld [vmem:[#allocation3 + $0x750] sm:$0xff]
    %v329 = vld [vmem:[#allocation3 + $0x758] sm:$0xff]
    %v330 = vld [vmem:[#allocation3 + $0x760] sm:$0xff]
    %v331 = vld [vmem:[#allocation3 + $0x768] sm:$0xff]
    %v332 = vld [vmem:[#allocation3 + $0x770] sm:$0xff]
    %v333 = vld [vmem:[#allocation3 + $0x778] sm:$0xff]
    %v334 = vld [vmem:[#allocation3 + $0x780] sm:$0xff]
    %v335 = vld [vmem:[#allocation3 + $0x788] sm:$0xff]
    %v336 = vld [vmem:[#allocation3 + $0x790] sm:$0xff]
    %v337 = vld [vmem:[#allocation3 + $0x798] sm:$0xff]
    %v338 = vld [vmem:[#allocation3 + $0x7a0] sm:$0xff]
    %v339 = vld [vmem:[#allocation5] sm:$0xff]
    %v340 = vld [vmem:[#allocation5 + $0x8] sm:$0xff]
    %v341 = vld [vmem:[#allocation5 + $0x10] sm:$0xff]
    %v342 = vld [vmem:[#allocation5 + $0x18] sm:$0xff]
    %v343 = vld [vmem:[#allocation5 + $0x20] sm:$0xff]
    %v344 = vld [vmem:[#allocation5 + $0x28] sm:$0xff]
    %v345 = vld [vmem:[#allocation5 + $0x30] sm:$0xff]
    %v346 = vld [vmem:[#allocation5 + $0x38] sm:$0xff]
    %v347 = vld [vmem:[#allocation5 + $0x40] sm:$0xff]
    %v348 = vld [vmem:[#allocation5 + $0x48] sm:$0xff]
    %v349 = vld [vmem:[#allocation5 + $0x50] sm:$0xff]
    %v350 = vld [vmem:[#allocation5 + $0x58] sm:$0xff]
    %v351 = vld [vmem:[#allocation5 + $0x60] sm:$0xff]
    %v352 = vld [vmem:[#allocation5 + $0x68] sm:$0xff]
    %v353 = vld [vmem:[#allocation5 + $0x70] sm:$0xff]
    %v354 = vld [vmem:[#allocation5 + $0x78] sm:$0xff]
    %v355 = vld [vmem:[#allocation5 + $0x80] sm:$0xff]
    %v356 = vld [vmem:[#allocation5 + $0x88] sm:$0xff]
    %v357 = vld [vmem:[#allocation5 + $0x90] sm:$0xff]
    %v358 = vld [vmem:[#allocation5 + $0x98] sm:$0xff]
    %v359 = vld [vmem:[#allocation5 + $0xa0] sm:$0xff]
    %v360 = vld [vmem:[#allocation5 + $0xa8] sm:$0xff]
    %v361 = vld [vmem:[#allocation5 + $0xb0] sm:$0xff]
    %v362 = vld [vmem:[#allocation5 + $0xb8] sm:$0xff]
    %v363 = vld [vmem:[#allocation5 + $0xc0] sm:$0xff]
    %v364 = vld [vmem:[#allocation5 + $0xc8] sm:$0xff]
    %v365 = vld [vmem:[#allocation5 + $0xd0] sm:$0xff]
    %v366 = vld [vmem:[#allocation5 + $0xd8] sm:$0xff]
    %v367 = vld [vmem:[#allocation5 + $0xe0] sm:$0xff]
    %v368 = vld [vmem:[#allocation5 + $0xe8] sm:$0xff]
    %v369 = vld [vmem:[#allocation5 + $0xf0] sm:$0xff]
    %v370 = vld [vmem:[#allocation5 + $0xf8] sm:$0xff]
    %v371 = vld [vmem:[#allocation5 + $0x100] sm:$0xff]
    %v372 = vld [vmem:[#allocation5 + $0x108] sm:$0xff]
    %v373 = vld [vmem:[#allocation5 + $0x110] sm:$0xff]
    %v374 = vld [vmem:[#allocation5 + $0x118] sm:$0xff]
    %v375 = vld [vmem:[#allocation5 + $0x120] sm:$0xff]
    %v376 = vld [vmem:[#allocation5 + $0x128] sm:$0xff]
    %v377 = vld [vmem:[#allocation5 + $0x130] sm:$0xff]
    %v378 = vld [vmem:[#allocation5 + $0x138] sm:$0xff]
    %v379 = vld [vmem:[#allocation5 + $0x140] sm:$0xff]
    %v380 = vld [vmem:[#allocation5 + $0x148] sm:$0xff]
    %v381 = vld [vmem:[#allocation5 + $0x150] sm:$0xff]
    %v382 = vld [vmem:[#allocation5 + $0x158] sm:$0xff]
    %v383 = vld [vmem:[#allocation5 + $0x160] sm:$0xff]
    %v384 = vld [vmem:[#allocation5 + $0x168] sm:$0xff]
    %v385 = vld [vmem:[#allocation5 + $0x170] sm:$0xff]
    %v386 = vld [vmem:[#allocation5 + $0x178] sm:$0xff]
    %v387 = vld [vmem:[#allocation5 + $0x180] sm:$0xff]
    %v388 = vld [vmem:[#allocation5 + $0x188] sm:$0xff]
    %v389 = vld [vmem:[#allocation5 + $0x190] sm:$0xff]
    %v390 = vld [vmem:[#allocation5 + $0x198] sm:$0xff]
    %v391 = vld [vmem:[#allocation5 + $0x1a0] sm:$0xff]
    %v392 = vld [vmem:[#allocation5 + $0x1a8] sm:$0xff]
    %v393 = vld [vmem:[#allocation5 + $0x1b0] sm:$0xff]
    %v394 = vld [vmem:[#allocation5 + $0x1b8] sm:$0xff]
    %v395 = vld [vmem:[#allocation5 + $0x1c0] sm:$0xff]
    %v396 = vld [vmem:[#allocation5 + $0x1c8] sm:$0xff]
    %v397 = vld [vmem:[#allocation5 + $0x1d0] sm:$0xff]
    %v398 = vld [vmem:[#allocation5 + $0x1d8] sm:$0xff]
    %v399 = vld [vmem:[#allocation5 + $0x1e0] sm:$0xff]
    %v400 = vld [vmem:[#allocation5 + $0x1e8] sm:$0xff]
    %v401 = vld [vmem:[#allocation5 + $0x1f0] sm:$0xff]
    %v402 = vld [vmem:[#allocation5 + $0x1f8] sm:$0xff]
    %v403 = vld [vmem:[#allocation5 + $0x200] sm:$0xff]
    %v404 = vld [vmem:[#allocation5 + $0x208] sm:$0xff]
    %v405 = vld [vmem:[#allocation5 + $0x210] sm:$0xff]
    %v406 = vld [vmem:[#allocation5 + $0x218] sm:$0xff]
    %v407 = vld [vmem:[#allocation5 + $0x220] sm:$0xff]
    %v408 = vld [vmem:[#allocation5 + $0x228] sm:$0xff]
    %v409 = vld [vmem:[#allocation5 + $0x230] sm:$0xff]
    %v410 = vld [vmem:[#allocation5 + $0x238] sm:$0xff]
    %v411 = vld [vmem:[#allocation5 + $0x240] sm:$0xff]
    %v412 = vld [vmem:[#allocation5 + $0x248] sm:$0xff]
    %v413 = vld [vmem:[#allocation5 + $0x250] sm:$0xff]
    %v414 = vld [vmem:[#allocation5 + $0x258] sm:$0xff]
    %v415 = vld [vmem:[#allocation5 + $0x260] sm:$0xff]
    %v416 = vld [vmem:[#allocation5 + $0x268] sm:$0xff]
    %v417 = vld [vmem:[#allocation5 + $0x270] sm:$0xff]
    %v418 = vld [vmem:[#allocation5 + $0x278] sm:$0xff]
    %v419 = vld [vmem:[#allocation5 + $0x280] sm:$0xff]
    %v420 = vld [vmem:[#allocation5 + $0x288] sm:$0xff]
    %v421 = vld [vmem:[#allocation5 + $0x290] sm:$0xff]
    %v422 = vld [vmem:[#allocation5 + $0x298] sm:$0xff]
    %v423 = vld [vmem:[#allocation5 + $0x2a0] sm:$0xff]
    %v424 = vld [vmem:[#allocation5 + $0x2a8] sm:$0xff]
    %v425 = vld [vmem:[#allocation5 + $0x2b0] sm:$0xff]
    %v426 = vld [vmem:[#allocation5 + $0x2b8] sm:$0xff]
    %v427 = vld [vmem:[#allocation5 + $0x2c0] sm:$0xff]
    %v428 = vld [vmem:[#allocation5 + $0x2c8] sm:$0xff]
    %v429 = vld [vmem:[#allocation5 + $0x2d0] sm:$0xff]
    %v430 = vld [vmem:[#allocation5 + $0x2d8] sm:$0xff]
    %v431 = vld [vmem:[#allocation5 + $0x2e0] sm:$0xff]
    %v432 = vld [vmem:[#allocation5 + $0x2e8] sm:$0xff]
    %v433 = vld [vmem:[#allocation5 + $0x2f0] sm:$0xff]
    %v434 = vld [vmem:[#allocation5 + $0x2f8] sm:$0xff]
    %v435 = vld [vmem:[#allocation5 + $0x300] sm:$0xff]
    %v436 = vld [vmem:[#allocation5 + $0x308] sm:$0xff]
    %v437 = vld [vmem:[#allocation5 + $0x310] sm:$0xff]
    %v438 = vld [vmem:[#allocation5 + $0x318] sm:$0xff]
    %v439 = vld [vmem:[#allocation5 + $0x320] sm:$0xff]
    %v440 = vld [vmem:[#allocation5 + $0x328] sm:$0xff]
    %v441 = vld [vmem:[#allocation5 + $0x330] sm:$0xff]
    %v442 = vld [vmem:[#allocation5 + $0x338] sm:$0xff]
    %v443 = vld [vmem:[#allocation5 + $0x340] sm:$0xff]
    %v444 = vld [vmem:[#allocation5 + $0x348] sm:$0xff]
    %v445 = vld [vmem:[#allocation5 + $0x350] sm:$0xff]
    %v446 = vld [vmem:[#allocation5 + $0x358] sm:$0xff]
    %v447 = vld [vmem:[#allocation5 + $0x360] sm:$0xff]
    %v448 = vld [vmem:[#allocation5 + $0x368] sm:$0xff]
    %v449 = vld [vmem:[#allocation5 + $0x370] sm:$0xff]
    %v450 = vld [vmem:[#allocation5 + $0x378] sm:$0xff]
    %v451 = vld [vmem:[#allocation5 + $0x380] sm:$0xff]
    %v452 = vld [vmem:[#allocation5 + $0x388] sm:$0xff]
    %v453 = vld [vmem:[#allocation5 + $0x390] sm:$0xff]
    %v454 = vld [vmem:[#allocation5 + $0x398] sm:$0xff]
    %v455 = vld [vmem:[#allocation5 + $0x3a0] sm:$0xff]
    %v456 = vld [vmem:[#allocation5 + $0x3a8] sm:$0xff]
    %v457 = vld [vmem:[#allocation5 + $0x3b0] sm:$0xff]
    %v458 = vld [vmem:[#allocation5 + $0x3b8] sm:$0xff]
    %v459 = vld [vmem:[#allocation5 + $0x3c0] sm:$0xff]
    %v460 = vld [vmem:[#allocation5 + $0x3c8] sm:$0xff]
    %v461 = vld [vmem:[#allocation5 + $0x3d0] sm:$0xff]
    %v462 = vld [vmem:[#allocation5 + $0x3d8] sm:$0xff]
    %v463 = vld [vmem:[#allocation5 + $0x3e0] sm:$0xff]
    %v464 = vld [vmem:[#allocation5 + $0x3e8] sm:$0xff]
    %v465 = vld [vmem:[#allocation5 + $0x3f0] sm:$0xff]
    %v466 = vld [vmem:[#allocation5 + $0x3f8] sm:$0xff]
    %v467 = vld [vmem:[#allocation5 + $0x400] sm:$0xff]
    %v468 = vld [vmem:[#allocation5 + $0x408] sm:$0xff]
    %v469 = vld [vmem:[#allocation5 + $0x410] sm:$0xff]
    %v470 = vld [vmem:[#allocation5 + $0x418] sm:$0xff]
    %v471 = vld [vmem:[#allocation5 + $0x420] sm:$0xff]
    %v472 = vld [vmem:[#allocation5 + $0x428] sm:$0xff]
    %v473 = vld [vmem:[#allocation5 + $0x430] sm:$0xff]
    %v474 = vld [vmem:[#allocation5 + $0x438] sm:$0xff]
    %v475 = vld [vmem:[#allocation5 + $0x440] sm:$0xff]
    %v476 = vld [vmem:[#allocation5 + $0x448] sm:$0xff]
    %v477 = vld [vmem:[#allocation5 + $0x450] sm:$0xff]
    %v478 = vld [vmem:[#allocation5 + $0x458] sm:$0xff]
    %v479 = vld [vmem:[#allocation5 + $0x460] sm:$0xff]
    %v480 = vld [vmem:[#allocation5 + $0x468] sm:$0xff]
    %v481 = vld [vmem:[#allocation5 + $0x470] sm:$0xff]
    %v482 = vld [vmem:[#allocation5 + $0x478] sm:$0xff]
    %v483 = vld [vmem:[#allocation5 + $0x480] sm:$0xff]
    %v484 = vld [vmem:[#allocation5 + $0x488] sm:$0xff]
    %v485 = vld [vmem:[#allocation5 + $0x490] sm:$0xff]
    %v486 = vld [vmem:[#allocation5 + $0x498] sm:$0xff]
    %v487 = vld [vmem:[#allocation5 + $0x4a0] sm:$0xff]
    %v488 = vld [vmem:[#allocation5 + $0x4a8] sm:$0xff]
    %v489 = vld [vmem:[#allocation5 + $0x4b0] sm:$0xff]
    %v490 = vld [vmem:[#allocation5 + $0x4b8] sm:$0xff]
    %v491 = vld [vmem:[#allocation5 + $0x4c0] sm:$0xff]
    %v492 = vld [vmem:[#allocation5 + $0x4c8] sm:$0xff]
    %v493 = vld [vmem:[#allocation5 + $0x4d0] sm:$0xff]
    %v494 = vld [vmem:[#allocation5 + $0x4d8] sm:$0xff]
    %v495 = vld [vmem:[#allocation5 + $0x4e0] sm:$0xff]
    %v496 = vld [vmem:[#allocation5 + $0x4e8] sm:$0xff]
    %v497 = vld [vmem:[#allocation5 + $0x4f0] sm:$0xff]
    %v498 = vld [vmem:[#allocation5 + $0x4f8] sm:$0xff]
    %v499 = vld [vmem:[#allocation5 + $0x500] sm:$0xff]
    %v500 = vld [vmem:[#allocation5 + $0x508] sm:$0xff]
    %v501 = vld [vmem:[#allocation5 + $0x510] sm:$0xff]
    %v502 = vld [vmem:[#allocation5 + $0x518] sm:$0xff]
    %v503 = vld [vmem:[#allocation5 + $0x520] sm:$0xff]
    %v504 = vld [vmem:[#allocation5 + $0x528] sm:$0xff]
    %v505 = vld [vmem:[#allocation5 + $0x530] sm:$0xff]
    %v506 = vld [vmem:[#allocation5 + $0x538] sm:$0xff]
    %v507 = vld [vmem:[#allocation5 + $0x540] sm:$0xff]
    %v508 = vld [vmem:[#allocation5 + $0x548] sm:$0xff]
    %v509 = vld [vmem:[#allocation5 + $0x550] sm:$0xff]
    %v510 = vld [vmem:[#allocation5 + $0x558] sm:$0xff]
    %v511 = vld [vmem:[#allocation5 + $0x560] sm:$0xff]
    %v512 = vld [vmem:[#allocation5 + $0x568] sm:$0xff]
    %v513 = vld [vmem:[#allocation5 + $0x570] sm:$0xff]
    %v514 = vld [vmem:[#allocation5 + $0x578] sm:$0xff]
    %v515 = vld [vmem:[#allocation5 + $0x580] sm:$0xff]
    %v516 = vld [vmem:[#allocation5 + $0x588] sm:$0xff]
    %v517 = vld [vmem:[#allocation5 + $0x590] sm:$0xff]
    %v518 = vld [vmem:[#allocation5 + $0x598] sm:$0xff]
    %v519 = vld [vmem:[#allocation5 + $0x5a0] sm:$0xff]
    %v520 = vld [vmem:[#allocation5 + $0x5a8] sm:$0xff]
    %v521 = vld [vmem:[#allocation5 + $0x5b0] sm:$0xff]
    %v522 = vld [vmem:[#allocation5 + $0x5b8] sm:$0xff]
    %v523 = vld [vmem:[#allocation5 + $0x5c0] sm:$0xff]
    %v524 = vld [vmem:[#allocation5 + $0x5c8] sm:$0xff]
    %v525 = vld [vmem:[#allocation5 + $0x5d0] sm:$0xff]
    %v526 = vld [vmem:[#allocation5 + $0x5d8] sm:$0xff]
    %v527 = vld [vmem:[#allocation5 + $0x5e0] sm:$0xff]
    %v528 = vld [vmem:[#allocation5 + $0x5e8] sm:$0xff]
    %v529 = vld [vmem:[#allocation5 + $0x5f0] sm:$0xff]
    %v530 = vld [vmem:[#allocation5 + $0x5f8] sm:$0xff]
    %v531 = vld [vmem:[#allocation5 + $0x600] sm:$0xff]
    %v532 = vld [vmem:[#allocation5 + $0x608] sm:$0xff]
    %v533 = vld [vmem:[#allocation5 + $0x610] sm:$0xff]
    %v534 = vld [vmem:[#allocation5 + $0x618] sm:$0xff]
    %v535 = vld [vmem:[#allocation5 + $0x620] sm:$0xff]
    %v536 = vld [vmem:[#allocation5 + $0x628] sm:$0xff]
    %v537 = vld [vmem:[#allocation5 + $0x630] sm:$0xff]
    %v538 = vld [vmem:[#allocation5 + $0x638] sm:$0xff]
    %v539 = vld [vmem:[#allocation5 + $0x640] sm:$0xff]
    %v540 = vld [vmem:[#allocation5 + $0x648] sm:$0xff]
    %v541 = vld [vmem:[#allocation5 + $0x650] sm:$0xff]
    %v542 = vld [vmem:[#allocation5 + $0x658] sm:$0xff]
    %v543 = vld [vmem:[#allocation5 + $0x660] sm:$0xff]
    %v544 = vld [vmem:[#allocation5 + $0x668] sm:$0xff]
    %v545 = vld [vmem:[#allocation5 + $0x670] sm:$0xff]
    %v546 = vld [vmem:[#allocation5 + $0x678] sm:$0xff]
    %v547 = vld [vmem:[#allocation5 + $0x680] sm:$0xff]
    %v548 = vld [vmem:[#allocation5 + $0x688] sm:$0xff]
    %v549 = vld [vmem:[#allocation5 + $0x690] sm:$0xff]
    %v550 = vld [vmem:[#allocation5 + $0x698] sm:$0xff]
    %v551 = vld [vmem:[#allocation5 + $0x6a0] sm:$0xff]
    %v552 = vld [vmem:[#allocation5 + $0x6a8] sm:$0xff]
    %v553 = vld [vmem:[#allocation5 + $0x6b0] sm:$0xff]
    %v554 = vld [vmem:[#allocation5 + $0x6b8] sm:$0xff]
    %v555 = vld [vmem:[#allocation5 + $0x6c0] sm:$0xff]
    %v556 = vld [vmem:[#allocation5 + $0x6c8] sm:$0xff]
    %v557 = vld [vmem:[#allocation5 + $0x6d0] sm:$0xff]
    %v558 = vld [vmem:[#allocation5 + $0x6d8] sm:$0xff]
    %v559 = vld [vmem:[#allocation5 + $0x6e0] sm:$0xff]
    %v560 = vld [vmem:[#allocation5 + $0x6e8] sm:$0xff]
    %v561 = vld [vmem:[#allocation5 + $0x6f0] sm:$0xff]
    %v562 = vld [vmem:[#allocation5 + $0x6f8] sm:$0xff]
    %v563 = vld [vmem:[#allocation5 + $0x700] sm:$0xff]
    %v564 = vld [vmem:[#allocation5 + $0x708] sm:$0xff]
    %v565 = vld [vmem:[#allocation5 + $0x710] sm:$0xff]
    %v566 = vld [vmem:[#allocation5 + $0x718] sm:$0xff]
    %v567 = vld [vmem:[#allocation5 + $0x720] sm:$0xff]
    %v568 = vld [vmem:[#allocation5 + $0x728] sm:$0xff]
    %v569 = vld [vmem:[#allocation5 + $0x730] sm:$0xff]
    %v570 = vld [vmem:[#allocation5 + $0x738] sm:$0xff]
    %v571 = vld [vmem:[#allocation5 + $0x740] sm:$0xff]
    %v572 = vld [vmem:[#allocation5 + $0x748] sm:$0xff]
    %v573 = vld [vmem:[#allocation5 + $0x750] sm:$0xff]
    %v574 = vld [vmem:[#allocation5 + $0x758] sm:$0xff]
    %v575 = vld [vmem:[#allocation5 + $0x760] sm:$0xff]
    %v576 = vld [vmem:[#allocation5 + $0x768] sm:$0xff]
    %v577 = vld [vmem:[#allocation5 + $0x770] sm:$0xff]
    %v578 = vld [vmem:[#allocation5 + $0x778] sm:$0xff]
    %v579 = vld [vmem:[#allocation5 + $0x780] sm:$0xff]
    %v580 = vld [vmem:[#allocation5 + $0x788] sm:$0xff]
    %v581 = vld [vmem:[#allocation5 + $0x790] sm:$0xff]
    %v582 = vld [vmem:[#allocation5 + $0x798] sm:$0xff]
    %v583 = vld [vmem:[#allocation5 + $0x7a0] sm:$0xff]
    %v584 = vld [vmem:[#allocation5 + $0x7a8] sm:$0xff]
    %v585 = vld [vmem:[#allocation5 + $0x7b0] sm:$0xff]
    %v586 = vld [vmem:[#allocation5 + $0x7b8] sm:$0xff]
    %v587 = vld [vmem:[#allocation5 + $0x7c0] sm:$0xff]
    %v588 = vld [vmem:[#allocation5 + $0x7c8] sm:$0xff]
    %v589 = vld [vmem:[#allocation5 + $0x7d0] sm:$0xff]
    %v590 = vld [vmem:[#allocation5 + $0x7d8] sm:$0xff]
    %v591 = vld [vmem:[#allocation5 + $0x7e0] sm:$0xff]
    %v592 = vld [vmem:[#allocation5 + $0x7e8] sm:$0xff]
    %v593 = vld [vmem:[#allocation5 + $0x7f0] sm:$0xff]
    %v594 = vld [vmem:[#allocation5 + $0x7f8] sm:$0xff]
    %v595 = vld [vmem:[#allocation5 + $0x800] sm:$0xff]
    %v596 = vld [vmem:[#allocation5 + $0x808] sm:$0xff]
    %v597 = vld [vmem:[#allocation5 + $0x810] sm:$0xff]
    %v598 = vld [vmem:[#allocation5 + $0x818] sm:$0xff]
    %v599 = vld [vmem:[#allocation5 + $0x820] sm:$0xff]
    %v600 = vld [vmem:[#allocation5 + $0x828] sm:$0xff]
    %v601 = vld [vmem:[#allocation5 + $0x830] sm:$0xff]
    %v602 = vld [vmem:[#allocation5 + $0x838] sm:$0xff]
    %v603 = vld [vmem:[#allocation5 + $0x840] sm:$0xff]
    %v604 = vld [vmem:[#allocation5 + $0x848] sm:$0xff]
    %v605 = vld [vmem:[#allocation5 + $0x850] sm:$0xff]
    %v606 = vld [vmem:[#allocation5 + $0x858] sm:$0xff]
    %v607 = vld [vmem:[#allocation5 + $0x860] sm:$0xff]
    %v608 = vld [vmem:[#allocation5 + $0x868] sm:$0xff]
    %v609 = vld [vmem:[#allocation5 + $0x870] sm:$0xff]
    %v610 = vld [vmem:[#allocation5 + $0x878] sm:$0xff]
    %v611 = vld [vmem:[#allocation5 + $0x880] sm:$0xff]
    %v612 = vld [vmem:[#allocation5 + $0x888] sm:$0xff]
    %v613 = vld [vmem:[#allocation5 + $0x890] sm:$0xff]
    %v614 = vld [vmem:[#allocation5 + $0x898] sm:$0xff]
    %v615 = vld [vmem:[#allocation5 + $0x8a0] sm:$0xff]
    %v616 = vld [vmem:[#allocation5 + $0x8a8] sm:$0xff]
    %v617 = vld [vmem:[#allocation5 + $0x8b0] sm:$0xff]
    %v618 = vld [vmem:[#allocation5 + $0x8b8] sm:$0xff]
    %v619 = vld [vmem:[#allocation5 + $0x8c0] sm:$0xff]
    %v620 = vld [vmem:[#allocation5 + $0x8c8] sm:$0xff]
    %v621 = vld [vmem:[#allocation5 + $0x8d0] sm:$0xff]
    %v622 = vld [vmem:[#allocation5 + $0x8d8] sm:$0xff]
    %v623 = vld [vmem:[#allocation5 + $0x8e0] sm:$0xff]
    %v624 = vld [vmem:[#allocation5 + $0x8e8] sm:$0xff]
    %v625 = vld [vmem:[#allocation5 + $0x8f0] sm:$0xff]
    %v626 = vld [vmem:[#allocation5 + $0x8f8] sm:$0xff]
    %v627 = vld [vmem:[#allocation5 + $0x900] sm:$0xff]
    %v628 = vld [vmem:[#allocation5 + $0x908] sm:$0xff]
    %v629 = vld [vmem:[#allocation5 + $0x910] sm:$0xff]
    %v630 = vld [vmem:[#allocation5 + $0x918] sm:$0xff]
    %v631 = vld [vmem:[#allocation5 + $0x920] sm:$0xff]
    %v632 = vld [vmem:[#allocation5 + $0x928] sm:$0xff]
    %v633 = vld [vmem:[#allocation5 + $0x930] sm:$0xff]
    %v634 = vld [vmem:[#allocation5 + $0x938] sm:$0xff]
    %v635 = vld [vmem:[#allocation5 + $0x940] sm:$0xff]
    %v636 = vld [vmem:[#allocation5 + $0x948] sm:$0xff]
    %v637 = vld [vmem:[#allocation5 + $0x950] sm:$0xff]
    %v638 = vld [vmem:[#allocation5 + $0x958] sm:$0xff]
    %v639 = vld [vmem:[#allocation5 + $0x960] sm:$0xff]
    %v640 = vld [vmem:[#allocation5 + $0x968] sm:$0xff]
    %v641 = vld [vmem:[#allocation5 + $0x970] sm:$0xff]
    %v642 = vld [vmem:[#allocation5 + $0x978] sm:$0xff]
    %v643 = vld [vmem:[#allocation5 + $0x980] sm:$0xff]
    %v644 = vld [vmem:[#allocation5 + $0x988] sm:$0xff]
    %v645 = vld [vmem:[#allocation5 + $0x990] sm:$0xff]
    %v646 = vld [vmem:[#allocation5 + $0x998] sm:$0xff]
    %v647 = vld [vmem:[#allocation5 + $0x9a0] sm:$0xff]
    %v648 = vld [vmem:[#allocation5 + $0x9a8] sm:$0xff]
    %v649 = vld [vmem:[#allocation5 + $0x9b0] sm:$0xff]
    %v650 = vld [vmem:[#allocation5 + $0x9b8] sm:$0xff]
    %v651 = vld [vmem:[#allocation5 + $0x9c0] sm:$0xff]
    %v652 = vld [vmem:[#allocation5 + $0x9c8] sm:$0xff]
    %v653 = vld [vmem:[#allocation5 + $0x9d0] sm:$0xff]
    %v654 = vld [vmem:[#allocation5 + $0x9d8] sm:$0xff]
    %v655 = vld [vmem:[#allocation5 + $0x9e0] sm:$0xff]
    %v656 = vld [vmem:[#allocation5 + $0x9e8] sm:$0xff]
    %v657 = vld [vmem:[#allocation5 + $0x9f0] sm:$0xff]
    %v658 = vld [vmem:[#allocation5 + $0x9f8] sm:$0xff]
    %v659 = vld [vmem:[#allocation5 + $0xa00] sm:$0xff]
    %v660 = vld [vmem:[#allocation5 + $0xa08] sm:$0xff]
    %v661 = vld [vmem:[#allocation5 + $0xa10] sm:$0xff]
    %v662 = vld [vmem:[#allocation5 + $0xa18] sm:$0xff]
    %v663 = vld [vmem:[#allocation5 + $0xa20] sm:$0xff]
    %v664 = vld [vmem:[#allocation5 + $0xa28] sm:$0xff]
    %v665 = vld [vmem:[#allocation5 + $0xa30] sm:$0xff]
    %v666 = vld [vmem:[#allocation5 + $0xa38] sm:$0xff]
    %v667 = vld [vmem:[#allocation5 + $0xa40] sm:$0xff]
    %v668 = vld [vmem:[#allocation5 + $0xa48] sm:$0xff]
    %v669 = vld [vmem:[#allocation5 + $0xa50] sm:$0xff]
    %v670 = vld [vmem:[#allocation5 + $0xa58] sm:$0xff]
    %v671 = vld [vmem:[#allocation5 + $0xa60] sm:$0xff]
    %v672 = vld [vmem:[#allocation5 + $0xa68] sm:$0xff]
    %v673 = vld [vmem:[#allocation5 + $0xa70] sm:$0xff]
    %v674 = vld [vmem:[#allocation5 + $0xa78] sm:$0xff]
    %v675 = vld [vmem:[#allocation5 + $0xa80] sm:$0xff]
    %v676 = vld [vmem:[#allocation5 + $0xa88] sm:$0xff]
    %v677 = vld [vmem:[#allocation5 + $0xa90] sm:$0xff]
    %v678 = vld [vmem:[#allocation5 + $0xa98] sm:$0xff]
    %v679 = vld [vmem:[#allocation5 + $0xaa0] sm:$0xff]
    %v680 = vld [vmem:[#allocation5 + $0xaa8] sm:$0xff]
    %v681 = vld [vmem:[#allocation5 + $0xab0] sm:$0xff]
    %v682 = vld [vmem:[#allocation5 + $0xab8] sm:$0xff]
    %v683 = vld [vmem:[#allocation5 + $0xac0] sm:$0xff]
    %v684 = vld [vmem:[#allocation5 + $0xac8] sm:$0xff]
    %v685 = vld [vmem:[#allocation5 + $0xad0] sm:$0xff]
    %v686 = vld [vmem:[#allocation5 + $0xad8] sm:$0xff]
    %v687 = vld [vmem:[#allocation5 + $0xae0] sm:$0xff]
    %v688 = vld [vmem:[#allocation5 + $0xae8] sm:$0xff]
    %v689 = vld [vmem:[#allocation5 + $0xaf0] sm:$0xff]
    %v690 = vld [vmem:[#allocation5 + $0xaf8] sm:$0xff]
    %v691 = vld [vmem:[#allocation5 + $0xb00] sm:$0xff]
    %v692 = vld [vmem:[#allocation5 + $0xb08] sm:$0xff]
    %v693 = vld [vmem:[#allocation5 + $0xb10] sm:$0xff]
    %v694 = vld [vmem:[#allocation5 + $0xb18] sm:$0xff]
    %v695 = vld [vmem:[#allocation5 + $0xb20] sm:$0xff]
    %v696 = vld [vmem:[#allocation5 + $0xb28] sm:$0xff]
    %v697 = vld [vmem:[#allocation5 + $0xb30] sm:$0xff]
    %v698 = vld [vmem:[#allocation5 + $0xb38] sm:$0xff]
    %v699 = vld [vmem:[#allocation5 + $0xb40] sm:$0xff]
    %v700 = vld [vmem:[#allocation5 + $0xb48] sm:$0xff]
    %v701 = vld [vmem:[#allocation5 + $0xb50] sm:$0xff]
    %v702 = vld [vmem:[#allocation5 + $0xb58] sm:$0xff]
    %v703 = vld [vmem:[#allocation5 + $0xb60] sm:$0xff]
    %v704 = vld [vmem:[#allocation5 + $0xb68] sm:$0xff]
    %v705 = vld [vmem:[#allocation5 + $0xb70] sm:$0xff]
    %v706 = vld [vmem:[#allocation5 + $0xb78] sm:$0xff]
    %v707 = vld [vmem:[#allocation5 + $0xb80] sm:$0xff]
    %v708 = vld [vmem:[#allocation5 + $0xb88] sm:$0xff]
    %v709 = vld [vmem:[#allocation5 + $0xb90] sm:$0xff]
    %v710 = vld [vmem:[#allocation5 + $0xb98] sm:$0xff]
    %v711 = vld [vmem:[#allocation5 + $0xba0] sm:$0xff]
    %v712 = vld [vmem:[#allocation5 + $0xba8] sm:$0xff]
    %v713 = vld [vmem:[#allocation5 + $0xbb0] sm:$0xff]
    %v714 = vld [vmem:[#allocation5 + $0xbb8] sm:$0xff]
    %v715 = vld [vmem:[#allocation5 + $0xbc0] sm:$0xff]
    %v716 = vld [vmem:[#allocation5 + $0xbc8] sm:$0xff]
    %v717 = vld [vmem:[#allocation5 + $0xbd0] sm:$0xff]
    %v718 = vld [vmem:[#allocation5 + $0xbd8] sm:$0xff]
    %v719 = vld [vmem:[#allocation5 + $0xbe0] sm:$0xff]
    %v720 = vld [vmem:[#allocation5 + $0xbe8] sm:$0xff]
    %v721 = vld [vmem:[#allocation5 + $0xbf0] sm:$0xff]
    %v722 = vld [vmem:[#allocation5 + $0xbf8] sm:$0xff]
    %v723 = vld [vmem:[#allocation5 + $0xc00] sm:$0xff]
    %v724 = vld [vmem:[#allocation5 + $0xc08] sm:$0xff]
    %v725 = vld [vmem:[#allocation5 + $0xc10] sm:$0xff]
    %v726 = vld [vmem:[#allocation5 + $0xc18] sm:$0xff]
    %v727 = vld [vmem:[#allocation5 + $0xc20] sm:$0xff]
    %v728 = vld [vmem:[#allocation5 + $0xc28] sm:$0xff]
    %v729 = vld [vmem:[#allocation5 + $0xc30] sm:$0xff]
    %v730 = vld [vmem:[#allocation5 + $0xc38] sm:$0xff]
    %v731 = vld [vmem:[#allocation5 + $0xc40] sm:$0xff]
    %v732 = vld [vmem:[#allocation5 + $0xc48] sm:$0xff]
    %v733 = vld [vmem:[#allocation5 + $0xc50] sm:$0xff]
    %v734 = vld [vmem:[#allocation5 + $0xc58] sm:$0xff]
    %v735 = vld [vmem:[#allocation5 + $0xc60] sm:$0xff]
    %v736 = vld [vmem:[#allocation5 + $0xc68] sm:$0xff]
    %v737 = vld [vmem:[#allocation5 + $0xc70] sm:$0xff]
    %v738 = vld [vmem:[#allocation5 + $0xc78] sm:$0xff]
    %v739 = vld [vmem:[#allocation5 + $0xc80] sm:$0xff]
    %v740 = vld [vmem:[#allocation5 + $0xc88] sm:$0xff]
    %v741 = vld [vmem:[#allocation5 + $0xc90] sm:$0xff]
    %v742 = vld [vmem:[#allocation5 + $0xc98] sm:$0xff]
    %v743 = vld [vmem:[#allocation5 + $0xca0] sm:$0xff]
    %v744 = vld [vmem:[#allocation5 + $0xca8] sm:$0xff]
    %v745 = vld [vmem:[#allocation5 + $0xcb0] sm:$0xff]
    %v746 = vld [vmem:[#allocation5 + $0xcb8] sm:$0xff]
    %v747 = vld [vmem:[#allocation5 + $0xcc0] sm:$0xff]
    %v748 = vld [vmem:[#allocation5 + $0xcc8] sm:$0xff]
    %v749 = vld [vmem:[#allocation5 + $0xcd0] sm:$0xff]
    %v750 = vld [vmem:[#allocation5 + $0xcd8] sm:$0xff]
    %v751 = vld [vmem:[#allocation5 + $0xce0] sm:$0xff]
    %v752 = vld [vmem:[#allocation5 + $0xce8] sm:$0xff]
    %v753 = vld [vmem:[#allocation5 + $0xcf0] sm:$0xff]
    %v754 = vld [vmem:[#allocation5 + $0xcf8] sm:$0xff]
    %v755 = vld [vmem:[#allocation5 + $0xd00] sm:$0xff]
    %v756 = vld [vmem:[#allocation5 + $0xd08] sm:$0xff]
    %v757 = vld [vmem:[#allocation5 + $0xd10] sm:$0xff]
    %v758 = vld [vmem:[#allocation5 + $0xd18] sm:$0xff]
    %v759 = vld [vmem:[#allocation5 + $0xd20] sm:$0xff]
    %v760 = vld [vmem:[#allocation5 + $0xd28] sm:$0xff]
    %v761 = vld [vmem:[#allocation5 + $0xd30] sm:$0xff]
    %v762 = vld [vmem:[#allocation5 + $0xd38] sm:$0xff]
    %v763 = vld [vmem:[#allocation5 + $0xd40] sm:$0xff]
    %v764 = vld [vmem:[#allocation5 + $0xd48] sm:$0xff]
    %v765 = vld [vmem:[#allocation5 + $0xd50] sm:$0xff]
    %v766 = vld [vmem:[#allocation5 + $0xd58] sm:$0xff]
    %v767 = vld [vmem:[#allocation5 + $0xd60] sm:$0xff]
    %v768 = vld [vmem:[#allocation5 + $0xd68] sm:$0xff]
    %v769 = vld [vmem:[#allocation5 + $0xd70] sm:$0xff]
    %v770 = vld [vmem:[#allocation5 + $0xd78] sm:$0xff]
    %v771 = vld [vmem:[#allocation5 + $0xd80] sm:$0xff]
    %v772 = vld [vmem:[#allocation5 + $0xd88] sm:$0xff]
    %v773 = vld [vmem:[#allocation5 + $0xd90] sm:$0xff]
    %v774 = vld [vmem:[#allocation5 + $0xd98] sm:$0xff]
    %v775 = vld [vmem:[#allocation5 + $0xda0] sm:$0xff]
    %v776 = vld [vmem:[#allocation5 + $0xda8] sm:$0xff]
    %v777 = vld [vmem:[#allocation5 + $0xdb0] sm:$0xff]
    %v778 = vld [vmem:[#allocation5 + $0xdb8] sm:$0xff]
    %v779 = vld [vmem:[#allocation5 + $0xdc0] sm:$0xff]
    %v780 = vld [vmem:[#allocation5 + $0xdc8] sm:$0xff]
    %v781 = vld [vmem:[#allocation5 + $0xdd0] sm:$0xff]
    %v782 = vld [vmem:[#allocation5 + $0xdd8] sm:$0xff]
    %v783 = vld [vmem:[#allocation5 + $0xde0] sm:$0xff]
    %v784 = vld [vmem:[#allocation5 + $0xde8] sm:$0xff]
    %v785 = vld [vmem:[#allocation5 + $0xdf0] sm:$0xff]
    %v786 = vld [vmem:[#allocation5 + $0xdf8] sm:$0xff]
    %v787 = vld [vmem:[#allocation5 + $0xe00] sm:$0xff]
    %v788 = vld [vmem:[#allocation5 + $0xe08] sm:$0xff]
    %v789 = vld [vmem:[#allocation5 + $0xe10] sm:$0xff]
    %v790 = vld [vmem:[#allocation5 + $0xe18] sm:$0xff]
    %v791 = vld [vmem:[#allocation5 + $0xe20] sm:$0xff]
    %v792 = vld [vmem:[#allocation5 + $0xe28] sm:$0xff]
    %v793 = vld [vmem:[#allocation5 + $0xe30] sm:$0xff]
    %v794 = vld [vmem:[#allocation5 + $0xe38] sm:$0xff]
    %v795 = vld [vmem:[#allocation5 + $0xe40] sm:$0xff]
    %v796 = vld [vmem:[#allocation5 + $0xe48] sm:$0xff]
    %v797 = vld [vmem:[#allocation5 + $0xe50] sm:$0xff]
    %v798 = vld [vmem:[#allocation5 + $0xe58] sm:$0xff]
    %v799 = vld [vmem:[#allocation5 + $0xe60] sm:$0xff]
    %v800 = vld [vmem:[#allocation5 + $0xe68] sm:$0xff]
    %v801 = vld [vmem:[#allocation5 + $0xe70] sm:$0xff]
    %v802 = vld [vmem:[#allocation5 + $0xe78] sm:$0xff]
    %v803 = vld [vmem:[#allocation5 + $0xe80] sm:$0xff]
    %v804 = vld [vmem:[#allocation5 + $0xe88] sm:$0xff]
    %v805 = vld [vmem:[#allocation5 + $0xe90] sm:$0xff]
    %v806 = vld [vmem:[#allocation5 + $0xe98] sm:$0xff]
    %v807 = vld [vmem:[#allocation5 + $0xea0] sm:$0xff]
    %v808 = vld [vmem:[#allocation5 + $0xea8] sm:$0xff]
    %v809 = vld [vmem:[#allocation5 + $0xeb0] sm:$0xff]
    %v810 = vld [vmem:[#allocation5 + $0xeb8] sm:$0xff]
    %v811 = vld [vmem:[#allocation5 + $0xec0] sm:$0xff]
    %v812 = vld [vmem:[#allocation5 + $0xec8] sm:$0xff]
    %v813 = vld [vmem:[#allocation5 + $0xed0] sm:$0xff]
    %v814 = vld [vmem:[#allocation5 + $0xed8] sm:$0xff]
    %v815 = vld [vmem:[#allocation5 + $0xee0] sm:$0xff]
    %v816 = vld [vmem:[#allocation5 + $0xee8] sm:$0xff]
    %v817 = vld [vmem:[#allocation5 + $0xef0] sm:$0xff]
    %v818 = vld [vmem:[#allocation5 + $0xef8] sm:$0xff]
    %v819 = vld [vmem:[#allocation5 + $0xf00] sm:$0xff]
    %v820 = vld [vmem:[#allocation5 + $0xf08] sm:$0xff]
    %v821 = vld [vmem:[#allocation5 + $0xf10] sm:$0xff]
    %v822 = vld [vmem:[#allocation5 + $0xf18] sm:$0xff]
    %v823 = vld [vmem:[#allocation5 + $0xf20] sm:$0xff]
    %v824 = vld [vmem:[#allocation5 + $0xf28] sm:$0xff]
    %v825 = vld [vmem:[#allocation5 + $0xf30] sm:$0xff]
    %v826 = vld [vmem:[#allocation5 + $0xf38] sm:$0xff]
    %v827 = vld [vmem:[#allocation5 + $0xf40] sm:$0xff]
    %v828 = vld [vmem:[#allocation5 + $0xf48] sm:$0xff]
    %v829 = vld [vmem:[#allocation5 + $0xf50] sm:$0xff]
    %v830 = vld [vmem:[#allocation5 + $0xf58] sm:$0xff]
    %v831 = vld [vmem:[#allocation5 + $0xf60] sm:$0xff]
    %v832 = vld [vmem:[#allocation5 + $0xf68] sm:$0xff]
    %v833 = vld [vmem:[#allocation5 + $0xf70] sm:$0xff]
    %v834 = vld [vmem:[#allocation5 + $0xf78] sm:$0xff]
    %v835 = vld [vmem:[#allocation5 + $0xf80] sm:$0xff]
    %v836 = vld [vmem:[#allocation5 + $0xf88] sm:$0xff]
    %v837 = vld [vmem:[#allocation5 + $0xf90] sm:$0xff]
    %v838 = vld [vmem:[#allocation5 + $0xf98] sm:$0xff]
    %v839 = vld [vmem:[#allocation5 + $0xfa0] sm:$0xff]
    %v840 = vld [vmem:[#allocation5 + $0xfa8] sm:$0xff]
    %v841 = vld [vmem:[#allocation5 + $0xfb0] sm:$0xff]
    %v842 = vld [vmem:[#allocation5 + $0xfb8] sm:$0xff]
    %v843 = vld [vmem:[#allocation5 + $0xfc0] sm:$0xff]
    %v844 = vld [vmem:[#allocation5 + $0xfc8] sm:$0xff]
    %v845 = vld [vmem:[#allocation5 + $0xfd0] sm:$0xff]
    %v846 = vld [vmem:[#allocation5 + $0xfd8] sm:$0xff]
    %v847 = vld [vmem:[#allocation5 + $0xfe0] sm:$0xff]
    %v848 = vld [vmem:[#allocation5 + $0xfe8] sm:$0xff]
    %v849 = vld [vmem:[#allocation5 + $0xff0] sm:$0xff]
    %v850 = vld [vmem:[#allocation5 + $0xff8] sm:$0xff]
    %v851 = vld [vmem:[#allocation5 + $0x1000] sm:$0xff]
    %v852 = vld [vmem:[#allocation5 + $0x1008] sm:$0xff]
    %v853 = vld [vmem:[#allocation5 + $0x1010] sm:$0xff]
    %v854 = vld [vmem:[#allocation5 + $0x1018] sm:$0xff]
    %v855 = vld [vmem:[#allocation5 + $0x1020] sm:$0xff]
    %v856 = vld [vmem:[#allocation5 + $0x1028] sm:$0xff]
    %v857 = vld [vmem:[#allocation5 + $0x1030] sm:$0xff]
    %v858 = vld [vmem:[#allocation5 + $0x1038] sm:$0xff]
    %v859 = vld [vmem:[#allocation5 + $0x1040] sm:$0xff]
    %v860 = vld [vmem:[#allocation5 + $0x1048] sm:$0xff]
    %v861 = vld [vmem:[#allocation5 + $0x1050] sm:$0xff]
    %v862 = vld [vmem:[#allocation5 + $0x1058] sm:$0xff]
    %v863 = vld [vmem:[#allocation5 + $0x1060] sm:$0xff]
    %v864 = vld [vmem:[#allocation5 + $0x1068] sm:$0xff]
    %v865 = vld [vmem:[#allocation5 + $0x1070] sm:$0xff]
    %v866 = vld [vmem:[#allocation5 + $0x1078] sm:$0xff]
    %v867 = vld [vmem:[#allocation5 + $0x1080] sm:$0xff]
    %v868 = vld [vmem:[#allocation5 + $0x1088] sm:$0xff]
    %v869 = vld [vmem:[#allocation5 + $0x1090] sm:$0xff]
    %v870 = vld [vmem:[#allocation5 + $0x1098] sm:$0xff]
    %v871 = vld [vmem:[#allocation5 + $0x10a0] sm:$0xff]
    %v872 = vld [vmem:[#allocation5 + $0x10a8] sm:$0xff]
    %v873 = vld [vmem:[#allocation5 + $0x10b0] sm:$0xff]
    %v874 = vld [vmem:[#allocation5 + $0x10b8] sm:$0xff]
    %v875 = vld [vmem:[#allocation5 + $0x10c0] sm:$0xff]
    %v876 = vld [vmem:[#allocation5 + $0x10c8] sm:$0xff]
    %v877 = vld [vmem:[#allocation5 + $0x10d0] sm:$0xff]
    %v878 = vld [vmem:[#allocation5 + $0x10d8] sm:$0xff]
    %v879 = vld [vmem:[#allocation5 + $0x10e0] sm:$0xff]
    %v880 = vld [vmem:[#allocation5 + $0x10e8] sm:$0xff]
    %v881 = vld [vmem:[#allocation5 + $0x10f0] sm:$0xff]
    %v882 = vld [vmem:[#allocation5 + $0x10f8] sm:$0xff]
    %v883 = vld [vmem:[#allocation5 + $0x1100] sm:$0xff]
    %v884 = vld [vmem:[#allocation5 + $0x1108] sm:$0xff]
    %v885 = vld [vmem:[#allocation5 + $0x1110] sm:$0xff]
    %v886 = vld [vmem:[#allocation5 + $0x1118] sm:$0xff]
    %v887 = vld [vmem:[#allocation5 + $0x1120] sm:$0xff]
    %v888 = vld [vmem:[#allocation5 + $0x1128] sm:$0xff]
    %v889 = vld [vmem:[#allocation5 + $0x1130] sm:$0xff]
    %v890 = vld [vmem:[#allocation5 + $0x1138] sm:$0xff]
    %v891 = vld [vmem:[#allocation5 + $0x1140] sm:$0xff]
    %v892 = vld [vmem:[#allocation5 + $0x1148] sm:$0xff]
    %v893 = vld [vmem:[#allocation5 + $0x1150] sm:$0xff]
    %v894 = vld [vmem:[#allocation5 + $0x1158] sm:$0xff]
    %v895 = vld [vmem:[#allocation5 + $0x1160] sm:$0xff]
    %v896 = vld [vmem:[#allocation5 + $0x1168] sm:$0xff]
    %v897 = vld [vmem:[#allocation5 + $0x1170] sm:$0xff]
    %v898 = vld [vmem:[#allocation5 + $0x1178] sm:$0xff]
    %v899 = vld [vmem:[#allocation5 + $0x1180] sm:$0xff]
    %v900 = vld [vmem:[#allocation5 + $0x1188] sm:$0xff]
    %v901 = vld [vmem:[#allocation5 + $0x1190] sm:$0xff]
    %v902 = vld [vmem:[#allocation5 + $0x1198] sm:$0xff]
    %v903 = vld [vmem:[#allocation5 + $0x11a0] sm:$0xff]
    %v904 = vld [vmem:[#allocation5 + $0x11a8] sm:$0xff]
    %v905 = vld [vmem:[#allocation5 + $0x11b0] sm:$0xff]
    %v906 = vld [vmem:[#allocation5 + $0x11b8] sm:$0xff]
    %v907 = vld [vmem:[#allocation5 + $0x11c0] sm:$0xff]
    %v908 = vld [vmem:[#allocation5 + $0x11c8] sm:$0xff]
    %v909 = vld [vmem:[#allocation5 + $0x11d0] sm:$0xff]
    %v910 = vld [vmem:[#allocation5 + $0x11d8] sm:$0xff]
    %v911 = vld [vmem:[#allocation5 + $0x11e0] sm:$0xff]
    %v912 = vld [vmem:[#allocation5 + $0x11e8] sm:$0xff]
    %v913 = vld [vmem:[#allocation5 + $0x11f0] sm:$0xff]
    %v914 = vld [vmem:[#allocation5 + $0x11f8] sm:$0xff]
    %v915 = vld [vmem:[#allocation5 + $0x1200] sm:$0xff]
    %v916 = vld [vmem:[#allocation5 + $0x1208] sm:$0xff]
    %v917 = vld [vmem:[#allocation5 + $0x1210] sm:$0xff]
    %v918 = vld [vmem:[#allocation5 + $0x1218] sm:$0xff]
    %v919 = vld [vmem:[#allocation5 + $0x1220] sm:$0xff]
    %v920 = vld [vmem:[#allocation5 + $0x1228] sm:$0xff]
    %v921 = vld [vmem:[#allocation5 + $0x1230] sm:$0xff]
    %v922 = vld [vmem:[#allocation5 + $0x1238] sm:$0xff]
    %v923 = vld [vmem:[#allocation5 + $0x1240] sm:$0xff]
    %v924 = vld [vmem:[#allocation5 + $0x1248] sm:$0xff]
    %v925 = vld [vmem:[#allocation5 + $0x1250] sm:$0xff]
    %v926 = vld [vmem:[#allocation5 + $0x1258] sm:$0xff]
    %v927 = vld [vmem:[#allocation5 + $0x1260] sm:$0xff]
    %v928 = vld [vmem:[#allocation5 + $0x1268] sm:$0xff]
    %v929 = vld [vmem:[#allocation5 + $0x1270] sm:$0xff]
    %v930 = vld [vmem:[#allocation5 + $0x1278] sm:$0xff]
    %v931 = vld [vmem:[#allocation5 + $0x1280] sm:$0xff]
    %v932 = vld [vmem:[#allocation5 + $0x1288] sm:$0xff]
    %v933 = vld [vmem:[#allocation5 + $0x1290] sm:$0xff]
    %v934 = vld [vmem:[#allocation5 + $0x1298] sm:$0xff]
    %v935 = vld [vmem:[#allocation5 + $0x12a0] sm:$0xff]
    %v936 = vld [vmem:[#allocation5 + $0x12a8] sm:$0xff]
    %v937 = vld [vmem:[#allocation5 + $0x12b0] sm:$0xff]
    %v938 = vld [vmem:[#allocation5 + $0x12b8] sm:$0xff]
    %v939 = vld [vmem:[#allocation5 + $0x12c0] sm:$0xff]
    %v940 = vld [vmem:[#allocation5 + $0x12c8] sm:$0xff]
    %v941 = vld [vmem:[#allocation5 + $0x12d0] sm:$0xff]
    %v942 = vld [vmem:[#allocation5 + $0x12d8] sm:$0xff]
    %v943 = vld [vmem:[#allocation5 + $0x12e0] sm:$0xff]
    %v944 = vld [vmem:[#allocation5 + $0x12e8] sm:$0xff]
    %v945 = vld [vmem:[#allocation5 + $0x12f0] sm:$0xff]
    %v946 = vld [vmem:[#allocation5 + $0x12f8] sm:$0xff]
    %v947 = vld [vmem:[#allocation5 + $0x1300] sm:$0xff]
    %v948 = vld [vmem:[#allocation5 + $0x1308] sm:$0xff]
    %v949 = vld [vmem:[#allocation5 + $0x1310] sm:$0xff]
    %v950 = vld [vmem:[#allocation5 + $0x1318] sm:$0xff]
    %v951 = vld [vmem:[#allocation5 + $0x1320] sm:$0xff]
    %v952 = vld [vmem:[#allocation5 + $0x1328] sm:$0xff]
    %v953 = vld [vmem:[#allocation5 + $0x1330] sm:$0xff]
    %v954 = vld [vmem:[#allocation5 + $0x1338] sm:$0xff]
    %v955 = vld [vmem:[#allocation5 + $0x1340] sm:$0xff]
    %v956 = vld [vmem:[#allocation5 + $0x1348] sm:$0xff]
    %v957 = vld [vmem:[#allocation5 + $0x1350] sm:$0xff]
    %v958 = vld [vmem:[#allocation5 + $0x1358] sm:$0xff]
    %v959 = vld [vmem:[#allocation5 + $0x1360] sm:$0xff]
    %v960 = vld [vmem:[#allocation5 + $0x1368] sm:$0xff]
    %v961 = vld [vmem:[#allocation5 + $0x1370] sm:$0xff]
    %v962 = vld [vmem:[#allocation5 + $0x1378] sm:$0xff]
    %v963 = vld [vmem:[#allocation5 + $0x1380] sm:$0xff]
    %v964 = vld [vmem:[#allocation5 + $0x1388] sm:$0xff]
    %v965 = vld [vmem:[#allocation5 + $0x1390] sm:$0xff]
    %v966 = vld [vmem:[#allocation5 + $0x1398] sm:$0xff]
    %v967 = vld [vmem:[#allocation5 + $0x13a0] sm:$0xff]
    %v968 = vld [vmem:[#allocation5 + $0x13a8] sm:$0xff]
    %v969 = vld [vmem:[#allocation5 + $0x13b0] sm:$0xff]
    %v970 = vld [vmem:[#allocation5 + $0x13b8] sm:$0xff]
    %v971 = vld [vmem:[#allocation5 + $0x13c0] sm:$0xff]
    %v972 = vld [vmem:[#allocation5 + $0x13c8] sm:$0xff]
    %v973 = vld [vmem:[#allocation5 + $0x13d0] sm:$0xff]
    %v974 = vld [vmem:[#allocation5 + $0x13d8] sm:$0xff]
    %v975 = vld [vmem:[#allocation5 + $0x13e0] sm:$0xff]
    %v976 = vld [vmem:[#allocation5 + $0x13e8] sm:$0xff]
    %v977 = vld [vmem:[#allocation5 + $0x13f0] sm:$0xff]
    %v978 = vld [vmem:[#allocation5 + $0x13f8] sm:$0xff]
    %v979 = vld [vmem:[#allocation5 + $0x1400] sm:$0xff]
    %v980 = vld [vmem:[#allocation5 + $0x1408] sm:$0xff]
    %v981 = vld [vmem:[#allocation5 + $0x1410] sm:$0xff]
    %v982 = vld [vmem:[#allocation5 + $0x1418] sm:$0xff]
    %v983 = vld [vmem:[#allocation5 + $0x1420] sm:$0xff]
    %v984 = vld [vmem:[#allocation5 + $0x1428] sm:$0xff]
    %v985 = vld [vmem:[#allocation5 + $0x1430] sm:$0xff]
    %v986 = vld [vmem:[#allocation5 + $0x1438] sm:$0xff]
    %v987 = vld [vmem:[#allocation5 + $0x1440] sm:$0xff]
    %v988 = vld [vmem:[#allocation5 + $0x1448] sm:$0xff]
    %v989 = vld [vmem:[#allocation5 + $0x1450] sm:$0xff]
    %v990 = vld [vmem:[#allocation5 + $0x1458] sm:$0xff]
    %v991 = vld [vmem:[#allocation5 + $0x1460] sm:$0xff]
    %v992 = vld [vmem:[#allocation5 + $0x1468] sm:$0xff]
    %v993 = vld [vmem:[#allocation5 + $0x1470] sm:$0xff]
    %v994 = vld [vmem:[#allocation5 + $0x1478] sm:$0xff]
    %v995 = vld [vmem:[#allocation5 + $0x1480] sm:$0xff]
    %v996 = vld [vmem:[#allocation5 + $0x1488] sm:$0xff]
    %v997 = vld [vmem:[#allocation5 + $0x1490] sm:$0xff]
    %v998 = vld [vmem:[#allocation5 + $0x1498] sm:$0xff]
    %v999 = vld [vmem:[#allocation5 + $0x14a0] sm:$0xff]
    %v1000 = vld [vmem:[#allocation5 + $0x14a8] sm:$0xff]
    %v1001 = vld [vmem:[#allocation5 + $0x14b0] sm:$0xff]
    %v1002 = vld [vmem:[#allocation5 + $0x14b8] sm:$0xff]
    %v1003 = vld [vmem:[#allocation5 + $0x14c0] sm:$0xff]
    %v1004 = vld [vmem:[#allocation5 + $0x14c8] sm:$0xff]
    %v1005 = vld [vmem:[#allocation5 + $0x14d0] sm:$0xff]
    %v1006 = vld [vmem:[#allocation5 + $0x14d8] sm:$0xff]
    %v1007 = vld [vmem:[#allocation5 + $0x14e0] sm:$0xff]
    %v1008 = vld [vmem:[#allocation5 + $0x14e8] sm:$0xff]
    %v1009 = vld [vmem:[#allocation5 + $0x14f0] sm:$0xff]
    %v1010 = vld [vmem:[#allocation5 + $0x14f8] sm:$0xff]
    %v1011 = vld [vmem:[#allocation5 + $0x1500] sm:$0xff]
    %v1012 = vld [vmem:[#allocation5 + $0x1508] sm:$0xff]
    %v1013 = vld [vmem:[#allocation5 + $0x1510] sm:$0xff]
    %v1014 = vld [vmem:[#allocation5 + $0x1518] sm:$0xff]
    %v1015 = vld [vmem:[#allocation5 + $0x1520] sm:$0xff]
    %v1016 = vld [vmem:[#allocation5 + $0x1528] sm:$0xff]
    %v1017 = vld [vmem:[#allocation5 + $0x1530] sm:$0xff]
    %v1018 = vld [vmem:[#allocation5 + $0x1538] sm:$0xff]
    %v1019 = vld [vmem:[#allocation5 + $0x1540] sm:$0xff]
    %v1020 = vld [vmem:[#allocation5 + $0x1548] sm:$0xff]
    %v1021 = vld [vmem:[#allocation5 + $0x1550] sm:$0xff]
    %v1022 = vld [vmem:[#allocation5 + $0x1558] sm:$0xff]
    %v1023 = vld [vmem:[#allocation5 + $0x1560] sm:$0xff]
    %v1024 = vld [vmem:[#allocation5 + $0x1568] sm:$0xff]
    %v1025 = vld [vmem:[#allocation5 + $0x1570] sm:$0xff]
    %v1026 = vld [vmem:[#allocation5 + $0x1578] sm:$0xff]
    %v1027 = vld [vmem:[#allocation5 + $0x1580] sm:$0xff]
    %v1028 = vld [vmem:[#allocation5 + $0x1588] sm:$0xff]
    %v1029 = vld [vmem:[#allocation5 + $0x1590] sm:$0xff]
    %v1030 = vld [vmem:[#allocation5 + $0x1598] sm:$0xff]
    %v1031 = vld [vmem:[#allocation5 + $0x15a0] sm:$0xff]
    %v1032 = vld [vmem:[#allocation5 + $0x15a8] sm:$0xff]
    %v1033 = vld [vmem:[#allocation5 + $0x15b0] sm:$0xff]
    %v1034 = vld [vmem:[#allocation5 + $0x15b8] sm:$0xff]
    %v1035 = vld [vmem:[#allocation5 + $0x15c0] sm:$0xff]
    %v1036 = vld [vmem:[#allocation5 + $0x15c8] sm:$0xff]
    %v1037 = vld [vmem:[#allocation5 + $0x15d0] sm:$0xff]
    %v1038 = vld [vmem:[#allocation5 + $0x15d8] sm:$0xff]
    %v1039 = vld [vmem:[#allocation5 + $0x15e0] sm:$0xff]
    %v1040 = vld [vmem:[#allocation5 + $0x15e8] sm:$0xff]
    %v1041 = vld [vmem:[#allocation5 + $0x15f0] sm:$0xff]
    %v1042 = vld [vmem:[#allocation5 + $0x15f8] sm:$0xff]
    %v1043 = vld [vmem:[#allocation5 + $0x1600] sm:$0xff]
    %v1044 = vld [vmem:[#allocation5 + $0x1608] sm:$0xff]
    %v1045 = vld [vmem:[#allocation5 + $0x1610] sm:$0xff]
    %v1046 = vld [vmem:[#allocation5 + $0x1618] sm:$0xff]
    %v1047 = vld [vmem:[#allocation5 + $0x1620] sm:$0xff]
    %v1048 = vld [vmem:[#allocation5 + $0x1628] sm:$0xff]
    %v1049 = vld [vmem:[#allocation5 + $0x1630] sm:$0xff]
    %v1050 = vld [vmem:[#allocation5 + $0x1638] sm:$0xff]
    %v1051 = vld [vmem:[#allocation5 + $0x1640] sm:$0xff]
    %v1052 = vld [vmem:[#allocation5 + $0x1648] sm:$0xff]
    %v1053 = vld [vmem:[#allocation5 + $0x1650] sm:$0xff]
    %v1054 = vld [vmem:[#allocation5 + $0x1658] sm:$0xff]
    %v1055 = vld [vmem:[#allocation5 + $0x1660] sm:$0xff]
    %v1056 = vld [vmem:[#allocation5 + $0x1668] sm:$0xff]
    %v1057 = vld [vmem:[#allocation5 + $0x1670] sm:$0xff]
    %v1058 = vld [vmem:[#allocation5 + $0x1678] sm:$0xff]
    %v1059 = vld [vmem:[#allocation5 + $0x1680] sm:$0xff]
    %v1060 = vld [vmem:[#allocation5 + $0x1688] sm:$0xff]
    %v1061 = vld [vmem:[#allocation5 + $0x1690] sm:$0xff]
    %v1062 = vld [vmem:[#allocation5 + $0x1698] sm:$0xff]
    %v1063 = vld [vmem:[#allocation5 + $0x16a0] sm:$0xff]
    %v1064 = vld [vmem:[#allocation5 + $0x16a8] sm:$0xff]
    %v1065 = vld [vmem:[#allocation5 + $0x16b0] sm:$0xff]
    %v1066 = vld [vmem:[#allocation5 + $0x16b8] sm:$0xff]
    %v1067 = vld [vmem:[#allocation5 + $0x16c0] sm:$0xff]
    %v1068 = vld [vmem:[#allocation5 + $0x16c8] sm:$0xff]
    %v1069 = vld [vmem:[#allocation5 + $0x16d0] sm:$0xff]
    %v1070 = vld [vmem:[#allocation5 + $0x16d8] sm:$0xff]
    %v1071 = vld [vmem:[#allocation5 + $0x16e0] sm:$0xff]
    %v1072 = vld [vmem:[#allocation5 + $0x16e8] sm:$0xff]
    %v1073 = vld [vmem:[#allocation5 + $0x16f0] sm:$0xff]
    %v1074 = vld [vmem:[#allocation5 + $0x16f8] sm:$0xff]
    %v1075 = vld [vmem:[#allocation5 + $0x1700] sm:$0xff]
    %v1076 = vld [vmem:[#allocation5 + $0x1708] sm:$0xff]
    %v1077 = vld [vmem:[#allocation5 + $0x1710] sm:$0xff]
    %v1078 = vld [vmem:[#allocation5 + $0x1718] sm:$0xff]
    %v1079 = vld [vmem:[#allocation5 + $0x1720] sm:$0xff]
    %v1080 = vld [vmem:[#allocation5 + $0x1728] sm:$0xff]
    %v1081 = vld [vmem:[#allocation5 + $0x1730] sm:$0xff]
    %v1082 = vld [vmem:[#allocation5 + $0x1738] sm:$0xff]
    %v1083 = vld [vmem:[#allocation5 + $0x1740] sm:$0xff]
    %v1084 = vld [vmem:[#allocation5 + $0x1748] sm:$0xff]
    %v1085 = vld [vmem:[#allocation5 + $0x1750] sm:$0xff]
    %v1086 = vld [vmem:[#allocation5 + $0x1758] sm:$0xff]
    %v1087 = vld [vmem:[#allocation5 + $0x1760] sm:$0xff]
    %v1088 = vld [vmem:[#allocation5 + $0x1768] sm:$0xff]
    %v1089 = vld [vmem:[#allocation5 + $0x1770] sm:$0xff]
    %v1090 = vld [vmem:[#allocation5 + $0x1778] sm:$0xff]
    %v1091 = vld [vmem:[#allocation5 + $0x1780] sm:$0xff]
    %v1092 = vld [vmem:[#allocation5 + $0x1788] sm:$0xff]
    %v1093 = vld [vmem:[#allocation5 + $0x1790] sm:$0xff]
    %v1094 = vld [vmem:[#allocation5 + $0x1798] sm:$0xff]
    %v1095 = vld [vmem:[#allocation5 + $0x17a0] sm:$0xff]
    %v1096 = vld [vmem:[#allocation5 + $0x17a8] sm:$0xff]
    %v1097 = vld [vmem:[#allocation5 + $0x17b0] sm:$0xff]
    %v1098 = vld [vmem:[#allocation5 + $0x17b8] sm:$0xff]
    %v1099 = vld [vmem:[#allocation5 + $0x17c0] sm:$0xff]
    %v1100 = vld [vmem:[#allocation5 + $0x17c8] sm:$0xff]
    %v1101 = vld [vmem:[#allocation5 + $0x17d0] sm:$0xff]
    %v1102 = vld [vmem:[#allocation5 + $0x17d8] sm:$0xff]
    %v1103 = vld [vmem:[#allocation5 + $0x17e0] sm:$0xff]
    %v1104 = vld [vmem:[#allocation5 + $0x17e8] sm:$0xff]
    %v1105 = vld [vmem:[#allocation5 + $0x17f0] sm:$0xff]
    %v1106 = vld [vmem:[#allocation5 + $0x17f8] sm:$0xff]
    %v1107 = vld [vmem:[#allocation5 + $0x1800] sm:$0xff]
    %v1108 = vld [vmem:[#allocation5 + $0x1808] sm:$0xff]
    %v1109 = vld [vmem:[#allocation5 + $0x1810] sm:$0xff]
    %v1110 = vld [vmem:[#allocation5 + $0x1818] sm:$0xff]
    %v1111 = vld [vmem:[#allocation5 + $0x1820] sm:$0xff]
    %v1112 = vld [vmem:[#allocation5 + $0x1828] sm:$0xff]
    %v1113 = vld [vmem:[#allocation5 + $0x1830] sm:$0xff]
    %v1114 = vld [vmem:[#allocation5 + $0x1838] sm:$0xff]
    %v1115 = vld [vmem:[#allocation5 + $0x1840] sm:$0xff]
    %v1116 = vld [vmem:[#allocation5 + $0x1848] sm:$0xff]
    %v1117 = vld [vmem:[#allocation5 + $0x1850] sm:$0xff]
    %v1118 = vld [vmem:[#allocation5 + $0x1858] sm:$0xff]
    %v1119 = vld [vmem:[#allocation5 + $0x1860] sm:$0xff]
    %v1120 = vld [vmem:[#allocation5 + $0x1868] sm:$0xff]
    %v1121 = vld [vmem:[#allocation5 + $0x1870] sm:$0xff]
    %v1122 = vld [vmem:[#allocation5 + $0x1878] sm:$0xff]
    %v1123 = vld [vmem:[#allocation5 + $0x1880] sm:$0xff]
    %v1124 = vld [vmem:[#allocation5 + $0x1888] sm:$0xff]
    %v1125 = vld [vmem:[#allocation5 + $0x1890] sm:$0xff]
    %v1126 = vld [vmem:[#allocation5 + $0x1898] sm:$0xff]
    %v1127 = vld [vmem:[#allocation5 + $0x18a0] sm:$0xff]
    %v1128 = vld [vmem:[#allocation5 + $0x18a8] sm:$0xff]
    %v1129 = vld [vmem:[#allocation5 + $0x18b0] sm:$0xff]
    %v1130 = vld [vmem:[#allocation5 + $0x18b8] sm:$0xff]
    %v1131 = vld [vmem:[#allocation5 + $0x18c0] sm:$0xff]
    %v1132 = vld [vmem:[#allocation5 + $0x18c8] sm:$0xff]
    %v1133 = vld [vmem:[#allocation5 + $0x18d0] sm:$0xff]
    %v1134 = vld [vmem:[#allocation5 + $0x18d8] sm:$0xff]
    %v1135 = vld [vmem:[#allocation5 + $0x18e0] sm:$0xff]
    %v1136 = vld [vmem:[#allocation5 + $0x18e8] sm:$0xff]
    %v1137 = vld [vmem:[#allocation5 + $0x18f0] sm:$0xff]
    %v1138 = vld [vmem:[#allocation5 + $0x18f8] sm:$0xff]
    %v1139 = vld [vmem:[#allocation5 + $0x1900] sm:$0xff]
    %v1140 = vld [vmem:[#allocation5 + $0x1908] sm:$0xff]
    %v1141 = vld [vmem:[#allocation5 + $0x1910] sm:$0xff]
    %v1142 = vld [vmem:[#allocation5 + $0x1918] sm:$0xff]
    %v1143 = vld [vmem:[#allocation5 + $0x1920] sm:$0xff]
    %v1144 = vld [vmem:[#allocation5 + $0x1928] sm:$0xff]
    %v1145 = vld [vmem:[#allocation5 + $0x1930] sm:$0xff]
    %v1146 = vld [vmem:[#allocation5 + $0x1938] sm:$0xff]
    %v1147 = vld [vmem:[#allocation5 + $0x1940] sm:$0xff]
    %v1148 = vld [vmem:[#allocation5 + $0x1948] sm:$0xff]
    %v1149 = vld [vmem:[#allocation5 + $0x1950] sm:$0xff]
    %v1150 = vld [vmem:[#allocation5 + $0x1958] sm:$0xff]
    %v1151 = vld [vmem:[#allocation5 + $0x1960] sm:$0xff]
    %v1152 = vld [vmem:[#allocation5 + $0x1968] sm:$0xff]
    %v1153 = vld [vmem:[#allocation5 + $0x1970] sm:$0xff]
    %v1154 = vld [vmem:[#allocation5 + $0x1978] sm:$0xff]
    %v1155 = vld [vmem:[#allocation5 + $0x1980] sm:$0xff]
    %v1156 = vld [vmem:[#allocation5 + $0x1988] sm:$0xff]
    %v1157 = vld [vmem:[#allocation5 + $0x1990] sm:$0xff]
    %v1158 = vld [vmem:[#allocation5 + $0x1998] sm:$0xff]
    %v1159 = vld [vmem:[#allocation5 + $0x19a0] sm:$0xff]
    %v1160 = vld [vmem:[#allocation5 + $0x19a8] sm:$0xff]
    %v1161 = vld [vmem:[#allocation5 + $0x19b0] sm:$0xff]
    %v1162 = vld [vmem:[#allocation5 + $0x19b8] sm:$0xff]
    %v1163 = vld [vmem:[#allocation5 + $0x19c0] sm:$0xff]
    %v1164 = vld [vmem:[#allocation5 + $0x19c8] sm:$0xff]
    %v1165 = vld [vmem:[#allocation5 + $0x19d0] sm:$0xff]
    %v1166 = vld [vmem:[#allocation5 + $0x19d8] sm:$0xff]
    %v1167 = vld [vmem:[#allocation5 + $0x19e0] sm:$0xff]
    %v1168 = vld [vmem:[#allocation5 + $0x19e8] sm:$0xff]
    %v1169 = vld [vmem:[#allocation5 + $0x19f0] sm:$0xff]
    %v1170 = vld [vmem:[#allocation5 + $0x19f8] sm:$0xff]
    %v1171 = vld [vmem:[#allocation5 + $0x1a00] sm:$0xff]
    %v1172 = vld [vmem:[#allocation5 + $0x1a08] sm:$0xff]
    %v1173 = vld [vmem:[#allocation5 + $0x1a10] sm:$0xff]
    %v1174 = vld [vmem:[#allocation5 + $0x1a18] sm:$0xff]
    %v1175 = vld [vmem:[#allocation5 + $0x1a20] sm:$0xff]
    %v1176 = vld [vmem:[#allocation5 + $0x1a28] sm:$0xff]
    %v1177 = vld [vmem:[#allocation5 + $0x1a30] sm:$0xff]
    %v1178 = vld [vmem:[#allocation5 + $0x1a38] sm:$0xff]
    %v1179 = vld [vmem:[#allocation5 + $0x1a40] sm:$0xff]
    %v1180 = vld [vmem:[#allocation5 + $0x1a48] sm:$0xff]
    %v1181 = vld [vmem:[#allocation5 + $0x1a50] sm:$0xff]
    %v1182 = vld [vmem:[#allocation5 + $0x1a58] sm:$0xff]
    %v1183 = vld [vmem:[#allocation5 + $0x1a60] sm:$0xff]
    %v1184 = vld [vmem:[#allocation5 + $0x1a68] sm:$0xff]
    %v1185 = vld [vmem:[#allocation5 + $0x1a70] sm:$0xff]
    %v1186 = vld [vmem:[#allocation5 + $0x1a78] sm:$0xff]
    %v1187 = vld [vmem:[#allocation5 + $0x1a80] sm:$0xff]
    %v1188 = vld [vmem:[#allocation5 + $0x1a88] sm:$0xff]
    %v1189 = vld [vmem:[#allocation5 + $0x1a90] sm:$0xff]
    %v1190 = vld [vmem:[#allocation5 + $0x1a98] sm:$0xff]
    %v1191 = vld [vmem:[#allocation5 + $0x1aa0] sm:$0xff]
    %v1192 = vld [vmem:[#allocation5 + $0x1aa8] sm:$0xff]
    %v1193 = vld [vmem:[#allocation5 + $0x1ab0] sm:$0xff]
    %v1194 = vld [vmem:[#allocation5 + $0x1ab8] sm:$0xff]
    %v1195 = vld [vmem:[#allocation5 + $0x1ac0] sm:$0xff]
    %v1196 = vld [vmem:[#allocation5 + $0x1ac8] sm:$0xff]
    %v1197 = vld [vmem:[#allocation5 + $0x1ad0] sm:$0xff]
    %v1198 = vld [vmem:[#allocation5 + $0x1ad8] sm:$0xff]
    %v1199 = vld [vmem:[#allocation5 + $0x1ae0] sm:$0xff]
    %v1200 = vld [vmem:[#allocation5 + $0x1ae8] sm:$0xff]
    %v1201 = vld [vmem:[#allocation5 + $0x1af0] sm:$0xff]
    %v1202 = vld [vmem:[#allocation5 + $0x1af8] sm:$0xff]
    %v1203 = vld [vmem:[#allocation5 + $0x1b00] sm:$0xff]
    %v1204 = vld [vmem:[#allocation5 + $0x1b08] sm:$0xff]
    %v1205 = vld [vmem:[#allocation5 + $0x1b10] sm:$0xff]
    %v1206 = vld [vmem:[#allocation5 + $0x1b18] sm:$0xff]
    %v1207 = vld [vmem:[#allocation5 + $0x1b20] sm:$0xff]
    %v1208 = vld [vmem:[#allocation5 + $0x1b28] sm:$0xff]
    %v1209 = vld [vmem:[#allocation5 + $0x1b30] sm:$0xff]
    %v1210 = vld [vmem:[#allocation5 + $0x1b38] sm:$0xff]
    %v1211 = vld [vmem:[#allocation5 + $0x1b40] sm:$0xff]
    %v1212 = vld [vmem:[#allocation5 + $0x1b48] sm:$0xff]
    %v1213 = vld [vmem:[#allocation5 + $0x1b50] sm:$0xff]
    %v1214 = vld [vmem:[#allocation5 + $0x1b58] sm:$0xff]
    %v1215 = vld [vmem:[#allocation5 + $0x1b60] sm:$0xff]
    %v1216 = vld [vmem:[#allocation5 + $0x1b68] sm:$0xff]
    %v1217 = vld [vmem:[#allocation5 + $0x1b70] sm:$0xff]
    %v1218 = vld [vmem:[#allocation5 + $0x1b78] sm:$0xff]
    %v1219 = vld [vmem:[#allocation5 + $0x1b80] sm:$0xff]
    %v1220 = vld [vmem:[#allocation5 + $0x1b88] sm:$0xff]
    %v1221 = vld [vmem:[#allocation5 + $0x1b90] sm:$0xff]
    %v1222 = vld [vmem:[#allocation5 + $0x1b98] sm:$0xff]
    %v1223 = vld [vmem:[#allocation5 + $0x1ba0] sm:$0xff]
    %v1224 = vld [vmem:[#allocation5 + $0x1ba8] sm:$0xff]
    %v1225 = vld [vmem:[#allocation5 + $0x1bb0] sm:$0xff]
    %v1226 = vld [vmem:[#allocation5 + $0x1bb8] sm:$0xff]
    %v1227 = vld [vmem:[#allocation5 + $0x1bc0] sm:$0xff]
    %v1228 = vld [vmem:[#allocation5 + $0x1bc8] sm:$0xff]
    %v1229 = vld [vmem:[#allocation5 + $0x1bd0] sm:$0xff]
    %v1230 = vld [vmem:[#allocation5 + $0x1bd8] sm:$0xff]
    %v1231 = vld [vmem:[#allocation5 + $0x1be0] sm:$0xff]
    %v1232 = vld [vmem:[#allocation5 + $0x1be8] sm:$0xff]
    %v1233 = vld [vmem:[#allocation5 + $0x1bf0] sm:$0xff]
    %v1234 = vld [vmem:[#allocation5 + $0x1bf8] sm:$0xff]
    %v1235 = vld [vmem:[#allocation5 + $0x1c00] sm:$0xff]
    %v1236 = vld [vmem:[#allocation5 + $0x1c08] sm:$0xff]
    %v1237 = vld [vmem:[#allocation5 + $0x1c10] sm:$0xff]
    %v1238 = vld [vmem:[#allocation5 + $0x1c18] sm:$0xff]
    %v1239 = vld [vmem:[#allocation5 + $0x1c20] sm:$0xff]
    %v1240 = vld [vmem:[#allocation5 + $0x1c28] sm:$0xff]
    %v1241 = vld [vmem:[#allocation5 + $0x1c30] sm:$0xff]
    %v1242 = vld [vmem:[#allocation5 + $0x1c38] sm:$0xff]
    %v1243 = vld [vmem:[#allocation5 + $0x1c40] sm:$0xff]
    %v1244 = vld [vmem:[#allocation5 + $0x1c48] sm:$0xff]
    %v1245 = vld [vmem:[#allocation5 + $0x1c50] sm:$0xff]
    %v1246 = vld [vmem:[#allocation5 + $0x1c58] sm:$0xff]
    %v1247 = vld [vmem:[#allocation5 + $0x1c60] sm:$0xff]
    %v1248 = vld [vmem:[#allocation5 + $0x1c68] sm:$0xff]
    %v1249 = vld [vmem:[#allocation5 + $0x1c70] sm:$0xff]
    %v1250 = vld [vmem:[#allocation5 + $0x1c78] sm:$0xff]
    %v1251 = vld [vmem:[#allocation5 + $0x1c80] sm:$0xff]
    %v1252 = vld [vmem:[#allocation5 + $0x1c88] sm:$0xff]
    %v1253 = vld [vmem:[#allocation5 + $0x1c90] sm:$0xff]
    %v1254 = vld [vmem:[#allocation5 + $0x1c98] sm:$0xff]
    %v1255 = vld [vmem:[#allocation5 + $0x1ca0] sm:$0xff]
    %v1256 = vld [vmem:[#allocation5 + $0x1ca8] sm:$0xff]
    %v1257 = vld [vmem:[#allocation5 + $0x1cb0] sm:$0xff]
    %v1258 = vld [vmem:[#allocation5 + $0x1cb8] sm:$0xff]
    %v1259 = vld [vmem:[#allocation5 + $0x1cc0] sm:$0xff]
    %v1260 = vld [vmem:[#allocation5 + $0x1cc8] sm:$0xff]
    %v1261 = vld [vmem:[#allocation5 + $0x1cd0] sm:$0xff]
    %v1262 = vld [vmem:[#allocation5 + $0x1cd8] sm:$0xff]
    %v1263 = vld [vmem:[#allocation5 + $0x1ce0] sm:$0xff]
    %v1264 = vld [vmem:[#allocation5 + $0x1ce8] sm:$0xff]
    %v1265 = vld [vmem:[#allocation5 + $0x1cf0] sm:$0xff]
    %v1266 = vld [vmem:[#allocation5 + $0x1cf8] sm:$0xff]
    %v1267 = vld [vmem:[#allocation5 + $0x1d00] sm:$0xff]
    %v1268 = vld [vmem:[#allocation5 + $0x1d08] sm:$0xff]
    %v1269 = vld [vmem:[#allocation5 + $0x1d10] sm:$0xff]
    %v1270 = vld [vmem:[#allocation5 + $0x1d18] sm:$0xff]
    %v1271 = vld [vmem:[#allocation5 + $0x1d20] sm:$0xff]
    %v1272 = vld [vmem:[#allocation5 + $0x1d28] sm:$0xff]
    %v1273 = vld [vmem:[#allocation5 + $0x1d30] sm:$0xff]
    %v1274 = vld [vmem:[#allocation5 + $0x1d38] sm:$0xff]
    %v1275 = vld [vmem:[#allocation5 + $0x1d40] sm:$0xff]
    %v1276 = vld [vmem:[#allocation5 + $0x1d48] sm:$0xff]
    %v1277 = vld [vmem:[#allocation5 + $0x1d50] sm:$0xff]
    %v1278 = vld [vmem:[#allocation5 + $0x1d58] sm:$0xff]
    %v1279 = vld [vmem:[#allocation5 + $0x1d60] sm:$0xff]
    %v1280 = vld [vmem:[#allocation5 + $0x1d68] sm:$0xff]
    %v1281 = vld [vmem:[#allocation5 + $0x1d70] sm:$0xff]
    %v1282 = vld [vmem:[#allocation5 + $0x1d78] sm:$0xff]
    %v1283 = vld [vmem:[#allocation5 + $0x1d80] sm:$0xff]
    %v1284 = vld [vmem:[#allocation5 + $0x1d88] sm:$0xff]
    %v1285 = vld [vmem:[#allocation5 + $0x1d90] sm:$0xff]
    %v1286 = vld [vmem:[#allocation5 + $0x1d98] sm:$0xff]
    %v1287 = vld [vmem:[#allocation5 + $0x1da0] sm:$0xff]
    %v1288 = vld [vmem:[#allocation5 + $0x1da8] sm:$0xff]
    %v1289 = vld [vmem:[#allocation5 + $0x1db0] sm:$0xff]
    %v1290 = vld [vmem:[#allocation5 + $0x1db8] sm:$0xff]
    %v1291 = vld [vmem:[#allocation5 + $0x1dc0] sm:$0xff]
    %v1292 = vld [vmem:[#allocation5 + $0x1dc8] sm:$0xff]
    %v1293 = vld [vmem:[#allocation5 + $0x1dd0] sm:$0xff]
    %v1294 = vld [vmem:[#allocation5 + $0x1dd8] sm:$0xff]
    %v1295 = vld [vmem:[#allocation5 + $0x1de0] sm:$0xff]
    %v1296 = vld [vmem:[#allocation5 + $0x1de8] sm:$0xff]
    %v1297 = vld [vmem:[#allocation5 + $0x1df0] sm:$0xff]
    %v1298 = vld [vmem:[#allocation5 + $0x1df8] sm:$0xff]
    %v1299 = vld [vmem:[#allocation5 + $0x1e00] sm:$0xff]
    %v1300 = vld [vmem:[#allocation5 + $0x1e08] sm:$0xff]
    %v1301 = vld [vmem:[#allocation5 + $0x1e10] sm:$0xff]
    %v1302 = vld [vmem:[#allocation5 + $0x1e18] sm:$0xff]
    %v1303 = vld [vmem:[#allocation5 + $0x1e20] sm:$0xff]
    %v1304 = vld [vmem:[#allocation5 + $0x1e28] sm:$0xff]
    %v1305 = vld [vmem:[#allocation5 + $0x1e30] sm:$0xff]
    %v1306 = vld [vmem:[#allocation5 + $0x1e38] sm:$0xff]
    %v1307 = vld [vmem:[#allocation5 + $0x1e40] sm:$0xff]
    %v1308 = vld [vmem:[#allocation5 + $0x1e48] sm:$0xff]
    %v1309 = vld [vmem:[#allocation5 + $0x1e50] sm:$0xff]
    %v1310 = vld [vmem:[#allocation5 + $0x1e58] sm:$0xff]
    %v1311 = vld [vmem:[#allocation5 + $0x1e60] sm:$0xff]
    %v1312 = vld [vmem:[#allocation5 + $0x1e68] sm:$0xff]
    %v1313 = vld [vmem:[#allocation5 + $0x1e70] sm:$0xff]
    %v1314 = vld [vmem:[#allocation5 + $0x1e78] sm:$0xff]
    %v1315 = vld [vmem:[#allocation5 + $0x1e80] sm:$0xff]
    %v1316 = vld [vmem:[#allocation5 + $0x1e88] sm:$0xff]
    %v1317 = vld [vmem:[#allocation5 + $0x1e90] sm:$0xff]
    %v1318 = vld [vmem:[#allocation5 + $0x1e98] sm:$0xff]
    %v1319 = vld [vmem:[#allocation5 + $0x1ea0] sm:$0xff]
    %v1320 = vld [vmem:[#allocation5 + $0x1ea8] sm:$0xff]
    %v1321 = vld [vmem:[#allocation5 + $0x1eb0] sm:$0xff]
    %v1322 = vld [vmem:[#allocation5 + $0x1eb8] sm:$0xff]
    %v1323 = vld [vmem:[#allocation5 + $0x1ec0] sm:$0xff]
    %v1324 = vld [vmem:[#allocation5 + $0x1ec8] sm:$0xff]
    %v1325 = vld [vmem:[#allocation5 + $0x1ed0] sm:$0xff]
    %v1326 = vld [vmem:[#allocation5 + $0x1ed8] sm:$0xff]
    %v1327 = vld [vmem:[#allocation5 + $0x1ee0] sm:$0xff]
    %v1328 = vld [vmem:[#allocation5 + $0x1ee8] sm:$0xff]
    %v1329 = vld [vmem:[#allocation5 + $0x1ef0] sm:$0xff]
    %v1330 = vld [vmem:[#allocation5 + $0x1ef8] sm:$0xff]
    %v1331 = vld [vmem:[#allocation5 + $0x1f00] sm:$0xff]
    %v1332 = vld [vmem:[#allocation5 + $0x1f08] sm:$0xff]
    %v1333 = vld [vmem:[#allocation5 + $0x1f10] sm:$0xff]
    %v1334 = vld [vmem:[#allocation5 + $0x1f18] sm:$0xff]
    %v1335 = vld [vmem:[#allocation5 + $0x1f20] sm:$0xff]
    %v1336 = vld [vmem:[#allocation5 + $0x1f28] sm:$0xff]
    %v1337 = vld [vmem:[#allocation5 + $0x1f30] sm:$0xff]
    %v1338 = vld [vmem:[#allocation5 + $0x1f38] sm:$0xff]
    %v1339 = vld [vmem:[#allocation5 + $0x1f40] sm:$0xff]
    %v1340 = vld [vmem:[#allocation5 + $0x1f48] sm:$0xff]
    %v1341 = vld [vmem:[#allocation5 + $0x1f50] sm:$0xff]
    %v1342 = vld [vmem:[#allocation5 + $0x1f58] sm:$0xff]
    %v1343 = vld [vmem:[#allocation5 + $0x1f60] sm:$0xff]
    %v1344 = vld [vmem:[#allocation5 + $0x1f68] sm:$0xff]
    %v1345 = vld [vmem:[#allocation5 + $0x1f70] sm:$0xff]
    %v1346 = vld [vmem:[#allocation5 + $0x1f78] sm:$0xff]
    %v1347 = vld [vmem:[#allocation5 + $0x1f80] sm:$0xff]
    %v1348 = vld [vmem:[#allocation5 + $0x1f88] sm:$0xff]
    %v1349 = vld [vmem:[#allocation5 + $0x1f90] sm:$0xff]
    %v1350 = vld [vmem:[#allocation5 + $0x1f98] sm:$0xff]
    %v1351 = vld [vmem:[#allocation5 + $0x1fa0] sm:$0xff]
    %v1352 = vld [vmem:[#allocation5 + $0x1fa8] sm:$0xff]
    %v1353 = vld [vmem:[#allocation5 + $0x1fb0] sm:$0xff]
    %v1354 = vld [vmem:[#allocation5 + $0x1fb8] sm:$0xff]
    %v1355 = vld [vmem:[#allocation5 + $0x1fc0] sm:$0xff]
    %v1356 = vld [vmem:[#allocation5 + $0x1fc8] sm:$0xff]
    %v1357 = vld [vmem:[#allocation5 + $0x1fd0] sm:$0xff]
    %v1358 = vld [vmem:[#allocation5 + $0x1fd8] sm:$0xff]
    %v1359 = vld [vmem:[#allocation5 + $0x1fe0] sm:$0xff]
    %v1360 = vld [vmem:[#allocation5 + $0x1fe8] sm:$0xff]
    %v1361 = vld [vmem:[#allocation5 + $0x1ff0] sm:$0xff]
    %v1362 = vld [vmem:[#allocation5 + $0x1ff8] sm:$0xff]
    %v1363 = vld [vmem:[#allocation5 + $0x2000] sm:$0xff]
    %v1364 = vld [vmem:[#allocation5 + $0x2008] sm:$0xff]
    %v1365 = vld [vmem:[#allocation5 + $0x2010] sm:$0xff]
    %v1366 = vld [vmem:[#allocation5 + $0x2018] sm:$0xff]
    %v1367 = vld [vmem:[#allocation5 + $0x2020] sm:$0xff]
    %v1368 = vld [vmem:[#allocation5 + $0x2028] sm:$0xff]
    %v1369 = vld [vmem:[#allocation5 + $0x2030] sm:$0xff]
    %v1370 = vld [vmem:[#allocation5 + $0x2038] sm:$0xff]
    %v1371 = vld [vmem:[#allocation5 + $0x2040] sm:$0xff]
    %v1372 = vld [vmem:[#allocation5 + $0x2048] sm:$0xff]
    %v1373 = vld [vmem:[#allocation5 + $0x2050] sm:$0xff]
    %v1374 = vld [vmem:[#allocation5 + $0x2058] sm:$0xff]
    %v1375 = vld [vmem:[#allocation5 + $0x2060] sm:$0xff]
    %v1376 = vld [vmem:[#allocation5 + $0x2068] sm:$0xff]
    %v1377 = vld [vmem:[#allocation5 + $0x2070] sm:$0xff]
    %v1378 = vld [vmem:[#allocation5 + $0x2078] sm:$0xff]
    %v1379 = vld [vmem:[#allocation5 + $0x2080] sm:$0xff]
    %v1380 = vld [vmem:[#allocation5 + $0x2088] sm:$0xff]
    %v1381 = vld [vmem:[#allocation5 + $0x2090] sm:$0xff]
    %v1382 = vld [vmem:[#allocation5 + $0x2098] sm:$0xff]
    %v1383 = vld [vmem:[#allocation5 + $0x20a0] sm:$0xff]
    %v1384 = vld [vmem:[#allocation5 + $0x20a8] sm:$0xff]
    %v1385 = vld [vmem:[#allocation5 + $0x20b0] sm:$0xff]
    %v1386 = vld [vmem:[#allocation5 + $0x20b8] sm:$0xff]
    %v1387 = vld [vmem:[#allocation5 + $0x20c0] sm:$0xff]
    %v1388 = vld [vmem:[#allocation5 + $0x20c8] sm:$0xff]
    %v1389 = vld [vmem:[#allocation5 + $0x20d0] sm:$0xff]
    %v1390 = vld [vmem:[#allocation5 + $0x20d8] sm:$0xff]
    %v1391 = vld [vmem:[#allocation5 + $0x20e0] sm:$0xff]
    %v1392 = vld [vmem:[#allocation5 + $0x20e8] sm:$0xff]
    %v1393 = vld [vmem:[#allocation5 + $0x20f0] sm:$0xff]
    %v1394 = vld [vmem:[#allocation5 + $0x20f8] sm:$0xff]
    %v1395 = vld [vmem:[#allocation5 + $0x2100] sm:$0xff]
    %v1396 = vld [vmem:[#allocation5 + $0x2108] sm:$0xff]
    %v1397 = vld [vmem:[#allocation5 + $0x2110] sm:$0xff]
    %v1398 = vld [vmem:[#allocation5 + $0x2118] sm:$0xff]
    %v1399 = vld [vmem:[#allocation5 + $0x2120] sm:$0xff]
    %v1400 = vld [vmem:[#allocation5 + $0x2128] sm:$0xff]
    %v1401 = vld [vmem:[#allocation5 + $0x2130] sm:$0xff]
    %v1402 = vld [vmem:[#allocation5 + $0x2138] sm:$0xff]
    %v1403 = vld [vmem:[#allocation5 + $0x2140] sm:$0xff]
    %v1404 = vld [vmem:[#allocation5 + $0x2148] sm:$0xff]
    %v1405 = vld [vmem:[#allocation5 + $0x2150] sm:$0xff]
    %v1406 = vld [vmem:[#allocation5 + $0x2158] sm:$0xff]
    %v1407 = vld [vmem:[#allocation5 + $0x2160] sm:$0xff]
    %v1408 = vld [vmem:[#allocation5 + $0x2168] sm:$0xff]
    %v1409 = vld [vmem:[#allocation5 + $0x2170] sm:$0xff]
    %v1410 = vld [vmem:[#allocation5 + $0x2178] sm:$0xff]
    %v1411 = vld [vmem:[#allocation5 + $0x2180] sm:$0xff]
    %v1412 = vld [vmem:[#allocation5 + $0x2188] sm:$0xff]
    %v1413 = vld [vmem:[#allocation5 + $0x2190] sm:$0xff]
    %v1414 = vld [vmem:[#allocation5 + $0x2198] sm:$0xff]
    %v1415 = vld [vmem:[#allocation5 + $0x21a0] sm:$0xff]
    %v1416 = vld [vmem:[#allocation5 + $0x21a8] sm:$0xff]
    %v1417 = vld [vmem:[#allocation5 + $0x21b0] sm:$0xff]
    %v1418 = vld [vmem:[#allocation5 + $0x21b8] sm:$0xff]
    %v1419 = vld [vmem:[#allocation5 + $0x21c0] sm:$0xff]
    %v1420 = vld [vmem:[#allocation5 + $0x21c8] sm:$0xff]
    %v1421 = vld [vmem:[#allocation5 + $0x21d0] sm:$0xff]
    %v1422 = vld [vmem:[#allocation5 + $0x21d8] sm:$0xff]
    %v1423 = vld [vmem:[#allocation5 + $0x21e0] sm:$0xff]
    %v1424 = vld [vmem:[#allocation5 + $0x21e8] sm:$0xff]
    %v1425 = vld [vmem:[#allocation5 + $0x21f0] sm:$0xff]
    %v1426 = vld [vmem:[#allocation5 + $0x21f8] sm:$0xff]
    %v1427 = vld [vmem:[#allocation5 + $0x2200] sm:$0xff]
    %v1428 = vld [vmem:[#allocation5 + $0x2208] sm:$0xff]
    %v1429 = vld [vmem:[#allocation5 + $0x2210] sm:$0xff]
    %v1430 = vld [vmem:[#allocation5 + $0x2218] sm:$0xff]
    %v1431 = vld [vmem:[#allocation5 + $0x2220] sm:$0xff]
    %v1432 = vld [vmem:[#allocation5 + $0x2228] sm:$0xff]
    %v1433 = vld [vmem:[#allocation5 + $0x2230] sm:$0xff]
    %v1434 = vld [vmem:[#allocation5 + $0x2238] sm:$0xff]
    %v1435 = vld [vmem:[#allocation5 + $0x2240] sm:$0xff]
    %v1436 = vld [vmem:[#allocation5 + $0x2248] sm:$0xff]
    %v1437 = vld [vmem:[#allocation5 + $0x2250] sm:$0xff]
    %v1438 = vld [vmem:[#allocation5 + $0x2258] sm:$0xff]
    %v1439 = vld [vmem:[#allocation5 + $0x2260] sm:$0xff]
    %v1440 = vld [vmem:[#allocation5 + $0x2268] sm:$0xff]
    %v1441 = vld [vmem:[#allocation5 + $0x2270] sm:$0xff]
    %v1442 = vld [vmem:[#allocation5 + $0x2278] sm:$0xff]
    %v1443 = vld [vmem:[#allocation5 + $0x2280] sm:$0xff]
    %v1444 = vld [vmem:[#allocation5 + $0x2288] sm:$0xff]
    %v1445 = vld [vmem:[#allocation5 + $0x2290] sm:$0xff]
    %v1446 = vld [vmem:[#allocation5 + $0x2298] sm:$0xff]
    %v1447 = vld [vmem:[#allocation5 + $0x22a0] sm:$0xff]
    %v1448 = vld [vmem:[#allocation5 + $0x22a8] sm:$0xff]
    %v1449 = vld [vmem:[#allocation5 + $0x22b0] sm:$0xff]
    %v1450 = vld [vmem:[#allocation5 + $0x22b8] sm:$0xff]
    %v1451 = vld [vmem:[#allocation5 + $0x22c0] sm:$0xff]
    %v1452 = vld [vmem:[#allocation5 + $0x22c8] sm:$0xff]
    %v1453 = vld [vmem:[#allocation5 + $0x22d0] sm:$0xff]
    %v1454 = vld [vmem:[#allocation5 + $0x22d8] sm:$0xff]
    %v1455 = vld [vmem:[#allocation5 + $0x22e0] sm:$0xff]
    %v1456 = vld [vmem:[#allocation5 + $0x22e8] sm:$0xff]
    %v1457 = vld [vmem:[#allocation5 + $0x22f0] sm:$0xff]
    %v1458 = vld [vmem:[#allocation5 + $0x22f8] sm:$0xff]
    %v1459 = vld [vmem:[#allocation5 + $0x2300] sm:$0xff]
    %v1460 = vld [vmem:[#allocation5 + $0x2308] sm:$0xff]
    %v1461 = vld [vmem:[#allocation5 + $0x2310] sm:$0xff]
    %v1462 = vld [vmem:[#allocation5 + $0x2318] sm:$0xff]
    %v1463 = vld [vmem:[#allocation5 + $0x2320] sm:$0xff]
    %v1464 = vld [vmem:[#allocation5 + $0x2328] sm:$0xff]
    %v1465 = vld [vmem:[#allocation5 + $0x2330] sm:$0xff]
    %v1466 = vld [vmem:[#allocation5 + $0x2338] sm:$0xff]
    %v1467 = vld [vmem:[#allocation5 + $0x2340] sm:$0xff]
    %v1468 = vld [vmem:[#allocation5 + $0x2348] sm:$0xff]
    %v1469 = vld [vmem:[#allocation5 + $0x2350] sm:$0xff]
    %v1470 = vld [vmem:[#allocation5 + $0x2358] sm:$0xff]
    %v1471 = vld [vmem:[#allocation5 + $0x2360] sm:$0xff]
    %v1472 = vld [vmem:[#allocation5 + $0x2368] sm:$0xff]
    %v1473 = vld [vmem:[#allocation5 + $0x2370] sm:$0xff]
    %v1474 = vld [vmem:[#allocation5 + $0x2378] sm:$0xff]
    %v1475 = vld [vmem:[#allocation5 + $0x2380] sm:$0xff]
    %v1476 = vld [vmem:[#allocation5 + $0x2388] sm:$0xff]
    %v1477 = vld [vmem:[#allocation5 + $0x2390] sm:$0xff]
    %v1478 = vld [vmem:[#allocation5 + $0x2398] sm:$0xff]
    %v1479 = vld [vmem:[#allocation5 + $0x23a0] sm:$0xff]
    %v1480 = vld [vmem:[#allocation5 + $0x23a8] sm:$0xff]
    %v1481 = vld [vmem:[#allocation5 + $0x23b0] sm:$0xff]
    %v1482 = vld [vmem:[#allocation5 + $0x23b8] sm:$0xff]
    %v1483 = vld [vmem:[#allocation5 + $0x23c0] sm:$0xff]
    %v1484 = vld [vmem:[#allocation5 + $0x23c8] sm:$0xff]
    %v1485 = vld [vmem:[#allocation5 + $0x23d0] sm:$0xff]
    %v1486 = vld [vmem:[#allocation5 + $0x23d8] sm:$0xff]
    %v1487 = vld [vmem:[#allocation5 + $0x23e0] sm:$0xff]
    %v1488 = vld [vmem:[#allocation5 + $0x23e8] sm:$0xff]
    %v1489 = vld [vmem:[#allocation5 + $0x23f0] sm:$0xff]
    %v1490 = vld [vmem:[#allocation5 + $0x23f8] sm:$0xff]
    %v1491 = vld [vmem:[#allocation5 + $0x2400] sm:$0xff]
    %v1492 = vld [vmem:[#allocation5 + $0x2408] sm:$0xff]
    %v1493 = vld [vmem:[#allocation5 + $0x2410] sm:$0xff]
    %v1494 = vld [vmem:[#allocation5 + $0x2418] sm:$0xff]
    %v1495 = vld [vmem:[#allocation5 + $0x2420] sm:$0xff]
    %v1496 = vld [vmem:[#allocation5 + $0x2428] sm:$0xff]
    %v1497 = vld [vmem:[#allocation5 + $0x2430] sm:$0xff]
    %v1498 = vld [vmem:[#allocation5 + $0x2438] sm:$0xff]
    %v1499 = vld [vmem:[#allocation5 + $0x2440] sm:$0xff]
    %v1500 = vld [vmem:[#allocation5 + $0x2448] sm:$0xff]
    %v1501 = vld [vmem:[#allocation5 + $0x2450] sm:$0xff]
    %v1502 = vld [vmem:[#allocation5 + $0x2458] sm:$0xff]
    %v1503 = vld [vmem:[#allocation5 + $0x2460] sm:$0xff]
    %v1504 = vld [vmem:[#allocation5 + $0x2468] sm:$0xff]
    %v1505 = vld [vmem:[#allocation5 + $0x2470] sm:$0xff]
    %v1506 = vld [vmem:[#allocation5 + $0x2478] sm:$0xff]
    %v1507 = vld [vmem:[#allocation5 + $0x2480] sm:$0xff]
    %v1508 = vld [vmem:[#allocation5 + $0x2488] sm:$0xff]
    %v1509 = vld [vmem:[#allocation5 + $0x2490] sm:$0xff]
    %v1510 = vld [vmem:[#allocation5 + $0x2498] sm:$0xff]
    %v1511 = vld [vmem:[#allocation5 + $0x24a0] sm:$0xff]
    %v1512 = vld [vmem:[#allocation5 + $0x24a8] sm:$0xff]
    %v1513 = vld [vmem:[#allocation5 + $0x24b0] sm:$0xff]
    %v1514 = vld [vmem:[#allocation5 + $0x24b8] sm:$0xff]
    %v1515 = vld [vmem:[#allocation5 + $0x24c0] sm:$0xff]
    %v1516 = vld [vmem:[#allocation5 + $0x24c8] sm:$0xff]
    %v1517 = vld [vmem:[#allocation5 + $0x24d0] sm:$0xff]
    %v1518 = vld [vmem:[#allocation5 + $0x24d8] sm:$0xff]
    %v1519 = vld [vmem:[#allocation5 + $0x24e0] sm:$0xff]
    %v1520 = vld [vmem:[#allocation5 + $0x24e8] sm:$0xff]
    %v1521 = vld [vmem:[#allocation5 + $0x24f0] sm:$0xff]
    %v1522 = vld [vmem:[#allocation5 + $0x24f8] sm:$0xff]
    %v1523 = vld [vmem:[#allocation5 + $0x2500] sm:$0xff]
    %v1524 = vld [vmem:[#allocation5 + $0x2508] sm:$0xff]
    %v1525 = vld [vmem:[#allocation5 + $0x2510] sm:$0xff]
    %v1526 = vld [vmem:[#allocation5 + $0x2518] sm:$0xff]
    %v1527 = vld [vmem:[#allocation5 + $0x2520] sm:$0xff]
    %v1528 = vld [vmem:[#allocation5 + $0x2528] sm:$0xff]
    %v1529 = vld [vmem:[#allocation5 + $0x2530] sm:$0xff]
    %v1530 = vld [vmem:[#allocation5 + $0x2538] sm:$0xff]
    %v1531 = vld [vmem:[#allocation5 + $0x2540] sm:$0xff]
    %v1532 = vld [vmem:[#allocation5 + $0x2548] sm:$0xff]
    %v1533 = vld [vmem:[#allocation5 + $0x2550] sm:$0xff]
    %v1534 = vld [vmem:[#allocation5 + $0x2558] sm:$0xff]
    %v1535 = vld [vmem:[#allocation5 + $0x2560] sm:$0xff]
    %v1536 = vld [vmem:[#allocation5 + $0x2568] sm:$0xff]
    %v1537 = vld [vmem:[#allocation5 + $0x2570] sm:$0xff]
    %v1538 = vld [vmem:[#allocation5 + $0x2578] sm:$0xff]
    %v1539 = vld [vmem:[#allocation5 + $0x2580] sm:$0xff]
    %v1540 = vld [vmem:[#allocation5 + $0x2588] sm:$0xff]
    %v1541 = vld [vmem:[#allocation5 + $0x2590] sm:$0xff]
    %v1542 = vld [vmem:[#allocation5 + $0x2598] sm:$0xff]
    %v1543 = vld [vmem:[#allocation5 + $0x25a0] sm:$0xff]
    %v1544 = vld [vmem:[#allocation5 + $0x25a8] sm:$0xff]
    %v1545 = vld [vmem:[#allocation5 + $0x25b0] sm:$0xff]
    %v1546 = vld [vmem:[#allocation5 + $0x25b8] sm:$0xff]
    %v1547 = vld [vmem:[#allocation5 + $0x25c0] sm:$0xff]
    %v1548 = vld [vmem:[#allocation5 + $0x25c8] sm:$0xff]
    %v1549 = vld [vmem:[#allocation5 + $0x25d0] sm:$0xff]
    %v1550 = vld [vmem:[#allocation5 + $0x25d8] sm:$0xff]
    %v1551 = vld [vmem:[#allocation5 + $0x25e0] sm:$0xff]
    %v1552 = vld [vmem:[#allocation5 + $0x25e8] sm:$0xff]
    %v1553 = vld [vmem:[#allocation5 + $0x25f0] sm:$0xff]
    %v1554 = vld [vmem:[#allocation5 + $0x25f8] sm:$0xff]
    %v1555 = vld [vmem:[#allocation5 + $0x2600] sm:$0xff]
    %v1556 = vld [vmem:[#allocation5 + $0x2608] sm:$0xff]
    %v1557 = vld [vmem:[#allocation5 + $0x2610] sm:$0xff]
    %v1558 = vld [vmem:[#allocation5 + $0x2618] sm:$0xff]
    %v1559 = vld [vmem:[#allocation5 + $0x2620] sm:$0xff]
    %v1560 = vld [vmem:[#allocation5 + $0x2628] sm:$0xff]
    %v1561 = vld [vmem:[#allocation5 + $0x2630] sm:$0xff]
    %v1562 = vld [vmem:[#allocation5 + $0x2638] sm:$0xff]
    %v1563 = vld [vmem:[#allocation5 + $0x2640] sm:$0xff]
    %v1564 = vld [vmem:[#allocation5 + $0x2648] sm:$0x1f]
    %v1565 = vld [vmem:[#allocation5 + $0x2650] sm:$0x1f]
    %v1566 = vld [vmem:[#allocation5 + $0x2658] sm:$0x1f]
    %v1567 = vld [vmem:[#allocation5 + $0x2660] sm:$0x1f]
    %v1568 = vld [vmem:[#allocation5 + $0x2668] sm:$0x1f]
    %v1569 = vld [vmem:[#allocation5 + $0x2670] sm:$0x1f]
    %v1570 = vld [vmem:[#allocation5 + $0x2678] sm:$0x1f]
    %v1571 = vld [vmem:[#allocation5 + $0x2680] sm:$0x1f]
    %v1572 = vld [vmem:[#allocation5 + $0x2688] sm:$0x1f]
    %v1573 = vld [vmem:[#allocation5 + $0x2690] sm:$0x1f]
    %v1574 = vld [vmem:[#allocation5 + $0x2698] sm:$0x1f]
    %v1575 = vld [vmem:[#allocation5 + $0x26a0] sm:$0x1f]
    %v1576 = vld [vmem:[#allocation5 + $0x26a8] sm:$0x1f]
    %v1577 = vld [vmem:[#allocation5 + $0x26b0] sm:$0x1f]
    %v1578 = vld [vmem:[#allocation5 + $0x26b8] sm:$0x1f]
    %v1579 = vld [vmem:[#allocation5 + $0x26c0] sm:$0x1f]
    %v1580 = vld [vmem:[#allocation5 + $0x26c8] sm:$0x1f]
    %v1581 = vld [vmem:[#allocation5 + $0x26d0] sm:$0x1f]
    %v1582 = vld [vmem:[#allocation5 + $0x26d8] sm:$0x1f]
    %v1583 = vld [vmem:[#allocation5 + $0x26e0] sm:$0x1f]
    %v1584 = vld [vmem:[#allocation5 + $0x26e8] sm:$0x1f]
    %v1585 = vld [vmem:[#allocation5 + $0x26f0] sm:$0x1f]
    %v1586 = vld [vmem:[#allocation5 + $0x26f8] sm:$0x1f]
    %v1587 = vld [vmem:[#allocation5 + $0x2700] sm:$0x1f]
    %v1588 = vld [vmem:[#allocation5 + $0x2708] sm:$0x1f]
    %v1589 = vld [vmem:[#allocation5 + $0x2710] sm:$0x1f]
    %v1590 = vld [vmem:[#allocation5 + $0x2718] sm:$0x1f]
    %v1591 = vld [vmem:[#allocation5 + $0x2720] sm:$0x1f]
    %v1592 = vld [vmem:[#allocation5 + $0x2728] sm:$0x1f]
    %v1593 = vld [vmem:[#allocation5 + $0x2730] sm:$0x1f]
    %v1594 = vld [vmem:[#allocation5 + $0x2738] sm:$0x1f]
    %v1595 = vld [vmem:[#allocation5 + $0x2740] sm:$0x1f]
    %v1596 = vld [vmem:[#allocation5 + $0x2748] sm:$0x1f]
    %v1597 = vld [vmem:[#allocation5 + $0x2750] sm:$0x1f]
    %v1598 = vld [vmem:[#allocation5 + $0x2758] sm:$0x1f]
    %v1599 = vld [vmem:[#allocation5 + $0x2760] sm:$0x1f]
    %v1600 = vld [vmem:[#allocation5 + $0x2768] sm:$0x1f]
    %v1601 = vld [vmem:[#allocation5 + $0x2770] sm:$0x1f]
    %v1602 = vld [vmem:[#allocation5 + $0x2778] sm:$0x1f]
    %v1603 = vld [vmem:[#allocation5 + $0x2780] sm:$0x1f]
    %v1604 = vld [vmem:[#allocation5 + $0x2788] sm:$0x1f]
    %v1605 = vld [vmem:[#allocation5 + $0x2790] sm:$0x1f]
    %v1606 = vld [vmem:[#allocation5 + $0x2798] sm:$0x1f]
    %v1607 = vld [vmem:[#allocation5 + $0x27a0] sm:$0x1f]
    %v1608 = vld [vmem:[#allocation5 + $0x27a8] sm:$0x1f]
    %v1609 = vld [vmem:[#allocation5 + $0x27b0] sm:$0x1f]
    %v1610 = vld [vmem:[#allocation5 + $0x27b8] sm:$0x1f]
    %v1611 = vld [vmem:[#allocation5 + $0x27c0] sm:$0x1f]
    %v1612 = vld [vmem:[#allocation5 + $0x27c8] sm:$0x1f]
    %v1613 = vld [vmem:[#allocation5 + $0x27d0] sm:$0x1f]
    %v1614 = vld [vmem:[#allocation5 + $0x27d8] sm:$0x1f]
    %v1615 = vld [vmem:[#allocation5 + $0x27e0] sm:$0x1f]
    %v1616 = vld [vmem:[#allocation5 + $0x27e8] sm:$0x1f]
    %v1617 = vld [vmem:[#allocation5 + $0x27f0] sm:$0x1f]
    %v1618 = vld [vmem:[#allocation5 + $0x27f8] sm:$0x1f]
    %v1619 = vld [vmem:[#allocation5 + $0x2800] sm:$0x1f]
    %v1620 = vld [vmem:[#allocation5 + $0x2808] sm:$0x1f]
    %v1621 = vld [vmem:[#allocation5 + $0x2810] sm:$0x1f]
    %v1622 = vld [vmem:[#allocation5 + $0x2818] sm:$0x1f]
    %v1623 = vld [vmem:[#allocation5 + $0x2820] sm:$0x1f]
    %v1624 = vld [vmem:[#allocation5 + $0x2828] sm:$0x1f]
    %v1625 = vld [vmem:[#allocation5 + $0x2830] sm:$0x1f]
    %v1626 = vld [vmem:[#allocation5 + $0x2838] sm:$0x1f]
    %v1627 = vld [vmem:[#allocation5 + $0x2840] sm:$0x1f]
    %v1628 = vld [vmem:[#allocation5 + $0x2848] sm:$0x1f]
    %v1629 = vld [vmem:[#allocation5 + $0x2850] sm:$0x1f]
    %v1630 = vld [vmem:[#allocation5 + $0x2858] sm:$0x1f]
    %v1631 = vld [vmem:[#allocation5 + $0x2860] sm:$0x1f]
    %v1632 = vld [vmem:[#allocation5 + $0x2868] sm:$0x1f]
    %v1633 = vld [vmem:[#allocation5 + $0x2870] sm:$0x1f]
    %v1634 = vld [vmem:[#allocation5 + $0x2878] sm:$0x1f]
    %v1635 = vld [vmem:[#allocation5 + $0x2880] sm:$0x1f]
    %v1636 = vld [vmem:[#allocation5 + $0x2888] sm:$0x1f]
    %v1637 = vld [vmem:[#allocation5 + $0x2890] sm:$0x1f]
    %v1638 = vld [vmem:[#allocation5 + $0x2898] sm:$0x1f]
    %v1639 = vld [vmem:[#allocation5 + $0x28a0] sm:$0x1f]
    %v1640 = vld [vmem:[#allocation5 + $0x28a8] sm:$0x1f]
    %v1641 = vld [vmem:[#allocation5 + $0x28b0] sm:$0x1f]
    %v1642 = vld [vmem:[#allocation5 + $0x28b8] sm:$0x1f]
    %v1643 = vld [vmem:[#allocation5 + $0x28c0] sm:$0x1f]
    %v1644 = vld [vmem:[#allocation5 + $0x28c8] sm:$0x1f]
    %v1645 = vld [vmem:[#allocation5 + $0x28d0] sm:$0x1f]
    %v1646 = vld [vmem:[#allocation5 + $0x28d8] sm:$0x1f]
    %v1647 = vld [vmem:[#allocation5 + $0x28e0] sm:$0x1f]
    %v1648 = vld [vmem:[#allocation5 + $0x28e8] sm:$0x1f]
    %v1649 = vld [vmem:[#allocation5 + $0x28f0] sm:$0x1f]
    %v1650 = vld [vmem:[#allocation5 + $0x28f8] sm:$0x1f]
    %v1651 = vld [vmem:[#allocation5 + $0x2900] sm:$0x1f]
    %v1652 = vld [vmem:[#allocation5 + $0x2908] sm:$0x1f]
    %v1653 = vld [vmem:[#allocation5 + $0x2910] sm:$0x1f]
    %v1654 = vld [vmem:[#allocation5 + $0x2918] sm:$0x1f]
    %v1655 = vld [vmem:[#allocation5 + $0x2920] sm:$0x1f]
    %v1656 = vld [vmem:[#allocation5 + $0x2928] sm:$0x1f]
    %v1657 = vld [vmem:[#allocation5 + $0x2930] sm:$0x1f]
    %v1658 = vld [vmem:[#allocation5 + $0x2938] sm:$0x1f]
    %v1659 = vld [vmem:[#allocation5 + $0x2940] sm:$0x1f]
    %v1660 = vld [vmem:[#allocation5 + $0x2948] sm:$0x1f]
    %v1661 = vld [vmem:[#allocation5 + $0x2950] sm:$0x1f]
    %v1662 = vld [vmem:[#allocation5 + $0x2958] sm:$0x1f]
    %v1663 = vld [vmem:[#allocation5 + $0x2960] sm:$0x1f]
    %v1664 = vld [vmem:[#allocation5 + $0x2968] sm:$0x1f]
    %v1665 = vld [vmem:[#allocation5 + $0x2970] sm:$0x1f]
    %v1666 = vld [vmem:[#allocation5 + $0x2978] sm:$0x1f]
    %v1667 = vld [vmem:[#allocation5 + $0x2980] sm:$0x1f]
    %v1668 = vld [vmem:[#allocation5 + $0x2988] sm:$0x1f]
    %v1669 = vld [vmem:[#allocation5 + $0x2990] sm:$0x1f]
    %v1670 = vld [vmem:[#allocation5 + $0x2998] sm:$0x1f]
    %v1671 = vld [vmem:[#allocation5 + $0x29a0] sm:$0x1f]
    %v1672 = vld [vmem:[#allocation5 + $0x29a8] sm:$0x1f]
    %v1673 = vld [vmem:[#allocation5 + $0x29b0] sm:$0x1f]
    %v1674 = vld [vmem:[#allocation5 + $0x29b8] sm:$0x1f]
    %v1675 = vld [vmem:[#allocation5 + $0x29c0] sm:$0x1f]
    %v1676 = vld [vmem:[#allocation5 + $0x29c8] sm:$0x1f]
    %v1677 = vld [vmem:[#allocation5 + $0x29d0] sm:$0x1f]
    %v1678 = vld [vmem:[#allocation5 + $0x29d8] sm:$0x1f]
    %v1679 = vld [vmem:[#allocation5 + $0x29e0] sm:$0x1f]
    %v1680 = vld [vmem:[#allocation5 + $0x29e8] sm:$0x1f]
    %v1681 = vld [vmem:[#allocation5 + $0x29f0] sm:$0x1f]
    %v1682 = vld [vmem:[#allocation5 + $0x29f8] sm:$0x1f]
    %v1683 = vld [vmem:[#allocation5 + $0x2a00] sm:$0x1f]
    %v1684 = vld [vmem:[#allocation5 + $0x2a08] sm:$0x1f]
    %v1685 = vld [vmem:[#allocation5 + $0x2a10] sm:$0x1f]
    %v1686 = vld [vmem:[#allocation5 + $0x2a18] sm:$0x1f]
    %v1687 = vld [vmem:[#allocation5 + $0x2a20] sm:$0x1f]
    %v1688 = vld [vmem:[#allocation5 + $0x2a28] sm:$0x1f]
    %v1689 = vld [vmem:[#allocation5 + $0x2a30] sm:$0x1f]
    %v1690 = vld [vmem:[#allocation5 + $0x2a38] sm:$0x1f]
    %v1691 = vld [vmem:[#allocation5 + $0x2a40] sm:$0x1f]
    %v1692 = vld [vmem:[#allocation5 + $0x2a48] sm:$0x1f]
    %v1693 = vld [vmem:[#allocation5 + $0x2a50] sm:$0x1f]
    %v1694 = vld [vmem:[#allocation5 + $0x2a58] sm:$0x1f]
    %v1695 = vld [vmem:[#allocation5 + $0x2a60] sm:$0x1f]
    %v1696 = vld [vmem:[#allocation5 + $0x2a68] sm:$0x1f]
    %v1697 = vld [vmem:[#allocation5 + $0x2a70] sm:$0x1f]
    %v1698 = vld [vmem:[#allocation5 + $0x2a78] sm:$0x1f]
    %v1699 = vld [vmem:[#allocation5 + $0x2a80] sm:$0x1f]
    %v1700 = vld [vmem:[#allocation5 + $0x2a88] sm:$0x1f]
    %v1701 = vld [vmem:[#allocation5 + $0x2a90] sm:$0x1f]
    %v1702 = vld [vmem:[#allocation5 + $0x2a98] sm:$0x1f]
    %v1703 = vld [vmem:[#allocation5 + $0x2aa0] sm:$0x1f]
    %v1704 = vld [vmem:[#allocation5 + $0x2aa8] sm:$0x1f]
    %v1705 = vld [vmem:[#allocation5 + $0x2ab0] sm:$0x1f]
    %v1706 = vld [vmem:[#allocation5 + $0x2ab8] sm:$0x1f]
    %v1707 = vld [vmem:[#allocation5 + $0x2ac0] sm:$0x1f]
    %v1708 = vld [vmem:[#allocation5 + $0x2ac8] sm:$0x1f]
    %v1709 = vld [vmem:[#allocation5 + $0x2ad0] sm:$0x1f]
    %v1710 = vld [vmem:[#allocation5 + $0x2ad8] sm:$0x1f]
    %v1711 = vld [vmem:[#allocation5 + $0x2ae0] sm:$0x1f]
    %v1712 = vld [vmem:[#allocation5 + $0x2ae8] sm:$0x1f]
    %v1713 = vld [vmem:[#allocation5 + $0x2af0] sm:$0x1f]
    %v1714 = vld [vmem:[#allocation5 + $0x2af8] sm:$0x1f]
    %v1715 = vld [vmem:[#allocation5 + $0x2b00] sm:$0x1f]
    %v1716 = vld [vmem:[#allocation5 + $0x2b08] sm:$0x1f]
    %v1717 = vld [vmem:[#allocation5 + $0x2b10] sm:$0x1f]
    %v1718 = vld [vmem:[#allocation5 + $0x2b18] sm:$0x1f]
    %v1719 = vld [vmem:[#allocation5 + $0x2b20] sm:$0x1f]
    %v1720 = vld [vmem:[#allocation5 + $0x2b28] sm:$0x1f]
    %v1721 = vld [vmem:[#allocation5 + $0x2b30] sm:$0x1f]
    %v1722 = vld [vmem:[#allocation5 + $0x2b38] sm:$0x1f]
    %v1723 = vld [vmem:[#allocation5 + $0x2b40] sm:$0x1f]
    %v1724 = vld [vmem:[#allocation5 + $0x2b48] sm:$0x1f]
    %v1725 = vld [vmem:[#allocation5 + $0x2b50] sm:$0x1f]
    %v1726 = vld [vmem:[#allocation5 + $0x2b58] sm:$0x1f]
    %v1727 = vld [vmem:[#allocation5 + $0x2b60] sm:$0x1f]
    %v1728 = vld [vmem:[#allocation5 + $0x2b68] sm:$0x1f]
    %v1729 = vld [vmem:[#allocation5 + $0x2b70] sm:$0x1f]
    %v1730 = vld [vmem:[#allocation5 + $0x2b78] sm:$0x1f]
    %v1731 = vld [vmem:[#allocation5 + $0x2b80] sm:$0x1f]
    %v1732 = vld [vmem:[#allocation5 + $0x2b88] sm:$0x1f]
    %v1733 = vld [vmem:[#allocation5 + $0x2b90] sm:$0x1f]
    %v1734 = vld [vmem:[#allocation5 + $0x2b98] sm:$0x1f]
    %v1735 = vld [vmem:[#allocation5 + $0x2ba0] sm:$0x1f]
    %v1736 = vld [vmem:[#allocation5 + $0x2ba8] sm:$0x1f]
    %v1737 = vld [vmem:[#allocation5 + $0x2bb0] sm:$0x1f]
    %v1738 = vld [vmem:[#allocation5 + $0x2bb8] sm:$0x1f]
    %v1739 = vld [vmem:[#allocation5 + $0x2bc0] sm:$0x1f]
    %v1740 = vld [vmem:[#allocation5 + $0x2bc8] sm:$0x1f]
    %v1741 = vld [vmem:[#allocation5 + $0x2bd0] sm:$0x1f]
    %v1742 = vld [vmem:[#allocation5 + $0x2bd8] sm:$0x1f]
    %v1743 = vld [vmem:[#allocation5 + $0x2be0] sm:$0x1f]
    %v1744 = vld [vmem:[#allocation5 + $0x2be8] sm:$0x1f]
    %v1745 = vld [vmem:[#allocation5 + $0x2bf0] sm:$0x1f]
    %v1746 = vld [vmem:[#allocation5 + $0x2bf8] sm:$0x1f]
    %v1747 = vld [vmem:[#allocation5 + $0x2c00] sm:$0x1f]
    %v1748 = vld [vmem:[#allocation5 + $0x2c08] sm:$0x1f]
    %v1749 = vld [vmem:[#allocation5 + $0x2c10] sm:$0x1f]
    %v1750 = vld [vmem:[#allocation5 + $0x2c18] sm:$0x1f]
    %v1751 = vld [vmem:[#allocation5 + $0x2c20] sm:$0x1f]
    %v1752 = vld [vmem:[#allocation5 + $0x2c28] sm:$0x1f]
    %v1753 = vld [vmem:[#allocation5 + $0x2c30] sm:$0x1f]
    %v1754 = vld [vmem:[#allocation5 + $0x2c38] sm:$0x1f]
    %v1755 = vld [vmem:[#allocation5 + $0x2c40] sm:$0x1f]
    %v1756 = vld [vmem:[#allocation5 + $0x2c48] sm:$0x1f]
    %v1757 = vld [vmem:[#allocation5 + $0x2c50] sm:$0x1f]
    %v1758 = vld [vmem:[#allocation5 + $0x2c58] sm:$0x1f]
    %v1759 = vld [vmem:[#allocation5 + $0x2c60] sm:$0x1f]
    %v1760 = vld [vmem:[#allocation5 + $0x2c68] sm:$0x1f]
    %v1761 = vld [vmem:[#allocation5 + $0x2c70] sm:$0x1f]
    %v1762 = vld [vmem:[#allocation5 + $0x2c78] sm:$0x1f]
    %v1763 = vld [vmem:[#allocation5 + $0x2c80] sm:$0x1f]
    %v1764 = vld [vmem:[#allocation5 + $0x2c88] sm:$0x1f]
    %v1765 = vld [vmem:[#allocation5 + $0x2c90] sm:$0x1f]
    %v1766 = vld [vmem:[#allocation5 + $0x2c98] sm:$0x1f]
    %v1767 = vld [vmem:[#allocation5 + $0x2ca0] sm:$0x1f]
    %v1768 = vld [vmem:[#allocation5 + $0x2ca8] sm:$0x1f]
    %v1769 = vld [vmem:[#allocation5 + $0x2cb0] sm:$0x1f]
    %v1770 = vld [vmem:[#allocation5 + $0x2cb8] sm:$0x1f]
    %v1771 = vld [vmem:[#allocation5 + $0x2cc0] sm:$0x1f]
    %v1772 = vld [vmem:[#allocation5 + $0x2cc8] sm:$0x1f]
    %v1773 = vld [vmem:[#allocation5 + $0x2cd0] sm:$0x1f]
    %v1774 = vld [vmem:[#allocation5 + $0x2cd8] sm:$0x1f]
    %v1775 = vld [vmem:[#allocation5 + $0x2ce0] sm:$0x1f]
    %v1776 = vld [vmem:[#allocation5 + $0x2ce8] sm:$0x1f]
    %v1777 = vld [vmem:[#allocation5 + $0x2cf0] sm:$0x1f]
    %v1778 = vld [vmem:[#allocation5 + $0x2cf8] sm:$0x1f]
    %v1779 = vld [vmem:[#allocation5 + $0x2d00] sm:$0x1f]
    %v1780 = vld [vmem:[#allocation5 + $0x2d08] sm:$0x1f]
    %v1781 = vld [vmem:[#allocation5 + $0x2d10] sm:$0x1f]
    %v1782 = vld [vmem:[#allocation5 + $0x2d18] sm:$0x1f]
    %v1783 = vld [vmem:[#allocation5 + $0x2d20] sm:$0x1f]
    %v1784 = vld [vmem:[#allocation5 + $0x2d28] sm:$0x1f]
    %v1785 = vld [vmem:[#allocation5 + $0x2d30] sm:$0x1f]
    %v1786 = vld [vmem:[#allocation5 + $0x2d38] sm:$0x1f]
    %v1787 = vld [vmem:[#allocation5 + $0x2d40] sm:$0x1f]
    %v1788 = vld [vmem:[#allocation5 + $0x2d48] sm:$0x1f]
    %v1789 = vld [vmem:[#allocation5 + $0x2d50] sm:$0x1f]
    %v1790 = vld [vmem:[#allocation5 + $0x2d58] sm:$0x1f]
    %v1791 = vld [vmem:[#allocation5 + $0x2d60] sm:$0x1f]
    %v1792 = vld [vmem:[#allocation5 + $0x2d68] sm:$0x1f]
    %v1793 = vld [vmem:[#allocation5 + $0x2d70] sm:$0x1f]
    %v1794 = vld [vmem:[#allocation5 + $0x2d78] sm:$0x1f]
    %v1795 = vld [vmem:[#allocation5 + $0x2d80] sm:$0x1f]
    %v1796 = vld [vmem:[#allocation5 + $0x2d88] sm:$0x1f]
    %v1797 = vld [vmem:[#allocation5 + $0x2d90] sm:$0x1f]
    %v1798 = vld [vmem:[#allocation5 + $0x2d98] sm:$0x1f]
    %v1799 = vld [vmem:[#allocation5 + $0x2da0] sm:$0x1f]
    %v1800 = vld [vmem:[#allocation5 + $0x2da8] sm:$0x1f]
    %v1801 = vld [vmem:[#allocation5 + $0x2db0] sm:$0x1f]
    %v1802 = vld [vmem:[#allocation5 + $0x2db8] sm:$0x1f]
    %v1803 = vld [vmem:[#allocation5 + $0x2dc0] sm:$0x1f]
    %v1804 = vld [vmem:[#allocation5 + $0x2dc8] sm:$0x1f]
    %v1805 = vld [vmem:[#allocation5 + $0x2dd0] sm:$0x1f]
    %v1806 = vld [vmem:[#allocation5 + $0x2dd8] sm:$0x1f]
    %v1807 = vld [vmem:[#allocation5 + $0x2de0] sm:$0x1f]
    %v1808 = vld [vmem:[#allocation5 + $0x2de8] sm:$0x1f]
    %v1809 = vld [vmem:[#allocation7] sm:$0x1]
    %v1811 = vlaneseq
    %v1812 = vshrl.u32 %v1811, 7
    %v1813 = vsub.s32 0, %v1812
    %v1814 = vrot.slane %v1809, %v1813
    %vm1816 = vcmask 31744
    %v1818 = vsel %vm1816, %v338, 0
    %v1821 = vsel %vm1816, %v583, 0
    %v1824 = vsel %vm1816, %v828, 0
    %v1827 = vsel %vm1816, %v1073, 0
    %v1830 = vsel %vm1816, %v1318, 0
    %v1833 = vsel %vm1816, %v1563, 0
    %v1836 = vsel %vm1816, %v1808, 0
    %1838 = vmatprep.subr.mxu0 %v340
    %1839 = vmatpush1.xpose.msra.mxu0 %v339
    %1840 = vmatprep.subr.mxu0 %v585
    %1841 = vmatpush1.xpose.msra.mxu0 %v584
    %1842 = vmatprep.subr.mxu0 %v830
    %1843 = vmatpush1.xpose.msra.mxu0 %v829
    %1844 = vmatprep.subr.mxu0 %v1075
    %1845 = vmatpush1.xpose.msra.mxu0 %v1074
    %1846 = vmatprep.subr.mxu0 %v1320
    %1847 = vmatpush1.xpose.msra.mxu0 %v1319
    %1848 = vmatprep.subr.mxu0 %v1565
    %1849 = vmatpush1.xpose.msra.mxu0 %v1564
    %1850 = vmatprep.subr.mxu0 0.0
    %1851 = vmatpush1.xpose.msra.mxu0 0.0
    %1852 = vmatprep.subr.mxu0 0.0
    %1853 = vmatpush1.xpose.msra.mxu0 0.0
    %1854 = vmatprep.subr.mxu0 0.0
    %1855 = vmatpush1.xpose.msra.mxu0 0.0
    %1856 = vmatprep.subr.mxu0 0.0
    %1857 = vmatpush1.xpose.msra.mxu0 0.0
    %1858 = vmatprep.subr.mxu0 0.0
    %1859 = vmatpush1.xpose.msra.mxu0 0.0
    %1860 = vmatprep.subr.mxu0 0.0
    %1861 = vmatpush1.xpose.msra.mxu0 0.0
    %1862 = vmatprep.subr.mxu0 0.0
    %1863 = vmatpush1.xpose.msra.mxu0 0.0
    %1864 = vmatprep.subr.mxu0 0.0
    %1865 = vmatpush1.xpose.msra.mxu0 0.0
    %1866 = vmatprep.subr.mxu0 0.0
    %1867 = vmatpush1.xpose.msra.mxu0 0.0
    %1868 = vmatprep.subr.mxu0 0.0
    %1869 = vmatpush1.xpose.msra.mxu0 0.0
    %1870 = vmatprep.subr.mxu0 0.0
    %1871 = vmatpush1.xpose.msra.mxu0 0.0
    %1872 = vmatprep.subr.mxu0 0.0
    %1873 = vmatpush1.xpose.msra.mxu0 0.0
    %1874 = vmatprep.subr.mxu0 0.0
    %1875 = vmatpush1.xpose.msra.mxu0 0.0
    %1876 = vmatprep.subr.mxu0 0.0
    %1877 = vmatpush1.xpose.msra.mxu0 0.0
    %1878 = vmatprep.subr.mxu0 0.0
    %1879 = vmatpush1.xpose.msra.mxu0 0.0
    %1880 = vmatprep.subr.mxu0 0.0
    %1881 = vmatpush1.xpose.msra.mxu0 0.0
    %1882 = vmatprep.subr.mxu0 0.0
    %1883 = vmatpush1.xpose.msra.mxu0 0.0
    %1884 = vmatprep.subr.mxu0 0.0
    %1885 = vmatpush1.xpose.msra.mxu0 0.0
    %1886 = vmatprep.subr.mxu0 0.0
    %1887 = vmatpush1.xpose.msra.mxu0 0.0
    %1888 = vmatprep.subr.mxu0 0.0
    %1889 = vmatpush1.xpose.msra.mxu0 0.0
    %1890 = vmatprep.subr.mxu0 0.0
    %1891 = vmatpush1.xpose.msra.mxu0 0.0
    %1892 = vmatprep.subr.mxu0 0.0
    %1893 = vmatpush1.xpose.msra.mxu0 0.0
    %1894 = vmatprep.subr.mxu0 0.0
    %1895 = vmatpush1.xpose.msra.mxu0 0.0
    %1896 = vmatprep.subr.mxu0 0.0
    %1897 = vmatpush1.xpose.msra.mxu0 0.0
    %1898 = vmatprep.subr.mxu0 0.0
    %1899 = vmatpush1.xpose.msra.mxu0 0.0
    %1900 = vmatprep.subr.mxu0 0.0
    %1901 = vmatpush1.xpose.msra.mxu0 0.0
    %1902 = vmatprep.mubr.f32.mxu0 %v95
    %1903 = vmatmul.mubr.f32.gmra.mrb[0].mxu0 %v94
    %v1904 = vpop.f32.mrb[0].mxu0
    %v1905 = vadd.f32 %v1814, %v1904
    %v1906 = vpop.f32.mrb[0].mxu0
    %1907 = vdwg.mxu0
    %1908 = vmatprep.subr.mxu0 %v342
    %1909 = vmatpush1.xpose.msra.mxu0 %v341
    %1910 = vmatprep.subr.mxu0 %v587
    %1911 = vmatpush1.xpose.msra.mxu0 %v586
    %1912 = vmatprep.subr.mxu0 %v832
    %1913 = vmatpush1.xpose.msra.mxu0 %v831
    %1914 = vmatprep.subr.mxu0 %v1077
    %1915 = vmatpush1.xpose.msra.mxu0 %v1076
    %1916 = vmatprep.subr.mxu0 %v1322
    %1917 = vmatpush1.xpose.msra.mxu0 %v1321
    %1918 = vmatprep.subr.mxu0 %v1567
    %1919 = vmatpush1.xpose.msra.mxu0 %v1566
    %1920 = vmatprep.subr.mxu0 0.0
    %1921 = vmatpush1.xpose.msra.mxu0 0.0
    %1922 = vmatprep.subr.mxu0 0.0
    %1923 = vmatpush1.xpose.msra.mxu0 0.0
    %1924 = vmatprep.subr.mxu0 0.0
    %1925 = vmatpush1.xpose.msra.mxu0 0.0
    %1926 = vmatprep.subr.mxu0 0.0
    %1927 = vmatpush1.xpose.msra.mxu0 0.0
    %1928 = vmatprep.subr.mxu0 0.0
    %1929 = vmatpush1.xpose.msra.mxu0 0.0
    %1930 = vmatprep.subr.mxu0 0.0
    %1931 = vmatpush1.xpose.msra.mxu0 0.0
    %1932 = vmatprep.subr.mxu0 0.0
    %1933 = vmatpush1.xpose.msra.mxu0 0.0
    %1934 = vmatprep.subr.mxu0 0.0
    %1935 = vmatpush1.xpose.msra.mxu0 0.0
    %1936 = vmatprep.subr.mxu0 0.0
    %1937 = vmatpush1.xpose.msra.mxu0 0.0
    %1938 = vmatprep.subr.mxu0 0.0
    %1939 = vmatpush1.xpose.msra.mxu0 0.0
    %1940 = vmatprep.subr.mxu0 0.0
    %1941 = vmatpush1.xpose.msra.mxu0 0.0
    %1942 = vmatprep.subr.mxu0 0.0
    %1943 = vmatpush1.xpose.msra.mxu0 0.0
    %1944 = vmatprep.subr.mxu0 0.0
    %1945 = vmatpush1.xpose.msra.mxu0 0.0
    %1946 = vmatprep.subr.mxu0 0.0
    %1947 = vmatpush1.xpose.msra.mxu0 0.0
    %1948 = vmatprep.subr.mxu0 0.0
    %1949 = vmatpush1.xpose.msra.mxu0 0.0
    %1950 = vmatprep.subr.mxu0 0.0
    %1951 = vmatpush1.xpose.msra.mxu0 0.0
    %1952 = vmatprep.subr.mxu0 0.0
    %1953 = vmatpush1.xpose.msra.mxu0 0.0
    %1954 = vmatprep.subr.mxu0 0.0
    %1955 = vmatpush1.xpose.msra.mxu0 0.0
    %1956 = vmatprep.subr.mxu0 0.0
    %1957 = vmatpush1.xpose.msra.mxu0 0.0
    %1958 = vmatprep.subr.mxu0 0.0
    %1959 = vmatpush1.xpose.msra.mxu0 0.0
    %1960 = vmatprep.subr.mxu0 0.0
    %1961 = vmatpush1.xpose.msra.mxu0 0.0
    %1962 = vmatprep.subr.mxu0 0.0
    %1963 = vmatpush1.xpose.msra.mxu0 0.0
    %1964 = vmatprep.subr.mxu0 0.0
    %1965 = vmatpush1.xpose.msra.mxu0 0.0
    %1966 = vmatprep.subr.mxu0 0.0
    %1967 = vmatpush1.xpose.msra.mxu0 0.0
    %1968 = vmatprep.subr.mxu0 0.0
    %1969 = vmatpush1.xpose.msra.mxu0 0.0
    %1970 = vmatprep.subr.mxu0 0.0
    %1971 = vmatpush1.xpose.msra.mxu0 0.0
    %1972 = vmatprep.mubr.f32.mxu0 %v97
    %1973 = vmatmul.mubr.f32.gmra.mrb[0].mxu0 %v96
    %v1974 = vpop.f32.mrb[0].mxu0
    %v1975 = vadd.f32 %v1905, %v1974
    %v1976 = vpop.f32.mrb[0].mxu0
    %1977 = vdwg.mxu0
    %1978 = vmatprep.subr.mxu0 %v344
    %1979 = vmatpush1.xpose.msra.mxu0 %v343
    %1980 = vmatprep.subr.mxu0 %v589
    %1981 = vmatpush1.xpose.msra.mxu0 %v588
    %1982 = vmatprep.subr.mxu0 %v834
    %1983 = vmatpush1.xpose.msra.mxu0 %v833
    %1984 = vmatprep.subr.mxu0 %v1079
    %1985 = vmatpush1.xpose.msra.mxu0 %v1078
    %1986 = vmatprep.subr.mxu0 %v1324
    %1987 = vmatpush1.xpose.msra.mxu0 %v1323
    %1988 = vmatprep.subr.mxu0 %v1569
    %1989 = vmatpush1.xpose.msra.mxu0 %v1568
    %1990 = vmatprep.subr.mxu0 0.0
    %1991 = vmatpush1.xpose.msra.mxu0 0.0
    %1992 = vmatprep.subr.mxu0 0.0
    %1993 = vmatpush1.xpose.msra.mxu0 0.0
    %1994 = vmatprep.subr.mxu0 0.0
    %1995 = vmatpush1.xpose.msra.mxu0 0.0
    %1996 = vmatprep.subr.mxu0 0.0
    %1997 = vmatpush1.xpose.msra.mxu0 0.0
    %1998 = vmatprep.subr.mxu0 0.0
    %1999 = vmatpush1.xpose.msra.mxu0 0.0
    %2000 = vmatprep.subr.mxu0 0.0
    %2001 = vmatpush1.xpose.msra.mxu0 0.0
    %2002 = vmatprep.subr.mxu0 0.0
    %2003 = vmatpush1.xpose.msra.mxu0 0.0
    %2004 = vmatprep.subr.mxu0 0.0
    %2005 = vmatpush1.xpose.msra.mxu0 0.0
    %2006 = vmatprep.subr.mxu0 0.0
    %2007 = vmatpush1.xpose.msra.mxu0 0.0
    %2008 = vmatprep.subr.mxu0 0.0
    %2009 = vmatpush1.xpose.msra.mxu0 0.0
    %2010 = vmatprep.subr.mxu0 0.0
    %2011 = vmatpush1.xpose.msra.mxu0 0.0
    %2012 = vmatprep.subr.mxu0 0.0
    %2013 = vmatpush1.xpose.msra.mxu0 0.0
    %2014 = vmatprep.subr.mxu0 0.0
    %2015 = vmatpush1.xpose.msra.mxu0 0.0
    %2016 = vmatprep.subr.mxu0 0.0
    %2017 = vmatpush1.xpose.msra.mxu0 0.0
    %2018 = vmatprep.subr.mxu0 0.0
    %2019 = vmatpush1.xpose.msra.mxu0 0.0
    %2020 = vmatprep.subr.mxu0 0.0
    %2021 = vmatpush1.xpose.msra.mxu0 0.0
    %2022 = vmatprep.subr.mxu0 0.0
    %2023 = vmatpush1.xpose.msra.mxu0 0.0
    %2024 = vmatprep.subr.mxu0 0.0
    %2025 = vmatpush1.xpose.msra.mxu0 0.0
    %2026 = vmatprep.subr.mxu0 0.0
    %2027 = vmatpush1.xpose.msra.mxu0 0.0
    %2028 = vmatprep.subr.mxu0 0.0
    %2029 = vmatpush1.xpose.msra.mxu0 0.0
    %2030 = vmatprep.subr.mxu0 0.0
    %2031 = vmatpush1.xpose.msra.mxu0 0.0
    %2032 = vmatprep.subr.mxu0 0.0
    %2033 = vmatpush1.xpose.msra.mxu0 0.0
    %2034 = vmatprep.subr.mxu0 0.0
    %2035 = vmatpush1.xpose.msra.mxu0 0.0
    %2036 = vmatprep.subr.mxu0 0.0
    %2037 = vmatpush1.xpose.msra.mxu0 0.0
    %2038 = vmatprep.subr.mxu0 0.0
    %2039 = vmatpush1.xpose.msra.mxu0 0.0
    %2040 = vmatprep.subr.mxu0 0.0
    %2041 = vmatpush1.xpose.msra.mxu0 0.0
    %2042 = vmatprep.mubr.f32.mxu0 %v99
    %2043 = vmatmul.mubr.f32.gmra.mrb[0].mxu0 %v98
    %v2044 = vpop.f32.mrb[0].mxu0
    %v2045 = vadd.f32 %v1975, %v2044
    %v2046 = vpop.f32.mrb[0].mxu0
    %2047 = vdwg.mxu0
    %2048 = vmatprep.subr.mxu0 %v346
    %2049 = vmatpush1.xpose.msra.mxu0 %v345
    %2050 = vmatprep.subr.mxu0 %v591
    %2051 = vmatpush1.xpose.msra.mxu0 %v590
    %2052 = vmatprep.subr.mxu0 %v836
    %2053 = vmatpush1.xpose.msra.mxu0 %v835
    %2054 = vmatprep.subr.mxu0 %v1081
    %2055 = vmatpush1.xpose.msra.mxu0 %v1080
    %2056 = vmatprep.subr.mxu0 %v1326
    %2057 = vmatpush1.xpose.msra.mxu0 %v1325
    %2058 = vmatprep.subr.mxu0 %v1571
    %2059 = vmatpush1.xpose.msra.mxu0 %v1570
    %2060 = vmatprep.subr.mxu0 0.0
    %2061 = vmatpush1.xpose.msra.mxu0 0.0
    %2062 = vmatprep.subr.mxu0 0.0
    %2063 = vmatpush1.xpose.msra.mxu0 0.0
    %2064 = vmatprep.subr.mxu0 0.0
    %2065 = vmatpush1.xpose.msra.mxu0 0.0
    %2066 = vmatprep.subr.mxu0 0.0
    %2067 = vmatpush1.xpose.msra.mxu0 0.0
    %2068 = vmatprep.subr.mxu0 0.0
    %2069 = vmatpush1.xpose.msra.mxu0 0.0
    %2070 = vmatprep.subr.mxu0 0.0
    %2071 = vmatpush1.xpose.msra.mxu0 0.0
    %2072 = vmatprep.subr.mxu0 0.0
    %2073 = vmatpush1.xpose.msra.mxu0 0.0
    %2074 = vmatprep.subr.mxu0 0.0
    %2075 = vmatpush1.xpose.msra.mxu0 0.0
    %2076 = vmatprep.subr.mxu0 0.0
    %2077 = vmatpush1.xpose.msra.mxu0 0.0
    %2078 = vmatprep.subr.mxu0 0.0
    %2079 = vmatpush1.xpose.msra.mxu0 0.0
    %2080 = vmatprep.subr.mxu0 0.0
    %2081 = vmatpush1.xpose.msra.mxu0 0.0
    %2082 = vmatprep.subr.mxu0 0.0
    %2083 = vmatpush1.xpose.msra.mxu0 0.0
    %2084 = vmatprep.subr.mxu0 0.0
    %2085 = vmatpush1.xpose.msra.mxu0 0.0
    %2086 = vmatprep.subr.mxu0 0.0
    %2087 = vmatpush1.xpose.msra.mxu0 0.0
    %2088 = vmatprep.subr.mxu0 0.0
    %2089 = vmatpush1.xpose.msra.mxu0 0.0
    %2090 = vmatprep.subr.mxu0 0.0
    %2091 = vmatpush1.xpose.msra.mxu0 0.0
    %2092 = vmatprep.subr.mxu0 0.0
    %2093 = vmatpush1.xpose.msra.mxu0 0.0
    %2094 = vmatprep.subr.mxu0 0.0
    %2095 = vmatpush1.xpose.msra.mxu0 0.0
    %2096 = vmatprep.subr.mxu0 0.0
    %2097 = vmatpush1.xpose.msra.mxu0 0.0
    %2098 = vmatprep.subr.mxu0 0.0
    %2099 = vmatpush1.xpose.msra.mxu0 0.0
    %2100 = vmatprep.subr.mxu0 0.0
    %2101 = vmatpush1.xpose.msra.mxu0 0.0
    %2102 = vmatprep.subr.mxu0 0.0
    %2103 = vmatpush1.xpose.msra.mxu0 0.0
    %2104 = vmatprep.subr.mxu0 0.0
    %2105 = vmatpush1.xpose.msra.mxu0 0.0
    %2106 = vmatprep.subr.mxu0 0.0
    %2107 = vmatpush1.xpose.msra.mxu0 0.0
    %2108 = vmatprep.subr.mxu0 0.0
    %2109 = vmatpush1.xpose.msra.mxu0 0.0
    %2110 = vmatprep.subr.mxu0 0.0
    %2111 = vmatpush1.xpose.msra.mxu0 0.0
    %2112 = vmatprep.mubr.f32.mxu0 %v101
    %2113 = vmatmul.mubr.f32.gmra.mrb[0].mxu0 %v100
    %v2114 = vpop.f32.mrb[0].mxu0
    %v2115 = vadd.f32 %v2045, %v2114
    %v2116 = vpop.f32.mrb[0].mxu0
    %2117 = vdwg.mxu0
    %2118 = vmatprep.subr.mxu0 %v348
    %2119 = vmatpush1.xpose.msra.mxu0 %v347
    %2120 = vmatprep.subr.mxu0 %v593
    %2121 = vmatpush1.xpose.msra.mxu0 %v592
    %2122 = vmatprep.subr.mxu0 %v838
    %2123 = vmatpush1.xpose.msra.mxu0 %v837
    %2124 = vmatprep.subr.mxu0 %v1083
    %2125 = vmatpush1.xpose.msra.mxu0 %v1082
    %2126 = vmatprep.subr.mxu0 %v1328
    %2127 = vmatpush1.xpose.msra.mxu0 %v1327
    %2128 = vmatprep.subr.mxu0 %v1573
    %2129 = vmatpush1.xpose.msra.mxu0 %v1572
    %2130 = vmatprep.subr.mxu0 0.0
    %2131 = vmatpush1.xpose.msra.mxu0 0.0
    %2132 = vmatprep.subr.mxu0 0.0
    %2133 = vmatpush1.xpose.msra.mxu0 0.0
    %2134 = vmatprep.subr.mxu0 0.0
    %2135 = vmatpush1.xpose.msra.mxu0 0.0
    %2136 = vmatprep.subr.mxu0 0.0
    %2137 = vmatpush1.xpose.msra.mxu0 0.0
    %2138 = vmatprep.subr.mxu0 0.0
    %2139 = vmatpush1.xpose.msra.mxu0 0.0
    %2140 = vmatprep.subr.mxu0 0.0
    %2141 = vmatpush1.xpose.msra.mxu0 0.0
    %2142 = vmatprep.subr.mxu0 0.0
    %2143 = vmatpush1.xpose.msra.mxu0 0.0
    %2144 = vmatprep.subr.mxu0 0.0
    %2145 = vmatpush1.xpose.msra.mxu0 0.0
    %2146 = vmatprep.subr.mxu0 0.0
    %2147 = vmatpush1.xpose.msra.mxu0 0.0
    %2148 = vmatprep.subr.mxu0 0.0
    %2149 = vmatpush1.xpose.msra.mxu0 0.0
    %2150 = vmatprep.subr.mxu0 0.0
    %2151 = vmatpush1.xpose.msra.mxu0 0.0
    %2152 = vmatprep.subr.mxu0 0.0
    %2153 = vmatpush1.xpose.msra.mxu0 0.0
    %2154 = vmatprep.subr.mxu0 0.0
    %2155 = vmatpush1.xpose.msra.mxu0 0.0
    %2156 = vmatprep.subr.mxu0 0.0
    %2157 = vmatpush1.xpose.msra.mxu0 0.0
    %2158 = vmatprep.subr.mxu0 0.0
    %2159 = vmatpush1.xpose.msra.mxu0 0.0
    %2160 = vmatprep.subr.mxu0 0.0
    %2161 = vmatpush1.xpose.msra.mxu0 0.0
    %2162 = vmatprep.subr.mxu0 0.0
    %2163 = vmatpush1.xpose.msra.mxu0 0.0
    %2164 = vmatprep.subr.mxu0 0.0
    %2165 = vmatpush1.xpose.msra.mxu0 0.0
    %2166 = vmatprep.subr.mxu0 0.0
    %2167 = vmatpush1.xpose.msra.mxu0 0.0
    %2168 = vmatprep.subr.mxu0 0.0
    %2169 = vmatpush1.xpose.msra.mxu0 0.0
    %2170 = vmatprep.subr.mxu0 0.0
    %2171 = vmatpush1.xpose.msra.mxu0 0.0
    %2172 = vmatprep.subr.mxu0 0.0
    %2173 = vmatpush1.xpose.msra.mxu0 0.0
    %2174 = vmatprep.subr.mxu0 0.0
    %2175 = vmatpush1.xpose.msra.mxu0 0.0
    %2176 = vmatprep.subr.mxu0 0.0
    %2177 = vmatpush1.xpose.msra.mxu0 0.0
    %2178 = vmatprep.subr.mxu0 0.0
    %2179 = vmatpush1.xpose.msra.mxu0 0.0
    %2180 = vmatprep.subr.mxu0 0.0
    %2181 = vmatpush1.xpose.msra.mxu0 0.0
    %2182 = vmatprep.mubr.f32.mxu0 %v103
    %2183 = vmatmul.mubr.f32.gmra.mrb[0].mxu0 %v102
    %v2184 = vpop.f32.mrb[0].mxu0
    %v2185 = vadd.f32 %v2115, %v2184
    %v2186 = vpop.f32.mrb[0].mxu0
    %2187 = vdwg.mxu0
    %2188 = vmatprep.subr.mxu0 %v350
    %2189 = vmatpush1.xpose.msra.mxu0 %v349
    %2190 = vmatprep.subr.mxu0 %v595
    %2191 = vmatpush1.xpose.msra.mxu0 %v594
    %2192 = vmatprep.subr.mxu0 %v840
    %2193 = vmatpush1.xpose.msra.mxu0 %v839
    %2194 = vmatprep.subr.mxu0 %v1085
    %2195 = vmatpush1.xpose.msra.mxu0 %v1084
    %2196 = vmatprep.subr.mxu0 %v1330
    %2197 = vmatpush1.xpose.msra.mxu0 %v1329
    %2198 = vmatprep.subr.mxu0 %v1575
    %2199 = vmatpush1.xpose.msra.mxu0 %v1574
    %2200 = vmatprep.subr.mxu0 0.0
    %2201 = vmatpush1.xpose.msra.mxu0 0.0
    %2202 = vmatprep.subr.mxu0 0.0
    %2203 = vmatpush1.xpose.msra.mxu0 0.0
    %2204 = vmatprep.subr.mxu0 0.0
    %2205 = vmatpush1.xpose.msra.mxu0 0.0
    %2206 = vmatprep.subr.mxu0 0.0
    %2207 = vmatpush1.xpose.msra.mxu0 0.0
    %2208 = vmatprep.subr.mxu0 0.0
    %2209 = vmatpush1.xpose.msra.mxu0 0.0
    %2210 = vmatprep.subr.mxu0 0.0
    %2211 = vmatpush1.xpose.msra.mxu0 0.0
    %2212 = vmatprep.subr.mxu0 0.0
    %2213 = vmatpush1.xpose.msra.mxu0 0.0
    %2214 = vmatprep.subr.mxu0 0.0
    %2215 = vmatpush1.xpose.msra.mxu0 0.0
    %2216 = vmatprep.subr.mxu0 0.0
    %2217 = vmatpush1.xpose.msra.mxu0 0.0
    %2218 = vmatprep.subr.mxu0 0.0
    %2219 = vmatpush1.xpose.msra.mxu0 0.0
    %2220 = vmatprep.subr.mxu0 0.0
    %2221 = vmatpush1.xpose.msra.mxu0 0.0
    %2222 = vmatprep.subr.mxu0 0.0
    %2223 = vmatpush1.xpose.msra.mxu0 0.0
    %2224 = vmatprep.subr.mxu0 0.0
    %2225 = vmatpush1.xpose.msra.mxu0 0.0
    %2226 = vmatprep.subr.mxu0 0.0
    %2227 = vmatpush1.xpose.msra.mxu0 0.0
    %2228 = vmatprep.subr.mxu0 0.0
    %2229 = vmatpush1.xpose.msra.mxu0 0.0
    %2230 = vmatprep.subr.mxu0 0.0
    %2231 = vmatpush1.xpose.msra.mxu0 0.0
    %2232 = vmatprep.subr.mxu0 0.0
    %2233 = vmatpush1.xpose.msra.mxu0 0.0
    %2234 = vmatprep.subr.mxu0 0.0
    %2235 = vmatpush1.xpose.msra.mxu0 0.0
    %2236 = vmatprep.subr.mxu0 0.0
    %2237 = vmatpush1.xpose.msra.mxu0 0.0
    %2238 = vmatprep.subr.mxu0 0.0
    %2239 = vmatpush1.xpose.msra.mxu0 0.0
    %2240 = vmatprep.subr.mxu0 0.0
    %2241 = vmatpush1.xpose.msra.mxu0 0.0
    %2242 = vmatprep.subr.mxu0 0.0
    %2243 = vmatpush1.xpose.msra.mxu0 0.0
    %2244 = vmatprep.subr.mxu0 0.0
    %2245 = vmatpush1.xpose.msra.mxu0 0.0
    %2246 = vmatprep.subr.mxu0 0.0
    %2247 = vmatpush1.xpose.msra.mxu0 0.0
    %2248 = vmatprep.subr.mxu0 0.0
    %2249 = vmatpush1.xpose.msra.mxu0 0.0
    %2250 = vmatprep.subr.mxu0 0.0
    %2251 = vmatpush1.xpose.msra.mxu0 0.0
    %2252 = vmatprep.mubr.f32.mxu0 %v105
    %2253 = vmatmul.mubr.f32.gmra.mrb[0].mxu0 %v104
    %v2254 = vpop.f32.mrb[0].mxu0
    %v2255 = vadd.f32 %v2185, %v2254
    %v2256 = vpop.f32.mrb[0].mxu0
    %2257 = vdwg.mxu0
    %2258 = vmatprep.subr.mxu0 %v352
    %2259 = vmatpush1.xpose.msra.mxu0 %v351
    %2260 = vmatprep.subr.mxu0 %v597
    %2261 = vmatpush1.xpose.msra.mxu0 %v596
    %2262 = vmatprep.subr.mxu0 %v842
    %2263 = vmatpush1.xpose.msra.mxu0 %v841
    %2264 = vmatprep.subr.mxu0 %v1087
    %2265 = vmatpush1.xpose.msra.mxu0 %v1086
    %2266 = vmatprep.subr.mxu0 %v1332
    %2267 = vmatpush1.xpose.msra.mxu0 %v1331
    %2268 = vmatprep.subr.mxu0 %v1577
    %2269 = vmatpush1.xpose.msra.mxu0 %v1576
    %2270 = vmatprep.subr.mxu0 0.0
    %2271 = vmatpush1.xpose.msra.mxu0 0.0
    %2272 = vmatprep.subr.mxu0 0.0
    %2273 = vmatpush1.xpose.msra.mxu0 0.0
    %2274 = vmatprep.subr.mxu0 0.0
    %2275 = vmatpush1.xpose.msra.mxu0 0.0
    %2276 = vmatprep.subr.mxu0 0.0
    %2277 = vmatpush1.xpose.msra.mxu0 0.0
    %2278 = vmatprep.subr.mxu0 0.0
    %2279 = vmatpush1.xpose.msra.mxu0 0.0
    %2280 = vmatprep.subr.mxu0 0.0
    %2281 = vmatpush1.xpose.msra.mxu0 0.0
    %2282 = vmatprep.subr.mxu0 0.0
    %2283 = vmatpush1.xpose.msra.mxu0 0.0
    %2284 = vmatprep.subr.mxu0 0.0
    %2285 = vmatpush1.xpose.msra.mxu0 0.0
    %2286 = vmatprep.subr.mxu0 0.0
    %2287 = vmatpush1.xpose.msra.mxu0 0.0
    %2288 = vmatprep.subr.mxu0 0.0
    %2289 = vmatpush1.xpose.msra.mxu0 0.0
    %2290 = vmatprep.subr.mxu0 0.0
    %2291 = vmatpush1.xpose.msra.mxu0 0.0
    %2292 = vmatprep.subr.mxu0 0.0
    %2293 = vmatpush1.xpose.msra.mxu0 0.0
    %2294 = vmatprep.subr.mxu0 0.0
    %2295 = vmatpush1.xpose.msra.mxu0 0.0
    %2296 = vmatprep.subr.mxu0 0.0
    %2297 = vmatpush1.xpose.msra.mxu0 0.0
    %2298 = vmatprep.subr.mxu0 0.0
    %2299 = vmatpush1.xpose.msra.mxu0 0.0
    %2300 = vmatprep.subr.mxu0 0.0
    %2301 = vmatpush1.xpose.msra.mxu0 0.0
    %2302 = vmatprep.subr.mxu0 0.0
    %2303 = vmatpush1.xpose.msra.mxu0 0.0
    %2304 = vmatprep.subr.mxu0 0.0
    %2305 = vmatpush1.xpose.msra.mxu0 0.0
    %2306 = vmatprep.subr.mxu0 0.0
    %2307 = vmatpush1.xpose.msra.mxu0 0.0
    %2308 = vmatprep.subr.mxu0 0.0
    %2309 = vmatpush1.xpose.msra.mxu0 0.0
    %2310 = vmatprep.subr.mxu0 0.0
    %2311 = vmatpush1.xpose.msra.mxu0 0.0
    %2312 = vmatprep.subr.mxu0 0.0
    %2313 = vmatpush1.xpose.msra.mxu0 0.0
    %2314 = vmatprep.subr.mxu0 0.0
    %2315 = vmatpush1.xpose.msra.mxu0 0.0
    %2316 = vmatprep.subr.mxu0 0.0
    %2317 = vmatpush1.xpose.msra.mxu0 0.0
    %2318 = vmatprep.subr.mxu0 0.0
    %2319 = vmatpush1.xpose.msra.mxu0 0.0
    %2320 = vmatprep.subr.mxu0 0.0
    %2321 = vmatpush1.xpose.msra.mxu0 0.0
    %2322 = vmatprep.mubr.f32.mxu0 %v107
    %2323 = vmatmul.mubr.f32.gmra.mrb[0].mxu0 %v106
    %v2324 = vpop.f32.mrb[0].mxu0
    %v2325 = vadd.f32 %v2255, %v2324
    %v2326 = vpop.f32.mrb[0].mxu0
    %2327 = vdwg.mxu0
    %2328 = vmatprep.subr.mxu0 %v354
    %2329 = vmatpush1.xpose.msra.mxu0 %v353
    %2330 = vmatprep.subr.mxu0 %v599
    %2331 = vmatpush1.xpose.msra.mxu0 %v598
    %2332 = vmatprep.subr.mxu0 %v844
    %2333 = vmatpush1.xpose.msra.mxu0 %v843
    %2334 = vmatprep.subr.mxu0 %v1089
    %2335 = vmatpush1.xpose.msra.mxu0 %v1088
    %2336 = vmatprep.subr.mxu0 %v1334
    %2337 = vmatpush1.xpose.msra.mxu0 %v1333
    %2338 = vmatprep.subr.mxu0 %v1579
    %2339 = vmatpush1.xpose.msra.mxu0 %v1578
    %2340 = vmatprep.subr.mxu0 0.0
    %2341 = vmatpush1.xpose.msra.mxu0 0.0
    %2342 = vmatprep.subr.mxu0 0.0
    %2343 = vmatpush1.xpose.msra.mxu0 0.0
    %2344 = vmatprep.subr.mxu0 0.0
    %2345 = vmatpush1.xpose.msra.mxu0 0.0
    %2346 = vmatprep.subr.mxu0 0.0
    %2347 = vmatpush1.xpose.msra.mxu0 0.0
    %2348 = vmatprep.subr.mxu0 0.0
    %2349 = vmatpush1.xpose.msra.mxu0 0.0
    %2350 = vmatprep.subr.mxu0 0.0
    %2351 = vmatpush1.xpose.msra.mxu0 0.0
    %2352 = vmatprep.subr.mxu0 0.0
    %2353 = vmatpush1.xpose.msra.mxu0 0.0
    %2354 = vmatprep.subr.mxu0 0.0
    %2355 = vmatpush1.xpose.msra.mxu0 0.0
    %2356 = vmatprep.subr.mxu0 0.0
    %2357 = vmatpush1.xpose.msra.mxu0 0.0
    %2358 = vmatprep.subr.mxu0 0.0
    %2359 = vmatpush1.xpose.msra.mxu0 0.0
    %2360 = vmatprep.subr.mxu0 0.0
    %2361 = vmatpush1.xpose.msra.mxu0 0.0
    %2362 = vmatprep.subr.mxu0 0.0
    %2363 = vmatpush1.xpose.msra.mxu0 0.0
    %2364 = vmatprep.subr.mxu0 0.0
    %2365 = vmatpush1.xpose.msra.mxu0 0.0
    %2366 = vmatprep.subr.mxu0 0.0
    %2367 = vmatpush1.xpose.msra.mxu0 0.0
    %2368 = vmatprep.subr.mxu0 0.0
    %2369 = vmatpush1.xpose.msra.mxu0 0.0
    %2370 = vmatprep.subr.mxu0 0.0
    %2371 = vmatpush1.xpose.msra.mxu0 0.0
    %2372 = vmatprep.subr.mxu0 0.0
    %2373 = vmatpush1.xpose.msra.mxu0 0.0
    %2374 = vmatprep.subr.mxu0 0.0
    %2375 = vmatpush1.xpose.msra.mxu0 0.0
    %2376 = vmatprep.subr.mxu0 0.0
    %2377 = vmatpush1.xpose.msra.mxu0 0.0
    %2378 = vmatprep.subr.mxu0 0.0
    %2379 = vmatpush1.xpose.msra.mxu0 0.0
    %2380 = vmatprep.subr.mxu0 0.0
    %2381 = vmatpush1.xpose.msra.mxu0 0.0
    %2382 = vmatprep.subr.mxu0 0.0
    %2383 = vmatpush1.xpose.msra.mxu0 0.0
    %2384 = vmatprep.subr.mxu0 0.0
    %2385 = vmatpush1.xpose.msra.mxu0 0.0
    %2386 = vmatprep.subr.mxu0 0.0
    %2387 = vmatpush1.xpose.msra.mxu0 0.0
    %2388 = vmatprep.subr.mxu0 0.0
    %2389 = vmatpush1.xpose.msra.mxu0 0.0
    %2390 = vmatprep.subr.mxu0 0.0
    %2391 = vmatpush1.xpose.msra.mxu0 0.0
    %2392 = vmatprep.mubr.f32.mxu0 %v109
    %2393 = vmatmul.mubr.f32.gmra.mrb[0].mxu0 %v108
    %v2394 = vpop.f32.mrb[0].mxu0
    %v2395 = vadd.f32 %v2325, %v2394
    %v2396 = vpop.f32.mrb[0].mxu0
    %2397 = vdwg.mxu0
    %2398 = vmatprep.subr.mxu0 %v356
    %2399 = vmatpush1.xpose.msra.mxu0 %v355
    %2400 = vmatprep.subr.mxu0 %v601
    %2401 = vmatpush1.xpose.msra.mxu0 %v600
    %2402 = vmatprep.subr.mxu0 %v846
    %2403 = vmatpush1.xpose.msra.mxu0 %v845
    %2404 = vmatprep.subr.mxu0 %v1091
    %2405 = vmatpush1.xpose.msra.mxu0 %v1090
    %2406 = vmatprep.subr.mxu0 %v1336
    %2407 = vmatpush1.xpose.msra.mxu0 %v1335
    %2408 = vmatprep.subr.mxu0 %v1581
    %2409 = vmatpush1.xpose.msra.mxu0 %v1580
    %2410 = vmatprep.subr.mxu0 0.0
    %2411 = vmatpush1.xpose.msra.mxu0 0.0
    %2412 = vmatprep.subr.mxu0 0.0
    %2413 = vmatpush1.xpose.msra.mxu0 0.0
    %2414 = vmatprep.subr.mxu0 0.0
    %2415 = vmatpush1.xpose.msra.mxu0 0.0
    %2416 = vmatprep.subr.mxu0 0.0
    %2417 = vmatpush1.xpose.msra.mxu0 0.0
    %2418 = vmatprep.subr.mxu0 0.0
    %2419 = vmatpush1.xpose.msra.mxu0 0.0
    %2420 = vmatprep.subr.mxu0 0.0
    %2421 = vmatpush1.xpose.msra.mxu0 0.0
    %2422 = vmatprep.subr.mxu0 0.0
    %2423 = vmatpush1.xpose.msra.mxu0 0.0
    %2424 = vmatprep.subr.mxu0 0.0
    %2425 = vmatpush1.xpose.msra.mxu0 0.0
    %2426 = vmatprep.subr.mxu0 0.0
    %2427 = vmatpush1.xpose.msra.mxu0 0.0
    %2428 = vmatprep.subr.mxu0 0.0
    %2429 = vmatpush1.xpose.msra.mxu0 0.0
    %2430 = vmatprep.subr.mxu0 0.0
    %2431 = vmatpush1.xpose.msra.mxu0 0.0
    %2432 = vmatprep.subr.mxu0 0.0
    %2433 = vmatpush1.xpose.msra.mxu0 0.0
    %2434 = vmatprep.subr.mxu0 0.0
    %2435 = vmatpush1.xpose.msra.mxu0 0.0
    %2436 = vmatprep.subr.mxu0 0.0
    %2437 = vmatpush1.xpose.msra.mxu0 0.0
    %2438 = vmatprep.subr.mxu0 0.0
    %2439 = vmatpush1.xpose.msra.mxu0 0.0
    %2440 = vmatprep.subr.mxu0 0.0
    %2441 = vmatpush1.xpose.msra.mxu0 0.0
    %2442 = vmatprep.subr.mxu0 0.0
    %2443 = vmatpush1.xpose.msra.mxu0 0.0
    %2444 = vmatprep.subr.mxu0 0.0
    %2445 = vmatpush1.xpose.msra.mxu0 0.0
    %2446 = vmatprep.subr.mxu0 0.0
    %2447 = vmatpush1.xpose.msra.mxu0 0.0
    %2448 = vmatprep.subr.mxu0 0.0
    %2449 = vmatpush1.xpose.msra.mxu0 0.0
    %2450 = vmatprep.subr.mxu0 0.0
    %2451 = vmatpush1.xpose.msra.mxu0 0.0
    %2452 = vmatprep.subr.mxu0 0.0
    %2453 = vmatpush1.xpose.msra.mxu0 0.0
    %2454 = vmatprep.subr.mxu0 0.0
    %2455 = vmatpush1.xpose.msra.mxu0 0.0
    %2456 = vmatprep.subr.mxu0 0.0
    %2457 = vmatpush1.xpose.msra.mxu0 0.0
    %2458 = vmatprep.subr.mxu0 0.0
    %2459 = vmatpush1.xpose.msra.mxu0 0.0
    %2460 = vmatprep.subr.mxu0 0.0
    %2461 = vmatpush1.xpose.msra.mxu0 0.0
    %2462 = vmatprep.mubr.f32.mxu0 %v111
    %2463 = vmatmul.mubr.f32.gmra.mrb[0].mxu0 %v110
    %v2464 = vpop.f32.mrb[0].mxu0
    %v2465 = vadd.f32 %v2395, %v2464
    %v2466 = vpop.f32.mrb[0].mxu0
    %2467 = vdwg.mxu0
    %2468 = vmatprep.subr.mxu0 %v358
    %2469 = vmatpush1.xpose.msra.mxu0 %v357
    %2470 = vmatprep.subr.mxu0 %v603
    %2471 = vmatpush1.xpose.msra.mxu0 %v602
    %2472 = vmatprep.subr.mxu0 %v848
    %2473 = vmatpush1.xpose.msra.mxu0 %v847
    %2474 = vmatprep.subr.mxu0 %v1093
    %2475 = vmatpush1.xpose.msra.mxu0 %v1092
    %2476 = vmatprep.subr.mxu0 %v1338
    %2477 = vmatpush1.xpose.msra.mxu0 %v1337
    %2478 = vmatprep.subr.mxu0 %v1583
    %2479 = vmatpush1.xpose.msra.mxu0 %v1582
    %2480 = vmatprep.subr.mxu0 0.0
    %2481 = vmatpush1.xpose.msra.mxu0 0.0
    %2482 = vmatprep.subr.mxu0 0.0
    %2483 = vmatpush1.xpose.msra.mxu0 0.0
    %2484 = vmatprep.subr.mxu0 0.0
    %2485 = vmatpush1.xpose.msra.mxu0 0.0
    %2486 = vmatprep.subr.mxu0 0.0
    %2487 = vmatpush1.xpose.msra.mxu0 0.0
    %2488 = vmatprep.subr.mxu0 0.0
    %2489 = vmatpush1.xpose.msra.mxu0 0.0
    %2490 = vmatprep.subr.mxu0 0.0
    %2491 = vmatpush1.xpose.msra.mxu0 0.0
    %2492 = vmatprep.subr.mxu0 0.0
    %2493 = vmatpush1.xpose.msra.mxu0 0.0
    %2494 = vmatprep.subr.mxu0 0.0
    %2495 = vmatpush1.xpose.msra.mxu0 0.0
    %2496 = vmatprep.subr.mxu0 0.0
    %2497 = vmatpush1.xpose.msra.mxu0 0.0
    %2498 = vmatprep.subr.mxu0 0.0
    %2499 = vmatpush1.xpose.msra.mxu0 0.0
    %2500 = vmatprep.subr.mxu0 0.0
    %2501 = vmatpush1.xpose.msra.mxu0 0.0
    %2502 = vmatprep.subr.mxu0 0.0
    %2503 = vmatpush1.xpose.msra.mxu0 0.0
    %2504 = vmatprep.subr.mxu0 0.0
    %2505 = vmatpush1.xpose.msra.mxu0 0.0
    %2506 = vmatprep.subr.mxu0 0.0
    %2507 = vmatpush1.xpose.msra.mxu0 0.0
    %2508 = vmatprep.subr.mxu0 0.0
    %2509 = vmatpush1.xpose.msra.mxu0 0.0
    %2510 = vmatprep.subr.mxu0 0.0
    %2511 = vmatpush1.xpose.msra.mxu0 0.0
    %2512 = vmatprep.subr.mxu0 0.0
    %2513 = vmatpush1.xpose.msra.mxu0 0.0
    %2514 = vmatprep.subr.mxu0 0.0
    %2515 = vmatpush1.xpose.msra.mxu0 0.0
    %2516 = vmatprep.subr.mxu0 0.0
    %2517 = vmatpush1.xpose.msra.mxu0 0.0
    %2518 = vmatprep.subr.mxu0 0.0
    %2519 = vmatpush1.xpose.msra.mxu0 0.0
    %2520 = vmatprep.subr.mxu0 0.0
    %2521 = vmatpush1.xpose.msra.mxu0 0.0
    %2522 = vmatprep.subr.mxu0 0.0
    %2523 = vmatpush1.xpose.msra.mxu0 0.0
    %2524 = vmatprep.subr.mxu0 0.0
    %2525 = vmatpush1.xpose.msra.mxu0 0.0
    %2526 = vmatprep.subr.mxu0 0.0
    %2527 = vmatpush1.xpose.msra.mxu0 0.0
    %2528 = vmatprep.subr.mxu0 0.0
    %2529 = vmatpush1.xpose.msra.mxu0 0.0
    %2530 = vmatprep.subr.mxu0 0.0
    %2531 = vmatpush1.xpose.msra.mxu0 0.0
    %2532 = vmatprep.mubr.f32.mxu0 %v113
    %2533 = vmatmul.mubr.f32.gmra.mrb[0].mxu0 %v112
    %v2534 = vpop.f32.mrb[0].mxu0
    %v2535 = vadd.f32 %v2465, %v2534
    %v2536 = vpop.f32.mrb[0].mxu0
    %2537 = vdwg.mxu0
    %2538 = vmatprep.subr.mxu0 %v360
    %2539 = vmatpush1.xpose.msra.mxu0 %v359
    %2540 = vmatprep.subr.mxu0 %v605
    %2541 = vmatpush1.xpose.msra.mxu0 %v604
    %2542 = vmatprep.subr.mxu0 %v850
    %2543 = vmatpush1.xpose.msra.mxu0 %v849
    %2544 = vmatprep.subr.mxu0 %v1095
    %2545 = vmatpush1.xpose.msra.mxu0 %v1094
    %2546 = vmatprep.subr.mxu0 %v1340
    %2547 = vmatpush1.xpose.msra.mxu0 %v1339
    %2548 = vmatprep.subr.mxu0 %v1585
    %2549 = vmatpush1.xpose.msra.mxu0 %v1584
    %2550 = vmatprep.subr.mxu0 0.0
    %2551 = vmatpush1.xpose.msra.mxu0 0.0
    %2552 = vmatprep.subr.mxu0 0.0
    %2553 = vmatpush1.xpose.msra.mxu0 0.0
    %2554 = vmatprep.subr.mxu0 0.0
    %2555 = vmatpush1.xpose.msra.mxu0 0.0
    %2556 = vmatprep.subr.mxu0 0.0
    %2557 = vmatpush1.xpose.msra.mxu0 0.0
    %2558 = vmatprep.subr.mxu0 0.0
    %2559 = vmatpush1.xpose.msra.mxu0 0.0
    %2560 = vmatprep.subr.mxu0 0.0
    %2561 = vmatpush1.xpose.msra.mxu0 0.0
    %2562 = vmatprep.subr.mxu0 0.0
    %2563 = vmatpush1.xpose.msra.mxu0 0.0
    %2564 = vmatprep.subr.mxu0 0.0
    %2565 = vmatpush1.xpose.msra.mxu0 0.0
    %2566 = vmatprep.subr.mxu0 0.0
    %2567 = vmatpush1.xpose.msra.mxu0 0.0
    %2568 = vmatprep.subr.mxu0 0.0
    %2569 = vmatpush1.xpose.msra.mxu0 0.0
    %2570 = vmatprep.subr.mxu0 0.0
    %2571 = vmatpush1.xpose.msra.mxu0 0.0
    %2572 = vmatprep.subr.mxu0 0.0
    %2573 = vmatpush1.xpose.msra.mxu0 0.0
    %2574 = vmatprep.subr.mxu0 0.0
    %2575 = vmatpush1.xpose.msra.mxu0 0.0
    %2576 = vmatprep.subr.mxu0 0.0
    %2577 = vmatpush1.xpose.msra.mxu0 0.0
    %2578 = vmatprep.subr.mxu0 0.0
    %2579 = vmatpush1.xpose.msra.mxu0 0.0
    %2580 = vmatprep.subr.mxu0 0.0
    %2581 = vmatpush1.xpose.msra.mxu0 0.0
    %2582 = vmatprep.subr.mxu0 0.0
    %2583 = vmatpush1.xpose.msra.mxu0 0.0
    %2584 = vmatprep.subr.mxu0 0.0
    %2585 = vmatpush1.xpose.msra.mxu0 0.0
    %2586 = vmatprep.subr.mxu0 0.0
    %2587 = vmatpush1.xpose.msra.mxu0 0.0
    %2588 = vmatprep.subr.mxu0 0.0
    %2589 = vmatpush1.xpose.msra.mxu0 0.0
    %2590 = vmatprep.subr.mxu0 0.0
    %2591 = vmatpush1.xpose.msra.mxu0 0.0
    %2592 = vmatprep.subr.mxu0 0.0
    %2593 = vmatpush1.xpose.msra.mxu0 0.0
    %2594 = vmatprep.subr.mxu0 0.0
    %2595 = vmatpush1.xpose.msra.mxu0 0.0
    %2596 = vmatprep.subr.mxu0 0.0
    %2597 = vmatpush1.xpose.msra.mxu0 0.0
    %2598 = vmatprep.subr.mxu0 0.0
    %2599 = vmatpush1.xpose.msra.mxu0 0.0
    %2600 = vmatprep.subr.mxu0 0.0
    %2601 = vmatpush1.xpose.msra.mxu0 0.0
    %2602 = vmatprep.mubr.f32.mxu0 %v115
    %2603 = vmatmul.mubr.f32.gmra.mrb[0].mxu0 %v114
    %v2604 = vpop.f32.mrb[0].mxu0
    %v2605 = vadd.f32 %v2535, %v2604
    %v2606 = vpop.f32.mrb[0].mxu0
    %2607 = vdwg.mxu0
    %2608 = vmatprep.subr.mxu0 %v362
    %2609 = vmatpush1.xpose.msra.mxu0 %v361
    %2610 = vmatprep.subr.mxu0 %v607
    %2611 = vmatpush1.xpose.msra.mxu0 %v606
    %2612 = vmatprep.subr.mxu0 %v852
    %2613 = vmatpush1.xpose.msra.mxu0 %v851
    %2614 = vmatprep.subr.mxu0 %v1097
    %2615 = vmatpush1.xpose.msra.mxu0 %v1096
    %2616 = vmatprep.subr.mxu0 %v1342
    %2617 = vmatpush1.xpose.msra.mxu0 %v1341
    %2618 = vmatprep.subr.mxu0 %v1587
    %2619 = vmatpush1.xpose.msra.mxu0 %v1586
    %2620 = vmatprep.subr.mxu0 0.0
    %2621 = vmatpush1.xpose.msra.mxu0 0.0
    %2622 = vmatprep.subr.mxu0 0.0
    %2623 = vmatpush1.xpose.msra.mxu0 0.0
    %2624 = vmatprep.subr.mxu0 0.0
    %2625 = vmatpush1.xpose.msra.mxu0 0.0
    %2626 = vmatprep.subr.mxu0 0.0
    %2627 = vmatpush1.xpose.msra.mxu0 0.0
    %2628 = vmatprep.subr.mxu0 0.0
    %2629 = vmatpush1.xpose.msra.mxu0 0.0
    %2630 = vmatprep.subr.mxu0 0.0
    %2631 = vmatpush1.xpose.msra.mxu0 0.0
    %2632 = vmatprep.subr.mxu0 0.0
    %2633 = vmatpush1.xpose.msra.mxu0 0.0
    %2634 = vmatprep.subr.mxu0 0.0
    %2635 = vmatpush1.xpose.msra.mxu0 0.0
    %2636 = vmatprep.subr.mxu0 0.0
    %2637 = vmatpush1.xpose.msra.mxu0 0.0
    %2638 = vmatprep.subr.mxu0 0.0
    %2639 = vmatpush1.xpose.msra.mxu0 0.0
    %2640 = vmatprep.subr.mxu0 0.0
    %2641 = vmatpush1.xpose.msra.mxu0 0.0
    %2642 = vmatprep.subr.mxu0 0.0
    %2643 = vmatpush1.xpose.msra.mxu0 0.0
    %2644 = vmatprep.subr.mxu0 0.0
    %2645 = vmatpush1.xpose.msra.mxu0 0.0
    %2646 = vmatprep.subr.mxu0 0.0
    %2647 = vmatpush1.xpose.msra.mxu0 0.0
    %2648 = vmatprep.subr.mxu0 0.0
    %2649 = vmatpush1.xpose.msra.mxu0 0.0
    %2650 = vmatprep.subr.mxu0 0.0
    %2651 = vmatpush1.xpose.msra.mxu0 0.0
    %2652 = vmatprep.subr.mxu0 0.0
    %2653 = vmatpush1.xpose.msra.mxu0 0.0
    %2654 = vmatprep.subr.mxu0 0.0
    %2655 = vmatpush1.xpose.msra.mxu0 0.0
    %2656 = vmatprep.subr.mxu0 0.0
    %2657 = vmatpush1.xpose.msra.mxu0 0.0
    %2658 = vmatprep.subr.mxu0 0.0
    %2659 = vmatpush1.xpose.msra.mxu0 0.0
    %2660 = vmatprep.subr.mxu0 0.0
    %2661 = vmatpush1.xpose.msra.mxu0 0.0
    %2662 = vmatprep.subr.mxu0 0.0
    %2663 = vmatpush1.xpose.msra.mxu0 0.0
    %2664 = vmatprep.subr.mxu0 0.0
    %2665 = vmatpush1.xpose.msra.mxu0 0.0
    %2666 = vmatprep.subr.mxu0 0.0
    %2667 = vmatpush1.xpose.msra.mxu0 0.0
    %2668 = vmatprep.subr.mxu0 0.0
    %2669 = vmatpush1.xpose.msra.mxu0 0.0
    %2670 = vmatprep.subr.mxu0 0.0
    %2671 = vmatpush1.xpose.msra.mxu0 0.0
    %2672 = vmatprep.mubr.f32.mxu0 %v117
    %2673 = vmatmul.mubr.f32.gmra.mrb[0].mxu0 %v116
    %v2674 = vpop.f32.mrb[0].mxu0
    %v2675 = vadd.f32 %v2605, %v2674
    %v2676 = vpop.f32.mrb[0].mxu0
    %2677 = vdwg.mxu0
    %2678 = vmatprep.subr.mxu0 %v364
    %2679 = vmatpush1.xpose.msra.mxu0 %v363
    %2680 = vmatprep.subr.mxu0 %v609
    %2681 = vmatpush1.xpose.msra.mxu0 %v608
    %2682 = vmatprep.subr.mxu0 %v854
    %2683 = vmatpush1.xpose.msra.mxu0 %v853
    %2684 = vmatprep.subr.mxu0 %v1099
    %2685 = vmatpush1.xpose.msra.mxu0 %v1098
    %2686 = vmatprep.subr.mxu0 %v1344
    %2687 = vmatpush1.xpose.msra.mxu0 %v1343
    %2688 = vmatprep.subr.mxu0 %v1589
    %2689 = vmatpush1.xpose.msra.mxu0 %v1588
    %2690 = vmatprep.subr.mxu0 0.0
    %2691 = vmatpush1.xpose.msra.mxu0 0.0
    %2692 = vmatprep.subr.mxu0 0.0
    %2693 = vmatpush1.xpose.msra.mxu0 0.0
    %2694 = vmatprep.subr.mxu0 0.0
    %2695 = vmatpush1.xpose.msra.mxu0 0.0
    %2696 = vmatprep.subr.mxu0 0.0
    %2697 = vmatpush1.xpose.msra.mxu0 0.0
    %2698 = vmatprep.subr.mxu0 0.0
    %2699 = vmatpush1.xpose.msra.mxu0 0.0
    %2700 = vmatprep.subr.mxu0 0.0
    %2701 = vmatpush1.xpose.msra.mxu0 0.0
    %2702 = vmatprep.subr.mxu0 0.0
    %2703 = vmatpush1.xpose.msra.mxu0 0.0
    %2704 = vmatprep.subr.mxu0 0.0
    %2705 = vmatpush1.xpose.msra.mxu0 0.0
    %2706 = vmatprep.subr.mxu0 0.0
    %2707 = vmatpush1.xpose.msra.mxu0 0.0
    %2708 = vmatprep.subr.mxu0 0.0
    %2709 = vmatpush1.xpose.msra.mxu0 0.0
    %2710 = vmatprep.subr.mxu0 0.0
    %2711 = vmatpush1.xpose.msra.mxu0 0.0
    %2712 = vmatprep.subr.mxu0 0.0
    %2713 = vmatpush1.xpose.msra.mxu0 0.0
    %2714 = vmatprep.subr.mxu0 0.0
    %2715 = vmatpush1.xpose.msra.mxu0 0.0
    %2716 = vmatprep.subr.mxu0 0.0
    %2717 = vmatpush1.xpose.msra.mxu0 0.0
    %2718 = vmatprep.subr.mxu0 0.0
    %2719 = vmatpush1.xpose.msra.mxu0 0.0
    %2720 = vmatprep.subr.mxu0 0.0
    %2721 = vmatpush1.xpose.msra.mxu0 0.0
    %2722 = vmatprep.subr.mxu0 0.0
    %2723 = vmatpush1.xpose.msra.mxu0 0.0
    %2724 = vmatprep.subr.mxu0 0.0
    %2725 = vmatpush1.xpose.msra.mxu0 0.0
    %2726 = vmatprep.subr.mxu0 0.0
    %2727 = vmatpush1.xpose.msra.mxu0 0.0
    %2728 = vmatprep.subr.mxu0 0.0
    %2729 = vmatpush1.xpose.msra.mxu0 0.0
    %2730 = vmatprep.subr.mxu0 0.0
    %2731 = vmatpush1.xpose.msra.mxu0 0.0
    %2732 = vmatprep.subr.mxu0 0.0
    %2733 = vmatpush1.xpose.msra.mxu0 0.0
    %2734 = vmatprep.subr.mxu0 0.0
    %2735 = vmatpush1.xpose.msra.mxu0 0.0
    %2736 = vmatprep.subr.mxu0 0.0
    %2737 = vmatpush1.xpose.msra.mxu0 0.0
    %2738 = vmatprep.subr.mxu0 0.0
    %2739 = vmatpush1.xpose.msra.mxu0 0.0
    %2740 = vmatprep.subr.mxu0 0.0
    %2741 = vmatpush1.xpose.msra.mxu0 0.0
    %2742 = vmatprep.mubr.f32.mxu0 %v119
    %2743 = vmatmul.mubr.f32.gmra.mrb[0].mxu0 %v118
    %v2744 = vpop.f32.mrb[0].mxu0
    %v2745 = vadd.f32 %v2675, %v2744
    %v2746 = vpop.f32.mrb[0].mxu0
    %2747 = vdwg.mxu0
    %2748 = vmatprep.subr.mxu0 %v366
    %2749 = vmatpush1.xpose.msra.mxu0 %v365
    %2750 = vmatprep.subr.mxu0 %v611
    %2751 = vmatpush1.xpose.msra.mxu0 %v610
    %2752 = vmatprep.subr.mxu0 %v856
    %2753 = vmatpush1.xpose.msra.mxu0 %v855
    %2754 = vmatprep.subr.mxu0 %v1101
    %2755 = vmatpush1.xpose.msra.mxu0 %v1100
    %2756 = vmatprep.subr.mxu0 %v1346
    %2757 = vmatpush1.xpose.msra.mxu0 %v1345
    %2758 = vmatprep.subr.mxu0 %v1591
    %2759 = vmatpush1.xpose.msra.mxu0 %v1590
    %2760 = vmatprep.subr.mxu0 0.0
    %2761 = vmatpush1.xpose.msra.mxu0 0.0
    %2762 = vmatprep.subr.mxu0 0.0
    %2763 = vmatpush1.xpose.msra.mxu0 0.0
    %2764 = vmatprep.subr.mxu0 0.0
    %2765 = vmatpush1.xpose.msra.mxu0 0.0
    %2766 = vmatprep.subr.mxu0 0.0
    %2767 = vmatpush1.xpose.msra.mxu0 0.0
    %2768 = vmatprep.subr.mxu0 0.0
    %2769 = vmatpush1.xpose.msra.mxu0 0.0
    %2770 = vmatprep.subr.mxu0 0.0
    %2771 = vmatpush1.xpose.msra.mxu0 0.0
    %2772 = vmatprep.subr.mxu0 0.0
    %2773 = vmatpush1.xpose.msra.mxu0 0.0
    %2774 = vmatprep.subr.mxu0 0.0
    %2775 = vmatpush1.xpose.msra.mxu0 0.0
    %2776 = vmatprep.subr.mxu0 0.0
    %2777 = vmatpush1.xpose.msra.mxu0 0.0
    %2778 = vmatprep.subr.mxu0 0.0
    %2779 = vmatpush1.xpose.msra.mxu0 0.0
    %2780 = vmatprep.subr.mxu0 0.0
    %2781 = vmatpush1.xpose.msra.mxu0 0.0
    %2782 = vmatprep.subr.mxu0 0.0
    %2783 = vmatpush1.xpose.msra.mxu0 0.0
    %2784 = vmatprep.subr.mxu0 0.0
    %2785 = vmatpush1.xpose.msra.mxu0 0.0
    %2786 = vmatprep.subr.mxu0 0.0
    %2787 = vmatpush1.xpose.msra.mxu0 0.0
    %2788 = vmatprep.subr.mxu0 0.0
    %2789 = vmatpush1.xpose.msra.mxu0 0.0
    %2790 = vmatprep.subr.mxu0 0.0
    %2791 = vmatpush1.xpose.msra.mxu0 0.0
    %2792 = vmatprep.subr.mxu0 0.0
    %2793 = vmatpush1.xpose.msra.mxu0 0.0
    %2794 = vmatprep.subr.mxu0 0.0
    %2795 = vmatpush1.xpose.msra.mxu0 0.0
    %2796 = vmatprep.subr.mxu0 0.0
    %2797 = vmatpush1.xpose.msra.mxu0 0.0
    %2798 = vmatprep.subr.mxu0 0.0
    %2799 = vmatpush1.xpose.msra.mxu0 0.0
    %2800 = vmatprep.subr.mxu0 0.0
    %2801 = vmatpush1.xpose.msra.mxu0 0.0
    %2802 = vmatprep.subr.mxu0 0.0
    %2803 = vmatpush1.xpose.msra.mxu0 0.0
    %2804 = vmatprep.subr.mxu0 0.0
    %2805 = vmatpush1.xpose.msra.mxu0 0.0
    %2806 = vmatprep.subr.mxu0 0.0
    %2807 = vmatpush1.xpose.msra.mxu0 0.0
    %2808 = vmatprep.subr.mxu0 0.0
    %2809 = vmatpush1.xpose.msra.mxu0 0.0
    %2810 = vmatprep.subr.mxu0 0.0
    %2811 = vmatpush1.xpose.msra.mxu0 0.0
    %2812 = vmatprep.mubr.f32.mxu0 %v121
    %2813 = vmatmul.mubr.f32.gmra.mrb[0].mxu0 %v120
    %v2814 = vpop.f32.mrb[0].mxu0
    %v2815 = vadd.f32 %v2745, %v2814
    %v2816 = vpop.f32.mrb[0].mxu0
    %2817 = vdwg.mxu0
    %2818 = vmatprep.subr.mxu0 %v368
    %2819 = vmatpush1.xpose.msra.mxu0 %v367
    %2820 = vmatprep.subr.mxu0 %v613
    %2821 = vmatpush1.xpose.msra.mxu0 %v612
    %2822 = vmatprep.subr.mxu0 %v858
    %2823 = vmatpush1.xpose.msra.mxu0 %v857
    %2824 = vmatprep.subr.mxu0 %v1103
    %2825 = vmatpush1.xpose.msra.mxu0 %v1102
    %2826 = vmatprep.subr.mxu0 %v1348
    %2827 = vmatpush1.xpose.msra.mxu0 %v1347
    %2828 = vmatprep.subr.mxu0 %v1593
    %2829 = vmatpush1.xpose.msra.mxu0 %v1592
    %2830 = vmatprep.subr.mxu0 0.0
    %2831 = vmatpush1.xpose.msra.mxu0 0.0
    %2832 = vmatprep.subr.mxu0 0.0
    %2833 = vmatpush1.xpose.msra.mxu0 0.0
    %2834 = vmatprep.subr.mxu0 0.0
    %2835 = vmatpush1.xpose.msra.mxu0 0.0
    %2836 = vmatprep.subr.mxu0 0.0
    %2837 = vmatpush1.xpose.msra.mxu0 0.0
    %2838 = vmatprep.subr.mxu0 0.0
    %2839 = vmatpush1.xpose.msra.mxu0 0.0
    %2840 = vmatprep.subr.mxu0 0.0
    %2841 = vmatpush1.xpose.msra.mxu0 0.0
    %2842 = vmatprep.subr.mxu0 0.0
    %2843 = vmatpush1.xpose.msra.mxu0 0.0
    %2844 = vmatprep.subr.mxu0 0.0
    %2845 = vmatpush1.xpose.msra.mxu0 0.0
    %2846 = vmatprep.subr.mxu0 0.0
    %2847 = vmatpush1.xpose.msra.mxu0 0.0
    %2848 = vmatprep.subr.mxu0 0.0
    %2849 = vmatpush1.xpose.msra.mxu0 0.0
    %2850 = vmatprep.subr.mxu0 0.0
    %2851 = vmatpush1.xpose.msra.mxu0 0.0
    %2852 = vmatprep.subr.mxu0 0.0
    %2853 = vmatpush1.xpose.msra.mxu0 0.0
    %2854 = vmatprep.subr.mxu0 0.0
    %2855 = vmatpush1.xpose.msra.mxu0 0.0
    %2856 = vmatprep.subr.mxu0 0.0
    %2857 = vmatpush1.xpose.msra.mxu0 0.0
    %2858 = vmatprep.subr.mxu0 0.0
    %2859 = vmatpush1.xpose.msra.mxu0 0.0
    %2860 = vmatprep.subr.mxu0 0.0
    %2861 = vmatpush1.xpose.msra.mxu0 0.0
    %2862 = vmatprep.subr.mxu0 0.0
    %2863 = vmatpush1.xpose.msra.mxu0 0.0
    %2864 = vmatprep.subr.mxu0 0.0
    %2865 = vmatpush1.xpose.msra.mxu0 0.0
    %2866 = vmatprep.subr.mxu0 0.0
    %2867 = vmatpush1.xpose.msra.mxu0 0.0
    %2868 = vmatprep.subr.mxu0 0.0
    %2869 = vmatpush1.xpose.msra.mxu0 0.0
    %2870 = vmatprep.subr.mxu0 0.0
    %2871 = vmatpush1.xpose.msra.mxu0 0.0
    %2872 = vmatprep.subr.mxu0 0.0
    %2873 = vmatpush1.xpose.msra.mxu0 0.0
    %2874 = vmatprep.subr.mxu0 0.0
    %2875 = vmatpush1.xpose.msra.mxu0 0.0
    %2876 = vmatprep.subr.mxu0 0.0
    %2877 = vmatpush1.xpose.msra.mxu0 0.0
    %2878 = vmatprep.subr.mxu0 0.0
    %2879 = vmatpush1.xpose.msra.mxu0 0.0
    %2880 = vmatprep.subr.mxu0 0.0
    %2881 = vmatpush1.xpose.msra.mxu0 0.0
    %2882 = vmatprep.mubr.f32.mxu0 %v123
    %2883 = vmatmul.mubr.f32.gmra.mrb[0].mxu0 %v122
    %v2884 = vpop.f32.mrb[0].mxu0
    %v2885 = vadd.f32 %v2815, %v2884
    %v2886 = vpop.f32.mrb[0].mxu0
    %2887 = vdwg.mxu0
    %2888 = vmatprep.subr.mxu0 %v370
    %2889 = vmatpush1.xpose.msra.mxu0 %v369
    %2890 = vmatprep.subr.mxu0 %v615
    %2891 = vmatpush1.xpose.msra.mxu0 %v614
    %2892 = vmatprep.subr.mxu0 %v860
    %2893 = vmatpush1.xpose.msra.mxu0 %v859
    %2894 = vmatprep.subr.mxu0 %v1105
    %2895 = vmatpush1.xpose.msra.mxu0 %v1104
    %2896 = vmatprep.subr.mxu0 %v1350
    %2897 = vmatpush1.xpose.msra.mxu0 %v1349
    %2898 = vmatprep.subr.mxu0 %v1595
    %2899 = vmatpush1.xpose.msra.mxu0 %v1594
    %2900 = vmatprep.subr.mxu0 0.0
    %2901 = vmatpush1.xpose.msra.mxu0 0.0
    %2902 = vmatprep.subr.mxu0 0.0
    %2903 = vmatpush1.xpose.msra.mxu0 0.0
    %2904 = vmatprep.subr.mxu0 0.0
    %2905 = vmatpush1.xpose.msra.mxu0 0.0
    %2906 = vmatprep.subr.mxu0 0.0
    %2907 = vmatpush1.xpose.msra.mxu0 0.0
    %2908 = vmatprep.subr.mxu0 0.0
    %2909 = vmatpush1.xpose.msra.mxu0 0.0
    %2910 = vmatprep.subr.mxu0 0.0
    %2911 = vmatpush1.xpose.msra.mxu0 0.0
    %2912 = vmatprep.subr.mxu0 0.0
    %2913 = vmatpush1.xpose.msra.mxu0 0.0
    %2914 = vmatprep.subr.mxu0 0.0
    %2915 = vmatpush1.xpose.msra.mxu0 0.0
    %2916 = vmatprep.subr.mxu0 0.0
    %2917 = vmatpush1.xpose.msra.mxu0 0.0
    %2918 = vmatprep.subr.mxu0 0.0
    %2919 = vmatpush1.xpose.msra.mxu0 0.0
    %2920 = vmatprep.subr.mxu0 0.0
    %2921 = vmatpush1.xpose.msra.mxu0 0.0
    %2922 = vmatprep.subr.mxu0 0.0
    %2923 = vmatpush1.xpose.msra.mxu0 0.0
    %2924 = vmatprep.subr.mxu0 0.0
    %2925 = vmatpush1.xpose.msra.mxu0 0.0
    %2926 = vmatprep.subr.mxu0 0.0
    %2927 = vmatpush1.xpose.msra.mxu0 0.0
    %2928 = vmatprep.subr.mxu0 0.0
    %2929 = vmatpush1.xpose.msra.mxu0 0.0
    %2930 = vmatprep.subr.mxu0 0.0
    %2931 = vmatpush1.xpose.msra.mxu0 0.0
    %2932 = vmatprep.subr.mxu0 0.0
    %2933 = vmatpush1.xpose.msra.mxu0 0.0
    %2934 = vmatprep.subr.mxu0 0.0
    %2935 = vmatpush1.xpose.msra.mxu0 0.0
    %2936 = vmatprep.subr.mxu0 0.0
    %2937 = vmatpush1.xpose.msra.mxu0 0.0
    %2938 = vmatprep.subr.mxu0 0.0
    %2939 = vmatpush1.xpose.msra.mxu0 0.0
    %2940 = vmatprep.subr.mxu0 0.0
    %2941 = vmatpush1.xpose.msra.mxu0 0.0
    %2942 = vmatprep.subr.mxu0 0.0
    %2943 = vmatpush1.xpose.msra.mxu0 0.0
    %2944 = vmatprep.subr.mxu0 0.0
    %2945 = vmatpush1.xpose.msra.mxu0 0.0
    %2946 = vmatprep.subr.mxu0 0.0
    %2947 = vmatpush1.xpose.msra.mxu0 0.0
    %2948 = vmatprep.subr.mxu0 0.0
    %2949 = vmatpush1.xpose.msra.mxu0 0.0
    %2950 = vmatprep.subr.mxu0 0.0
    %2951 = vmatpush1.xpose.msra.mxu0 0.0
    %2952 = vmatprep.mubr.f32.mxu0 %v125
    %2953 = vmatmul.mubr.f32.gmra.mrb[0].mxu0 %v124
    %v2954 = vpop.f32.mrb[0].mxu0
    %v2955 = vadd.f32 %v2885, %v2954
    %v2956 = vpop.f32.mrb[0].mxu0
    %2957 = vdwg.mxu0
    %2958 = vmatprep.subr.mxu0 %v372
    %2959 = vmatpush1.xpose.msra.mxu0 %v371
    %2960 = vmatprep.subr.mxu0 %v617
    %2961 = vmatpush1.xpose.msra.mxu0 %v616
    %2962 = vmatprep.subr.mxu0 %v862
    %2963 = vmatpush1.xpose.msra.mxu0 %v861
    %2964 = vmatprep.subr.mxu0 %v1107
    %2965 = vmatpush1.xpose.msra.mxu0 %v1106
    %2966 = vmatprep.subr.mxu0 %v1352
    %2967 = vmatpush1.xpose.msra.mxu0 %v1351
    %2968 = vmatprep.subr.mxu0 %v1597
    %2969 = vmatpush1.xpose.msra.mxu0 %v1596
    %2970 = vmatprep.subr.mxu0 0.0
    %2971 = vmatpush1.xpose.msra.mxu0 0.0
    %2972 = vmatprep.subr.mxu0 0.0
    %2973 = vmatpush1.xpose.msra.mxu0 0.0
    %2974 = vmatprep.subr.mxu0 0.0
    %2975 = vmatpush1.xpose.msra.mxu0 0.0
    %2976 = vmatprep.subr.mxu0 0.0
    %2977 = vmatpush1.xpose.msra.mxu0 0.0
    %2978 = vmatprep.subr.mxu0 0.0
    %2979 = vmatpush1.xpose.msra.mxu0 0.0
    %2980 = vmatprep.subr.mxu0 0.0
    %2981 = vmatpush1.xpose.msra.mxu0 0.0
    %2982 = vmatprep.subr.mxu0 0.0
    %2983 = vmatpush1.xpose.msra.mxu0 0.0
    %2984 = vmatprep.subr.mxu0 0.0
    %2985 = vmatpush1.xpose.msra.mxu0 0.0
    %2986 = vmatprep.subr.mxu0 0.0
    %2987 = vmatpush1.xpose.msra.mxu0 0.0
    %2988 = vmatprep.subr.mxu0 0.0
    %2989 = vmatpush1.xpose.msra.mxu0 0.0
    %2990 = vmatprep.subr.mxu0 0.0
    %2991 = vmatpush1.xpose.msra.mxu0 0.0
    %2992 = vmatprep.subr.mxu0 0.0
    %2993 = vmatpush1.xpose.msra.mxu0 0.0
    %2994 = vmatprep.subr.mxu0 0.0
    %2995 = vmatpush1.xpose.msra.mxu0 0.0
    %2996 = vmatprep.subr.mxu0 0.0
    %2997 = vmatpush1.xpose.msra.mxu0 0.0
    %2998 = vmatprep.subr.mxu0 0.0
    %2999 = vmatpush1.xpose.msra.mxu0 0.0
    %3000 = vmatprep.subr.mxu0 0.0
    %3001 = vmatpush1.xpose.msra.mxu0 0.0
    %3002 = vmatprep.subr.mxu0 0.0
    %3003 = vmatpush1.xpose.msra.mxu0 0.0
    %3004 = vmatprep.subr.mxu0 0.0
    %3005 = vmatpush1.xpose.msra.mxu0 0.0
    %3006 = vmatprep.subr.mxu0 0.0
    %3007 = vmatpush1.xpose.msra.mxu0 0.0
    %3008 = vmatprep.subr.mxu0 0.0
    %3009 = vmatpush1.xpose.msra.mxu0 0.0
    %3010 = vmatprep.subr.mxu0 0.0
    %3011 = vmatpush1.xpose.msra.mxu0 0.0
    %3012 = vmatprep.subr.mxu0 0.0
    %3013 = vmatpush1.xpose.msra.mxu0 0.0
    %3014 = vmatprep.subr.mxu0 0.0
    %3015 = vmatpush1.xpose.msra.mxu0 0.0
    %3016 = vmatprep.subr.mxu0 0.0
    %3017 = vmatpush1.xpose.msra.mxu0 0.0
    %3018 = vmatprep.subr.mxu0 0.0
    %3019 = vmatpush1.xpose.msra.mxu0 0.0
    %3020 = vmatprep.subr.mxu0 0.0
    %3021 = vmatpush1.xpose.msra.mxu0 0.0
    %3022 = vmatprep.mubr.f32.mxu0 %v127
    %3023 = vmatmul.mubr.f32.gmra.mrb[0].mxu0 %v126
    %v3024 = vpop.f32.mrb[0].mxu0
    %v3025 = vadd.f32 %v2955, %v3024
    %v3026 = vpop.f32.mrb[0].mxu0
    %3027 = vdwg.mxu0
    %3028 = vmatprep.subr.mxu0 %v374
    %3029 = vmatpush1.xpose.msra.mxu0 %v373
    %3030 = vmatprep.subr.mxu0 %v619
    %3031 = vmatpush1.xpose.msra.mxu0 %v618
    %3032 = vmatprep.subr.mxu0 %v864
    %3033 = vmatpush1.xpose.msra.mxu0 %v863
    %3034 = vmatprep.subr.mxu0 %v1109
    %3035 = vmatpush1.xpose.msra.mxu0 %v1108
    %3036 = vmatprep.subr.mxu0 %v1354
    %3037 = vmatpush1.xpose.msra.mxu0 %v1353
    %3038 = vmatprep.subr.mxu0 %v1599
    %3039 = vmatpush1.xpose.msra.mxu0 %v1598
    %3040 = vmatprep.subr.mxu0 0.0
    %3041 = vmatpush1.xpose.msra.mxu0 0.0
    %3042 = vmatprep.subr.mxu0 0.0
    %3043 = vmatpush1.xpose.msra.mxu0 0.0
    %3044 = vmatprep.subr.mxu0 0.0
    %3045 = vmatpush1.xpose.msra.mxu0 0.0
    %3046 = vmatprep.subr.mxu0 0.0
    %3047 = vmatpush1.xpose.msra.mxu0 0.0
    %3048 = vmatprep.subr.mxu0 0.0
    %3049 = vmatpush1.xpose.msra.mxu0 0.0
    %3050 = vmatprep.subr.mxu0 0.0
    %3051 = vmatpush1.xpose.msra.mxu0 0.0
    %3052 = vmatprep.subr.mxu0 0.0
    %3053 = vmatpush1.xpose.msra.mxu0 0.0
    %3054 = vmatprep.subr.mxu0 0.0
    %3055 = vmatpush1.xpose.msra.mxu0 0.0
    %3056 = vmatprep.subr.mxu0 0.0
    %3057 = vmatpush1.xpose.msra.mxu0 0.0
    %3058 = vmatprep.subr.mxu0 0.0
    %3059 = vmatpush1.xpose.msra.mxu0 0.0
    %3060 = vmatprep.subr.mxu0 0.0
    %3061 = vmatpush1.xpose.msra.mxu0 0.0
    %3062 = vmatprep.subr.mxu0 0.0
    %3063 = vmatpush1.xpose.msra.mxu0 0.0
    %3064 = vmatprep.subr.mxu0 0.0
    %3065 = vmatpush1.xpose.msra.mxu0 0.0
    %3066 = vmatprep.subr.mxu0 0.0
    %3067 = vmatpush1.xpose.msra.mxu0 0.0
    %3068 = vmatprep.subr.mxu0 0.0
    %3069 = vmatpush1.xpose.msra.mxu0 0.0
    %3070 = vmatprep.subr.mxu0 0.0
    %3071 = vmatpush1.xpose.msra.mxu0 0.0
    %3072 = vmatprep.subr.mxu0 0.0
    %3073 = vmatpush1.xpose.msra.mxu0 0.0
    %3074 = vmatprep.subr.mxu0 0.0
    %3075 = vmatpush1.xpose.msra.mxu0 0.0
    %3076 = vmatprep.subr.mxu0 0.0
    %3077 = vmatpush1.xpose.msra.mxu0 0.0
    %3078 = vmatprep.subr.mxu0 0.0
    %3079 = vmatpush1.xpose.msra.mxu0 0.0
    %3080 = vmatprep.subr.mxu0 0.0
    %3081 = vmatpush1.xpose.msra.mxu0 0.0
    %3082 = vmatprep.subr.mxu0 0.0
    %3083 = vmatpush1.xpose.msra.mxu0 0.0
    %3084 = vmatprep.subr.mxu0 0.0
    %3085 = vmatpush1.xpose.msra.mxu0 0.0
    %3086 = vmatprep.subr.mxu0 0.0
    %3087 = vmatpush1.xpose.msra.mxu0 0.0
    %3088 = vmatprep.subr.mxu0 0.0
    %3089 = vmatpush1.xpose.msra.mxu0 0.0
    %3090 = vmatprep.subr.mxu0 0.0
    %3091 = vmatpush1.xpose.msra.mxu0 0.0
    %3092 = vmatprep.mubr.f32.mxu0 %v129
    %3093 = vmatmul.mubr.f32.gmra.mrb[0].mxu0 %v128
    %v3094 = vpop.f32.mrb[0].mxu0
    %v3095 = vadd.f32 %v3025, %v3094
    %v3096 = vpop.f32.mrb[0].mxu0
    %3097 = vdwg.mxu0
    %3098 = vmatprep.subr.mxu0 %v376
    %3099 = vmatpush1.xpose.msra.mxu0 %v375
    %3100 = vmatprep.subr.mxu0 %v621
    %3101 = vmatpush1.xpose.msra.mxu0 %v620
    %3102 = vmatprep.subr.mxu0 %v866
    %3103 = vmatpush1.xpose.msra.mxu0 %v865
    %3104 = vmatprep.subr.mxu0 %v1111
    %3105 = vmatpush1.xpose.msra.mxu0 %v1110
    %3106 = vmatprep.subr.mxu0 %v1356
    %3107 = vmatpush1.xpose.msra.mxu0 %v1355
    %3108 = vmatprep.subr.mxu0 %v1601
    %3109 = vmatpush1.xpose.msra.mxu0 %v1600
    %3110 = vmatprep.subr.mxu0 0.0
    %3111 = vmatpush1.xpose.msra.mxu0 0.0
    %3112 = vmatprep.subr.mxu0 0.0
    %3113 = vmatpush1.xpose.msra.mxu0 0.0
    %3114 = vmatprep.subr.mxu0 0.0
    %3115 = vmatpush1.xpose.msra.mxu0 0.0
    %3116 = vmatprep.subr.mxu0 0.0
    %3117 = vmatpush1.xpose.msra.mxu0 0.0
    %3118 = vmatprep.subr.mxu0 0.0
    %3119 = vmatpush1.xpose.msra.mxu0 0.0
    %3120 = vmatprep.subr.mxu0 0.0
    %3121 = vmatpush1.xpose.msra.mxu0 0.0
    %3122 = vmatprep.subr.mxu0 0.0
    %3123 = vmatpush1.xpose.msra.mxu0 0.0
    %3124 = vmatprep.subr.mxu0 0.0
    %3125 = vmatpush1.xpose.msra.mxu0 0.0
    %3126 = vmatprep.subr.mxu0 0.0
    %3127 = vmatpush1.xpose.msra.mxu0 0.0
    %3128 = vmatprep.subr.mxu0 0.0
    %3129 = vmatpush1.xpose.msra.mxu0 0.0
    %3130 = vmatprep.subr.mxu0 0.0
    %3131 = vmatpush1.xpose.msra.mxu0 0.0
    %3132 = vmatprep.subr.mxu0 0.0
    %3133 = vmatpush1.xpose.msra.mxu0 0.0
    %3134 = vmatprep.subr.mxu0 0.0
    %3135 = vmatpush1.xpose.msra.mxu0 0.0
    %3136 = vmatprep.subr.mxu0 0.0
    %3137 = vmatpush1.xpose.msra.mxu0 0.0
    %3138 = vmatprep.subr.mxu0 0.0
    %3139 = vmatpush1.xpose.msra.mxu0 0.0
    %3140 = vmatprep.subr.mxu0 0.0
    %3141 = vmatpush1.xpose.msra.mxu0 0.0
    %3142 = vmatprep.subr.mxu0 0.0
    %3143 = vmatpush1.xpose.msra.mxu0 0.0
    %3144 = vmatprep.subr.mxu0 0.0
    %3145 = vmatpush1.xpose.msra.mxu0 0.0
    %3146 = vmatprep.subr.mxu0 0.0
    %3147 = vmatpush1.xpose.msra.mxu0 0.0
    %3148 = vmatprep.subr.mxu0 0.0
    %3149 = vmatpush1.xpose.msra.mxu0 0.0
    %3150 = vmatprep.subr.mxu0 0.0
    %3151 = vmatpush1.xpose.msra.mxu0 0.0
    %3152 = vmatprep.subr.mxu0 0.0
    %3153 = vmatpush1.xpose.msra.mxu0 0.0
    %3154 = vmatprep.subr.mxu0 0.0
    %3155 = vmatpush1.xpose.msra.mxu0 0.0
    %3156 = vmatprep.subr.mxu0 0.0
    %3157 = vmatpush1.xpose.msra.mxu0 0.0
    %3158 = vmatprep.subr.mxu0 0.0
    %3159 = vmatpush1.xpose.msra.mxu0 0.0
    %3160 = vmatprep.subr.mxu0 0.0
    %3161 = vmatpush1.xpose.msra.mxu0 0.0
    %3162 = vmatprep.mubr.f32.mxu0 %v131
    %3163 = vmatmul.mubr.f32.gmra.mrb[0].mxu0 %v130
    %v3164 = vpop.f32.mrb[0].mxu0
    %v3165 = vadd.f32 %v3095, %v3164
    %v3166 = vpop.f32.mrb[0].mxu0
    %3167 = vdwg.mxu0
    %3168 = vmatprep.subr.mxu0 %v378
    %3169 = vmatpush1.xpose.msra.mxu0 %v377
    %3170 = vmatprep.subr.mxu0 %v623
    %3171 = vmatpush1.xpose.msra.mxu0 %v622
    %3172 = vmatprep.subr.mxu0 %v868
    %3173 = vmatpush1.xpose.msra.mxu0 %v867
    %3174 = vmatprep.subr.mxu0 %v1113
    %3175 = vmatpush1.xpose.msra.mxu0 %v1112
    %3176 = vmatprep.subr.mxu0 %v1358
    %3177 = vmatpush1.xpose.msra.mxu0 %v1357
    %3178 = vmatprep.subr.mxu0 %v1603
    %3179 = vmatpush1.xpose.msra.mxu0 %v1602
    %3180 = vmatprep.subr.mxu0 0.0
    %3181 = vmatpush1.xpose.msra.mxu0 0.0
    %3182 = vmatprep.subr.mxu0 0.0
    %3183 = vmatpush1.xpose.msra.mxu0 0.0
    %3184 = vmatprep.subr.mxu0 0.0
    %3185 = vmatpush1.xpose.msra.mxu0 0.0
    %3186 = vmatprep.subr.mxu0 0.0
    %3187 = vmatpush1.xpose.msra.mxu0 0.0
    %3188 = vmatprep.subr.mxu0 0.0
    %3189 = vmatpush1.xpose.msra.mxu0 0.0
    %3190 = vmatprep.subr.mxu0 0.0
    %3191 = vmatpush1.xpose.msra.mxu0 0.0
    %3192 = vmatprep.subr.mxu0 0.0
    %3193 = vmatpush1.xpose.msra.mxu0 0.0
    %3194 = vmatprep.subr.mxu0 0.0
    %3195 = vmatpush1.xpose.msra.mxu0 0.0
    %3196 = vmatprep.subr.mxu0 0.0
    %3197 = vmatpush1.xpose.msra.mxu0 0.0
    %3198 = vmatprep.subr.mxu0 0.0
    %3199 = vmatpush1.xpose.msra.mxu0 0.0
    %3200 = vmatprep.subr.mxu0 0.0
    %3201 = vmatpush1.xpose.msra.mxu0 0.0
    %3202 = vmatprep.subr.mxu0 0.0
    %3203 = vmatpush1.xpose.msra.mxu0 0.0
    %3204 = vmatprep.subr.mxu0 0.0
    %3205 = vmatpush1.xpose.msra.mxu0 0.0
    %3206 = vmatprep.subr.mxu0 0.0
    %3207 = vmatpush1.xpose.msra.mxu0 0.0
    %3208 = vmatprep.subr.mxu0 0.0
    %3209 = vmatpush1.xpose.msra.mxu0 0.0
    %3210 = vmatprep.subr.mxu0 0.0
    %3211 = vmatpush1.xpose.msra.mxu0 0.0
    %3212 = vmatprep.subr.mxu0 0.0
    %3213 = vmatpush1.xpose.msra.mxu0 0.0
    %3214 = vmatprep.subr.mxu0 0.0
    %3215 = vmatpush1.xpose.msra.mxu0 0.0
    %3216 = vmatprep.subr.mxu0 0.0
    %3217 = vmatpush1.xpose.msra.mxu0 0.0
    %3218 = vmatprep.subr.mxu0 0.0
    %3219 = vmatpush1.xpose.msra.mxu0 0.0
    %3220 = vmatprep.subr.mxu0 0.0
    %3221 = vmatpush1.xpose.msra.mxu0 0.0
    %3222 = vmatprep.subr.mxu0 0.0
    %3223 = vmatpush1.xpose.msra.mxu0 0.0
    %3224 = vmatprep.subr.mxu0 0.0
    %3225 = vmatpush1.xpose.msra.mxu0 0.0
    %3226 = vmatprep.subr.mxu0 0.0
    %3227 = vmatpush1.xpose.msra.mxu0 0.0
    %3228 = vmatprep.subr.mxu0 0.0
    %3229 = vmatpush1.xpose.msra.mxu0 0.0
    %3230 = vmatprep.subr.mxu0 0.0
    %3231 = vmatpush1.xpose.msra.mxu0 0.0
    %3232 = vmatprep.mubr.f32.mxu0 %v133
    %3233 = vmatmul.mubr.f32.gmra.mrb[0].mxu0 %v132
    %v3234 = vpop.f32.mrb[0].mxu0
    %v3235 = vadd.f32 %v3165, %v3234
    %v3236 = vpop.f32.mrb[0].mxu0
    %3237 = vdwg.mxu0
    %3238 = vmatprep.subr.mxu0 %v380
    %3239 = vmatpush1.xpose.msra.mxu0 %v379
    %3240 = vmatprep.subr.mxu0 %v625
    %3241 = vmatpush1.xpose.msra.mxu0 %v624
    %3242 = vmatprep.subr.mxu0 %v870
    %3243 = vmatpush1.xpose.msra.mxu0 %v869
    %3244 = vmatprep.subr.mxu0 %v1115
    %3245 = vmatpush1.xpose.msra.mxu0 %v1114
    %3246 = vmatprep.subr.mxu0 %v1360
    %3247 = vmatpush1.xpose.msra.mxu0 %v1359
    %3248 = vmatprep.subr.mxu0 %v1605
    %3249 = vmatpush1.xpose.msra.mxu0 %v1604
    %3250 = vmatprep.subr.mxu0 0.0
    %3251 = vmatpush1.xpose.msra.mxu0 0.0
    %3252 = vmatprep.subr.mxu0 0.0
    %3253 = vmatpush1.xpose.msra.mxu0 0.0
    %3254 = vmatprep.subr.mxu0 0.0
    %3255 = vmatpush1.xpose.msra.mxu0 0.0
    %3256 = vmatprep.subr.mxu0 0.0
    %3257 = vmatpush1.xpose.msra.mxu0 0.0
    %3258 = vmatprep.subr.mxu0 0.0
    %3259 = vmatpush1.xpose.msra.mxu0 0.0
    %3260 = vmatprep.subr.mxu0 0.0
    %3261 = vmatpush1.xpose.msra.mxu0 0.0
    %3262 = vmatprep.subr.mxu0 0.0
    %3263 = vmatpush1.xpose.msra.mxu0 0.0
    %3264 = vmatprep.subr.mxu0 0.0
    %3265 = vmatpush1.xpose.msra.mxu0 0.0
    %3266 = vmatprep.subr.mxu0 0.0
    %3267 = vmatpush1.xpose.msra.mxu0 0.0
    %3268 = vmatprep.subr.mxu0 0.0
    %3269 = vmatpush1.xpose.msra.mxu0 0.0
    %3270 = vmatprep.subr.mxu0 0.0
    %3271 = vmatpush1.xpose.msra.mxu0 0.0
    %3272 = vmatprep.subr.mxu0 0.0
    %3273 = vmatpush1.xpose.msra.mxu0 0.0
    %3274 = vmatprep.subr.mxu0 0.0
    %3275 = vmatpush1.xpose.msra.mxu0 0.0
    %3276 = vmatprep.subr.mxu0 0.0
    %3277 = vmatpush1.xpose.msra.mxu0 0.0
    %3278 = vmatprep.subr.mxu0 0.0
    %3279 = vmatpush1.xpose.msra.mxu0 0.0
    %3280 = vmatprep.subr.mxu0 0.0
    %3281 = vmatpush1.xpose.msra.mxu0 0.0
    %3282 = vmatprep.subr.mxu0 0.0
    %3283 = vmatpush1.xpose.msra.mxu0 0.0
    %3284 = vmatprep.subr.mxu0 0.0
    %3285 = vmatpush1.xpose.msra.mxu0 0.0
    %3286 = vmatprep.subr.mxu0 0.0
    %3287 = vmatpush1.xpose.msra.mxu0 0.0
    %3288 = vmatprep.subr.mxu0 0.0
    %3289 = vmatpush1.xpose.msra.mxu0 0.0
    %3290 = vmatprep.subr.mxu0 0.0
    %3291 = vmatpush1.xpose.msra.mxu0 0.0
    %3292 = vmatprep.subr.mxu0 0.0
    %3293 = vmatpush1.xpose.msra.mxu0 0.0
    %3294 = vmatprep.subr.mxu0 0.0
    %3295 = vmatpush1.xpose.msra.mxu0 0.0
    %3296 = vmatprep.subr.mxu0 0.0
    %3297 = vmatpush1.xpose.msra.mxu0 0.0
    %3298 = vmatprep.subr.mxu0 0.0
    %3299 = vmatpush1.xpose.msra.mxu0 0.0
    %3300 = vmatprep.subr.mxu0 0.0
    %3301 = vmatpush1.xpose.msra.mxu0 0.0
    %3302 = vmatprep.mubr.f32.mxu0 %v135
    %3303 = vmatmul.mubr.f32.gmra.mrb[0].mxu0 %v134
    %v3304 = vpop.f32.mrb[0].mxu0
    %v3305 = vadd.f32 %v3235, %v3304
    %v3306 = vpop.f32.mrb[0].mxu0
    %3307 = vdwg.mxu0
    %3308 = vmatprep.subr.mxu0 %v382
    %3309 = vmatpush1.xpose.msra.mxu0 %v381
    %3310 = vmatprep.subr.mxu0 %v627
    %3311 = vmatpush1.xpose.msra.mxu0 %v626
    %3312 = vmatprep.subr.mxu0 %v872
    %3313 = vmatpush1.xpose.msra.mxu0 %v871
    %3314 = vmatprep.subr.mxu0 %v1117
    %3315 = vmatpush1.xpose.msra.mxu0 %v1116
    %3316 = vmatprep.subr.mxu0 %v1362
    %3317 = vmatpush1.xpose.msra.mxu0 %v1361
    %3318 = vmatprep.subr.mxu0 %v1607
    %3319 = vmatpush1.xpose.msra.mxu0 %v1606
    %3320 = vmatprep.subr.mxu0 0.0
    %3321 = vmatpush1.xpose.msra.mxu0 0.0
    %3322 = vmatprep.subr.mxu0 0.0
    %3323 = vmatpush1.xpose.msra.mxu0 0.0
    %3324 = vmatprep.subr.mxu0 0.0
    %3325 = vmatpush1.xpose.msra.mxu0 0.0
    %3326 = vmatprep.subr.mxu0 0.0
    %3327 = vmatpush1.xpose.msra.mxu0 0.0
    %3328 = vmatprep.subr.mxu0 0.0
    %3329 = vmatpush1.xpose.msra.mxu0 0.0
    %3330 = vmatprep.subr.mxu0 0.0
    %3331 = vmatpush1.xpose.msra.mxu0 0.0
    %3332 = vmatprep.subr.mxu0 0.0
    %3333 = vmatpush1.xpose.msra.mxu0 0.0
    %3334 = vmatprep.subr.mxu0 0.0
    %3335 = vmatpush1.xpose.msra.mxu0 0.0
    %3336 = vmatprep.subr.mxu0 0.0
    %3337 = vmatpush1.xpose.msra.mxu0 0.0
    %3338 = vmatprep.subr.mxu0 0.0
    %3339 = vmatpush1.xpose.msra.mxu0 0.0
    %3340 = vmatprep.subr.mxu0 0.0
    %3341 = vmatpush1.xpose.msra.mxu0 0.0
    %3342 = vmatprep.subr.mxu0 0.0
    %3343 = vmatpush1.xpose.msra.mxu0 0.0
    %3344 = vmatprep.subr.mxu0 0.0
    %3345 = vmatpush1.xpose.msra.mxu0 0.0
    %3346 = vmatprep.subr.mxu0 0.0
    %3347 = vmatpush1.xpose.msra.mxu0 0.0
    %3348 = vmatprep.subr.mxu0 0.0
    %3349 = vmatpush1.xpose.msra.mxu0 0.0
    %3350 = vmatprep.subr.mxu0 0.0
    %3351 = vmatpush1.xpose.msra.mxu0 0.0
    %3352 = vmatprep.subr.mxu0 0.0
    %3353 = vmatpush1.xpose.msra.mxu0 0.0
    %3354 = vmatprep.subr.mxu0 0.0
    %3355 = vmatpush1.xpose.msra.mxu0 0.0
    %3356 = vmatprep.subr.mxu0 0.0
    %3357 = vmatpush1.xpose.msra.mxu0 0.0
    %3358 = vmatprep.subr.mxu0 0.0
    %3359 = vmatpush1.xpose.msra.mxu0 0.0
    %3360 = vmatprep.subr.mxu0 0.0
    %3361 = vmatpush1.xpose.msra.mxu0 0.0
    %3362 = vmatprep.subr.mxu0 0.0
    %3363 = vmatpush1.xpose.msra.mxu0 0.0
    %3364 = vmatprep.subr.mxu0 0.0
    %3365 = vmatpush1.xpose.msra.mxu0 0.0
    %3366 = vmatprep.subr.mxu0 0.0
    %3367 = vmatpush1.xpose.msra.mxu0 0.0
    %3368 = vmatprep.subr.mxu0 0.0
    %3369 = vmatpush1.xpose.msra.mxu0 0.0
    %3370 = vmatprep.subr.mxu0 0.0
    %3371 = vmatpush1.xpose.msra.mxu0 0.0
    %3372 = vmatprep.mubr.f32.mxu0 %v137
    %3373 = vmatmul.mubr.f32.gmra.mrb[0].mxu0 %v136
    %v3374 = vpop.f32.mrb[0].mxu0
    %v3375 = vadd.f32 %v3305, %v3374
    %v3376 = vpop.f32.mrb[0].mxu0
    %3377 = vdwg.mxu0
    %3378 = vmatprep.subr.mxu0 %v384
    %3379 = vmatpush1.xpose.msra.mxu0 %v383
    %3380 = vmatprep.subr.mxu0 %v629
    %3381 = vmatpush1.xpose.msra.mxu0 %v628
    %3382 = vmatprep.subr.mxu0 %v874
    %3383 = vmatpush1.xpose.msra.mxu0 %v873
    %3384 = vmatprep.subr.mxu0 %v1119
    %3385 = vmatpush1.xpose.msra.mxu0 %v1118
    %3386 = vmatprep.subr.mxu0 %v1364
    %3387 = vmatpush1.xpose.msra.mxu0 %v1363
    %3388 = vmatprep.subr.mxu0 %v1609
    %3389 = vmatpush1.xpose.msra.mxu0 %v1608
    %3390 = vmatprep.subr.mxu0 0.0
    %3391 = vmatpush1.xpose.msra.mxu0 0.0
    %3392 = vmatprep.subr.mxu0 0.0
    %3393 = vmatpush1.xpose.msra.mxu0 0.0
    %3394 = vmatprep.subr.mxu0 0.0
    %3395 = vmatpush1.xpose.msra.mxu0 0.0
    %3396 = vmatprep.subr.mxu0 0.0
    %3397 = vmatpush1.xpose.msra.mxu0 0.0
    %3398 = vmatprep.subr.mxu0 0.0
    %3399 = vmatpush1.xpose.msra.mxu0 0.0
    %3400 = vmatprep.subr.mxu0 0.0
    %3401 = vmatpush1.xpose.msra.mxu0 0.0
    %3402 = vmatprep.subr.mxu0 0.0
    %3403 = vmatpush1.xpose.msra.mxu0 0.0
    %3404 = vmatprep.subr.mxu0 0.0
    %3405 = vmatpush1.xpose.msra.mxu0 0.0
    %3406 = vmatprep.subr.mxu0 0.0
    %3407 = vmatpush1.xpose.msra.mxu0 0.0
    %3408 = vmatprep.subr.mxu0 0.0
    %3409 = vmatpush1.xpose.msra.mxu0 0.0
    %3410 = vmatprep.subr.mxu0 0.0
    %3411 = vmatpush1.xpose.msra.mxu0 0.0
    %3412 = vmatprep.subr.mxu0 0.0
    %3413 = vmatpush1.xpose.msra.mxu0 0.0
    %3414 = vmatprep.subr.mxu0 0.0
    %3415 = vmatpush1.xpose.msra.mxu0 0.0
    %3416 = vmatprep.subr.mxu0 0.0
    %3417 = vmatpush1.xpose.msra.mxu0 0.0
    %3418 = vmatprep.subr.mxu0 0.0
    %3419 = vmatpush1.xpose.msra.mxu0 0.0
    %3420 = vmatprep.subr.mxu0 0.0
    %3421 = vmatpush1.xpose.msra.mxu0 0.0
    %3422 = vmatprep.subr.mxu0 0.0
    %3423 = vmatpush1.xpose.msra.mxu0 0.0
    %3424 = vmatprep.subr.mxu0 0.0
    %3425 = vmatpush1.xpose.msra.mxu0 0.0
    %3426 = vmatprep.subr.mxu0 0.0
    %3427 = vmatpush1.xpose.msra.mxu0 0.0
    %3428 = vmatprep.subr.mxu0 0.0
    %3429 = vmatpush1.xpose.msra.mxu0 0.0
    %3430 = vmatprep.subr.mxu0 0.0
    %3431 = vmatpush1.xpose.msra.mxu0 0.0
    %3432 = vmatprep.subr.mxu0 0.0
    %3433 = vmatpush1.xpose.msra.mxu0 0.0
    %3434 = vmatprep.subr.mxu0 0.0
    %3435 = vmatpush1.xpose.msra.mxu0 0.0
    %3436 = vmatprep.subr.mxu0 0.0
    %3437 = vmatpush1.xpose.msra.mxu0 0.0
    %3438 = vmatprep.subr.mxu0 0.0
    %3439 = vmatpush1.xpose.msra.mxu0 0.0
    %3440 = vmatprep.subr.mxu0 0.0
    %3441 = vmatpush1.xpose.msra.mxu0 0.0
    %3442 = vmatprep.mubr.f32.mxu0 %v139
    %3443 = vmatmul.mubr.f32.gmra.mrb[0].mxu0 %v138
    %v3444 = vpop.f32.mrb[0].mxu0
    %v3445 = vadd.f32 %v3375, %v3444
    %v3446 = vpop.f32.mrb[0].mxu0
    %3447 = vdwg.mxu0
    %3448 = vmatprep.subr.mxu0 %v386
    %3449 = vmatpush1.xpose.msra.mxu0 %v385
    %3450 = vmatprep.subr.mxu0 %v631
    %3451 = vmatpush1.xpose.msra.mxu0 %v630
    %3452 = vmatprep.subr.mxu0 %v876
    %3453 = vmatpush1.xpose.msra.mxu0 %v875
    %3454 = vmatprep.subr.mxu0 %v1121
    %3455 = vmatpush1.xpose.msra.mxu0 %v1120
    %3456 = vmatprep.subr.mxu0 %v1366
    %3457 = vmatpush1.xpose.msra.mxu0 %v1365
    %3458 = vmatprep.subr.mxu0 %v1611
    %3459 = vmatpush1.xpose.msra.mxu0 %v1610
    %3460 = vmatprep.subr.mxu0 0.0
    %3461 = vmatpush1.xpose.msra.mxu0 0.0
    %3462 = vmatprep.subr.mxu0 0.0
    %3463 = vmatpush1.xpose.msra.mxu0 0.0
    %3464 = vmatprep.subr.mxu0 0.0
    %3465 = vmatpush1.xpose.msra.mxu0 0.0
    %3466 = vmatprep.subr.mxu0 0.0
    %3467 = vmatpush1.xpose.msra.mxu0 0.0
    %3468 = vmatprep.subr.mxu0 0.0
    %3469 = vmatpush1.xpose.msra.mxu0 0.0
    %3470 = vmatprep.subr.mxu0 0.0
    %3471 = vmatpush1.xpose.msra.mxu0 0.0
    %3472 = vmatprep.subr.mxu0 0.0
    %3473 = vmatpush1.xpose.msra.mxu0 0.0
    %3474 = vmatprep.subr.mxu0 0.0
    %3475 = vmatpush1.xpose.msra.mxu0 0.0
    %3476 = vmatprep.subr.mxu0 0.0
    %3477 = vmatpush1.xpose.msra.mxu0 0.0
    %3478 = vmatprep.subr.mxu0 0.0
    %3479 = vmatpush1.xpose.msra.mxu0 0.0
    %3480 = vmatprep.subr.mxu0 0.0
    %3481 = vmatpush1.xpose.msra.mxu0 0.0
    %3482 = vmatprep.subr.mxu0 0.0
    %3483 = vmatpush1.xpose.msra.mxu0 0.0
    %3484 = vmatprep.subr.mxu0 0.0
    %3485 = vmatpush1.xpose.msra.mxu0 0.0
    %3486 = vmatprep.subr.mxu0 0.0
    %3487 = vmatpush1.xpose.msra.mxu0 0.0
    %3488 = vmatprep.subr.mxu0 0.0
    %3489 = vmatpush1.xpose.msra.mxu0 0.0
    %3490 = vmatprep.subr.mxu0 0.0
    %3491 = vmatpush1.xpose.msra.mxu0 0.0
    %3492 = vmatprep.subr.mxu0 0.0
    %3493 = vmatpush1.xpose.msra.mxu0 0.0
    %3494 = vmatprep.subr.mxu0 0.0
    %3495 = vmatpush1.xpose.msra.mxu0 0.0
    %3496 = vmatprep.subr.mxu0 0.0
    %3497 = vmatpush1.xpose.msra.mxu0 0.0
    %3498 = vmatprep.subr.mxu0 0.0
    %3499 = vmatpush1.xpose.msra.mxu0 0.0
    %3500 = vmatprep.subr.mxu0 0.0
    %3501 = vmatpush1.xpose.msra.mxu0 0.0
    %3502 = vmatprep.subr.mxu0 0.0
    %3503 = vmatpush1.xpose.msra.mxu0 0.0
    %3504 = vmatprep.subr.mxu0 0.0
    %3505 = vmatpush1.xpose.msra.mxu0 0.0
    %3506 = vmatprep.subr.mxu0 0.0
    %3507 = vmatpush1.xpose.msra.mxu0 0.0
    %3508 = vmatprep.subr.mxu0 0.0
    %3509 = vmatpush1.xpose.msra.mxu0 0.0
    %3510 = vmatprep.subr.mxu0 0.0
    %3511 = vmatpush1.xpose.msra.mxu0 0.0
    %3512 = vmatprep.mubr.f32.mxu0 %v141
    %3513 = vmatmul.mubr.f32.gmra.mrb[0].mxu0 %v140
    %v3514 = vpop.f32.mrb[0].mxu0
    %v3515 = vadd.f32 %v3445, %v3514
    %v3516 = vpop.f32.mrb[0].mxu0
    %3517 = vdwg.mxu0
    %3518 = vmatprep.subr.mxu0 %v388
    %3519 = vmatpush1.xpose.msra.mxu0 %v387
    %3520 = vmatprep.subr.mxu0 %v633
    %3521 = vmatpush1.xpose.msra.mxu0 %v632
    %3522 = vmatprep.subr.mxu0 %v878
    %3523 = vmatpush1.xpose.msra.mxu0 %v877
    %3524 = vmatprep.subr.mxu0 %v1123
    %3525 = vmatpush1.xpose.msra.mxu0 %v1122
    %3526 = vmatprep.subr.mxu0 %v1368
    %3527 = vmatpush1.xpose.msra.mxu0 %v1367
    %3528 = vmatprep.subr.mxu0 %v1613
    %3529 = vmatpush1.xpose.msra.mxu0 %v1612
    %3530 = vmatprep.subr.mxu0 0.0
    %3531 = vmatpush1.xpose.msra.mxu0 0.0
    %3532 = vmatprep.subr.mxu0 0.0
    %3533 = vmatpush1.xpose.msra.mxu0 0.0
    %3534 = vmatprep.subr.mxu0 0.0
    %3535 = vmatpush1.xpose.msra.mxu0 0.0
    %3536 = vmatprep.subr.mxu0 0.0
    %3537 = vmatpush1.xpose.msra.mxu0 0.0
    %3538 = vmatprep.subr.mxu0 0.0
    %3539 = vmatpush1.xpose.msra.mxu0 0.0
    %3540 = vmatprep.subr.mxu0 0.0
    %3541 = vmatpush1.xpose.msra.mxu0 0.0
    %3542 = vmatprep.subr.mxu0 0.0
    %3543 = vmatpush1.xpose.msra.mxu0 0.0
    %3544 = vmatprep.subr.mxu0 0.0
    %3545 = vmatpush1.xpose.msra.mxu0 0.0
    %3546 = vmatprep.subr.mxu0 0.0
    %3547 = vmatpush1.xpose.msra.mxu0 0.0
    %3548 = vmatprep.subr.mxu0 0.0
    %3549 = vmatpush1.xpose.msra.mxu0 0.0
    %3550 = vmatprep.subr.mxu0 0.0
    %3551 = vmatpush1.xpose.msra.mxu0 0.0
    %3552 = vmatprep.subr.mxu0 0.0
    %3553 = vmatpush1.xpose.msra.mxu0 0.0
    %3554 = vmatprep.subr.mxu0 0.0
    %3555 = vmatpush1.xpose.msra.mxu0 0.0
    %3556 = vmatprep.subr.mxu0 0.0
    %3557 = vmatpush1.xpose.msra.mxu0 0.0
    %3558 = vmatprep.subr.mxu0 0.0
    %3559 = vmatpush1.xpose.msra.mxu0 0.0
    %3560 = vmatprep.subr.mxu0 0.0
    %3561 = vmatpush1.xpose.msra.mxu0 0.0
    %3562 = vmatprep.subr.mxu0 0.0
    %3563 = vmatpush1.xpose.msra.mxu0 0.0
    %3564 = vmatprep.subr.mxu0 0.0
    %3565 = vmatpush1.xpose.msra.mxu0 0.0
    %3566 = vmatprep.subr.mxu0 0.0
    %3567 = vmatpush1.xpose.msra.mxu0 0.0
    %3568 = vmatprep.subr.mxu0 0.0
    %3569 = vmatpush1.xpose.msra.mxu0 0.0
    %3570 = vmatprep.subr.mxu0 0.0
    %3571 = vmatpush1.xpose.msra.mxu0 0.0
    %3572 = vmatprep.subr.mxu0 0.0
    %3573 = vmatpush1.xpose.msra.mxu0 0.0
    %3574 = vmatprep.subr.mxu0 0.0
    %3575 = vmatpush1.xpose.msra.mxu0 0.0
    %3576 = vmatprep.subr.mxu0 0.0
    %3577 = vmatpush1.xpose.msra.mxu0 0.0
    %3578 = vmatprep.subr.mxu0 0.0
    %3579 = vmatpush1.xpose.msra.mxu0 0.0
    %3580 = vmatprep.subr.mxu0 0.0
    %3581 = vmatpush1.xpose.msra.mxu0 0.0
    %3582 = vmatprep.mubr.f32.mxu0 %v143
    %3583 = vmatmul.mubr.f32.gmra.mrb[0].mxu0 %v142
    %v3584 = vpop.f32.mrb[0].mxu0
    %v3585 = vadd.f32 %v3515, %v3584
    %v3586 = vpop.f32.mrb[0].mxu0
    %3587 = vdwg.mxu0
    %3588 = vmatprep.subr.mxu0 %v390
    %3589 = vmatpush1.xpose.msra.mxu0 %v389
    %3590 = vmatprep.subr.mxu0 %v635
    %3591 = vmatpush1.xpose.msra.mxu0 %v634
    %3592 = vmatprep.subr.mxu0 %v880
    %3593 = vmatpush1.xpose.msra.mxu0 %v879
    %3594 = vmatprep.subr.mxu0 %v1125
    %3595 = vmatpush1.xpose.msra.mxu0 %v1124
    %3596 = vmatprep.subr.mxu0 %v1370
    %3597 = vmatpush1.xpose.msra.mxu0 %v1369
    %3598 = vmatprep.subr.mxu0 %v1615
    %3599 = vmatpush1.xpose.msra.mxu0 %v1614
    %3600 = vmatprep.subr.mxu0 0.0
    %3601 = vmatpush1.xpose.msra.mxu0 0.0
    %3602 = vmatprep.subr.mxu0 0.0
    %3603 = vmatpush1.xpose.msra.mxu0 0.0
    %3604 = vmatprep.subr.mxu0 0.0
    %3605 = vmatpush1.xpose.msra.mxu0 0.0
    %3606 = vmatprep.subr.mxu0 0.0
    %3607 = vmatpush1.xpose.msra.mxu0 0.0
    %3608 = vmatprep.subr.mxu0 0.0
    %3609 = vmatpush1.xpose.msra.mxu0 0.0
    %3610 = vmatprep.subr.mxu0 0.0
    %3611 = vmatpush1.xpose.msra.mxu0 0.0
    %3612 = vmatprep.subr.mxu0 0.0
    %3613 = vmatpush1.xpose.msra.mxu0 0.0
    %3614 = vmatprep.subr.mxu0 0.0
    %3615 = vmatpush1.xpose.msra.mxu0 0.0
    %3616 = vmatprep.subr.mxu0 0.0
    %3617 = vmatpush1.xpose.msra.mxu0 0.0
    %3618 = vmatprep.subr.mxu0 0.0
    %3619 = vmatpush1.xpose.msra.mxu0 0.0
    %3620 = vmatprep.subr.mxu0 0.0
    %3621 = vmatpush1.xpose.msra.mxu0 0.0
    %3622 = vmatprep.subr.mxu0 0.0
    %3623 = vmatpush1.xpose.msra.mxu0 0.0
    %3624 = vmatprep.subr.mxu0 0.0
    %3625 = vmatpush1.xpose.msra.mxu0 0.0
    %3626 = vmatprep.subr.mxu0 0.0
    %3627 = vmatpush1.xpose.msra.mxu0 0.0
    %3628 = vmatprep.subr.mxu0 0.0
    %3629 = vmatpush1.xpose.msra.mxu0 0.0
    %3630 = vmatprep.subr.mxu0 0.0
    %3631 = vmatpush1.xpose.msra.mxu0 0.0
    %3632 = vmatprep.subr.mxu0 0.0
    %3633 = vmatpush1.xpose.msra.mxu0 0.0
    %3634 = vmatprep.subr.mxu0 0.0
    %3635 = vmatpush1.xpose.msra.mxu0 0.0
    %3636 = vmatprep.subr.mxu0 0.0
    %3637 = vmatpush1.xpose.msra.mxu0 0.0
    %3638 = vmatprep.subr.mxu0 0.0
    %3639 = vmatpush1.xpose.msra.mxu0 0.0
    %3640 = vmatprep.subr.mxu0 0.0
    %3641 = vmatpush1.xpose.msra.mxu0 0.0
    %3642 = vmatprep.subr.mxu0 0.0
    %3643 = vmatpush1.xpose.msra.mxu0 0.0
    %3644 = vmatprep.subr.mxu0 0.0
    %3645 = vmatpush1.xpose.msra.mxu0 0.0
    %3646 = vmatprep.subr.mxu0 0.0
    %3647 = vmatpush1.xpose.msra.mxu0 0.0
    %3648 = vmatprep.subr.mxu0 0.0
    %3649 = vmatpush1.xpose.msra.mxu0 0.0
    %3650 = vmatprep.subr.mxu0 0.0
    %3651 = vmatpush1.xpose.msra.mxu0 0.0
    %3652 = vmatprep.mubr.f32.mxu0 %v145
    %3653 = vmatmul.mubr.f32.gmra.mrb[0].mxu0 %v144
    %v3654 = vpop.f32.mrb[0].mxu0
    %v3655 = vadd.f32 %v3585, %v3654
    %v3656 = vpop.f32.mrb[0].mxu0
    %3657 = vdwg.mxu0
    %3658 = vmatprep.subr.mxu0 %v392
    %3659 = vmatpush1.xpose.msra.mxu0 %v391
    %3660 = vmatprep.subr.mxu0 %v637
    %3661 = vmatpush1.xpose.msra.mxu0 %v636
    %3662 = vmatprep.subr.mxu0 %v882
    %3663 = vmatpush1.xpose.msra.mxu0 %v881
    %3664 = vmatprep.subr.mxu0 %v1127
    %3665 = vmatpush1.xpose.msra.mxu0 %v1126
    %3666 = vmatprep.subr.mxu0 %v1372
    %3667 = vmatpush1.xpose.msra.mxu0 %v1371
    %3668 = vmatprep.subr.mxu0 %v1617
    %3669 = vmatpush1.xpose.msra.mxu0 %v1616
    %3670 = vmatprep.subr.mxu0 0.0
    %3671 = vmatpush1.xpose.msra.mxu0 0.0
    %3672 = vmatprep.subr.mxu0 0.0
    %3673 = vmatpush1.xpose.msra.mxu0 0.0
    %3674 = vmatprep.subr.mxu0 0.0
    %3675 = vmatpush1.xpose.msra.mxu0 0.0
    %3676 = vmatprep.subr.mxu0 0.0
    %3677 = vmatpush1.xpose.msra.mxu0 0.0
    %3678 = vmatprep.subr.mxu0 0.0
    %3679 = vmatpush1.xpose.msra.mxu0 0.0
    %3680 = vmatprep.subr.mxu0 0.0
    %3681 = vmatpush1.xpose.msra.mxu0 0.0
    %3682 = vmatprep.subr.mxu0 0.0
    %3683 = vmatpush1.xpose.msra.mxu0 0.0
    %3684 = vmatprep.subr.mxu0 0.0
    %3685 = vmatpush1.xpose.msra.mxu0 0.0
    %3686 = vmatprep.subr.mxu0 0.0
    %3687 = vmatpush1.xpose.msra.mxu0 0.0
    %3688 = vmatprep.subr.mxu0 0.0
    %3689 = vmatpush1.xpose.msra.mxu0 0.0
    %3690 = vmatprep.subr.mxu0 0.0
    %3691 = vmatpush1.xpose.msra.mxu0 0.0
    %3692 = vmatprep.subr.mxu0 0.0
    %3693 = vmatpush1.xpose.msra.mxu0 0.0
    %3694 = vmatprep.subr.mxu0 0.0
    %3695 = vmatpush1.xpose.msra.mxu0 0.0
    %3696 = vmatprep.subr.mxu0 0.0
    %3697 = vmatpush1.xpose.msra.mxu0 0.0
    %3698 = vmatprep.subr.mxu0 0.0
    %3699 = vmatpush1.xpose.msra.mxu0 0.0
    %3700 = vmatprep.subr.mxu0 0.0
    %3701 = vmatpush1.xpose.msra.mxu0 0.0
    %3702 = vmatprep.subr.mxu0 0.0
    %3703 = vmatpush1.xpose.msra.mxu0 0.0
    %3704 = vmatprep.subr.mxu0 0.0
    %3705 = vmatpush1.xpose.msra.mxu0 0.0
    %3706 = vmatprep.subr.mxu0 0.0
    %3707 = vmatpush1.xpose.msra.mxu0 0.0
    %3708 = vmatprep.subr.mxu0 0.0
    %3709 = vmatpush1.xpose.msra.mxu0 0.0
    %3710 = vmatprep.subr.mxu0 0.0
    %3711 = vmatpush1.xpose.msra.mxu0 0.0
    %3712 = vmatprep.subr.mxu0 0.0
    %3713 = vmatpush1.xpose.msra.mxu0 0.0
    %3714 = vmatprep.subr.mxu0 0.0
    %3715 = vmatpush1.xpose.msra.mxu0 0.0
    %3716 = vmatprep.subr.mxu0 0.0
    %3717 = vmatpush1.xpose.msra.mxu0 0.0
    %3718 = vmatprep.subr.mxu0 0.0
    %3719 = vmatpush1.xpose.msra.mxu0 0.0
    %3720 = vmatprep.subr.mxu0 0.0
    %3721 = vmatpush1.xpose.msra.mxu0 0.0
    %3722 = vmatprep.mubr.f32.mxu0 %v147
    %3723 = vmatmul.mubr.f32.gmra.mrb[0].mxu0 %v146
    %v3724 = vpop.f32.mrb[0].mxu0
    %v3725 = vadd.f32 %v3655, %v3724
    %v3726 = vpop.f32.mrb[0].mxu0
    %3727 = vdwg.mxu0
    %3728 = vmatprep.subr.mxu0 %v394
    %3729 = vmatpush1.xpose.msra.mxu0 %v393
    %3730 = vmatprep.subr.mxu0 %v639
    %3731 = vmatpush1.xpose.msra.mxu0 %v638
    %3732 = vmatprep.subr.mxu0 %v884
    %3733 = vmatpush1.xpose.msra.mxu0 %v883
    %3734 = vmatprep.subr.mxu0 %v1129
    %3735 = vmatpush1.xpose.msra.mxu0 %v1128
    %3736 = vmatprep.subr.mxu0 %v1374
    %3737 = vmatpush1.xpose.msra.mxu0 %v1373
    %3738 = vmatprep.subr.mxu0 %v1619
    %3739 = vmatpush1.xpose.msra.mxu0 %v1618
    %3740 = vmatprep.subr.mxu0 0.0
    %3741 = vmatpush1.xpose.msra.mxu0 0.0
    %3742 = vmatprep.subr.mxu0 0.0
    %3743 = vmatpush1.xpose.msra.mxu0 0.0
    %3744 = vmatprep.subr.mxu0 0.0
    %3745 = vmatpush1.xpose.msra.mxu0 0.0
    %3746 = vmatprep.subr.mxu0 0.0
    %3747 = vmatpush1.xpose.msra.mxu0 0.0
    %3748 = vmatprep.subr.mxu0 0.0
    %3749 = vmatpush1.xpose.msra.mxu0 0.0
    %3750 = vmatprep.subr.mxu0 0.0
    %3751 = vmatpush1.xpose.msra.mxu0 0.0
    %3752 = vmatprep.subr.mxu0 0.0
    %3753 = vmatpush1.xpose.msra.mxu0 0.0
    %3754 = vmatprep.subr.mxu0 0.0
    %3755 = vmatpush1.xpose.msra.mxu0 0.0
    %3756 = vmatprep.subr.mxu0 0.0
    %3757 = vmatpush1.xpose.msra.mxu0 0.0
    %3758 = vmatprep.subr.mxu0 0.0
    %3759 = vmatpush1.xpose.msra.mxu0 0.0
    %3760 = vmatprep.subr.mxu0 0.0
    %3761 = vmatpush1.xpose.msra.mxu0 0.0
    %3762 = vmatprep.subr.mxu0 0.0
    %3763 = vmatpush1.xpose.msra.mxu0 0.0
    %3764 = vmatprep.subr.mxu0 0.0
    %3765 = vmatpush1.xpose.msra.mxu0 0.0
    %3766 = vmatprep.subr.mxu0 0.0
    %3767 = vmatpush1.xpose.msra.mxu0 0.0
    %3768 = vmatprep.subr.mxu0 0.0
    %3769 = vmatpush1.xpose.msra.mxu0 0.0
    %3770 = vmatprep.subr.mxu0 0.0
    %3771 = vmatpush1.xpose.msra.mxu0 0.0
    %3772 = vmatprep.subr.mxu0 0.0
    %3773 = vmatpush1.xpose.msra.mxu0 0.0
    %3774 = vmatprep.subr.mxu0 0.0
    %3775 = vmatpush1.xpose.msra.mxu0 0.0
    %3776 = vmatprep.subr.mxu0 0.0
    %3777 = vmatpush1.xpose.msra.mxu0 0.0
    %3778 = vmatprep.subr.mxu0 0.0
    %3779 = vmatpush1.xpose.msra.mxu0 0.0
    %3780 = vmatprep.subr.mxu0 0.0
    %3781 = vmatpush1.xpose.msra.mxu0 0.0
    %3782 = vmatprep.subr.mxu0 0.0
    %3783 = vmatpush1.xpose.msra.mxu0 0.0
    %3784 = vmatprep.subr.mxu0 0.0
    %3785 = vmatpush1.xpose.msra.mxu0 0.0
    %3786 = vmatprep.subr.mxu0 0.0
    %3787 = vmatpush1.xpose.msra.mxu0 0.0
    %3788 = vmatprep.subr.mxu0 0.0
    %3789 = vmatpush1.xpose.msra.mxu0 0.0
    %3790 = vmatprep.subr.mxu0 0.0
    %3791 = vmatpush1.xpose.msra.mxu0 0.0
    %3792 = vmatprep.mubr.f32.mxu0 %v149
    %3793 = vmatmul.mubr.f32.gmra.mrb[0].mxu0 %v148
    %v3794 = vpop.f32.mrb[0].mxu0
    %v3795 = vadd.f32 %v3725, %v3794
    %v3796 = vpop.f32.mrb[0].mxu0
    %3797 = vdwg.mxu0
    %3798 = vmatprep.subr.mxu0 %v396
    %3799 = vmatpush1.xpose.msra.mxu0 %v395
    %3800 = vmatprep.subr.mxu0 %v641
    %3801 = vmatpush1.xpose.msra.mxu0 %v640
    %3802 = vmatprep.subr.mxu0 %v886
    %3803 = vmatpush1.xpose.msra.mxu0 %v885
    %3804 = vmatprep.subr.mxu0 %v1131
    %3805 = vmatpush1.xpose.msra.mxu0 %v1130
    %3806 = vmatprep.subr.mxu0 %v1376
    %3807 = vmatpush1.xpose.msra.mxu0 %v1375
    %3808 = vmatprep.subr.mxu0 %v1621
    %3809 = vmatpush1.xpose.msra.mxu0 %v1620
    %3810 = vmatprep.subr.mxu0 0.0
    %3811 = vmatpush1.xpose.msra.mxu0 0.0
    %3812 = vmatprep.subr.mxu0 0.0
    %3813 = vmatpush1.xpose.msra.mxu0 0.0
    %3814 = vmatprep.subr.mxu0 0.0
    %3815 = vmatpush1.xpose.msra.mxu0 0.0
    %3816 = vmatprep.subr.mxu0 0.0
    %3817 = vmatpush1.xpose.msra.mxu0 0.0
    %3818 = vmatprep.subr.mxu0 0.0
    %3819 = vmatpush1.xpose.msra.mxu0 0.0
    %3820 = vmatprep.subr.mxu0 0.0
    %3821 = vmatpush1.xpose.msra.mxu0 0.0
    %3822 = vmatprep.subr.mxu0 0.0
    %3823 = vmatpush1.xpose.msra.mxu0 0.0
    %3824 = vmatprep.subr.mxu0 0.0
    %3825 = vmatpush1.xpose.msra.mxu0 0.0
    %3826 = vmatprep.subr.mxu0 0.0
    %3827 = vmatpush1.xpose.msra.mxu0 0.0
    %3828 = vmatprep.subr.mxu0 0.0
    %3829 = vmatpush1.xpose.msra.mxu0 0.0
    %3830 = vmatprep.subr.mxu0 0.0
    %3831 = vmatpush1.xpose.msra.mxu0 0.0
    %3832 = vmatprep.subr.mxu0 0.0
    %3833 = vmatpush1.xpose.msra.mxu0 0.0
    %3834 = vmatprep.subr.mxu0 0.0
    %3835 = vmatpush1.xpose.msra.mxu0 0.0
    %3836 = vmatprep.subr.mxu0 0.0
    %3837 = vmatpush1.xpose.msra.mxu0 0.0
    %3838 = vmatprep.subr.mxu0 0.0
    %3839 = vmatpush1.xpose.msra.mxu0 0.0
    %3840 = vmatprep.subr.mxu0 0.0
    %3841 = vmatpush1.xpose.msra.mxu0 0.0
    %3842 = vmatprep.subr.mxu0 0.0
    %3843 = vmatpush1.xpose.msra.mxu0 0.0
    %3844 = vmatprep.subr.mxu0 0.0
    %3845 = vmatpush1.xpose.msra.mxu0 0.0
    %3846 = vmatprep.subr.mxu0 0.0
    %3847 = vmatpush1.xpose.msra.mxu0 0.0
    %3848 = vmatprep.subr.mxu0 0.0
    %3849 = vmatpush1.xpose.msra.mxu0 0.0
    %3850 = vmatprep.subr.mxu0 0.0
    %3851 = vmatpush1.xpose.msra.mxu0 0.0
    %3852 = vmatprep.subr.mxu0 0.0
    %3853 = vmatpush1.xpose.msra.mxu0 0.0
    %3854 = vmatprep.subr.mxu0 0.0
    %3855 = vmatpush1.xpose.msra.mxu0 0.0
    %3856 = vmatprep.subr.mxu0 0.0
    %3857 = vmatpush1.xpose.msra.mxu0 0.0
    %3858 = vmatprep.subr.mxu0 0.0
    %3859 = vmatpush1.xpose.msra.mxu0 0.0
    %3860 = vmatprep.subr.mxu0 0.0
    %3861 = vmatpush1.xpose.msra.mxu0 0.0
    %3862 = vmatprep.mubr.f32.mxu0 %v151
    %3863 = vmatmul.mubr.f32.gmra.mrb[0].mxu0 %v150
    %v3864 = vpop.f32.mrb[0].mxu0
    %v3865 = vadd.f32 %v3795, %v3864
    %v3866 = vpop.f32.mrb[0].mxu0
    %3867 = vdwg.mxu0
    %3868 = vmatprep.subr.mxu0 %v398
    %3869 = vmatpush1.xpose.msra.mxu0 %v397
    %3870 = vmatprep.subr.mxu0 %v643
    %3871 = vmatpush1.xpose.msra.mxu0 %v642
    %3872 = vmatprep.subr.mxu0 %v888
    %3873 = vmatpush1.xpose.msra.mxu0 %v887
    %3874 = vmatprep.subr.mxu0 %v1133
    %3875 = vmatpush1.xpose.msra.mxu0 %v1132
    %3876 = vmatprep.subr.mxu0 %v1378
    %3877 = vmatpush1.xpose.msra.mxu0 %v1377
    %3878 = vmatprep.subr.mxu0 %v1623
    %3879 = vmatpush1.xpose.msra.mxu0 %v1622
    %3880 = vmatprep.subr.mxu0 0.0
    %3881 = vmatpush1.xpose.msra.mxu0 0.0
    %3882 = vmatprep.subr.mxu0 0.0
    %3883 = vmatpush1.xpose.msra.mxu0 0.0
    %3884 = vmatprep.subr.mxu0 0.0
    %3885 = vmatpush1.xpose.msra.mxu0 0.0
    %3886 = vmatprep.subr.mxu0 0.0
    %3887 = vmatpush1.xpose.msra.mxu0 0.0
    %3888 = vmatprep.subr.mxu0 0.0
    %3889 = vmatpush1.xpose.msra.mxu0 0.0
    %3890 = vmatprep.subr.mxu0 0.0
    %3891 = vmatpush1.xpose.msra.mxu0 0.0
    %3892 = vmatprep.subr.mxu0 0.0
    %3893 = vmatpush1.xpose.msra.mxu0 0.0
    %3894 = vmatprep.subr.mxu0 0.0
    %3895 = vmatpush1.xpose.msra.mxu0 0.0
    %3896 = vmatprep.subr.mxu0 0.0
    %3897 = vmatpush1.xpose.msra.mxu0 0.0
    %3898 = vmatprep.subr.mxu0 0.0
    %3899 = vmatpush1.xpose.msra.mxu0 0.0
    %3900 = vmatprep.subr.mxu0 0.0
    %3901 = vmatpush1.xpose.msra.mxu0 0.0
    %3902 = vmatprep.subr.mxu0 0.0
    %3903 = vmatpush1.xpose.msra.mxu0 0.0
    %3904 = vmatprep.subr.mxu0 0.0
    %3905 = vmatpush1.xpose.msra.mxu0 0.0
    %3906 = vmatprep.subr.mxu0 0.0
    %3907 = vmatpush1.xpose.msra.mxu0 0.0
    %3908 = vmatprep.subr.mxu0 0.0
    %3909 = vmatpush1.xpose.msra.mxu0 0.0
    %3910 = vmatprep.subr.mxu0 0.0
    %3911 = vmatpush1.xpose.msra.mxu0 0.0
    %3912 = vmatprep.subr.mxu0 0.0
    %3913 = vmatpush1.xpose.msra.mxu0 0.0
    %3914 = vmatprep.subr.mxu0 0.0
    %3915 = vmatpush1.xpose.msra.mxu0 0.0
    %3916 = vmatprep.subr.mxu0 0.0
    %3917 = vmatpush1.xpose.msra.mxu0 0.0
    %3918 = vmatprep.subr.mxu0 0.0
    %3919 = vmatpush1.xpose.msra.mxu0 0.0
    %3920 = vmatprep.subr.mxu0 0.0
    %3921 = vmatpush1.xpose.msra.mxu0 0.0
    %3922 = vmatprep.subr.mxu0 0.0
    %3923 = vmatpush1.xpose.msra.mxu0 0.0
    %3924 = vmatprep.subr.mxu0 0.0
    %3925 = vmatpush1.xpose.msra.mxu0 0.0
    %3926 = vmatprep.subr.mxu0 0.0
    %3927 = vmatpush1.xpose.msra.mxu0 0.0
    %3928 = vmatprep.subr.mxu0 0.0
    %3929 = vmatpush1.xpose.msra.mxu0 0.0
    %3930 = vmatprep.subr.mxu0 0.0
    %3931 = vmatpush1.xpose.msra.mxu0 0.0
    %3932 = vmatprep.mubr.f32.mxu0 %v153
    %3933 = vmatmul.mubr.f32.gmra.mrb[0].mxu0 %v152
    %v3934 = vpop.f32.mrb[0].mxu0
    %v3935 = vadd.f32 %v3865, %v3934
    %v3936 = vpop.f32.mrb[0].mxu0
    %3937 = vdwg.mxu0
    %3938 = vmatprep.subr.mxu0 %v400
    %3939 = vmatpush1.xpose.msra.mxu0 %v399
    %3940 = vmatprep.subr.mxu0 %v645
    %3941 = vmatpush1.xpose.msra.mxu0 %v644
    %3942 = vmatprep.subr.mxu0 %v890
    %3943 = vmatpush1.xpose.msra.mxu0 %v889
    %3944 = vmatprep.subr.mxu0 %v1135
    %3945 = vmatpush1.xpose.msra.mxu0 %v1134
    %3946 = vmatprep.subr.mxu0 %v1380
    %3947 = vmatpush1.xpose.msra.mxu0 %v1379
    %3948 = vmatprep.subr.mxu0 %v1625
    %3949 = vmatpush1.xpose.msra.mxu0 %v1624
    %3950 = vmatprep.subr.mxu0 0.0
    %3951 = vmatpush1.xpose.msra.mxu0 0.0
    %3952 = vmatprep.subr.mxu0 0.0
    %3953 = vmatpush1.xpose.msra.mxu0 0.0
    %3954 = vmatprep.subr.mxu0 0.0
    %3955 = vmatpush1.xpose.msra.mxu0 0.0
    %3956 = vmatprep.subr.mxu0 0.0
    %3957 = vmatpush1.xpose.msra.mxu0 0.0
    %3958 = vmatprep.subr.mxu0 0.0
    %3959 = vmatpush1.xpose.msra.mxu0 0.0
    %3960 = vmatprep.subr.mxu0 0.0
    %3961 = vmatpush1.xpose.msra.mxu0 0.0
    %3962 = vmatprep.subr.mxu0 0.0
    %3963 = vmatpush1.xpose.msra.mxu0 0.0
    %3964 = vmatprep.subr.mxu0 0.0
    %3965 = vmatpush1.xpose.msra.mxu0 0.0
    %3966 = vmatprep.subr.mxu0 0.0
    %3967 = vmatpush1.xpose.msra.mxu0 0.0
    %3968 = vmatprep.subr.mxu0 0.0
    %3969 = vmatpush1.xpose.msra.mxu0 0.0
    %3970 = vmatprep.subr.mxu0 0.0
    %3971 = vmatpush1.xpose.msra.mxu0 0.0
    %3972 = vmatprep.subr.mxu0 0.0
    %3973 = vmatpush1.xpose.msra.mxu0 0.0
    %3974 = vmatprep.subr.mxu0 0.0
    %3975 = vmatpush1.xpose.msra.mxu0 0.0
    %3976 = vmatprep.subr.mxu0 0.0
    %3977 = vmatpush1.xpose.msra.mxu0 0.0
    %3978 = vmatprep.subr.mxu0 0.0
    %3979 = vmatpush1.xpose.msra.mxu0 0.0
    %3980 = vmatprep.subr.mxu0 0.0
    %3981 = vmatpush1.xpose.msra.mxu0 0.0
    %3982 = vmatprep.subr.mxu0 0.0
    %3983 = vmatpush1.xpose.msra.mxu0 0.0
    %3984 = vmatprep.subr.mxu0 0.0
    %3985 = vmatpush1.xpose.msra.mxu0 0.0
    %3986 = vmatprep.subr.mxu0 0.0
    %3987 = vmatpush1.xpose.msra.mxu0 0.0
    %3988 = vmatprep.subr.mxu0 0.0
    %3989 = vmatpush1.xpose.msra.mxu0 0.0
    %3990 = vmatprep.subr.mxu0 0.0
    %3991 = vmatpush1.xpose.msra.mxu0 0.0
    %3992 = vmatprep.subr.mxu0 0.0
    %3993 = vmatpush1.xpose.msra.mxu0 0.0
    %3994 = vmatprep.subr.mxu0 0.0
    %3995 = vmatpush1.xpose.msra.mxu0 0.0
    %3996 = vmatprep.subr.mxu0 0.0
    %3997 = vmatpush1.xpose.msra.mxu0 0.0
    %3998 = vmatprep.subr.mxu0 0.0
    %3999 = vmatpush1.xpose.msra.mxu0 0.0
    %4000 = vmatprep.subr.mxu0 0.0
    %4001 = vmatpush1.xpose.msra.mxu0 0.0
    %4002 = vmatprep.mubr.f32.mxu0 %v155
    %4003 = vmatmul.mubr.f32.gmra.mrb[0].mxu0 %v154
    %v4004 = vpop.f32.mrb[0].mxu0
    %v4005 = vadd.f32 %v3935, %v4004
    %v4006 = vpop.f32.mrb[0].mxu0
    %4007 = vdwg.mxu0
    %4008 = vmatprep.subr.mxu0 %v402
    %4009 = vmatpush1.xpose.msra.mxu0 %v401
    %4010 = vmatprep.subr.mxu0 %v647
    %4011 = vmatpush1.xpose.msra.mxu0 %v646
    %4012 = vmatprep.subr.mxu0 %v892
    %4013 = vmatpush1.xpose.msra.mxu0 %v891
    %4014 = vmatprep.subr.mxu0 %v1137
    %4015 = vmatpush1.xpose.msra.mxu0 %v1136
    %4016 = vmatprep.subr.mxu0 %v1382
    %4017 = vmatpush1.xpose.msra.mxu0 %v1381
    %4018 = vmatprep.subr.mxu0 %v1627
    %4019 = vmatpush1.xpose.msra.mxu0 %v1626
    %4020 = vmatprep.subr.mxu0 0.0
    %4021 = vmatpush1.xpose.msra.mxu0 0.0
    %4022 = vmatprep.subr.mxu0 0.0
    %4023 = vmatpush1.xpose.msra.mxu0 0.0
    %4024 = vmatprep.subr.mxu0 0.0
    %4025 = vmatpush1.xpose.msra.mxu0 0.0
    %4026 = vmatprep.subr.mxu0 0.0
    %4027 = vmatpush1.xpose.msra.mxu0 0.0
    %4028 = vmatprep.subr.mxu0 0.0
    %4029 = vmatpush1.xpose.msra.mxu0 0.0
    %4030 = vmatprep.subr.mxu0 0.0
    %4031 = vmatpush1.xpose.msra.mxu0 0.0
    %4032 = vmatprep.subr.mxu0 0.0
    %4033 = vmatpush1.xpose.msra.mxu0 0.0
    %4034 = vmatprep.subr.mxu0 0.0
    %4035 = vmatpush1.xpose.msra.mxu0 0.0
    %4036 = vmatprep.subr.mxu0 0.0
    %4037 = vmatpush1.xpose.msra.mxu0 0.0
    %4038 = vmatprep.subr.mxu0 0.0
    %4039 = vmatpush1.xpose.msra.mxu0 0.0
    %4040 = vmatprep.subr.mxu0 0.0
    %4041 = vmatpush1.xpose.msra.mxu0 0.0
    %4042 = vmatprep.subr.mxu0 0.0
    %4043 = vmatpush1.xpose.msra.mxu0 0.0
    %4044 = vmatprep.subr.mxu0 0.0
    %4045 = vmatpush1.xpose.msra.mxu0 0.0
    %4046 = vmatprep.subr.mxu0 0.0
    %4047 = vmatpush1.xpose.msra.mxu0 0.0
    %4048 = vmatprep.subr.mxu0 0.0
    %4049 = vmatpush1.xpose.msra.mxu0 0.0
    %4050 = vmatprep.subr.mxu0 0.0
    %4051 = vmatpush1.xpose.msra.mxu0 0.0
    %4052 = vmatprep.subr.mxu0 0.0
    %4053 = vmatpush1.xpose.msra.mxu0 0.0
    %4054 = vmatprep.subr.mxu0 0.0
    %4055 = vmatpush1.xpose.msra.mxu0 0.0
    %4056 = vmatprep.subr.mxu0 0.0
    %4057 = vmatpush1.xpose.msra.mxu0 0.0
    %4058 = vmatprep.subr.mxu0 0.0
    %4059 = vmatpush1.xpose.msra.mxu0 0.0
    %4060 = vmatprep.subr.mxu0 0.0
    %4061 = vmatpush1.xpose.msra.mxu0 0.0
    %4062 = vmatprep.subr.mxu0 0.0
    %4063 = vmatpush1.xpose.msra.mxu0 0.0
    %4064 = vmatprep.subr.mxu0 0.0
    %4065 = vmatpush1.xpose.msra.mxu0 0.0
    %4066 = vmatprep.subr.mxu0 0.0
    %4067 = vmatpush1.xpose.msra.mxu0 0.0
    %4068 = vmatprep.subr.mxu0 0.0
    %4069 = vmatpush1.xpose.msra.mxu0 0.0
    %4070 = vmatprep.subr.mxu0 0.0
    %4071 = vmatpush1.xpose.msra.mxu0 0.0
    %4072 = vmatprep.mubr.f32.mxu0 %v157
    %4073 = vmatmul.mubr.f32.gmra.mrb[0].mxu0 %v156
    %v4074 = vpop.f32.mrb[0].mxu0
    %v4075 = vadd.f32 %v4005, %v4074
    %v4076 = vpop.f32.mrb[0].mxu0
    %4077 = vdwg.mxu0
    %4078 = vmatprep.subr.mxu0 %v404
    %4079 = vmatpush1.xpose.msra.mxu0 %v403
    %4080 = vmatprep.subr.mxu0 %v649
    %4081 = vmatpush1.xpose.msra.mxu0 %v648
    %4082 = vmatprep.subr.mxu0 %v894
    %4083 = vmatpush1.xpose.msra.mxu0 %v893
    %4084 = vmatprep.subr.mxu0 %v1139
    %4085 = vmatpush1.xpose.msra.mxu0 %v1138
    %4086 = vmatprep.subr.mxu0 %v1384
    %4087 = vmatpush1.xpose.msra.mxu0 %v1383
    %4088 = vmatprep.subr.mxu0 %v1629
    %4089 = vmatpush1.xpose.msra.mxu0 %v1628
    %4090 = vmatprep.subr.mxu0 0.0
    %4091 = vmatpush1.xpose.msra.mxu0 0.0
    %4092 = vmatprep.subr.mxu0 0.0
    %4093 = vmatpush1.xpose.msra.mxu0 0.0
    %4094 = vmatprep.subr.mxu0 0.0
    %4095 = vmatpush1.xpose.msra.mxu0 0.0
    %4096 = vmatprep.subr.mxu0 0.0
    %4097 = vmatpush1.xpose.msra.mxu0 0.0
    %4098 = vmatprep.subr.mxu0 0.0
    %4099 = vmatpush1.xpose.msra.mxu0 0.0
    %4100 = vmatprep.subr.mxu0 0.0
    %4101 = vmatpush1.xpose.msra.mxu0 0.0
    %4102 = vmatprep.subr.mxu0 0.0
    %4103 = vmatpush1.xpose.msra.mxu0 0.0
    %4104 = vmatprep.subr.mxu0 0.0
    %4105 = vmatpush1.xpose.msra.mxu0 0.0
    %4106 = vmatprep.subr.mxu0 0.0
    %4107 = vmatpush1.xpose.msra.mxu0 0.0
    %4108 = vmatprep.subr.mxu0 0.0
    %4109 = vmatpush1.xpose.msra.mxu0 0.0
    %4110 = vmatprep.subr.mxu0 0.0
    %4111 = vmatpush1.xpose.msra.mxu0 0.0
    %4112 = vmatprep.subr.mxu0 0.0
    %4113 = vmatpush1.xpose.msra.mxu0 0.0
    %4114 = vmatprep.subr.mxu0 0.0
    %4115 = vmatpush1.xpose.msra.mxu0 0.0
    %4116 = vmatprep.subr.mxu0 0.0
    %4117 = vmatpush1.xpose.msra.mxu0 0.0
    %4118 = vmatprep.subr.mxu0 0.0
    %4119 = vmatpush1.xpose.msra.mxu0 0.0
    %4120 = vmatprep.subr.mxu0 0.0
    %4121 = vmatpush1.xpose.msra.mxu0 0.0
    %4122 = vmatprep.subr.mxu0 0.0
    %4123 = vmatpush1.xpose.msra.mxu0 0.0
    %4124 = vmatprep.subr.mxu0 0.0
    %4125 = vmatpush1.xpose.msra.mxu0 0.0
    %4126 = vmatprep.subr.mxu0 0.0
    %4127 = vmatpush1.xpose.msra.mxu0 0.0
    %4128 = vmatprep.subr.mxu0 0.0
    %4129 = vmatpush1.xpose.msra.mxu0 0.0
    %4130 = vmatprep.subr.mxu0 0.0
    %4131 = vmatpush1.xpose.msra.mxu0 0.0
    %4132 = vmatprep.subr.mxu0 0.0
    %4133 = vmatpush1.xpose.msra.mxu0 0.0
    %4134 = vmatprep.subr.mxu0 0.0
    %4135 = vmatpush1.xpose.msra.mxu0 0.0
    %4136 = vmatprep.subr.mxu0 0.0
    %4137 = vmatpush1.xpose.msra.mxu0 0.0
    %4138 = vmatprep.subr.mxu0 0.0
    %4139 = vmatpush1.xpose.msra.mxu0 0.0
    %4140 = vmatprep.subr.mxu0 0.0
    %4141 = vmatpush1.xpose.msra.mxu0 0.0
    %4142 = vmatprep.mubr.f32.mxu0 %v159
    %4143 = vmatmul.mubr.f32.gmra.mrb[0].mxu0 %v158
    %v4144 = vpop.f32.mrb[0].mxu0
    %v4145 = vadd.f32 %v4075, %v4144
    %v4146 = vpop.f32.mrb[0].mxu0
    %4147 = vdwg.mxu0
    %4148 = vmatprep.subr.mxu0 %v406
    %4149 = vmatpush1.xpose.msra.mxu0 %v405
    %4150 = vmatprep.subr.mxu0 %v651
    %4151 = vmatpush1.xpose.msra.mxu0 %v650
    %4152 = vmatprep.subr.mxu0 %v896
    %4153 = vmatpush1.xpose.msra.mxu0 %v895
    %4154 = vmatprep.subr.mxu0 %v1141
    %4155 = vmatpush1.xpose.msra.mxu0 %v1140
    %4156 = vmatprep.subr.mxu0 %v1386
    %4157 = vmatpush1.xpose.msra.mxu0 %v1385
    %4158 = vmatprep.subr.mxu0 %v1631
    %4159 = vmatpush1.xpose.msra.mxu0 %v1630
    %4160 = vmatprep.subr.mxu0 0.0
    %4161 = vmatpush1.xpose.msra.mxu0 0.0
    %4162 = vmatprep.subr.mxu0 0.0
    %4163 = vmatpush1.xpose.msra.mxu0 0.0
    %4164 = vmatprep.subr.mxu0 0.0
    %4165 = vmatpush1.xpose.msra.mxu0 0.0
    %4166 = vmatprep.subr.mxu0 0.0
    %4167 = vmatpush1.xpose.msra.mxu0 0.0
    %4168 = vmatprep.subr.mxu0 0.0
    %4169 = vmatpush1.xpose.msra.mxu0 0.0
    %4170 = vmatprep.subr.mxu0 0.0
    %4171 = vmatpush1.xpose.msra.mxu0 0.0
    %4172 = vmatprep.subr.mxu0 0.0
    %4173 = vmatpush1.xpose.msra.mxu0 0.0
    %4174 = vmatprep.subr.mxu0 0.0
    %4175 = vmatpush1.xpose.msra.mxu0 0.0
    %4176 = vmatprep.subr.mxu0 0.0
    %4177 = vmatpush1.xpose.msra.mxu0 0.0
    %4178 = vmatprep.subr.mxu0 0.0
    %4179 = vmatpush1.xpose.msra.mxu0 0.0
    %4180 = vmatprep.subr.mxu0 0.0
    %4181 = vmatpush1.xpose.msra.mxu0 0.0
    %4182 = vmatprep.subr.mxu0 0.0
    %4183 = vmatpush1.xpose.msra.mxu0 0.0
    %4184 = vmatprep.subr.mxu0 0.0
    %4185 = vmatpush1.xpose.msra.mxu0 0.0
    %4186 = vmatprep.subr.mxu0 0.0
    %4187 = vmatpush1.xpose.msra.mxu0 0.0
    %4188 = vmatprep.subr.mxu0 0.0
    %4189 = vmatpush1.xpose.msra.mxu0 0.0
    %4190 = vmatprep.subr.mxu0 0.0
    %4191 = vmatpush1.xpose.msra.mxu0 0.0
    %4192 = vmatprep.subr.mxu0 0.0
    %4193 = vmatpush1.xpose.msra.mxu0 0.0
    %4194 = vmatprep.subr.mxu0 0.0
    %4195 = vmatpush1.xpose.msra.mxu0 0.0
    %4196 = vmatprep.subr.mxu0 0.0
    %4197 = vmatpush1.xpose.msra.mxu0 0.0
    %4198 = vmatprep.subr.mxu0 0.0
    %4199 = vmatpush1.xpose.msra.mxu0 0.0
    %4200 = vmatprep.subr.mxu0 0.0
    %4201 = vmatpush1.xpose.msra.mxu0 0.0
    %4202 = vmatprep.subr.mxu0 0.0
    %4203 = vmatpush1.xpose.msra.mxu0 0.0
    %4204 = vmatprep.subr.mxu0 0.0
    %4205 = vmatpush1.xpose.msra.mxu0 0.0
    %4206 = vmatprep.subr.mxu0 0.0
    %4207 = vmatpush1.xpose.msra.mxu0 0.0
    %4208 = vmatprep.subr.mxu0 0.0
    %4209 = vmatpush1.xpose.msra.mxu0 0.0
    %4210 = vmatprep.subr.mxu0 0.0
    %4211 = vmatpush1.xpose.msra.mxu0 0.0
    %4212 = vmatprep.mubr.f32.mxu0 %v161
    %4213 = vmatmul.mubr.f32.gmra.mrb[0].mxu0 %v160
    %v4214 = vpop.f32.mrb[0].mxu0
    %v4215 = vadd.f32 %v4145, %v4214
    %v4216 = vpop.f32.mrb[0].mxu0
    %4217 = vdwg.mxu0
    %4218 = vmatprep.subr.mxu0 %v408
    %4219 = vmatpush1.xpose.msra.mxu0 %v407
    %4220 = vmatprep.subr.mxu0 %v653
    %4221 = vmatpush1.xpose.msra.mxu0 %v652
    %4222 = vmatprep.subr.mxu0 %v898
    %4223 = vmatpush1.xpose.msra.mxu0 %v897
    %4224 = vmatprep.subr.mxu0 %v1143
    %4225 = vmatpush1.xpose.msra.mxu0 %v1142
    %4226 = vmatprep.subr.mxu0 %v1388
    %4227 = vmatpush1.xpose.msra.mxu0 %v1387
    %4228 = vmatprep.subr.mxu0 %v1633
    %4229 = vmatpush1.xpose.msra.mxu0 %v1632
    %4230 = vmatprep.subr.mxu0 0.0
    %4231 = vmatpush1.xpose.msra.mxu0 0.0
    %4232 = vmatprep.subr.mxu0 0.0
    %4233 = vmatpush1.xpose.msra.mxu0 0.0
    %4234 = vmatprep.subr.mxu0 0.0
    %4235 = vmatpush1.xpose.msra.mxu0 0.0
    %4236 = vmatprep.subr.mxu0 0.0
    %4237 = vmatpush1.xpose.msra.mxu0 0.0
    %4238 = vmatprep.subr.mxu0 0.0
    %4239 = vmatpush1.xpose.msra.mxu0 0.0
    %4240 = vmatprep.subr.mxu0 0.0
    %4241 = vmatpush1.xpose.msra.mxu0 0.0
    %4242 = vmatprep.subr.mxu0 0.0
    %4243 = vmatpush1.xpose.msra.mxu0 0.0
    %4244 = vmatprep.subr.mxu0 0.0
    %4245 = vmatpush1.xpose.msra.mxu0 0.0
    %4246 = vmatprep.subr.mxu0 0.0
    %4247 = vmatpush1.xpose.msra.mxu0 0.0
    %4248 = vmatprep.subr.mxu0 0.0
    %4249 = vmatpush1.xpose.msra.mxu0 0.0
    %4250 = vmatprep.subr.mxu0 0.0
    %4251 = vmatpush1.xpose.msra.mxu0 0.0
    %4252 = vmatprep.subr.mxu0 0.0
    %4253 = vmatpush1.xpose.msra.mxu0 0.0
    %4254 = vmatprep.subr.mxu0 0.0
    %4255 = vmatpush1.xpose.msra.mxu0 0.0
    %4256 = vmatprep.subr.mxu0 0.0
    %4257 = vmatpush1.xpose.msra.mxu0 0.0
    %4258 = vmatprep.subr.mxu0 0.0
    %4259 = vmatpush1.xpose.msra.mxu0 0.0
    %4260 = vmatprep.subr.mxu0 0.0
    %4261 = vmatpush1.xpose.msra.mxu0 0.0
    %4262 = vmatprep.subr.mxu0 0.0
    %4263 = vmatpush1.xpose.msra.mxu0 0.0
    %4264 = vmatprep.subr.mxu0 0.0
    %4265 = vmatpush1.xpose.msra.mxu0 0.0
    %4266 = vmatprep.subr.mxu0 0.0
    %4267 = vmatpush1.xpose.msra.mxu0 0.0
    %4268 = vmatprep.subr.mxu0 0.0
    %4269 = vmatpush1.xpose.msra.mxu0 0.0
    %4270 = vmatprep.subr.mxu0 0.0
    %4271 = vmatpush1.xpose.msra.mxu0 0.0
    %4272 = vmatprep.subr.mxu0 0.0
    %4273 = vmatpush1.xpose.msra.mxu0 0.0
    %4274 = vmatprep.subr.mxu0 0.0
    %4275 = vmatpush1.xpose.msra.mxu0 0.0
    %4276 = vmatprep.subr.mxu0 0.0
    %4277 = vmatpush1.xpose.msra.mxu0 0.0
    %4278 = vmatprep.subr.mxu0 0.0
    %4279 = vmatpush1.xpose.msra.mxu0 0.0
    %4280 = vmatprep.subr.mxu0 0.0
    %4281 = vmatpush1.xpose.msra.mxu0 0.0
    %4282 = vmatprep.mubr.f32.mxu0 %v163
    %4283 = vmatmul.mubr.f32.gmra.mrb[0].mxu0 %v162
    %v4284 = vpop.f32.mrb[0].mxu0
    %v4285 = vadd.f32 %v4215, %v4284
    %v4286 = vpop.f32.mrb[0].mxu0
    %4287 = vdwg.mxu0
    %4288 = vmatprep.subr.mxu0 %v410
    %4289 = vmatpush1.xpose.msra.mxu0 %v409
    %4290 = vmatprep.subr.mxu0 %v655
    %4291 = vmatpush1.xpose.msra.mxu0 %v654
    %4292 = vmatprep.subr.mxu0 %v900
    %4293 = vmatpush1.xpose.msra.mxu0 %v899
    %4294 = vmatprep.subr.mxu0 %v1145
    %4295 = vmatpush1.xpose.msra.mxu0 %v1144
    %4296 = vmatprep.subr.mxu0 %v1390
    %4297 = vmatpush1.xpose.msra.mxu0 %v1389
    %4298 = vmatprep.subr.mxu0 %v1635
    %4299 = vmatpush1.xpose.msra.mxu0 %v1634
    %4300 = vmatprep.subr.mxu0 0.0
    %4301 = vmatpush1.xpose.msra.mxu0 0.0
    %4302 = vmatprep.subr.mxu0 0.0
    %4303 = vmatpush1.xpose.msra.mxu0 0.0
    %4304 = vmatprep.subr.mxu0 0.0
    %4305 = vmatpush1.xpose.msra.mxu0 0.0
    %4306 = vmatprep.subr.mxu0 0.0
    %4307 = vmatpush1.xpose.msra.mxu0 0.0
    %4308 = vmatprep.subr.mxu0 0.0
    %4309 = vmatpush1.xpose.msra.mxu0 0.0
    %4310 = vmatprep.subr.mxu0 0.0
    %4311 = vmatpush1.xpose.msra.mxu0 0.0
    %4312 = vmatprep.subr.mxu0 0.0
    %4313 = vmatpush1.xpose.msra.mxu0 0.0
    %4314 = vmatprep.subr.mxu0 0.0
    %4315 = vmatpush1.xpose.msra.mxu0 0.0
    %4316 = vmatprep.subr.mxu0 0.0
    %4317 = vmatpush1.xpose.msra.mxu0 0.0
    %4318 = vmatprep.subr.mxu0 0.0
    %4319 = vmatpush1.xpose.msra.mxu0 0.0
    %4320 = vmatprep.subr.mxu0 0.0
    %4321 = vmatpush1.xpose.msra.mxu0 0.0
    %4322 = vmatprep.subr.mxu0 0.0
    %4323 = vmatpush1.xpose.msra.mxu0 0.0
    %4324 = vmatprep.subr.mxu0 0.0
    %4325 = vmatpush1.xpose.msra.mxu0 0.0
    %4326 = vmatprep.subr.mxu0 0.0
    %4327 = vmatpush1.xpose.msra.mxu0 0.0
    %4328 = vmatprep.subr.mxu0 0.0
    %4329 = vmatpush1.xpose.msra.mxu0 0.0
    %4330 = vmatprep.subr.mxu0 0.0
    %4331 = vmatpush1.xpose.msra.mxu0 0.0
    %4332 = vmatprep.subr.mxu0 0.0
    %4333 = vmatpush1.xpose.msra.mxu0 0.0
    %4334 = vmatprep.subr.mxu0 0.0
    %4335 = vmatpush1.xpose.msra.mxu0 0.0
    %4336 = vmatprep.subr.mxu0 0.0
    %4337 = vmatpush1.xpose.msra.mxu0 0.0
    %4338 = vmatprep.subr.mxu0 0.0
    %4339 = vmatpush1.xpose.msra.mxu0 0.0
    %4340 = vmatprep.subr.mxu0 0.0
    %4341 = vmatpush1.xpose.msra.mxu0 0.0
    %4342 = vmatprep.subr.mxu0 0.0
    %4343 = vmatpush1.xpose.msra.mxu0 0.0
    %4344 = vmatprep.subr.mxu0 0.0
    %4345 = vmatpush1.xpose.msra.mxu0 0.0
    %4346 = vmatprep.subr.mxu0 0.0
    %4347 = vmatpush1.xpose.msra.mxu0 0.0
    %4348 = vmatprep.subr.mxu0 0.0
    %4349 = vmatpush1.xpose.msra.mxu0 0.0
    %4350 = vmatprep.subr.mxu0 0.0
    %4351 = vmatpush1.xpose.msra.mxu0 0.0
    %4352 = vmatprep.mubr.f32.mxu0 %v165
    %4353 = vmatmul.mubr.f32.gmra.mrb[0].mxu0 %v164
    %v4354 = vpop.f32.mrb[0].mxu0
    %v4355 = vadd.f32 %v4285, %v4354
    %v4356 = vpop.f32.mrb[0].mxu0
    %4357 = vdwg.mxu0
    %4358 = vmatprep.subr.mxu0 %v412
    %4359 = vmatpush1.xpose.msra.mxu0 %v411
    %4360 = vmatprep.subr.mxu0 %v657
    %4361 = vmatpush1.xpose.msra.mxu0 %v656
    %4362 = vmatprep.subr.mxu0 %v902
    %4363 = vmatpush1.xpose.msra.mxu0 %v901
    %4364 = vmatprep.subr.mxu0 %v1147
    %4365 = vmatpush1.xpose.msra.mxu0 %v1146
    %4366 = vmatprep.subr.mxu0 %v1392
    %4367 = vmatpush1.xpose.msra.mxu0 %v1391
    %4368 = vmatprep.subr.mxu0 %v1637
    %4369 = vmatpush1.xpose.msra.mxu0 %v1636
    %4370 = vmatprep.subr.mxu0 0.0
    %4371 = vmatpush1.xpose.msra.mxu0 0.0
    %4372 = vmatprep.subr.mxu0 0.0
    %4373 = vmatpush1.xpose.msra.mxu0 0.0
    %4374 = vmatprep.subr.mxu0 0.0
    %4375 = vmatpush1.xpose.msra.mxu0 0.0
    %4376 = vmatprep.subr.mxu0 0.0
    %4377 = vmatpush1.xpose.msra.mxu0 0.0
    %4378 = vmatprep.subr.mxu0 0.0
    %4379 = vmatpush1.xpose.msra.mxu0 0.0
    %4380 = vmatprep.subr.mxu0 0.0
    %4381 = vmatpush1.xpose.msra.mxu0 0.0
    %4382 = vmatprep.subr.mxu0 0.0
    %4383 = vmatpush1.xpose.msra.mxu0 0.0
    %4384 = vmatprep.subr.mxu0 0.0
    %4385 = vmatpush1.xpose.msra.mxu0 0.0
    %4386 = vmatprep.subr.mxu0 0.0
    %4387 = vmatpush1.xpose.msra.mxu0 0.0
    %4388 = vmatprep.subr.mxu0 0.0
    %4389 = vmatpush1.xpose.msra.mxu0 0.0
    %4390 = vmatprep.subr.mxu0 0.0
    %4391 = vmatpush1.xpose.msra.mxu0 0.0
    %4392 = vmatprep.subr.mxu0 0.0
    %4393 = vmatpush1.xpose.msra.mxu0 0.0
    %4394 = vmatprep.subr.mxu0 0.0
    %4395 = vmatpush1.xpose.msra.mxu0 0.0
    %4396 = vmatprep.subr.mxu0 0.0
    %4397 = vmatpush1.xpose.msra.mxu0 0.0
    %4398 = vmatprep.subr.mxu0 0.0
    %4399 = vmatpush1.xpose.msra.mxu0 0.0
    %4400 = vmatprep.subr.mxu0 0.0
    %4401 = vmatpush1.xpose.msra.mxu0 0.0
    %4402 = vmatprep.subr.mxu0 0.0
    %4403 = vmatpush1.xpose.msra.mxu0 0.0
    %4404 = vmatprep.subr.mxu0 0.0
    %4405 = vmatpush1.xpose.msra.mxu0 0.0
    %4406 = vmatprep.subr.mxu0 0.0
    %4407 = vmatpush1.xpose.msra.mxu0 0.0
    %4408 = vmatprep.subr.mxu0 0.0
    %4409 = vmatpush1.xpose.msra.mxu0 0.0
    %4410 = vmatprep.subr.mxu0 0.0
    %4411 = vmatpush1.xpose.msra.mxu0 0.0
    %4412 = vmatprep.subr.mxu0 0.0
    %4413 = vmatpush1.xpose.msra.mxu0 0.0
    %4414 = vmatprep.subr.mxu0 0.0
    %4415 = vmatpush1.xpose.msra.mxu0 0.0
    %4416 = vmatprep.subr.mxu0 0.0
    %4417 = vmatpush1.xpose.msra.mxu0 0.0
    %4418 = vmatprep.subr.mxu0 0.0
    %4419 = vmatpush1.xpose.msra.mxu0 0.0
    %4420 = vmatprep.subr.mxu0 0.0
    %4421 = vmatpush1.xpose.msra.mxu0 0.0
    %4422 = vmatprep.mubr.f32.mxu0 %v167
    %4423 = vmatmul.mubr.f32.gmra.mrb[0].mxu0 %v166
    %v4424 = vpop.f32.mrb[0].mxu0
    %v4425 = vadd.f32 %v4355, %v4424
    %v4426 = vpop.f32.mrb[0].mxu0
    %4427 = vdwg.mxu0
    %4428 = vmatprep.subr.mxu0 %v414
    %4429 = vmatpush1.xpose.msra.mxu0 %v413
    %4430 = vmatprep.subr.mxu0 %v659
    %4431 = vmatpush1.xpose.msra.mxu0 %v658
    %4432 = vmatprep.subr.mxu0 %v904
    %4433 = vmatpush1.xpose.msra.mxu0 %v903
    %4434 = vmatprep.subr.mxu0 %v1149
    %4435 = vmatpush1.xpose.msra.mxu0 %v1148
    %4436 = vmatprep.subr.mxu0 %v1394
    %4437 = vmatpush1.xpose.msra.mxu0 %v1393
    %4438 = vmatprep.subr.mxu0 %v1639
    %4439 = vmatpush1.xpose.msra.mxu0 %v1638
    %4440 = vmatprep.subr.mxu0 0.0
    %4441 = vmatpush1.xpose.msra.mxu0 0.0
    %4442 = vmatprep.subr.mxu0 0.0
    %4443 = vmatpush1.xpose.msra.mxu0 0.0
    %4444 = vmatprep.subr.mxu0 0.0
    %4445 = vmatpush1.xpose.msra.mxu0 0.0
    %4446 = vmatprep.subr.mxu0 0.0
    %4447 = vmatpush1.xpose.msra.mxu0 0.0
    %4448 = vmatprep.subr.mxu0 0.0
    %4449 = vmatpush1.xpose.msra.mxu0 0.0
    %4450 = vmatprep.subr.mxu0 0.0
    %4451 = vmatpush1.xpose.msra.mxu0 0.0
    %4452 = vmatprep.subr.mxu0 0.0
    %4453 = vmatpush1.xpose.msra.mxu0 0.0
    %4454 = vmatprep.subr.mxu0 0.0
    %4455 = vmatpush1.xpose.msra.mxu0 0.0
    %4456 = vmatprep.subr.mxu0 0.0
    %4457 = vmatpush1.xpose.msra.mxu0 0.0
    %4458 = vmatprep.subr.mxu0 0.0
    %4459 = vmatpush1.xpose.msra.mxu0 0.0
    %4460 = vmatprep.subr.mxu0 0.0
    %4461 = vmatpush1.xpose.msra.mxu0 0.0
    %4462 = vmatprep.subr.mxu0 0.0
    %4463 = vmatpush1.xpose.msra.mxu0 0.0
    %4464 = vmatprep.subr.mxu0 0.0
    %4465 = vmatpush1.xpose.msra.mxu0 0.0
    %4466 = vmatprep.subr.mxu0 0.0
    %4467 = vmatpush1.xpose.msra.mxu0 0.0
    %4468 = vmatprep.subr.mxu0 0.0
    %4469 = vmatpush1.xpose.msra.mxu0 0.0
    %4470 = vmatprep.subr.mxu0 0.0
    %4471 = vmatpush1.xpose.msra.mxu0 0.0
    %4472 = vmatprep.subr.mxu0 0.0
    %4473 = vmatpush1.xpose.msra.mxu0 0.0
    %4474 = vmatprep.subr.mxu0 0.0
    %4475 = vmatpush1.xpose.msra.mxu0 0.0
    %4476 = vmatprep.subr.mxu0 0.0
    %4477 = vmatpush1.xpose.msra.mxu0 0.0
    %4478 = vmatprep.subr.mxu0 0.0
    %4479 = vmatpush1.xpose.msra.mxu0 0.0
    %4480 = vmatprep.subr.mxu0 0.0
    %4481 = vmatpush1.xpose.msra.mxu0 0.0
    %4482 = vmatprep.subr.mxu0 0.0
    %4483 = vmatpush1.xpose.msra.mxu0 0.0
    %4484 = vmatprep.subr.mxu0 0.0
    %4485 = vmatpush1.xpose.msra.mxu0 0.0
    %4486 = vmatprep.subr.mxu0 0.0
    %4487 = vmatpush1.xpose.msra.mxu0 0.0
    %4488 = vmatprep.subr.mxu0 0.0
    %4489 = vmatpush1.xpose.msra.mxu0 0.0
    %4490 = vmatprep.subr.mxu0 0.0
    %4491 = vmatpush1.xpose.msra.mxu0 0.0
    %4492 = vmatprep.mubr.f32.mxu0 %v169
    %4493 = vmatmul.mubr.f32.gmra.mrb[0].mxu0 %v168
    %v4494 = vpop.f32.mrb[0].mxu0
    %v4495 = vadd.f32 %v4425, %v4494
    %v4496 = vpop.f32.mrb[0].mxu0
    %4497 = vdwg.mxu0
    %4498 = vmatprep.subr.mxu0 %v416
    %4499 = vmatpush1.xpose.msra.mxu0 %v415
    %4500 = vmatprep.subr.mxu0 %v661
    %4501 = vmatpush1.xpose.msra.mxu0 %v660
    %4502 = vmatprep.subr.mxu0 %v906
    %4503 = vmatpush1.xpose.msra.mxu0 %v905
    %4504 = vmatprep.subr.mxu0 %v1151
    %4505 = vmatpush1.xpose.msra.mxu0 %v1150
    %4506 = vmatprep.subr.mxu0 %v1396
    %4507 = vmatpush1.xpose.msra.mxu0 %v1395
    %4508 = vmatprep.subr.mxu0 %v1641
    %4509 = vmatpush1.xpose.msra.mxu0 %v1640
    %4510 = vmatprep.subr.mxu0 0.0
    %4511 = vmatpush1.xpose.msra.mxu0 0.0
    %4512 = vmatprep.subr.mxu0 0.0
    %4513 = vmatpush1.xpose.msra.mxu0 0.0
    %4514 = vmatprep.subr.mxu0 0.0
    %4515 = vmatpush1.xpose.msra.mxu0 0.0
    %4516 = vmatprep.subr.mxu0 0.0
    %4517 = vmatpush1.xpose.msra.mxu0 0.0
    %4518 = vmatprep.subr.mxu0 0.0
    %4519 = vmatpush1.xpose.msra.mxu0 0.0
    %4520 = vmatprep.subr.mxu0 0.0
    %4521 = vmatpush1.xpose.msra.mxu0 0.0
    %4522 = vmatprep.subr.mxu0 0.0
    %4523 = vmatpush1.xpose.msra.mxu0 0.0
    %4524 = vmatprep.subr.mxu0 0.0
    %4525 = vmatpush1.xpose.msra.mxu0 0.0
    %4526 = vmatprep.subr.mxu0 0.0
    %4527 = vmatpush1.xpose.msra.mxu0 0.0
    %4528 = vmatprep.subr.mxu0 0.0
    %4529 = vmatpush1.xpose.msra.mxu0 0.0
    %4530 = vmatprep.subr.mxu0 0.0
    %4531 = vmatpush1.xpose.msra.mxu0 0.0
    %4532 = vmatprep.subr.mxu0 0.0
    %4533 = vmatpush1.xpose.msra.mxu0 0.0
    %4534 = vmatprep.subr.mxu0 0.0
    %4535 = vmatpush1.xpose.msra.mxu0 0.0
    %4536 = vmatprep.subr.mxu0 0.0
    %4537 = vmatpush1.xpose.msra.mxu0 0.0
    %4538 = vmatprep.subr.mxu0 0.0
    %4539 = vmatpush1.xpose.msra.mxu0 0.0
    %4540 = vmatprep.subr.mxu0 0.0
    %4541 = vmatpush1.xpose.msra.mxu0 0.0
    %4542 = vmatprep.subr.mxu0 0.0
    %4543 = vmatpush1.xpose.msra.mxu0 0.0
    %4544 = vmatprep.subr.mxu0 0.0
    %4545 = vmatpush1.xpose.msra.mxu0 0.0
    %4546 = vmatprep.subr.mxu0 0.0
    %4547 = vmatpush1.xpose.msra.mxu0 0.0
    %4548 = vmatprep.subr.mxu0 0.0
    %4549 = vmatpush1.xpose.msra.mxu0 0.0
    %4550 = vmatprep.subr.mxu0 0.0
    %4551 = vmatpush1.xpose.msra.mxu0 0.0
    %4552 = vmatprep.subr.mxu0 0.0
    %4553 = vmatpush1.xpose.msra.mxu0 0.0
    %4554 = vmatprep.subr.mxu0 0.0
    %4555 = vmatpush1.xpose.msra.mxu0 0.0
    %4556 = vmatprep.subr.mxu0 0.0
    %4557 = vmatpush1.xpose.msra.mxu0 0.0
    %4558 = vmatprep.subr.mxu0 0.0
    %4559 = vmatpush1.xpose.msra.mxu0 0.0
    %4560 = vmatprep.subr.mxu0 0.0
    %4561 = vmatpush1.xpose.msra.mxu0 0.0
    %4562 = vmatprep.mubr.f32.mxu0 %v171
    %4563 = vmatmul.mubr.f32.gmra.mrb[0].mxu0 %v170
    %v4564 = vpop.f32.mrb[0].mxu0
    %v4565 = vadd.f32 %v4495, %v4564
    %v4566 = vpop.f32.mrb[0].mxu0
    %4567 = vdwg.mxu0
    %4568 = vmatprep.subr.mxu0 %v418
    %4569 = vmatpush1.xpose.msra.mxu0 %v417
    %4570 = vmatprep.subr.mxu0 %v663
    %4571 = vmatpush1.xpose.msra.mxu0 %v662
    %4572 = vmatprep.subr.mxu0 %v908
    %4573 = vmatpush1.xpose.msra.mxu0 %v907
    %4574 = vmatprep.subr.mxu0 %v1153
    %4575 = vmatpush1.xpose.msra.mxu0 %v1152
    %4576 = vmatprep.subr.mxu0 %v1398
    %4577 = vmatpush1.xpose.msra.mxu0 %v1397
    %4578 = vmatprep.subr.mxu0 %v1643
    %4579 = vmatpush1.xpose.msra.mxu0 %v1642
    %4580 = vmatprep.subr.mxu0 0.0
    %4581 = vmatpush1.xpose.msra.mxu0 0.0
    %4582 = vmatprep.subr.mxu0 0.0
    %4583 = vmatpush1.xpose.msra.mxu0 0.0
    %4584 = vmatprep.subr.mxu0 0.0
    %4585 = vmatpush1.xpose.msra.mxu0 0.0
    %4586 = vmatprep.subr.mxu0 0.0
    %4587 = vmatpush1.xpose.msra.mxu0 0.0
    %4588 = vmatprep.subr.mxu0 0.0
    %4589 = vmatpush1.xpose.msra.mxu0 0.0
    %4590 = vmatprep.subr.mxu0 0.0
    %4591 = vmatpush1.xpose.msra.mxu0 0.0
    %4592 = vmatprep.subr.mxu0 0.0
    %4593 = vmatpush1.xpose.msra.mxu0 0.0
    %4594 = vmatprep.subr.mxu0 0.0
    %4595 = vmatpush1.xpose.msra.mxu0 0.0
    %4596 = vmatprep.subr.mxu0 0.0
    %4597 = vmatpush1.xpose.msra.mxu0 0.0
    %4598 = vmatprep.subr.mxu0 0.0
    %4599 = vmatpush1.xpose.msra.mxu0 0.0
    %4600 = vmatprep.subr.mxu0 0.0
    %4601 = vmatpush1.xpose.msra.mxu0 0.0
    %4602 = vmatprep.subr.mxu0 0.0
    %4603 = vmatpush1.xpose.msra.mxu0 0.0
    %4604 = vmatprep.subr.mxu0 0.0
    %4605 = vmatpush1.xpose.msra.mxu0 0.0
    %4606 = vmatprep.subr.mxu0 0.0
    %4607 = vmatpush1.xpose.msra.mxu0 0.0
    %4608 = vmatprep.subr.mxu0 0.0
    %4609 = vmatpush1.xpose.msra.mxu0 0.0
    %4610 = vmatprep.subr.mxu0 0.0
    %4611 = vmatpush1.xpose.msra.mxu0 0.0
    %4612 = vmatprep.subr.mxu0 0.0
    %4613 = vmatpush1.xpose.msra.mxu0 0.0
    %4614 = vmatprep.subr.mxu0 0.0
    %4615 = vmatpush1.xpose.msra.mxu0 0.0
    %4616 = vmatprep.subr.mxu0 0.0
    %4617 = vmatpush1.xpose.msra.mxu0 0.0
    %4618 = vmatprep.subr.mxu0 0.0
    %4619 = vmatpush1.xpose.msra.mxu0 0.0
    %4620 = vmatprep.subr.mxu0 0.0
    %4621 = vmatpush1.xpose.msra.mxu0 0.0
    %4622 = vmatprep.subr.mxu0 0.0
    %4623 = vmatpush1.xpose.msra.mxu0 0.0
    %4624 = vmatprep.subr.mxu0 0.0
    %4625 = vmatpush1.xpose.msra.mxu0 0.0
    %4626 = vmatprep.subr.mxu0 0.0
    %4627 = vmatpush1.xpose.msra.mxu0 0.0
    %4628 = vmatprep.subr.mxu0 0.0
    %4629 = vmatpush1.xpose.msra.mxu0 0.0
    %4630 = vmatprep.subr.mxu0 0.0
    %4631 = vmatpush1.xpose.msra.mxu0 0.0
    %4632 = vmatprep.mubr.f32.mxu0 %v173
    %4633 = vmatmul.mubr.f32.gmra.mrb[0].mxu0 %v172
    %v4634 = vpop.f32.mrb[0].mxu0
    %v4635 = vadd.f32 %v4565, %v4634
    %v4636 = vpop.f32.mrb[0].mxu0
    %4637 = vdwg.mxu0
    %4638 = vmatprep.subr.mxu0 %v420
    %4639 = vmatpush1.xpose.msra.mxu0 %v419
    %4640 = vmatprep.subr.mxu0 %v665
    %4641 = vmatpush1.xpose.msra.mxu0 %v664
    %4642 = vmatprep.subr.mxu0 %v910
    %4643 = vmatpush1.xpose.msra.mxu0 %v909
    %4644 = vmatprep.subr.mxu0 %v1155
    %4645 = vmatpush1.xpose.msra.mxu0 %v1154
    %4646 = vmatprep.subr.mxu0 %v1400
    %4647 = vmatpush1.xpose.msra.mxu0 %v1399
    %4648 = vmatprep.subr.mxu0 %v1645
    %4649 = vmatpush1.xpose.msra.mxu0 %v1644
    %4650 = vmatprep.subr.mxu0 0.0
    %4651 = vmatpush1.xpose.msra.mxu0 0.0
    %4652 = vmatprep.subr.mxu0 0.0
    %4653 = vmatpush1.xpose.msra.mxu0 0.0
    %4654 = vmatprep.subr.mxu0 0.0
    %4655 = vmatpush1.xpose.msra.mxu0 0.0
    %4656 = vmatprep.subr.mxu0 0.0
    %4657 = vmatpush1.xpose.msra.mxu0 0.0
    %4658 = vmatprep.subr.mxu0 0.0
    %4659 = vmatpush1.xpose.msra.mxu0 0.0
    %4660 = vmatprep.subr.mxu0 0.0
    %4661 = vmatpush1.xpose.msra.mxu0 0.0
    %4662 = vmatprep.subr.mxu0 0.0
    %4663 = vmatpush1.xpose.msra.mxu0 0.0
    %4664 = vmatprep.subr.mxu0 0.0
    %4665 = vmatpush1.xpose.msra.mxu0 0.0
    %4666 = vmatprep.subr.mxu0 0.0
    %4667 = vmatpush1.xpose.msra.mxu0 0.0
    %4668 = vmatprep.subr.mxu0 0.0
    %4669 = vmatpush1.xpose.msra.mxu0 0.0
    %4670 = vmatprep.subr.mxu0 0.0
    %4671 = vmatpush1.xpose.msra.mxu0 0.0
    %4672 = vmatprep.subr.mxu0 0.0
    %4673 = vmatpush1.xpose.msra.mxu0 0.0
    %4674 = vmatprep.subr.mxu0 0.0
    %4675 = vmatpush1.xpose.msra.mxu0 0.0
    %4676 = vmatprep.subr.mxu0 0.0
    %4677 = vmatpush1.xpose.msra.mxu0 0.0
    %4678 = vmatprep.subr.mxu0 0.0
    %4679 = vmatpush1.xpose.msra.mxu0 0.0
    %4680 = vmatprep.subr.mxu0 0.0
    %4681 = vmatpush1.xpose.msra.mxu0 0.0
    %4682 = vmatprep.subr.mxu0 0.0
    %4683 = vmatpush1.xpose.msra.mxu0 0.0
    %4684 = vmatprep.subr.mxu0 0.0
    %4685 = vmatpush1.xpose.msra.mxu0 0.0
    %4686 = vmatprep.subr.mxu0 0.0
    %4687 = vmatpush1.xpose.msra.mxu0 0.0
    %4688 = vmatprep.subr.mxu0 0.0
    %4689 = vmatpush1.xpose.msra.mxu0 0.0
    %4690 = vmatprep.subr.mxu0 0.0
    %4691 = vmatpush1.xpose.msra.mxu0 0.0
    %4692 = vmatprep.subr.mxu0 0.0
    %4693 = vmatpush1.xpose.msra.mxu0 0.0
    %4694 = vmatprep.subr.mxu0 0.0
    %4695 = vmatpush1.xpose.msra.mxu0 0.0
    %4696 = vmatprep.subr.mxu0 0.0
    %4697 = vmatpush1.xpose.msra.mxu0 0.0
    %4698 = vmatprep.subr.mxu0 0.0
    %4699 = vmatpush1.xpose.msra.mxu0 0.0
    %4700 = vmatprep.subr.mxu0 0.0
    %4701 = vmatpush1.xpose.msra.mxu0 0.0
    %4702 = vmatprep.mubr.f32.mxu0 %v175
    %4703 = vmatmul.mubr.f32.gmra.mrb[0].mxu0 %v174
    %v4704 = vpop.f32.mrb[0].mxu0
    %v4705 = vadd.f32 %v4635, %v4704
    %v4706 = vpop.f32.mrb[0].mxu0
    %4707 = vdwg.mxu0
    %4708 = vmatprep.subr.mxu0 %v422
    %4709 = vmatpush1.xpose.msra.mxu0 %v421
    %4710 = vmatprep.subr.mxu0 %v667
    %4711 = vmatpush1.xpose.msra.mxu0 %v666
    %4712 = vmatprep.subr.mxu0 %v912
    %4713 = vmatpush1.xpose.msra.mxu0 %v911
    %4714 = vmatprep.subr.mxu0 %v1157
    %4715 = vmatpush1.xpose.msra.mxu0 %v1156
    %4716 = vmatprep.subr.mxu0 %v1402
    %4717 = vmatpush1.xpose.msra.mxu0 %v1401
    %4718 = vmatprep.subr.mxu0 %v1647
    %4719 = vmatpush1.xpose.msra.mxu0 %v1646
    %4720 = vmatprep.subr.mxu0 0.0
    %4721 = vmatpush1.xpose.msra.mxu0 0.0
    %4722 = vmatprep.subr.mxu0 0.0
    %4723 = vmatpush1.xpose.msra.mxu0 0.0
    %4724 = vmatprep.subr.mxu0 0.0
    %4725 = vmatpush1.xpose.msra.mxu0 0.0
    %4726 = vmatprep.subr.mxu0 0.0
    %4727 = vmatpush1.xpose.msra.mxu0 0.0
    %4728 = vmatprep.subr.mxu0 0.0
    %4729 = vmatpush1.xpose.msra.mxu0 0.0
    %4730 = vmatprep.subr.mxu0 0.0
    %4731 = vmatpush1.xpose.msra.mxu0 0.0
    %4732 = vmatprep.subr.mxu0 0.0
    %4733 = vmatpush1.xpose.msra.mxu0 0.0
    %4734 = vmatprep.subr.mxu0 0.0
    %4735 = vmatpush1.xpose.msra.mxu0 0.0
    %4736 = vmatprep.subr.mxu0 0.0
    %4737 = vmatpush1.xpose.msra.mxu0 0.0
    %4738 = vmatprep.subr.mxu0 0.0
    %4739 = vmatpush1.xpose.msra.mxu0 0.0
    %4740 = vmatprep.subr.mxu0 0.0
    %4741 = vmatpush1.xpose.msra.mxu0 0.0
    %4742 = vmatprep.subr.mxu0 0.0
    %4743 = vmatpush1.xpose.msra.mxu0 0.0
    %4744 = vmatprep.subr.mxu0 0.0
    %4745 = vmatpush1.xpose.msra.mxu0 0.0
    %4746 = vmatprep.subr.mxu0 0.0
    %4747 = vmatpush1.xpose.msra.mxu0 0.0
    %4748 = vmatprep.subr.mxu0 0.0
    %4749 = vmatpush1.xpose.msra.mxu0 0.0
    %4750 = vmatprep.subr.mxu0 0.0
    %4751 = vmatpush1.xpose.msra.mxu0 0.0
    %4752 = vmatprep.subr.mxu0 0.0
    %4753 = vmatpush1.xpose.msra.mxu0 0.0
    %4754 = vmatprep.subr.mxu0 0.0
    %4755 = vmatpush1.xpose.msra.mxu0 0.0
    %4756 = vmatprep.subr.mxu0 0.0
    %4757 = vmatpush1.xpose.msra.mxu0 0.0
    %4758 = vmatprep.subr.mxu0 0.0
    %4759 = vmatpush1.xpose.msra.mxu0 0.0
    %4760 = vmatprep.subr.mxu0 0.0
    %4761 = vmatpush1.xpose.msra.mxu0 0.0
    %4762 = vmatprep.subr.mxu0 0.0
    %4763 = vmatpush1.xpose.msra.mxu0 0.0
    %4764 = vmatprep.subr.mxu0 0.0
    %4765 = vmatpush1.xpose.msra.mxu0 0.0
    %4766 = vmatprep.subr.mxu0 0.0
    %4767 = vmatpush1.xpose.msra.mxu0 0.0
    %4768 = vmatprep.subr.mxu0 0.0
    %4769 = vmatpush1.xpose.msra.mxu0 0.0
    %4770 = vmatprep.subr.mxu0 0.0
    %4771 = vmatpush1.xpose.msra.mxu0 0.0
    %4772 = vmatprep.mubr.f32.mxu0 %v177
    %4773 = vmatmul.mubr.f32.gmra.mrb[0].mxu0 %v176
    %v4774 = vpop.f32.mrb[0].mxu0
    %v4775 = vadd.f32 %v4705, %v4774
    %v4776 = vpop.f32.mrb[0].mxu0
    %4777 = vdwg.mxu0
    %4778 = vmatprep.subr.mxu0 %v424
    %4779 = vmatpush1.xpose.msra.mxu0 %v423
    %4780 = vmatprep.subr.mxu0 %v669
    %4781 = vmatpush1.xpose.msra.mxu0 %v668
    %4782 = vmatprep.subr.mxu0 %v914
    %4783 = vmatpush1.xpose.msra.mxu0 %v913
    %4784 = vmatprep.subr.mxu0 %v1159
    %4785 = vmatpush1.xpose.msra.mxu0 %v1158
    %4786 = vmatprep.subr.mxu0 %v1404
    %4787 = vmatpush1.xpose.msra.mxu0 %v1403
    %4788 = vmatprep.subr.mxu0 %v1649
    %4789 = vmatpush1.xpose.msra.mxu0 %v1648
    %4790 = vmatprep.subr.mxu0 0.0
    %4791 = vmatpush1.xpose.msra.mxu0 0.0
    %4792 = vmatprep.subr.mxu0 0.0
    %4793 = vmatpush1.xpose.msra.mxu0 0.0
    %4794 = vmatprep.subr.mxu0 0.0
    %4795 = vmatpush1.xpose.msra.mxu0 0.0
    %4796 = vmatprep.subr.mxu0 0.0
    %4797 = vmatpush1.xpose.msra.mxu0 0.0
    %4798 = vmatprep.subr.mxu0 0.0
    %4799 = vmatpush1.xpose.msra.mxu0 0.0
    %4800 = vmatprep.subr.mxu0 0.0
    %4801 = vmatpush1.xpose.msra.mxu0 0.0
    %4802 = vmatprep.subr.mxu0 0.0
    %4803 = vmatpush1.xpose.msra.mxu0 0.0
    %4804 = vmatprep.subr.mxu0 0.0
    %4805 = vmatpush1.xpose.msra.mxu0 0.0
    %4806 = vmatprep.subr.mxu0 0.0
    %4807 = vmatpush1.xpose.msra.mxu0 0.0
    %4808 = vmatprep.subr.mxu0 0.0
    %4809 = vmatpush1.xpose.msra.mxu0 0.0
    %4810 = vmatprep.subr.mxu0 0.0
    %4811 = vmatpush1.xpose.msra.mxu0 0.0
    %4812 = vmatprep.subr.mxu0 0.0
    %4813 = vmatpush1.xpose.msra.mxu0 0.0
    %4814 = vmatprep.subr.mxu0 0.0
    %4815 = vmatpush1.xpose.msra.mxu0 0.0
    %4816 = vmatprep.subr.mxu0 0.0
    %4817 = vmatpush1.xpose.msra.mxu0 0.0
    %4818 = vmatprep.subr.mxu0 0.0
    %4819 = vmatpush1.xpose.msra.mxu0 0.0
    %4820 = vmatprep.subr.mxu0 0.0
    %4821 = vmatpush1.xpose.msra.mxu0 0.0
    %4822 = vmatprep.subr.mxu0 0.0
    %4823 = vmatpush1.xpose.msra.mxu0 0.0
    %4824 = vmatprep.subr.mxu0 0.0
    %4825 = vmatpush1.xpose.msra.mxu0 0.0
    %4826 = vmatprep.subr.mxu0 0.0
    %4827 = vmatpush1.xpose.msra.mxu0 0.0
    %4828 = vmatprep.subr.mxu0 0.0
    %4829 = vmatpush1.xpose.msra.mxu0 0.0
    %4830 = vmatprep.subr.mxu0 0.0
    %4831 = vmatpush1.xpose.msra.mxu0 0.0
    %4832 = vmatprep.subr.mxu0 0.0
    %4833 = vmatpush1.xpose.msra.mxu0 0.0
    %4834 = vmatprep.subr.mxu0 0.0
    %4835 = vmatpush1.xpose.msra.mxu0 0.0
    %4836 = vmatprep.subr.mxu0 0.0
    %4837 = vmatpush1.xpose.msra.mxu0 0.0
    %4838 = vmatprep.subr.mxu0 0.0
    %4839 = vmatpush1.xpose.msra.mxu0 0.0
    %4840 = vmatprep.subr.mxu0 0.0
    %4841 = vmatpush1.xpose.msra.mxu0 0.0
    %4842 = vmatprep.mubr.f32.mxu0 %v179
    %4843 = vmatmul.mubr.f32.gmra.mrb[0].mxu0 %v178
    %v4844 = vpop.f32.mrb[0].mxu0
    %v4845 = vadd.f32 %v4775, %v4844
    %v4846 = vpop.f32.mrb[0].mxu0
    %4847 = vdwg.mxu0
    %4848 = vmatprep.subr.mxu0 %v426
    %4849 = vmatpush1.xpose.msra.mxu0 %v425
    %4850 = vmatprep.subr.mxu0 %v671
    %4851 = vmatpush1.xpose.msra.mxu0 %v670
    %4852 = vmatprep.subr.mxu0 %v916
    %4853 = vmatpush1.xpose.msra.mxu0 %v915
    %4854 = vmatprep.subr.mxu0 %v1161
    %4855 = vmatpush1.xpose.msra.mxu0 %v1160
    %4856 = vmatprep.subr.mxu0 %v1406
    %4857 = vmatpush1.xpose.msra.mxu0 %v1405
    %4858 = vmatprep.subr.mxu0 %v1651
    %4859 = vmatpush1.xpose.msra.mxu0 %v1650
    %4860 = vmatprep.subr.mxu0 0.0
    %4861 = vmatpush1.xpose.msra.mxu0 0.0
    %4862 = vmatprep.subr.mxu0 0.0
    %4863 = vmatpush1.xpose.msra.mxu0 0.0
    %4864 = vmatprep.subr.mxu0 0.0
    %4865 = vmatpush1.xpose.msra.mxu0 0.0
    %4866 = vmatprep.subr.mxu0 0.0
    %4867 = vmatpush1.xpose.msra.mxu0 0.0
    %4868 = vmatprep.subr.mxu0 0.0
    %4869 = vmatpush1.xpose.msra.mxu0 0.0
    %4870 = vmatprep.subr.mxu0 0.0
    %4871 = vmatpush1.xpose.msra.mxu0 0.0
    %4872 = vmatprep.subr.mxu0 0.0
    %4873 = vmatpush1.xpose.msra.mxu0 0.0
    %4874 = vmatprep.subr.mxu0 0.0
    %4875 = vmatpush1.xpose.msra.mxu0 0.0
    %4876 = vmatprep.subr.mxu0 0.0
    %4877 = vmatpush1.xpose.msra.mxu0 0.0
    %4878 = vmatprep.subr.mxu0 0.0
    %4879 = vmatpush1.xpose.msra.mxu0 0.0
    %4880 = vmatprep.subr.mxu0 0.0
    %4881 = vmatpush1.xpose.msra.mxu0 0.0
    %4882 = vmatprep.subr.mxu0 0.0
    %4883 = vmatpush1.xpose.msra.mxu0 0.0
    %4884 = vmatprep.subr.mxu0 0.0
    %4885 = vmatpush1.xpose.msra.mxu0 0.0
    %4886 = vmatprep.subr.mxu0 0.0
    %4887 = vmatpush1.xpose.msra.mxu0 0.0
    %4888 = vmatprep.subr.mxu0 0.0
    %4889 = vmatpush1.xpose.msra.mxu0 0.0
    %4890 = vmatprep.subr.mxu0 0.0
    %4891 = vmatpush1.xpose.msra.mxu0 0.0
    %4892 = vmatprep.subr.mxu0 0.0
    %4893 = vmatpush1.xpose.msra.mxu0 0.0
    %4894 = vmatprep.subr.mxu0 0.0
    %4895 = vmatpush1.xpose.msra.mxu0 0.0
    %4896 = vmatprep.subr.mxu0 0.0
    %4897 = vmatpush1.xpose.msra.mxu0 0.0
    %4898 = vmatprep.subr.mxu0 0.0
    %4899 = vmatpush1.xpose.msra.mxu0 0.0
    %4900 = vmatprep.subr.mxu0 0.0
    %4901 = vmatpush1.xpose.msra.mxu0 0.0
    %4902 = vmatprep.subr.mxu0 0.0
    %4903 = vmatpush1.xpose.msra.mxu0 0.0
    %4904 = vmatprep.subr.mxu0 0.0
    %4905 = vmatpush1.xpose.msra.mxu0 0.0
    %4906 = vmatprep.subr.mxu0 0.0
    %4907 = vmatpush1.xpose.msra.mxu0 0.0
    %4908 = vmatprep.subr.mxu0 0.0
    %4909 = vmatpush1.xpose.msra.mxu0 0.0
    %4910 = vmatprep.subr.mxu0 0.0
    %4911 = vmatpush1.xpose.msra.mxu0 0.0
    %4912 = vmatprep.mubr.f32.mxu0 %v181
    %4913 = vmatmul.mubr.f32.gmra.mrb[0].mxu0 %v180
    %v4914 = vpop.f32.mrb[0].mxu0
    %v4915 = vadd.f32 %v4845, %v4914
    %v4916 = vpop.f32.mrb[0].mxu0
    %4917 = vdwg.mxu0
    %4918 = vmatprep.subr.mxu0 %v428
    %4919 = vmatpush1.xpose.msra.mxu0 %v427
    %4920 = vmatprep.subr.mxu0 %v673
    %4921 = vmatpush1.xpose.msra.mxu0 %v672
    %4922 = vmatprep.subr.mxu0 %v918
    %4923 = vmatpush1.xpose.msra.mxu0 %v917
    %4924 = vmatprep.subr.mxu0 %v1163
    %4925 = vmatpush1.xpose.msra.mxu0 %v1162
    %4926 = vmatprep.subr.mxu0 %v1408
    %4927 = vmatpush1.xpose.msra.mxu0 %v1407
    %4928 = vmatprep.subr.mxu0 %v1653
    %4929 = vmatpush1.xpose.msra.mxu0 %v1652
    %4930 = vmatprep.subr.mxu0 0.0
    %4931 = vmatpush1.xpose.msra.mxu0 0.0
    %4932 = vmatprep.subr.mxu0 0.0
    %4933 = vmatpush1.xpose.msra.mxu0 0.0
    %4934 = vmatprep.subr.mxu0 0.0
    %4935 = vmatpush1.xpose.msra.mxu0 0.0
    %4936 = vmatprep.subr.mxu0 0.0
    %4937 = vmatpush1.xpose.msra.mxu0 0.0
    %4938 = vmatprep.subr.mxu0 0.0
    %4939 = vmatpush1.xpose.msra.mxu0 0.0
    %4940 = vmatprep.subr.mxu0 0.0
    %4941 = vmatpush1.xpose.msra.mxu0 0.0
    %4942 = vmatprep.subr.mxu0 0.0
    %4943 = vmatpush1.xpose.msra.mxu0 0.0
    %4944 = vmatprep.subr.mxu0 0.0
    %4945 = vmatpush1.xpose.msra.mxu0 0.0
    %4946 = vmatprep.subr.mxu0 0.0
    %4947 = vmatpush1.xpose.msra.mxu0 0.0
    %4948 = vmatprep.subr.mxu0 0.0
    %4949 = vmatpush1.xpose.msra.mxu0 0.0
    %4950 = vmatprep.subr.mxu0 0.0
    %4951 = vmatpush1.xpose.msra.mxu0 0.0
    %4952 = vmatprep.subr.mxu0 0.0
    %4953 = vmatpush1.xpose.msra.mxu0 0.0
    %4954 = vmatprep.subr.mxu0 0.0
    %4955 = vmatpush1.xpose.msra.mxu0 0.0
    %4956 = vmatprep.subr.mxu0 0.0
    %4957 = vmatpush1.xpose.msra.mxu0 0.0
    %4958 = vmatprep.subr.mxu0 0.0
    %4959 = vmatpush1.xpose.msra.mxu0 0.0
    %4960 = vmatprep.subr.mxu0 0.0
    %4961 = vmatpush1.xpose.msra.mxu0 0.0
    %4962 = vmatprep.subr.mxu0 0.0
    %4963 = vmatpush1.xpose.msra.mxu0 0.0
    %4964 = vmatprep.subr.mxu0 0.0
    %4965 = vmatpush1.xpose.msra.mxu0 0.0
    %4966 = vmatprep.subr.mxu0 0.0
    %4967 = vmatpush1.xpose.msra.mxu0 0.0
    %4968 = vmatprep.subr.mxu0 0.0
    %4969 = vmatpush1.xpose.msra.mxu0 0.0
    %4970 = vmatprep.subr.mxu0 0.0
    %4971 = vmatpush1.xpose.msra.mxu0 0.0
    %4972 = vmatprep.subr.mxu0 0.0
    %4973 = vmatpush1.xpose.msra.mxu0 0.0
    %4974 = vmatprep.subr.mxu0 0.0
    %4975 = vmatpush1.xpose.msra.mxu0 0.0
    %4976 = vmatprep.subr.mxu0 0.0
    %4977 = vmatpush1.xpose.msra.mxu0 0.0
    %4978 = vmatprep.subr.mxu0 0.0
    %4979 = vmatpush1.xpose.msra.mxu0 0.0
    %4980 = vmatprep.subr.mxu0 0.0
    %4981 = vmatpush1.xpose.msra.mxu0 0.0
    %4982 = vmatprep.mubr.f32.mxu0 %v183
    %4983 = vmatmul.mubr.f32.gmra.mrb[0].mxu0 %v182
    %v4984 = vpop.f32.mrb[0].mxu0
    %v4985 = vadd.f32 %v4915, %v4984
    %v4986 = vpop.f32.mrb[0].mxu0
    %4987 = vdwg.mxu0
    %4988 = vmatprep.subr.mxu0 %v430
    %4989 = vmatpush1.xpose.msra.mxu0 %v429
    %4990 = vmatprep.subr.mxu0 %v675
    %4991 = vmatpush1.xpose.msra.mxu0 %v674
    %4992 = vmatprep.subr.mxu0 %v920
    %4993 = vmatpush1.xpose.msra.mxu0 %v919
    %4994 = vmatprep.subr.mxu0 %v1165
    %4995 = vmatpush1.xpose.msra.mxu0 %v1164
    %4996 = vmatprep.subr.mxu0 %v1410
    %4997 = vmatpush1.xpose.msra.mxu0 %v1409
    %4998 = vmatprep.subr.mxu0 %v1655
    %4999 = vmatpush1.xpose.msra.mxu0 %v1654
    %5000 = vmatprep.subr.mxu0 0.0
    %5001 = vmatpush1.xpose.msra.mxu0 0.0
    %5002 = vmatprep.subr.mxu0 0.0
    %5003 = vmatpush1.xpose.msra.mxu0 0.0
    %5004 = vmatprep.subr.mxu0 0.0
    %5005 = vmatpush1.xpose.msra.mxu0 0.0
    %5006 = vmatprep.subr.mxu0 0.0
    %5007 = vmatpush1.xpose.msra.mxu0 0.0
    %5008 = vmatprep.subr.mxu0 0.0
    %5009 = vmatpush1.xpose.msra.mxu0 0.0
    %5010 = vmatprep.subr.mxu0 0.0
    %5011 = vmatpush1.xpose.msra.mxu0 0.0
    %5012 = vmatprep.subr.mxu0 0.0
    %5013 = vmatpush1.xpose.msra.mxu0 0.0
    %5014 = vmatprep.subr.mxu0 0.0
    %5015 = vmatpush1.xpose.msra.mxu0 0.0
    %5016 = vmatprep.subr.mxu0 0.0
    %5017 = vmatpush1.xpose.msra.mxu0 0.0
    %5018 = vmatprep.subr.mxu0 0.0
    %5019 = vmatpush1.xpose.msra.mxu0 0.0
    %5020 = vmatprep.subr.mxu0 0.0
    %5021 = vmatpush1.xpose.msra.mxu0 0.0
    %5022 = vmatprep.subr.mxu0 0.0
    %5023 = vmatpush1.xpose.msra.mxu0 0.0
    %5024 = vmatprep.subr.mxu0 0.0
    %5025 = vmatpush1.xpose.msra.mxu0 0.0
    %5026 = vmatprep.subr.mxu0 0.0
    %5027 = vmatpush1.xpose.msra.mxu0 0.0
    %5028 = vmatprep.subr.mxu0 0.0
    %5029 = vmatpush1.xpose.msra.mxu0 0.0
    %5030 = vmatprep.subr.mxu0 0.0
    %5031 = vmatpush1.xpose.msra.mxu0 0.0
    %5032 = vmatprep.subr.mxu0 0.0
    %5033 = vmatpush1.xpose.msra.mxu0 0.0
    %5034 = vmatprep.subr.mxu0 0.0
    %5035 = vmatpush1.xpose.msra.mxu0 0.0
    %5036 = vmatprep.subr.mxu0 0.0
    %5037 = vmatpush1.xpose.msra.mxu0 0.0
    %5038 = vmatprep.subr.mxu0 0.0
    %5039 = vmatpush1.xpose.msra.mxu0 0.0
    %5040 = vmatprep.subr.mxu0 0.0
    %5041 = vmatpush1.xpose.msra.mxu0 0.0
    %5042 = vmatprep.subr.mxu0 0.0
    %5043 = vmatpush1.xpose.msra.mxu0 0.0
    %5044 = vmatprep.subr.mxu0 0.0
    %5045 = vmatpush1.xpose.msra.mxu0 0.0
    %5046 = vmatprep.subr.mxu0 0.0
    %5047 = vmatpush1.xpose.msra.mxu0 0.0
    %5048 = vmatprep.subr.mxu0 0.0
    %5049 = vmatpush1.xpose.msra.mxu0 0.0
    %5050 = vmatprep.subr.mxu0 0.0
    %5051 = vmatpush1.xpose.msra.mxu0 0.0
    %5052 = vmatprep.mubr.f32.mxu0 %v185
    %5053 = vmatmul.mubr.f32.gmra.mrb[0].mxu0 %v184
    %v5054 = vpop.f32.mrb[0].mxu0
    %v5055 = vadd.f32 %v4985, %v5054
    %v5056 = vpop.f32.mrb[0].mxu0
    %5057 = vdwg.mxu0
    %5058 = vmatprep.subr.mxu0 %v432
    %5059 = vmatpush1.xpose.msra.mxu0 %v431
    %5060 = vmatprep.subr.mxu0 %v677
    %5061 = vmatpush1.xpose.msra.mxu0 %v676
    %5062 = vmatprep.subr.mxu0 %v922
    %5063 = vmatpush1.xpose.msra.mxu0 %v921
    %5064 = vmatprep.subr.mxu0 %v1167
    %5065 = vmatpush1.xpose.msra.mxu0 %v1166
    %5066 = vmatprep.subr.mxu0 %v1412
    %5067 = vmatpush1.xpose.msra.mxu0 %v1411
    %5068 = vmatprep.subr.mxu0 %v1657
    %5069 = vmatpush1.xpose.msra.mxu0 %v1656
    %5070 = vmatprep.subr.mxu0 0.0
    %5071 = vmatpush1.xpose.msra.mxu0 0.0
    %5072 = vmatprep.subr.mxu0 0.0
    %5073 = vmatpush1.xpose.msra.mxu0 0.0
    %5074 = vmatprep.subr.mxu0 0.0
    %5075 = vmatpush1.xpose.msra.mxu0 0.0
    %5076 = vmatprep.subr.mxu0 0.0
    %5077 = vmatpush1.xpose.msra.mxu0 0.0
    %5078 = vmatprep.subr.mxu0 0.0
    %5079 = vmatpush1.xpose.msra.mxu0 0.0
    %5080 = vmatprep.subr.mxu0 0.0
    %5081 = vmatpush1.xpose.msra.mxu0 0.0
    %5082 = vmatprep.subr.mxu0 0.0
    %5083 = vmatpush1.xpose.msra.mxu0 0.0
    %5084 = vmatprep.subr.mxu0 0.0
    %5085 = vmatpush1.xpose.msra.mxu0 0.0
    %5086 = vmatprep.subr.mxu0 0.0
    %5087 = vmatpush1.xpose.msra.mxu0 0.0
    %5088 = vmatprep.subr.mxu0 0.0
    %5089 = vmatpush1.xpose.msra.mxu0 0.0
    %5090 = vmatprep.subr.mxu0 0.0
    %5091 = vmatpush1.xpose.msra.mxu0 0.0
    %5092 = vmatprep.subr.mxu0 0.0
    %5093 = vmatpush1.xpose.msra.mxu0 0.0
    %5094 = vmatprep.subr.mxu0 0.0
    %5095 = vmatpush1.xpose.msra.mxu0 0.0
    %5096 = vmatprep.subr.mxu0 0.0
    %5097 = vmatpush1.xpose.msra.mxu0 0.0
    %5098 = vmatprep.subr.mxu0 0.0
    %5099 = vmatpush1.xpose.msra.mxu0 0.0
    %5100 = vmatprep.subr.mxu0 0.0
    %5101 = vmatpush1.xpose.msra.mxu0 0.0
    %5102 = vmatprep.subr.mxu0 0.0
    %5103 = vmatpush1.xpose.msra.mxu0 0.0
    %5104 = vmatprep.subr.mxu0 0.0
    %5105 = vmatpush1.xpose.msra.mxu0 0.0
    %5106 = vmatprep.subr.mxu0 0.0
    %5107 = vmatpush1.xpose.msra.mxu0 0.0
    %5108 = vmatprep.subr.mxu0 0.0
    %5109 = vmatpush1.xpose.msra.mxu0 0.0
    %5110 = vmatprep.subr.mxu0 0.0
    %5111 = vmatpush1.xpose.msra.mxu0 0.0
    %5112 = vmatprep.subr.mxu0 0.0
    %5113 = vmatpush1.xpose.msra.mxu0 0.0
    %5114 = vmatprep.subr.mxu0 0.0
    %5115 = vmatpush1.xpose.msra.mxu0 0.0
    %5116 = vmatprep.subr.mxu0 0.0
    %5117 = vmatpush1.xpose.msra.mxu0 0.0
    %5118 = vmatprep.subr.mxu0 0.0
    %5119 = vmatpush1.xpose.msra.mxu0 0.0
    %5120 = vmatprep.subr.mxu0 0.0
    %5121 = vmatpush1.xpose.msra.mxu0 0.0
    %5122 = vmatprep.mubr.f32.mxu0 %v187
    %5123 = vmatmul.mubr.f32.gmra.mrb[0].mxu0 %v186
    %v5124 = vpop.f32.mrb[0].mxu0
    %v5125 = vadd.f32 %v5055, %v5124
    %v5126 = vpop.f32.mrb[0].mxu0
    %5127 = vdwg.mxu0
    %5128 = vmatprep.subr.mxu0 %v434
    %5129 = vmatpush1.xpose.msra.mxu0 %v433
    %5130 = vmatprep.subr.mxu0 %v679
    %5131 = vmatpush1.xpose.msra.mxu0 %v678
    %5132 = vmatprep.subr.mxu0 %v924
    %5133 = vmatpush1.xpose.msra.mxu0 %v923
    %5134 = vmatprep.subr.mxu0 %v1169
    %5135 = vmatpush1.xpose.msra.mxu0 %v1168
    %5136 = vmatprep.subr.mxu0 %v1414
    %5137 = vmatpush1.xpose.msra.mxu0 %v1413
    %5138 = vmatprep.subr.mxu0 %v1659
    %5139 = vmatpush1.xpose.msra.mxu0 %v1658
    %5140 = vmatprep.subr.mxu0 0.0
    %5141 = vmatpush1.xpose.msra.mxu0 0.0
    %5142 = vmatprep.subr.mxu0 0.0
    %5143 = vmatpush1.xpose.msra.mxu0 0.0
    %5144 = vmatprep.subr.mxu0 0.0
    %5145 = vmatpush1.xpose.msra.mxu0 0.0
    %5146 = vmatprep.subr.mxu0 0.0
    %5147 = vmatpush1.xpose.msra.mxu0 0.0
    %5148 = vmatprep.subr.mxu0 0.0
    %5149 = vmatpush1.xpose.msra.mxu0 0.0
    %5150 = vmatprep.subr.mxu0 0.0
    %5151 = vmatpush1.xpose.msra.mxu0 0.0
    %5152 = vmatprep.subr.mxu0 0.0
    %5153 = vmatpush1.xpose.msra.mxu0 0.0
    %5154 = vmatprep.subr.mxu0 0.0
    %5155 = vmatpush1.xpose.msra.mxu0 0.0
    %5156 = vmatprep.subr.mxu0 0.0
    %5157 = vmatpush1.xpose.msra.mxu0 0.0
    %5158 = vmatprep.subr.mxu0 0.0
    %5159 = vmatpush1.xpose.msra.mxu0 0.0
    %5160 = vmatprep.subr.mxu0 0.0
    %5161 = vmatpush1.xpose.msra.mxu0 0.0
    %5162 = vmatprep.subr.mxu0 0.0
    %5163 = vmatpush1.xpose.msra.mxu0 0.0
    %5164 = vmatprep.subr.mxu0 0.0
    %5165 = vmatpush1.xpose.msra.mxu0 0.0
    %5166 = vmatprep.subr.mxu0 0.0
    %5167 = vmatpush1.xpose.msra.mxu0 0.0
    %5168 = vmatprep.subr.mxu0 0.0
    %5169 = vmatpush1.xpose.msra.mxu0 0.0
    %5170 = vmatprep.subr.mxu0 0.0
    %5171 = vmatpush1.xpose.msra.mxu0 0.0
    %5172 = vmatprep.subr.mxu0 0.0
    %5173 = vmatpush1.xpose.msra.mxu0 0.0
    %5174 = vmatprep.subr.mxu0 0.0
    %5175 = vmatpush1.xpose.msra.mxu0 0.0
    %5176 = vmatprep.subr.mxu0 0.0
    %5177 = vmatpush1.xpose.msra.mxu0 0.0
    %5178 = vmatprep.subr.mxu0 0.0
    %5179 = vmatpush1.xpose.msra.mxu0 0.0
    %5180 = vmatprep.subr.mxu0 0.0
    %5181 = vmatpush1.xpose.msra.mxu0 0.0
    %5182 = vmatprep.subr.mxu0 0.0
    %5183 = vmatpush1.xpose.msra.mxu0 0.0
    %5184 = vmatprep.subr.mxu0 0.0
    %5185 = vmatpush1.xpose.msra.mxu0 0.0
    %5186 = vmatprep.subr.mxu0 0.0
    %5187 = vmatpush1.xpose.msra.mxu0 0.0
    %5188 = vmatprep.subr.mxu0 0.0
    %5189 = vmatpush1.xpose.msra.mxu0 0.0
    %5190 = vmatprep.subr.mxu0 0.0
    %5191 = vmatpush1.xpose.msra.mxu0 0.0
    %5192 = vmatprep.mubr.f32.mxu0 %v189
    %5193 = vmatmul.mubr.f32.gmra.mrb[0].mxu0 %v188
    %v5194 = vpop.f32.mrb[0].mxu0
    %v5195 = vadd.f32 %v5125, %v5194
    %v5196 = vpop.f32.mrb[0].mxu0
    %5197 = vdwg.mxu0
    %5198 = vmatprep.subr.mxu0 %v436
    %5199 = vmatpush1.xpose.msra.mxu0 %v435
    %5200 = vmatprep.subr.mxu0 %v681
    %5201 = vmatpush1.xpose.msra.mxu0 %v680
    %5202 = vmatprep.subr.mxu0 %v926
    %5203 = vmatpush1.xpose.msra.mxu0 %v925
    %5204 = vmatprep.subr.mxu0 %v1171
    %5205 = vmatpush1.xpose.msra.mxu0 %v1170
    %5206 = vmatprep.subr.mxu0 %v1416
    %5207 = vmatpush1.xpose.msra.mxu0 %v1415
    %5208 = vmatprep.subr.mxu0 %v1661
    %5209 = vmatpush1.xpose.msra.mxu0 %v1660
    %5210 = vmatprep.subr.mxu0 0.0
    %5211 = vmatpush1.xpose.msra.mxu0 0.0
    %5212 = vmatprep.subr.mxu0 0.0
    %5213 = vmatpush1.xpose.msra.mxu0 0.0
    %5214 = vmatprep.subr.mxu0 0.0
    %5215 = vmatpush1.xpose.msra.mxu0 0.0
    %5216 = vmatprep.subr.mxu0 0.0
    %5217 = vmatpush1.xpose.msra.mxu0 0.0
    %5218 = vmatprep.subr.mxu0 0.0
    %5219 = vmatpush1.xpose.msra.mxu0 0.0
    %5220 = vmatprep.subr.mxu0 0.0
    %5221 = vmatpush1.xpose.msra.mxu0 0.0
    %5222 = vmatprep.subr.mxu0 0.0
    %5223 = vmatpush1.xpose.msra.mxu0 0.0
    %5224 = vmatprep.subr.mxu0 0.0
    %5225 = vmatpush1.xpose.msra.mxu0 0.0
    %5226 = vmatprep.subr.mxu0 0.0
    %5227 = vmatpush1.xpose.msra.mxu0 0.0
    %5228 = vmatprep.subr.mxu0 0.0
    %5229 = vmatpush1.xpose.msra.mxu0 0.0
    %5230 = vmatprep.subr.mxu0 0.0
    %5231 = vmatpush1.xpose.msra.mxu0 0.0
    %5232 = vmatprep.subr.mxu0 0.0
    %5233 = vmatpush1.xpose.msra.mxu0 0.0
    %5234 = vmatprep.subr.mxu0 0.0
    %5235 = vmatpush1.xpose.msra.mxu0 0.0
    %5236 = vmatprep.subr.mxu0 0.0
    %5237 = vmatpush1.xpose.msra.mxu0 0.0
    %5238 = vmatprep.subr.mxu0 0.0
    %5239 = vmatpush1.xpose.msra.mxu0 0.0
    %5240 = vmatprep.subr.mxu0 0.0
    %5241 = vmatpush1.xpose.msra.mxu0 0.0
    %5242 = vmatprep.subr.mxu0 0.0
    %5243 = vmatpush1.xpose.msra.mxu0 0.0
    %5244 = vmatprep.subr.mxu0 0.0
    %5245 = vmatpush1.xpose.msra.mxu0 0.0
    %5246 = vmatprep.subr.mxu0 0.0
    %5247 = vmatpush1.xpose.msra.mxu0 0.0
    %5248 = vmatprep.subr.mxu0 0.0
    %5249 = vmatpush1.xpose.msra.mxu0 0.0
    %5250 = vmatprep.subr.mxu0 0.0
    %5251 = vmatpush1.xpose.msra.mxu0 0.0
    %5252 = vmatprep.subr.mxu0 0.0
    %5253 = vmatpush1.xpose.msra.mxu0 0.0
    %5254 = vmatprep.subr.mxu0 0.0
    %5255 = vmatpush1.xpose.msra.mxu0 0.0
    %5256 = vmatprep.subr.mxu0 0.0
    %5257 = vmatpush1.xpose.msra.mxu0 0.0
    %5258 = vmatprep.subr.mxu0 0.0
    %5259 = vmatpush1.xpose.msra.mxu0 0.0
    %5260 = vmatprep.subr.mxu0 0.0
    %5261 = vmatpush1.xpose.msra.mxu0 0.0
    %5262 = vmatprep.mubr.f32.mxu0 %v191
    %5263 = vmatmul.mubr.f32.gmra.mrb[0].mxu0 %v190
    %v5264 = vpop.f32.mrb[0].mxu0
    %v5265 = vadd.f32 %v5195, %v5264
    %v5266 = vpop.f32.mrb[0].mxu0
    %5267 = vdwg.mxu0
    %5268 = vmatprep.subr.mxu0 %v438
    %5269 = vmatpush1.xpose.msra.mxu0 %v437
    %5270 = vmatprep.subr.mxu0 %v683
    %5271 = vmatpush1.xpose.msra.mxu0 %v682
    %5272 = vmatprep.subr.mxu0 %v928
    %5273 = vmatpush1.xpose.msra.mxu0 %v927
    %5274 = vmatprep.subr.mxu0 %v1173
    %5275 = vmatpush1.xpose.msra.mxu0 %v1172
    %5276 = vmatprep.subr.mxu0 %v1418
    %5277 = vmatpush1.xpose.msra.mxu0 %v1417
    %5278 = vmatprep.subr.mxu0 %v1663
    %5279 = vmatpush1.xpose.msra.mxu0 %v1662
    %5280 = vmatprep.subr.mxu0 0.0
    %5281 = vmatpush1.xpose.msra.mxu0 0.0
    %5282 = vmatprep.subr.mxu0 0.0
    %5283 = vmatpush1.xpose.msra.mxu0 0.0
    %5284 = vmatprep.subr.mxu0 0.0
    %5285 = vmatpush1.xpose.msra.mxu0 0.0
    %5286 = vmatprep.subr.mxu0 0.0
    %5287 = vmatpush1.xpose.msra.mxu0 0.0
    %5288 = vmatprep.subr.mxu0 0.0
    %5289 = vmatpush1.xpose.msra.mxu0 0.0
    %5290 = vmatprep.subr.mxu0 0.0
    %5291 = vmatpush1.xpose.msra.mxu0 0.0
    %5292 = vmatprep.subr.mxu0 0.0
    %5293 = vmatpush1.xpose.msra.mxu0 0.0
    %5294 = vmatprep.subr.mxu0 0.0
    %5295 = vmatpush1.xpose.msra.mxu0 0.0
    %5296 = vmatprep.subr.mxu0 0.0
    %5297 = vmatpush1.xpose.msra.mxu0 0.0
    %5298 = vmatprep.subr.mxu0 0.0
    %5299 = vmatpush1.xpose.msra.mxu0 0.0
    %5300 = vmatprep.subr.mxu0 0.0
    %5301 = vmatpush1.xpose.msra.mxu0 0.0
    %5302 = vmatprep.subr.mxu0 0.0
    %5303 = vmatpush1.xpose.msra.mxu0 0.0
    %5304 = vmatprep.subr.mxu0 0.0
    %5305 = vmatpush1.xpose.msra.mxu0 0.0
    %5306 = vmatprep.subr.mxu0 0.0
    %5307 = vmatpush1.xpose.msra.mxu0 0.0
    %5308 = vmatprep.subr.mxu0 0.0
    %5309 = vmatpush1.xpose.msra.mxu0 0.0
    %5310 = vmatprep.subr.mxu0 0.0
    %5311 = vmatpush1.xpose.msra.mxu0 0.0
    %5312 = vmatprep.subr.mxu0 0.0
    %5313 = vmatpush1.xpose.msra.mxu0 0.0
    %5314 = vmatprep.subr.mxu0 0.0
    %5315 = vmatpush1.xpose.msra.mxu0 0.0
    %5316 = vmatprep.subr.mxu0 0.0
    %5317 = vmatpush1.xpose.msra.mxu0 0.0
    %5318 = vmatprep.subr.mxu0 0.0
    %5319 = vmatpush1.xpose.msra.mxu0 0.0
    %5320 = vmatprep.subr.mxu0 0.0
    %5321 = vmatpush1.xpose.msra.mxu0 0.0
    %5322 = vmatprep.subr.mxu0 0.0
    %5323 = vmatpush1.xpose.msra.mxu0 0.0
    %5324 = vmatprep.subr.mxu0 0.0
    %5325 = vmatpush1.xpose.msra.mxu0 0.0
    %5326 = vmatprep.subr.mxu0 0.0
    %5327 = vmatpush1.xpose.msra.mxu0 0.0
    %5328 = vmatprep.subr.mxu0 0.0
    %5329 = vmatpush1.xpose.msra.mxu0 0.0
    %5330 = vmatprep.subr.mxu0 0.0
    %5331 = vmatpush1.xpose.msra.mxu0 0.0
    %5332 = vmatprep.mubr.f32.mxu0 %v193
    %5333 = vmatmul.mubr.f32.gmra.mrb[0].mxu0 %v192
    %v5334 = vpop.f32.mrb[0].mxu0
    %v5335 = vadd.f32 %v5265, %v5334
    %v5336 = vpop.f32.mrb[0].mxu0
    %5337 = vdwg.mxu0
    %5338 = vmatprep.subr.mxu0 %v440
    %5339 = vmatpush1.xpose.msra.mxu0 %v439
    %5340 = vmatprep.subr.mxu0 %v685
    %5341 = vmatpush1.xpose.msra.mxu0 %v684
    %5342 = vmatprep.subr.mxu0 %v930
    %5343 = vmatpush1.xpose.msra.mxu0 %v929
    %5344 = vmatprep.subr.mxu0 %v1175
    %5345 = vmatpush1.xpose.msra.mxu0 %v1174
    %5346 = vmatprep.subr.mxu0 %v1420
    %5347 = vmatpush1.xpose.msra.mxu0 %v1419
    %5348 = vmatprep.subr.mxu0 %v1665
    %5349 = vmatpush1.xpose.msra.mxu0 %v1664
    %5350 = vmatprep.subr.mxu0 0.0
    %5351 = vmatpush1.xpose.msra.mxu0 0.0
    %5352 = vmatprep.subr.mxu0 0.0
    %5353 = vmatpush1.xpose.msra.mxu0 0.0
    %5354 = vmatprep.subr.mxu0 0.0
    %5355 = vmatpush1.xpose.msra.mxu0 0.0
    %5356 = vmatprep.subr.mxu0 0.0
    %5357 = vmatpush1.xpose.msra.mxu0 0.0
    %5358 = vmatprep.subr.mxu0 0.0
    %5359 = vmatpush1.xpose.msra.mxu0 0.0
    %5360 = vmatprep.subr.mxu0 0.0
    %5361 = vmatpush1.xpose.msra.mxu0 0.0
    %5362 = vmatprep.subr.mxu0 0.0
    %5363 = vmatpush1.xpose.msra.mxu0 0.0
    %5364 = vmatprep.subr.mxu0 0.0
    %5365 = vmatpush1.xpose.msra.mxu0 0.0
    %5366 = vmatprep.subr.mxu0 0.0
    %5367 = vmatpush1.xpose.msra.mxu0 0.0
    %5368 = vmatprep.subr.mxu0 0.0
    %5369 = vmatpush1.xpose.msra.mxu0 0.0
    %5370 = vmatprep.subr.mxu0 0.0
    %5371 = vmatpush1.xpose.msra.mxu0 0.0
    %5372 = vmatprep.subr.mxu0 0.0
    %5373 = vmatpush1.xpose.msra.mxu0 0.0
    %5374 = vmatprep.subr.mxu0 0.0
    %5375 = vmatpush1.xpose.msra.mxu0 0.0
    %5376 = vmatprep.subr.mxu0 0.0
    %5377 = vmatpush1.xpose.msra.mxu0 0.0
    %5378 = vmatprep.subr.mxu0 0.0
    %5379 = vmatpush1.xpose.msra.mxu0 0.0
    %5380 = vmatprep.subr.mxu0 0.0
    %5381 = vmatpush1.xpose.msra.mxu0 0.0
    %5382 = vmatprep.subr.mxu0 0.0
    %5383 = vmatpush1.xpose.msra.mxu0 0.0
    %5384 = vmatprep.subr.mxu0 0.0
    %5385 = vmatpush1.xpose.msra.mxu0 0.0
    %5386 = vmatprep.subr.mxu0 0.0
    %5387 = vmatpush1.xpose.msra.mxu0 0.0
    %5388 = vmatprep.subr.mxu0 0.0
    %5389 = vmatpush1.xpose.msra.mxu0 0.0
    %5390 = vmatprep.subr.mxu0 0.0
    %5391 = vmatpush1.xpose.msra.mxu0 0.0
    %5392 = vmatprep.subr.mxu0 0.0
    %5393 = vmatpush1.xpose.msra.mxu0 0.0
    %5394 = vmatprep.subr.mxu0 0.0
    %5395 = vmatpush1.xpose.msra.mxu0 0.0
    %5396 = vmatprep.subr.mxu0 0.0
    %5397 = vmatpush1.xpose.msra.mxu0 0.0
    %5398 = vmatprep.subr.mxu0 0.0
    %5399 = vmatpush1.xpose.msra.mxu0 0.0
    %5400 = vmatprep.subr.mxu0 0.0
    %5401 = vmatpush1.xpose.msra.mxu0 0.0
    %5402 = vmatprep.mubr.f32.mxu0 %v195
    %5403 = vmatmul.mubr.f32.gmra.mrb[0].mxu0 %v194
    %v5404 = vpop.f32.mrb[0].mxu0
    %v5405 = vadd.f32 %v5335, %v5404
    %v5406 = vpop.f32.mrb[0].mxu0
    %5407 = vdwg.mxu0
    %5408 = vmatprep.subr.mxu0 %v442
    %5409 = vmatpush1.xpose.msra.mxu0 %v441
    %5410 = vmatprep.subr.mxu0 %v687
    %5411 = vmatpush1.xpose.msra.mxu0 %v686
    %5412 = vmatprep.subr.mxu0 %v932
    %5413 = vmatpush1.xpose.msra.mxu0 %v931
    %5414 = vmatprep.subr.mxu0 %v1177
    %5415 = vmatpush1.xpose.msra.mxu0 %v1176
    %5416 = vmatprep.subr.mxu0 %v1422
    %5417 = vmatpush1.xpose.msra.mxu0 %v1421
    %5418 = vmatprep.subr.mxu0 %v1667
    %5419 = vmatpush1.xpose.msra.mxu0 %v1666
    %5420 = vmatprep.subr.mxu0 0.0
    %5421 = vmatpush1.xpose.msra.mxu0 0.0
    %5422 = vmatprep.subr.mxu0 0.0
    %5423 = vmatpush1.xpose.msra.mxu0 0.0
    %5424 = vmatprep.subr.mxu0 0.0
    %5425 = vmatpush1.xpose.msra.mxu0 0.0
    %5426 = vmatprep.subr.mxu0 0.0
    %5427 = vmatpush1.xpose.msra.mxu0 0.0
    %5428 = vmatprep.subr.mxu0 0.0
    %5429 = vmatpush1.xpose.msra.mxu0 0.0
    %5430 = vmatprep.subr.mxu0 0.0
    %5431 = vmatpush1.xpose.msra.mxu0 0.0
    %5432 = vmatprep.subr.mxu0 0.0
    %5433 = vmatpush1.xpose.msra.mxu0 0.0
    %5434 = vmatprep.subr.mxu0 0.0
    %5435 = vmatpush1.xpose.msra.mxu0 0.0
    %5436 = vmatprep.subr.mxu0 0.0
    %5437 = vmatpush1.xpose.msra.mxu0 0.0
    %5438 = vmatprep.subr.mxu0 0.0
    %5439 = vmatpush1.xpose.msra.mxu0 0.0
    %5440 = vmatprep.subr.mxu0 0.0
    %5441 = vmatpush1.xpose.msra.mxu0 0.0
    %5442 = vmatprep.subr.mxu0 0.0
    %5443 = vmatpush1.xpose.msra.mxu0 0.0
    %5444 = vmatprep.subr.mxu0 0.0
    %5445 = vmatpush1.xpose.msra.mxu0 0.0
    %5446 = vmatprep.subr.mxu0 0.0
    %5447 = vmatpush1.xpose.msra.mxu0 0.0
    %5448 = vmatprep.subr.mxu0 0.0
    %5449 = vmatpush1.xpose.msra.mxu0 0.0
    %5450 = vmatprep.subr.mxu0 0.0
    %5451 = vmatpush1.xpose.msra.mxu0 0.0
    %5452 = vmatprep.subr.mxu0 0.0
    %5453 = vmatpush1.xpose.msra.mxu0 0.0
    %5454 = vmatprep.subr.mxu0 0.0
    %5455 = vmatpush1.xpose.msra.mxu0 0.0
    %5456 = vmatprep.subr.mxu0 0.0
    %5457 = vmatpush1.xpose.msra.mxu0 0.0
    %5458 = vmatprep.subr.mxu0 0.0
    %5459 = vmatpush1.xpose.msra.mxu0 0.0
    %5460 = vmatprep.subr.mxu0 0.0
    %5461 = vmatpush1.xpose.msra.mxu0 0.0
    %5462 = vmatprep.subr.mxu0 0.0
    %5463 = vmatpush1.xpose.msra.mxu0 0.0
    %5464 = vmatprep.subr.mxu0 0.0
    %5465 = vmatpush1.xpose.msra.mxu0 0.0
    %5466 = vmatprep.subr.mxu0 0.0
    %5467 = vmatpush1.xpose.msra.mxu0 0.0
    %5468 = vmatprep.subr.mxu0 0.0
    %5469 = vmatpush1.xpose.msra.mxu0 0.0
    %5470 = vmatprep.subr.mxu0 0.0
    %5471 = vmatpush1.xpose.msra.mxu0 0.0
    %5472 = vmatprep.mubr.f32.mxu0 %v197
    %5473 = vmatmul.mubr.f32.gmra.mrb[0].mxu0 %v196
    %v5474 = vpop.f32.mrb[0].mxu0
    %v5475 = vadd.f32 %v5405, %v5474
    %v5476 = vpop.f32.mrb[0].mxu0
    %5477 = vdwg.mxu0
    %5478 = vmatprep.subr.mxu0 %v444
    %5479 = vmatpush1.xpose.msra.mxu0 %v443
    %5480 = vmatprep.subr.mxu0 %v689
    %5481 = vmatpush1.xpose.msra.mxu0 %v688
    %5482 = vmatprep.subr.mxu0 %v934
    %5483 = vmatpush1.xpose.msra.mxu0 %v933
    %5484 = vmatprep.subr.mxu0 %v1179
    %5485 = vmatpush1.xpose.msra.mxu0 %v1178
    %5486 = vmatprep.subr.mxu0 %v1424
    %5487 = vmatpush1.xpose.msra.mxu0 %v1423
    %5488 = vmatprep.subr.mxu0 %v1669
    %5489 = vmatpush1.xpose.msra.mxu0 %v1668
    %5490 = vmatprep.subr.mxu0 0.0
    %5491 = vmatpush1.xpose.msra.mxu0 0.0
    %5492 = vmatprep.subr.mxu0 0.0
    %5493 = vmatpush1.xpose.msra.mxu0 0.0
    %5494 = vmatprep.subr.mxu0 0.0
    %5495 = vmatpush1.xpose.msra.mxu0 0.0
    %5496 = vmatprep.subr.mxu0 0.0
    %5497 = vmatpush1.xpose.msra.mxu0 0.0
    %5498 = vmatprep.subr.mxu0 0.0
    %5499 = vmatpush1.xpose.msra.mxu0 0.0
    %5500 = vmatprep.subr.mxu0 0.0
    %5501 = vmatpush1.xpose.msra.mxu0 0.0
    %5502 = vmatprep.subr.mxu0 0.0
    %5503 = vmatpush1.xpose.msra.mxu0 0.0
    %5504 = vmatprep.subr.mxu0 0.0
    %5505 = vmatpush1.xpose.msra.mxu0 0.0
    %5506 = vmatprep.subr.mxu0 0.0
    %5507 = vmatpush1.xpose.msra.mxu0 0.0
    %5508 = vmatprep.subr.mxu0 0.0
    %5509 = vmatpush1.xpose.msra.mxu0 0.0
    %5510 = vmatprep.subr.mxu0 0.0
    %5511 = vmatpush1.xpose.msra.mxu0 0.0
    %5512 = vmatprep.subr.mxu0 0.0
    %5513 = vmatpush1.xpose.msra.mxu0 0.0
    %5514 = vmatprep.subr.mxu0 0.0
    %5515 = vmatpush1.xpose.msra.mxu0 0.0
    %5516 = vmatprep.subr.mxu0 0.0
    %5517 = vmatpush1.xpose.msra.mxu0 0.0
    %5518 = vmatprep.subr.mxu0 0.0
    %5519 = vmatpush1.xpose.msra.mxu0 0.0
    %5520 = vmatprep.subr.mxu0 0.0
    %5521 = vmatpush1.xpose.msra.mxu0 0.0
    %5522 = vmatprep.subr.mxu0 0.0
    %5523 = vmatpush1.xpose.msra.mxu0 0.0
    %5524 = vmatprep.subr.mxu0 0.0
    %5525 = vmatpush1.xpose.msra.mxu0 0.0
    %5526 = vmatprep.subr.mxu0 0.0
    %5527 = vmatpush1.xpose.msra.mxu0 0.0
    %5528 = vmatprep.subr.mxu0 0.0
    %5529 = vmatpush1.xpose.msra.mxu0 0.0
    %5530 = vmatprep.subr.mxu0 0.0
    %5531 = vmatpush1.xpose.msra.mxu0 0.0
    %5532 = vmatprep.subr.mxu0 0.0
    %5533 = vmatpush1.xpose.msra.mxu0 0.0
    %5534 = vmatprep.subr.mxu0 0.0
    %5535 = vmatpush1.xpose.msra.mxu0 0.0
    %5536 = vmatprep.subr.mxu0 0.0
    %5537 = vmatpush1.xpose.msra.mxu0 0.0
    %5538 = vmatprep.subr.mxu0 0.0
    %5539 = vmatpush1.xpose.msra.mxu0 0.0
    %5540 = vmatprep.subr.mxu0 0.0
    %5541 = vmatpush1.xpose.msra.mxu0 0.0
    %5542 = vmatprep.mubr.f32.mxu0 %v199
    %5543 = vmatmul.mubr.f32.gmra.mrb[0].mxu0 %v198
    %v5544 = vpop.f32.mrb[0].mxu0
    %v5545 = vadd.f32 %v5475, %v5544
    %v5546 = vpop.f32.mrb[0].mxu0
    %5547 = vdwg.mxu0
    %5548 = vmatprep.subr.mxu0 %v446
    %5549 = vmatpush1.xpose.msra.mxu0 %v445
    %5550 = vmatprep.subr.mxu0 %v691
    %5551 = vmatpush1.xpose.msra.mxu0 %v690
    %5552 = vmatprep.subr.mxu0 %v936
    %5553 = vmatpush1.xpose.msra.mxu0 %v935
    %5554 = vmatprep.subr.mxu0 %v1181
    %5555 = vmatpush1.xpose.msra.mxu0 %v1180
    %5556 = vmatprep.subr.mxu0 %v1426
    %5557 = vmatpush1.xpose.msra.mxu0 %v1425
    %5558 = vmatprep.subr.mxu0 %v1671
    %5559 = vmatpush1.xpose.msra.mxu0 %v1670
    %5560 = vmatprep.subr.mxu0 0.0
    %5561 = vmatpush1.xpose.msra.mxu0 0.0
    %5562 = vmatprep.subr.mxu0 0.0
    %5563 = vmatpush1.xpose.msra.mxu0 0.0
    %5564 = vmatprep.subr.mxu0 0.0
    %5565 = vmatpush1.xpose.msra.mxu0 0.0
    %5566 = vmatprep.subr.mxu0 0.0
    %5567 = vmatpush1.xpose.msra.mxu0 0.0
    %5568 = vmatprep.subr.mxu0 0.0
    %5569 = vmatpush1.xpose.msra.mxu0 0.0
    %5570 = vmatprep.subr.mxu0 0.0
    %5571 = vmatpush1.xpose.msra.mxu0 0.0
    %5572 = vmatprep.subr.mxu0 0.0
    %5573 = vmatpush1.xpose.msra.mxu0 0.0
    %5574 = vmatprep.subr.mxu0 0.0
    %5575 = vmatpush1.xpose.msra.mxu0 0.0
    %5576 = vmatprep.subr.mxu0 0.0
    %5577 = vmatpush1.xpose.msra.mxu0 0.0
    %5578 = vmatprep.subr.mxu0 0.0
    %5579 = vmatpush1.xpose.msra.mxu0 0.0
    %5580 = vmatprep.subr.mxu0 0.0
    %5581 = vmatpush1.xpose.msra.mxu0 0.0
    %5582 = vmatprep.subr.mxu0 0.0
    %5583 = vmatpush1.xpose.msra.mxu0 0.0
    %5584 = vmatprep.subr.mxu0 0.0
    %5585 = vmatpush1.xpose.msra.mxu0 0.0
    %5586 = vmatprep.subr.mxu0 0.0
    %5587 = vmatpush1.xpose.msra.mxu0 0.0
    %5588 = vmatprep.subr.mxu0 0.0
    %5589 = vmatpush1.xpose.msra.mxu0 0.0
    %5590 = vmatprep.subr.mxu0 0.0
    %5591 = vmatpush1.xpose.msra.mxu0 0.0
    %5592 = vmatprep.subr.mxu0 0.0
    %5593 = vmatpush1.xpose.msra.mxu0 0.0
    %5594 = vmatprep.subr.mxu0 0.0
    %5595 = vmatpush1.xpose.msra.mxu0 0.0
    %5596 = vmatprep.subr.mxu0 0.0
    %5597 = vmatpush1.xpose.msra.mxu0 0.0
    %5598 = vmatprep.subr.mxu0 0.0
    %5599 = vmatpush1.xpose.msra.mxu0 0.0
    %5600 = vmatprep.subr.mxu0 0.0
    %5601 = vmatpush1.xpose.msra.mxu0 0.0
    %5602 = vmatprep.subr.mxu0 0.0
    %5603 = vmatpush1.xpose.msra.mxu0 0.0
    %5604 = vmatprep.subr.mxu0 0.0
    %5605 = vmatpush1.xpose.msra.mxu0 0.0
    %5606 = vmatprep.subr.mxu0 0.0
    %5607 = vmatpush1.xpose.msra.mxu0 0.0
    %5608 = vmatprep.subr.mxu0 0.0
    %5609 = vmatpush1.xpose.msra.mxu0 0.0
    %5610 = vmatprep.subr.mxu0 0.0
    %5611 = vmatpush1.xpose.msra.mxu0 0.0
    %5612 = vmatprep.mubr.f32.mxu0 %v201
    %5613 = vmatmul.mubr.f32.gmra.mrb[0].mxu0 %v200
    %v5614 = vpop.f32.mrb[0].mxu0
    %v5615 = vadd.f32 %v5545, %v5614
    %v5616 = vpop.f32.mrb[0].mxu0
    %5617 = vdwg.mxu0
    %5618 = vmatprep.subr.mxu0 %v448
    %5619 = vmatpush1.xpose.msra.mxu0 %v447
    %5620 = vmatprep.subr.mxu0 %v693
    %5621 = vmatpush1.xpose.msra.mxu0 %v692
    %5622 = vmatprep.subr.mxu0 %v938
    %5623 = vmatpush1.xpose.msra.mxu0 %v937
    %5624 = vmatprep.subr.mxu0 %v1183
    %5625 = vmatpush1.xpose.msra.mxu0 %v1182
    %5626 = vmatprep.subr.mxu0 %v1428
    %5627 = vmatpush1.xpose.msra.mxu0 %v1427
    %5628 = vmatprep.subr.mxu0 %v1673
    %5629 = vmatpush1.xpose.msra.mxu0 %v1672
    %5630 = vmatprep.subr.mxu0 0.0
    %5631 = vmatpush1.xpose.msra.mxu0 0.0
    %5632 = vmatprep.subr.mxu0 0.0
    %5633 = vmatpush1.xpose.msra.mxu0 0.0
    %5634 = vmatprep.subr.mxu0 0.0
    %5635 = vmatpush1.xpose.msra.mxu0 0.0
    %5636 = vmatprep.subr.mxu0 0.0
    %5637 = vmatpush1.xpose.msra.mxu0 0.0
    %5638 = vmatprep.subr.mxu0 0.0
    %5639 = vmatpush1.xpose.msra.mxu0 0.0
    %5640 = vmatprep.subr.mxu0 0.0
    %5641 = vmatpush1.xpose.msra.mxu0 0.0
    %5642 = vmatprep.subr.mxu0 0.0
    %5643 = vmatpush1.xpose.msra.mxu0 0.0
    %5644 = vmatprep.subr.mxu0 0.0
    %5645 = vmatpush1.xpose.msra.mxu0 0.0
    %5646 = vmatprep.subr.mxu0 0.0
    %5647 = vmatpush1.xpose.msra.mxu0 0.0
    %5648 = vmatprep.subr.mxu0 0.0
    %5649 = vmatpush1.xpose.msra.mxu0 0.0
    %5650 = vmatprep.subr.mxu0 0.0
    %5651 = vmatpush1.xpose.msra.mxu0 0.0
    %5652 = vmatprep.subr.mxu0 0.0
    %5653 = vmatpush1.xpose.msra.mxu0 0.0
    %5654 = vmatprep.subr.mxu0 0.0
    %5655 = vmatpush1.xpose.msra.mxu0 0.0
    %5656 = vmatprep.subr.mxu0 0.0
    %5657 = vmatpush1.xpose.msra.mxu0 0.0
    %5658 = vmatprep.subr.mxu0 0.0
    %5659 = vmatpush1.xpose.msra.mxu0 0.0
    %5660 = vmatprep.subr.mxu0 0.0
    %5661 = vmatpush1.xpose.msra.mxu0 0.0
    %5662 = vmatprep.subr.mxu0 0.0
    %5663 = vmatpush1.xpose.msra.mxu0 0.0
    %5664 = vmatprep.subr.mxu0 0.0
    %5665 = vmatpush1.xpose.msra.mxu0 0.0
    %5666 = vmatprep.subr.mxu0 0.0
    %5667 = vmatpush1.xpose.msra.mxu0 0.0
    %5668 = vmatprep.subr.mxu0 0.0
    %5669 = vmatpush1.xpose.msra.mxu0 0.0
    %5670 = vmatprep.subr.mxu0 0.0
    %5671 = vmatpush1.xpose.msra.mxu0 0.0
    %5672 = vmatprep.subr.mxu0 0.0
    %5673 = vmatpush1.xpose.msra.mxu0 0.0
    %5674 = vmatprep.subr.mxu0 0.0
    %5675 = vmatpush1.xpose.msra.mxu0 0.0
    %5676 = vmatprep.subr.mxu0 0.0
    %5677 = vmatpush1.xpose.msra.mxu0 0.0
    %5678 = vmatprep.subr.mxu0 0.0
    %5679 = vmatpush1.xpose.msra.mxu0 0.0
    %5680 = vmatprep.subr.mxu0 0.0
    %5681 = vmatpush1.xpose.msra.mxu0 0.0
    %5682 = vmatprep.mubr.f32.mxu0 %v203
    %5683 = vmatmul.mubr.f32.gmra.mrb[0].mxu0 %v202
    %v5684 = vpop.f32.mrb[0].mxu0
    %v5685 = vadd.f32 %v5615, %v5684
    %v5686 = vpop.f32.mrb[0].mxu0
    %5687 = vdwg.mxu0
    %5688 = vmatprep.subr.mxu0 %v450
    %5689 = vmatpush1.xpose.msra.mxu0 %v449
    %5690 = vmatprep.subr.mxu0 %v695
    %5691 = vmatpush1.xpose.msra.mxu0 %v694
    %5692 = vmatprep.subr.mxu0 %v940
    %5693 = vmatpush1.xpose.msra.mxu0 %v939
    %5694 = vmatprep.subr.mxu0 %v1185
    %5695 = vmatpush1.xpose.msra.mxu0 %v1184
    %5696 = vmatprep.subr.mxu0 %v1430
    %5697 = vmatpush1.xpose.msra.mxu0 %v1429
    %5698 = vmatprep.subr.mxu0 %v1675
    %5699 = vmatpush1.xpose.msra.mxu0 %v1674
    %5700 = vmatprep.subr.mxu0 0.0
    %5701 = vmatpush1.xpose.msra.mxu0 0.0
    %5702 = vmatprep.subr.mxu0 0.0
    %5703 = vmatpush1.xpose.msra.mxu0 0.0
    %5704 = vmatprep.subr.mxu0 0.0
    %5705 = vmatpush1.xpose.msra.mxu0 0.0
    %5706 = vmatprep.subr.mxu0 0.0
    %5707 = vmatpush1.xpose.msra.mxu0 0.0
    %5708 = vmatprep.subr.mxu0 0.0
    %5709 = vmatpush1.xpose.msra.mxu0 0.0
    %5710 = vmatprep.subr.mxu0 0.0
    %5711 = vmatpush1.xpose.msra.mxu0 0.0
    %5712 = vmatprep.subr.mxu0 0.0
    %5713 = vmatpush1.xpose.msra.mxu0 0.0
    %5714 = vmatprep.subr.mxu0 0.0
    %5715 = vmatpush1.xpose.msra.mxu0 0.0
    %5716 = vmatprep.subr.mxu0 0.0
    %5717 = vmatpush1.xpose.msra.mxu0 0.0
    %5718 = vmatprep.subr.mxu0 0.0
    %5719 = vmatpush1.xpose.msra.mxu0 0.0
    %5720 = vmatprep.subr.mxu0 0.0
    %5721 = vmatpush1.xpose.msra.mxu0 0.0
    %5722 = vmatprep.subr.mxu0 0.0
    %5723 = vmatpush1.xpose.msra.mxu0 0.0
    %5724 = vmatprep.subr.mxu0 0.0
    %5725 = vmatpush1.xpose.msra.mxu0 0.0
    %5726 = vmatprep.subr.mxu0 0.0
    %5727 = vmatpush1.xpose.msra.mxu0 0.0
    %5728 = vmatprep.subr.mxu0 0.0
    %5729 = vmatpush1.xpose.msra.mxu0 0.0
    %5730 = vmatprep.subr.mxu0 0.0
    %5731 = vmatpush1.xpose.msra.mxu0 0.0
    %5732 = vmatprep.subr.mxu0 0.0
    %5733 = vmatpush1.xpose.msra.mxu0 0.0
    %5734 = vmatprep.subr.mxu0 0.0
    %5735 = vmatpush1.xpose.msra.mxu0 0.0
    %5736 = vmatprep.subr.mxu0 0.0
    %5737 = vmatpush1.xpose.msra.mxu0 0.0
    %5738 = vmatprep.subr.mxu0 0.0
    %5739 = vmatpush1.xpose.msra.mxu0 0.0
    %5740 = vmatprep.subr.mxu0 0.0
    %5741 = vmatpush1.xpose.msra.mxu0 0.0
    %5742 = vmatprep.subr.mxu0 0.0
    %5743 = vmatpush1.xpose.msra.mxu0 0.0
    %5744 = vmatprep.subr.mxu0 0.0
    %5745 = vmatpush1.xpose.msra.mxu0 0.0
    %5746 = vmatprep.subr.mxu0 0.0
    %5747 = vmatpush1.xpose.msra.mxu0 0.0
    %5748 = vmatprep.subr.mxu0 0.0
    %5749 = vmatpush1.xpose.msra.mxu0 0.0
    %5750 = vmatprep.subr.mxu0 0.0
    %5751 = vmatpush1.xpose.msra.mxu0 0.0
    %5752 = vmatprep.mubr.f32.mxu0 %v205
    %5753 = vmatmul.mubr.f32.gmra.mrb[0].mxu0 %v204
    %v5754 = vpop.f32.mrb[0].mxu0
    %v5755 = vadd.f32 %v5685, %v5754
    %v5756 = vpop.f32.mrb[0].mxu0
    %5757 = vdwg.mxu0
    %5758 = vmatprep.subr.mxu0 %v452
    %5759 = vmatpush1.xpose.msra.mxu0 %v451
    %5760 = vmatprep.subr.mxu0 %v697
    %5761 = vmatpush1.xpose.msra.mxu0 %v696
    %5762 = vmatprep.subr.mxu0 %v942
    %5763 = vmatpush1.xpose.msra.mxu0 %v941
    %5764 = vmatprep.subr.mxu0 %v1187
    %5765 = vmatpush1.xpose.msra.mxu0 %v1186
    %5766 = vmatprep.subr.mxu0 %v1432
    %5767 = vmatpush1.xpose.msra.mxu0 %v1431
    %5768 = vmatprep.subr.mxu0 %v1677
    %5769 = vmatpush1.xpose.msra.mxu0 %v1676
    %5770 = vmatprep.subr.mxu0 0.0
    %5771 = vmatpush1.xpose.msra.mxu0 0.0
    %5772 = vmatprep.subr.mxu0 0.0
    %5773 = vmatpush1.xpose.msra.mxu0 0.0
    %5774 = vmatprep.subr.mxu0 0.0
    %5775 = vmatpush1.xpose.msra.mxu0 0.0
    %5776 = vmatprep.subr.mxu0 0.0
    %5777 = vmatpush1.xpose.msra.mxu0 0.0
    %5778 = vmatprep.subr.mxu0 0.0
    %5779 = vmatpush1.xpose.msra.mxu0 0.0
    %5780 = vmatprep.subr.mxu0 0.0
    %5781 = vmatpush1.xpose.msra.mxu0 0.0
    %5782 = vmatprep.subr.mxu0 0.0
    %5783 = vmatpush1.xpose.msra.mxu0 0.0
    %5784 = vmatprep.subr.mxu0 0.0
    %5785 = vmatpush1.xpose.msra.mxu0 0.0
    %5786 = vmatprep.subr.mxu0 0.0
    %5787 = vmatpush1.xpose.msra.mxu0 0.0
    %5788 = vmatprep.subr.mxu0 0.0
    %5789 = vmatpush1.xpose.msra.mxu0 0.0
    %5790 = vmatprep.subr.mxu0 0.0
    %5791 = vmatpush1.xpose.msra.mxu0 0.0
    %5792 = vmatprep.subr.mxu0 0.0
    %5793 = vmatpush1.xpose.msra.mxu0 0.0
    %5794 = vmatprep.subr.mxu0 0.0
    %5795 = vmatpush1.xpose.msra.mxu0 0.0
    %5796 = vmatprep.subr.mxu0 0.0
    %5797 = vmatpush1.xpose.msra.mxu0 0.0
    %5798 = vmatprep.subr.mxu0 0.0
    %5799 = vmatpush1.xpose.msra.mxu0 0.0
    %5800 = vmatprep.subr.mxu0 0.0
    %5801 = vmatpush1.xpose.msra.mxu0 0.0
    %5802 = vmatprep.subr.mxu0 0.0
    %5803 = vmatpush1.xpose.msra.mxu0 0.0
    %5804 = vmatprep.subr.mxu0 0.0
    %5805 = vmatpush1.xpose.msra.mxu0 0.0
    %5806 = vmatprep.subr.mxu0 0.0
    %5807 = vmatpush1.xpose.msra.mxu0 0.0
    %5808 = vmatprep.subr.mxu0 0.0
    %5809 = vmatpush1.xpose.msra.mxu0 0.0
    %5810 = vmatprep.subr.mxu0 0.0
    %5811 = vmatpush1.xpose.msra.mxu0 0.0
    %5812 = vmatprep.subr.mxu0 0.0
    %5813 = vmatpush1.xpose.msra.mxu0 0.0
    %5814 = vmatprep.subr.mxu0 0.0
    %5815 = vmatpush1.xpose.msra.mxu0 0.0
    %5816 = vmatprep.subr.mxu0 0.0
    %5817 = vmatpush1.xpose.msra.mxu0 0.0
    %5818 = vmatprep.subr.mxu0 0.0
    %5819 = vmatpush1.xpose.msra.mxu0 0.0
    %5820 = vmatprep.subr.mxu0 0.0
    %5821 = vmatpush1.xpose.msra.mxu0 0.0
    %5822 = vmatprep.mubr.f32.mxu0 %v207
    %5823 = vmatmul.mubr.f32.gmra.mrb[0].mxu0 %v206
    %v5824 = vpop.f32.mrb[0].mxu0
    %v5825 = vadd.f32 %v5755, %v5824
    %v5826 = vpop.f32.mrb[0].mxu0
    %5827 = vdwg.mxu0
    %5828 = vmatprep.subr.mxu0 %v454
    %5829 = vmatpush1.xpose.msra.mxu0 %v453
    %5830 = vmatprep.subr.mxu0 %v699
    %5831 = vmatpush1.xpose.msra.mxu0 %v698
    %5832 = vmatprep.subr.mxu0 %v944
    %5833 = vmatpush1.xpose.msra.mxu0 %v943
    %5834 = vmatprep.subr.mxu0 %v1189
    %5835 = vmatpush1.xpose.msra.mxu0 %v1188
    %5836 = vmatprep.subr.mxu0 %v1434
    %5837 = vmatpush1.xpose.msra.mxu0 %v1433
    %5838 = vmatprep.subr.mxu0 %v1679
    %5839 = vmatpush1.xpose.msra.mxu0 %v1678
    %5840 = vmatprep.subr.mxu0 0.0
    %5841 = vmatpush1.xpose.msra.mxu0 0.0
    %5842 = vmatprep.subr.mxu0 0.0
    %5843 = vmatpush1.xpose.msra.mxu0 0.0
    %5844 = vmatprep.subr.mxu0 0.0
    %5845 = vmatpush1.xpose.msra.mxu0 0.0
    %5846 = vmatprep.subr.mxu0 0.0
    %5847 = vmatpush1.xpose.msra.mxu0 0.0
    %5848 = vmatprep.subr.mxu0 0.0
    %5849 = vmatpush1.xpose.msra.mxu0 0.0
    %5850 = vmatprep.subr.mxu0 0.0
    %5851 = vmatpush1.xpose.msra.mxu0 0.0
    %5852 = vmatprep.subr.mxu0 0.0
    %5853 = vmatpush1.xpose.msra.mxu0 0.0
    %5854 = vmatprep.subr.mxu0 0.0
    %5855 = vmatpush1.xpose.msra.mxu0 0.0
    %5856 = vmatprep.subr.mxu0 0.0
    %5857 = vmatpush1.xpose.msra.mxu0 0.0
    %5858 = vmatprep.subr.mxu0 0.0
    %5859 = vmatpush1.xpose.msra.mxu0 0.0
    %5860 = vmatprep.subr.mxu0 0.0
    %5861 = vmatpush1.xpose.msra.mxu0 0.0
    %5862 = vmatprep.subr.mxu0 0.0
    %5863 = vmatpush1.xpose.msra.mxu0 0.0
    %5864 = vmatprep.subr.mxu0 0.0
    %5865 = vmatpush1.xpose.msra.mxu0 0.0
    %5866 = vmatprep.subr.mxu0 0.0
    %5867 = vmatpush1.xpose.msra.mxu0 0.0
    %5868 = vmatprep.subr.mxu0 0.0
    %5869 = vmatpush1.xpose.msra.mxu0 0.0
    %5870 = vmatprep.subr.mxu0 0.0
    %5871 = vmatpush1.xpose.msra.mxu0 0.0
    %5872 = vmatprep.subr.mxu0 0.0
    %5873 = vmatpush1.xpose.msra.mxu0 0.0
    %5874 = vmatprep.subr.mxu0 0.0
    %5875 = vmatpush1.xpose.msra.mxu0 0.0
    %5876 = vmatprep.subr.mxu0 0.0
    %5877 = vmatpush1.xpose.msra.mxu0 0.0
    %5878 = vmatprep.subr.mxu0 0.0
    %5879 = vmatpush1.xpose.msra.mxu0 0.0
    %5880 = vmatprep.subr.mxu0 0.0
    %5881 = vmatpush1.xpose.msra.mxu0 0.0
    %5882 = vmatprep.subr.mxu0 0.0
    %5883 = vmatpush1.xpose.msra.mxu0 0.0
    %5884 = vmatprep.subr.mxu0 0.0
    %5885 = vmatpush1.xpose.msra.mxu0 0.0
    %5886 = vmatprep.subr.mxu0 0.0
    %5887 = vmatpush1.xpose.msra.mxu0 0.0
    %5888 = vmatprep.subr.mxu0 0.0
    %5889 = vmatpush1.xpose.msra.mxu0 0.0
    %5890 = vmatprep.subr.mxu0 0.0
    %5891 = vmatpush1.xpose.msra.mxu0 0.0
    %5892 = vmatprep.mubr.f32.mxu0 %v209
    %5893 = vmatmul.mubr.f32.gmra.mrb[0].mxu0 %v208
    %v5894 = vpop.f32.mrb[0].mxu0
    %v5895 = vadd.f32 %v5825, %v5894
    %v5896 = vpop.f32.mrb[0].mxu0
    %5897 = vdwg.mxu0
    %5898 = vmatprep.subr.mxu0 %v456
    %5899 = vmatpush1.xpose.msra.mxu0 %v455
    %5900 = vmatprep.subr.mxu0 %v701
    %5901 = vmatpush1.xpose.msra.mxu0 %v700
    %5902 = vmatprep.subr.mxu0 %v946
    %5903 = vmatpush1.xpose.msra.mxu0 %v945
    %5904 = vmatprep.subr.mxu0 %v1191
    %5905 = vmatpush1.xpose.msra.mxu0 %v1190
    %5906 = vmatprep.subr.mxu0 %v1436
    %5907 = vmatpush1.xpose.msra.mxu0 %v1435
    %5908 = vmatprep.subr.mxu0 %v1681
    %5909 = vmatpush1.xpose.msra.mxu0 %v1680
    %5910 = vmatprep.subr.mxu0 0.0
    %5911 = vmatpush1.xpose.msra.mxu0 0.0
    %5912 = vmatprep.subr.mxu0 0.0
    %5913 = vmatpush1.xpose.msra.mxu0 0.0
    %5914 = vmatprep.subr.mxu0 0.0
    %5915 = vmatpush1.xpose.msra.mxu0 0.0
    %5916 = vmatprep.subr.mxu0 0.0
    %5917 = vmatpush1.xpose.msra.mxu0 0.0
    %5918 = vmatprep.subr.mxu0 0.0
    %5919 = vmatpush1.xpose.msra.mxu0 0.0
    %5920 = vmatprep.subr.mxu0 0.0
    %5921 = vmatpush1.xpose.msra.mxu0 0.0
    %5922 = vmatprep.subr.mxu0 0.0
    %5923 = vmatpush1.xpose.msra.mxu0 0.0
    %5924 = vmatprep.subr.mxu0 0.0
    %5925 = vmatpush1.xpose.msra.mxu0 0.0
    %5926 = vmatprep.subr.mxu0 0.0
    %5927 = vmatpush1.xpose.msra.mxu0 0.0
    %5928 = vmatprep.subr.mxu0 0.0
    %5929 = vmatpush1.xpose.msra.mxu0 0.0
    %5930 = vmatprep.subr.mxu0 0.0
    %5931 = vmatpush1.xpose.msra.mxu0 0.0
    %5932 = vmatprep.subr.mxu0 0.0
    %5933 = vmatpush1.xpose.msra.mxu0 0.0
    %5934 = vmatprep.subr.mxu0 0.0
    %5935 = vmatpush1.xpose.msra.mxu0 0.0
    %5936 = vmatprep.subr.mxu0 0.0
    %5937 = vmatpush1.xpose.msra.mxu0 0.0
    %5938 = vmatprep.subr.mxu0 0.0
    %5939 = vmatpush1.xpose.msra.mxu0 0.0
    %5940 = vmatprep.subr.mxu0 0.0
    %5941 = vmatpush1.xpose.msra.mxu0 0.0
    %5942 = vmatprep.subr.mxu0 0.0
    %5943 = vmatpush1.xpose.msra.mxu0 0.0
    %5944 = vmatprep.subr.mxu0 0.0
    %5945 = vmatpush1.xpose.msra.mxu0 0.0
    %5946 = vmatprep.subr.mxu0 0.0
    %5947 = vmatpush1.xpose.msra.mxu0 0.0
    %5948 = vmatprep.subr.mxu0 0.0
    %5949 = vmatpush1.xpose.msra.mxu0 0.0
    %5950 = vmatprep.subr.mxu0 0.0
    %5951 = vmatpush1.xpose.msra.mxu0 0.0
    %5952 = vmatprep.subr.mxu0 0.0
    %5953 = vmatpush1.xpose.msra.mxu0 0.0
    %5954 = vmatprep.subr.mxu0 0.0
    %5955 = vmatpush1.xpose.msra.mxu0 0.0
    %5956 = vmatprep.subr.mxu0 0.0
    %5957 = vmatpush1.xpose.msra.mxu0 0.0
    %5958 = vmatprep.subr.mxu0 0.0
    %5959 = vmatpush1.xpose.msra.mxu0 0.0
    %5960 = vmatprep.subr.mxu0 0.0
    %5961 = vmatpush1.xpose.msra.mxu0 0.0
    %5962 = vmatprep.mubr.f32.mxu0 %v211
    %5963 = vmatmul.mubr.f32.gmra.mrb[0].mxu0 %v210
    %v5964 = vpop.f32.mrb[0].mxu0
    %v5965 = vadd.f32 %v5895, %v5964
    %v5966 = vpop.f32.mrb[0].mxu0
    %5967 = vdwg.mxu0
    %5968 = vmatprep.subr.mxu0 %v458
    %5969 = vmatpush1.xpose.msra.mxu0 %v457
    %5970 = vmatprep.subr.mxu0 %v703
    %5971 = vmatpush1.xpose.msra.mxu0 %v702
    %5972 = vmatprep.subr.mxu0 %v948
    %5973 = vmatpush1.xpose.msra.mxu0 %v947
    %5974 = vmatprep.subr.mxu0 %v1193
    %5975 = vmatpush1.xpose.msra.mxu0 %v1192
    %5976 = vmatprep.subr.mxu0 %v1438
    %5977 = vmatpush1.xpose.msra.mxu0 %v1437
    %5978 = vmatprep.subr.mxu0 %v1683
    %5979 = vmatpush1.xpose.msra.mxu0 %v1682
    %5980 = vmatprep.subr.mxu0 0.0
    %5981 = vmatpush1.xpose.msra.mxu0 0.0
    %5982 = vmatprep.subr.mxu0 0.0
    %5983 = vmatpush1.xpose.msra.mxu0 0.0
    %5984 = vmatprep.subr.mxu0 0.0
    %5985 = vmatpush1.xpose.msra.mxu0 0.0
    %5986 = vmatprep.subr.mxu0 0.0
    %5987 = vmatpush1.xpose.msra.mxu0 0.0
    %5988 = vmatprep.subr.mxu0 0.0
    %5989 = vmatpush1.xpose.msra.mxu0 0.0
    %5990 = vmatprep.subr.mxu0 0.0
    %5991 = vmatpush1.xpose.msra.mxu0 0.0
    %5992 = vmatprep.subr.mxu0 0.0
    %5993 = vmatpush1.xpose.msra.mxu0 0.0
    %5994 = vmatprep.subr.mxu0 0.0
    %5995 = vmatpush1.xpose.msra.mxu0 0.0
    %5996 = vmatprep.subr.mxu0 0.0
    %5997 = vmatpush1.xpose.msra.mxu0 0.0
    %5998 = vmatprep.subr.mxu0 0.0
    %5999 = vmatpush1.xpose.msra.mxu0 0.0
    %6000 = vmatprep.subr.mxu0 0.0
    %6001 = vmatpush1.xpose.msra.mxu0 0.0
    %6002 = vmatprep.subr.mxu0 0.0
    %6003 = vmatpush1.xpose.msra.mxu0 0.0
    %6004 = vmatprep.subr.mxu0 0.0
    %6005 = vmatpush1.xpose.msra.mxu0 0.0
    %6006 = vmatprep.subr.mxu0 0.0
    %6007 = vmatpush1.xpose.msra.mxu0 0.0
    %6008 = vmatprep.subr.mxu0 0.0
    %6009 = vmatpush1.xpose.msra.mxu0 0.0
    %6010 = vmatprep.subr.mxu0 0.0
    %6011 = vmatpush1.xpose.msra.mxu0 0.0
    %6012 = vmatprep.subr.mxu0 0.0
    %6013 = vmatpush1.xpose.msra.mxu0 0.0
    %6014 = vmatprep.subr.mxu0 0.0
    %6015 = vmatpush1.xpose.msra.mxu0 0.0
    %6016 = vmatprep.subr.mxu0 0.0
    %6017 = vmatpush1.xpose.msra.mxu0 0.0
    %6018 = vmatprep.subr.mxu0 0.0
    %6019 = vmatpush1.xpose.msra.mxu0 0.0
    %6020 = vmatprep.subr.mxu0 0.0
    %6021 = vmatpush1.xpose.msra.mxu0 0.0
    %6022 = vmatprep.subr.mxu0 0.0
    %6023 = vmatpush1.xpose.msra.mxu0 0.0
    %6024 = vmatprep.subr.mxu0 0.0
    %6025 = vmatpush1.xpose.msra.mxu0 0.0
    %6026 = vmatprep.subr.mxu0 0.0
    %6027 = vmatpush1.xpose.msra.mxu0 0.0
    %6028 = vmatprep.subr.mxu0 0.0
    %6029 = vmatpush1.xpose.msra.mxu0 0.0
    %6030 = vmatprep.subr.mxu0 0.0
    %6031 = vmatpush1.xpose.msra.mxu0 0.0
    %6032 = vmatprep.mubr.f32.mxu0 %v213
    %6033 = vmatmul.mubr.f32.gmra.mrb[0].mxu0 %v212
    %v6034 = vpop.f32.mrb[0].mxu0
    %v6035 = vadd.f32 %v5965, %v6034
    %v6036 = vpop.f32.mrb[0].mxu0
    %6037 = vdwg.mxu0
    %6038 = vmatprep.subr.mxu0 %v460
    %6039 = vmatpush1.xpose.msra.mxu0 %v459
    %6040 = vmatprep.subr.mxu0 %v705
    %6041 = vmatpush1.xpose.msra.mxu0 %v704
    %6042 = vmatprep.subr.mxu0 %v950
    %6043 = vmatpush1.xpose.msra.mxu0 %v949
    %6044 = vmatprep.subr.mxu0 %v1195
    %6045 = vmatpush1.xpose.msra.mxu0 %v1194
    %6046 = vmatprep.subr.mxu0 %v1440
    %6047 = vmatpush1.xpose.msra.mxu0 %v1439
    %6048 = vmatprep.subr.mxu0 %v1685
    %6049 = vmatpush1.xpose.msra.mxu0 %v1684
    %6050 = vmatprep.subr.mxu0 0.0
    %6051 = vmatpush1.xpose.msra.mxu0 0.0
    %6052 = vmatprep.subr.mxu0 0.0
    %6053 = vmatpush1.xpose.msra.mxu0 0.0
    %6054 = vmatprep.subr.mxu0 0.0
    %6055 = vmatpush1.xpose.msra.mxu0 0.0
    %6056 = vmatprep.subr.mxu0 0.0
    %6057 = vmatpush1.xpose.msra.mxu0 0.0
    %6058 = vmatprep.subr.mxu0 0.0
    %6059 = vmatpush1.xpose.msra.mxu0 0.0
    %6060 = vmatprep.subr.mxu0 0.0
    %6061 = vmatpush1.xpose.msra.mxu0 0.0
    %6062 = vmatprep.subr.mxu0 0.0
    %6063 = vmatpush1.xpose.msra.mxu0 0.0
    %6064 = vmatprep.subr.mxu0 0.0
    %6065 = vmatpush1.xpose.msra.mxu0 0.0
    %6066 = vmatprep.subr.mxu0 0.0
    %6067 = vmatpush1.xpose.msra.mxu0 0.0
    %6068 = vmatprep.subr.mxu0 0.0
    %6069 = vmatpush1.xpose.msra.mxu0 0.0
    %6070 = vmatprep.subr.mxu0 0.0
    %6071 = vmatpush1.xpose.msra.mxu0 0.0
    %6072 = vmatprep.subr.mxu0 0.0
    %6073 = vmatpush1.xpose.msra.mxu0 0.0
    %6074 = vmatprep.subr.mxu0 0.0
    %6075 = vmatpush1.xpose.msra.mxu0 0.0
    %6076 = vmatprep.subr.mxu0 0.0
    %6077 = vmatpush1.xpose.msra.mxu0 0.0
    %6078 = vmatprep.subr.mxu0 0.0
    %6079 = vmatpush1.xpose.msra.mxu0 0.0
    %6080 = vmatprep.subr.mxu0 0.0
    %6081 = vmatpush1.xpose.msra.mxu0 0.0
    %6082 = vmatprep.subr.mxu0 0.0
    %6083 = vmatpush1.xpose.msra.mxu0 0.0
    %6084 = vmatprep.subr.mxu0 0.0
    %6085 = vmatpush1.xpose.msra.mxu0 0.0
    %6086 = vmatprep.subr.mxu0 0.0
    %6087 = vmatpush1.xpose.msra.mxu0 0.0
    %6088 = vmatprep.subr.mxu0 0.0
    %6089 = vmatpush1.xpose.msra.mxu0 0.0
    %6090 = vmatprep.subr.mxu0 0.0
    %6091 = vmatpush1.xpose.msra.mxu0 0.0
    %6092 = vmatprep.subr.mxu0 0.0
    %6093 = vmatpush1.xpose.msra.mxu0 0.0
    %6094 = vmatprep.subr.mxu0 0.0
    %6095 = vmatpush1.xpose.msra.mxu0 0.0
    %6096 = vmatprep.subr.mxu0 0.0
    %6097 = vmatpush1.xpose.msra.mxu0 0.0
    %6098 = vmatprep.subr.mxu0 0.0
    %6099 = vmatpush1.xpose.msra.mxu0 0.0
    %6100 = vmatprep.subr.mxu0 0.0
    %6101 = vmatpush1.xpose.msra.mxu0 0.0
    %6102 = vmatprep.mubr.f32.mxu0 %v215
    %6103 = vmatmul.mubr.f32.gmra.mrb[0].mxu0 %v214
    %v6104 = vpop.f32.mrb[0].mxu0
    %v6105 = vadd.f32 %v6035, %v6104
    %v6106 = vpop.f32.mrb[0].mxu0
    %6107 = vdwg.mxu0
    %6108 = vmatprep.subr.mxu0 %v462
    %6109 = vmatpush1.xpose.msra.mxu0 %v461
    %6110 = vmatprep.subr.mxu0 %v707
    %6111 = vmatpush1.xpose.msra.mxu0 %v706
    %6112 = vmatprep.subr.mxu0 %v952
    %6113 = vmatpush1.xpose.msra.mxu0 %v951
    %6114 = vmatprep.subr.mxu0 %v1197
    %6115 = vmatpush1.xpose.msra.mxu0 %v1196
    %6116 = vmatprep.subr.mxu0 %v1442
    %6117 = vmatpush1.xpose.msra.mxu0 %v1441
    %6118 = vmatprep.subr.mxu0 %v1687
    %6119 = vmatpush1.xpose.msra.mxu0 %v1686
    %6120 = vmatprep.subr.mxu0 0.0
    %6121 = vmatpush1.xpose.msra.mxu0 0.0
    %6122 = vmatprep.subr.mxu0 0.0
    %6123 = vmatpush1.xpose.msra.mxu0 0.0
    %6124 = vmatprep.subr.mxu0 0.0
    %6125 = vmatpush1.xpose.msra.mxu0 0.0
    %6126 = vmatprep.subr.mxu0 0.0
    %6127 = vmatpush1.xpose.msra.mxu0 0.0
    %6128 = vmatprep.subr.mxu0 0.0
    %6129 = vmatpush1.xpose.msra.mxu0 0.0
    %6130 = vmatprep.subr.mxu0 0.0
    %6131 = vmatpush1.xpose.msra.mxu0 0.0
    %6132 = vmatprep.subr.mxu0 0.0
    %6133 = vmatpush1.xpose.msra.mxu0 0.0
    %6134 = vmatprep.subr.mxu0 0.0
    %6135 = vmatpush1.xpose.msra.mxu0 0.0
    %6136 = vmatprep.subr.mxu0 0.0
    %6137 = vmatpush1.xpose.msra.mxu0 0.0
    %6138 = vmatprep.subr.mxu0 0.0
    %6139 = vmatpush1.xpose.msra.mxu0 0.0
    %6140 = vmatprep.subr.mxu0 0.0
    %6141 = vmatpush1.xpose.msra.mxu0 0.0
    %6142 = vmatprep.subr.mxu0 0.0
    %6143 = vmatpush1.xpose.msra.mxu0 0.0
    %6144 = vmatprep.subr.mxu0 0.0
    %6145 = vmatpush1.xpose.msra.mxu0 0.0
    %6146 = vmatprep.subr.mxu0 0.0
    %6147 = vmatpush1.xpose.msra.mxu0 0.0
    %6148 = vmatprep.subr.mxu0 0.0
    %6149 = vmatpush1.xpose.msra.mxu0 0.0
    %6150 = vmatprep.subr.mxu0 0.0
    %6151 = vmatpush1.xpose.msra.mxu0 0.0
    %6152 = vmatprep.subr.mxu0 0.0
    %6153 = vmatpush1.xpose.msra.mxu0 0.0
    %6154 = vmatprep.subr.mxu0 0.0
    %6155 = vmatpush1.xpose.msra.mxu0 0.0
    %6156 = vmatprep.subr.mxu0 0.0
    %6157 = vmatpush1.xpose.msra.mxu0 0.0
    %6158 = vmatprep.subr.mxu0 0.0
    %6159 = vmatpush1.xpose.msra.mxu0 0.0
    %6160 = vmatprep.subr.mxu0 0.0
    %6161 = vmatpush1.xpose.msra.mxu0 0.0
    %6162 = vmatprep.subr.mxu0 0.0
    %6163 = vmatpush1.xpose.msra.mxu0 0.0
    %6164 = vmatprep.subr.mxu0 0.0
    %6165 = vmatpush1.xpose.msra.mxu0 0.0
    %6166 = vmatprep.subr.mxu0 0.0
    %6167 = vmatpush1.xpose.msra.mxu0 0.0
    %6168 = vmatprep.subr.mxu0 0.0
    %6169 = vmatpush1.xpose.msra.mxu0 0.0
    %6170 = vmatprep.subr.mxu0 0.0
    %6171 = vmatpush1.xpose.msra.mxu0 0.0
    %6172 = vmatprep.mubr.f32.mxu0 %v217
    %6173 = vmatmul.mubr.f32.gmra.mrb[0].mxu0 %v216
    %v6174 = vpop.f32.mrb[0].mxu0
    %v6175 = vadd.f32 %v6105, %v6174
    %v6176 = vpop.f32.mrb[0].mxu0
    %6177 = vdwg.mxu0
    %6178 = vmatprep.subr.mxu0 %v464
    %6179 = vmatpush1.xpose.msra.mxu0 %v463
    %6180 = vmatprep.subr.mxu0 %v709
    %6181 = vmatpush1.xpose.msra.mxu0 %v708
    %6182 = vmatprep.subr.mxu0 %v954
    %6183 = vmatpush1.xpose.msra.mxu0 %v953
    %6184 = vmatprep.subr.mxu0 %v1199
    %6185 = vmatpush1.xpose.msra.mxu0 %v1198
    %6186 = vmatprep.subr.mxu0 %v1444
    %6187 = vmatpush1.xpose.msra.mxu0 %v1443
    %6188 = vmatprep.subr.mxu0 %v1689
    %6189 = vmatpush1.xpose.msra.mxu0 %v1688
    %6190 = vmatprep.subr.mxu0 0.0
    %6191 = vmatpush1.xpose.msra.mxu0 0.0
    %6192 = vmatprep.subr.mxu0 0.0
    %6193 = vmatpush1.xpose.msra.mxu0 0.0
    %6194 = vmatprep.subr.mxu0 0.0
    %6195 = vmatpush1.xpose.msra.mxu0 0.0
    %6196 = vmatprep.subr.mxu0 0.0
    %6197 = vmatpush1.xpose.msra.mxu0 0.0
    %6198 = vmatprep.subr.mxu0 0.0
    %6199 = vmatpush1.xpose.msra.mxu0 0.0
    %6200 = vmatprep.subr.mxu0 0.0
    %6201 = vmatpush1.xpose.msra.mxu0 0.0
    %6202 = vmatprep.subr.mxu0 0.0
    %6203 = vmatpush1.xpose.msra.mxu0 0.0
    %6204 = vmatprep.subr.mxu0 0.0
    %6205 = vmatpush1.xpose.msra.mxu0 0.0
    %6206 = vmatprep.subr.mxu0 0.0
    %6207 = vmatpush1.xpose.msra.mxu0 0.0
    %6208 = vmatprep.subr.mxu0 0.0
    %6209 = vmatpush1.xpose.msra.mxu0 0.0
    %6210 = vmatprep.subr.mxu0 0.0
    %6211 = vmatpush1.xpose.msra.mxu0 0.0
    %6212 = vmatprep.subr.mxu0 0.0
    %6213 = vmatpush1.xpose.msra.mxu0 0.0
    %6214 = vmatprep.subr.mxu0 0.0
    %6215 = vmatpush1.xpose.msra.mxu0 0.0
    %6216 = vmatprep.subr.mxu0 0.0
    %6217 = vmatpush1.xpose.msra.mxu0 0.0
    %6218 = vmatprep.subr.mxu0 0.0
    %6219 = vmatpush1.xpose.msra.mxu0 0.0
    %6220 = vmatprep.subr.mxu0 0.0
    %6221 = vmatpush1.xpose.msra.mxu0 0.0
    %6222 = vmatprep.subr.mxu0 0.0
    %6223 = vmatpush1.xpose.msra.mxu0 0.0
    %6224 = vmatprep.subr.mxu0 0.0
    %6225 = vmatpush1.xpose.msra.mxu0 0.0
    %6226 = vmatprep.subr.mxu0 0.0
    %6227 = vmatpush1.xpose.msra.mxu0 0.0
    %6228 = vmatprep.subr.mxu0 0.0
    %6229 = vmatpush1.xpose.msra.mxu0 0.0
    %6230 = vmatprep.subr.mxu0 0.0
    %6231 = vmatpush1.xpose.msra.mxu0 0.0
    %6232 = vmatprep.subr.mxu0 0.0
    %6233 = vmatpush1.xpose.msra.mxu0 0.0
    %6234 = vmatprep.subr.mxu0 0.0
    %6235 = vmatpush1.xpose.msra.mxu0 0.0
    %6236 = vmatprep.subr.mxu0 0.0
    %6237 = vmatpush1.xpose.msra.mxu0 0.0
    %6238 = vmatprep.subr.mxu0 0.0
    %6239 = vmatpush1.xpose.msra.mxu0 0.0
    %6240 = vmatprep.subr.mxu0 0.0
    %6241 = vmatpush1.xpose.msra.mxu0 0.0
    %6242 = vmatprep.mubr.f32.mxu0 %v219
    %6243 = vmatmul.mubr.f32.gmra.mrb[0].mxu0 %v218
    %v6244 = vpop.f32.mrb[0].mxu0
    %v6245 = vadd.f32 %v6175, %v6244
    %v6246 = vpop.f32.mrb[0].mxu0
    %6247 = vdwg.mxu0
    %6248 = vmatprep.subr.mxu0 %v466
    %6249 = vmatpush1.xpose.msra.mxu0 %v465
    %6250 = vmatprep.subr.mxu0 %v711
    %6251 = vmatpush1.xpose.msra.mxu0 %v710
    %6252 = vmatprep.subr.mxu0 %v956
    %6253 = vmatpush1.xpose.msra.mxu0 %v955
    %6254 = vmatprep.subr.mxu0 %v1201
    %6255 = vmatpush1.xpose.msra.mxu0 %v1200
    %6256 = vmatprep.subr.mxu0 %v1446
    %6257 = vmatpush1.xpose.msra.mxu0 %v1445
    %6258 = vmatprep.subr.mxu0 %v1691
    %6259 = vmatpush1.xpose.msra.mxu0 %v1690
    %6260 = vmatprep.subr.mxu0 0.0
    %6261 = vmatpush1.xpose.msra.mxu0 0.0
    %6262 = vmatprep.subr.mxu0 0.0
    %6263 = vmatpush1.xpose.msra.mxu0 0.0
    %6264 = vmatprep.subr.mxu0 0.0
    %6265 = vmatpush1.xpose.msra.mxu0 0.0
    %6266 = vmatprep.subr.mxu0 0.0
    %6267 = vmatpush1.xpose.msra.mxu0 0.0
    %6268 = vmatprep.subr.mxu0 0.0
    %6269 = vmatpush1.xpose.msra.mxu0 0.0
    %6270 = vmatprep.subr.mxu0 0.0
    %6271 = vmatpush1.xpose.msra.mxu0 0.0
    %6272 = vmatprep.subr.mxu0 0.0
    %6273 = vmatpush1.xpose.msra.mxu0 0.0
    %6274 = vmatprep.subr.mxu0 0.0
    %6275 = vmatpush1.xpose.msra.mxu0 0.0
    %6276 = vmatprep.subr.mxu0 0.0
    %6277 = vmatpush1.xpose.msra.mxu0 0.0
    %6278 = vmatprep.subr.mxu0 0.0
    %6279 = vmatpush1.xpose.msra.mxu0 0.0
    %6280 = vmatprep.subr.mxu0 0.0
    %6281 = vmatpush1.xpose.msra.mxu0 0.0
    %6282 = vmatprep.subr.mxu0 0.0
    %6283 = vmatpush1.xpose.msra.mxu0 0.0
    %6284 = vmatprep.subr.mxu0 0.0
    %6285 = vmatpush1.xpose.msra.mxu0 0.0
    %6286 = vmatprep.subr.mxu0 0.0
    %6287 = vmatpush1.xpose.msra.mxu0 0.0
    %6288 = vmatprep.subr.mxu0 0.0
    %6289 = vmatpush1.xpose.msra.mxu0 0.0
    %6290 = vmatprep.subr.mxu0 0.0
    %6291 = vmatpush1.xpose.msra.mxu0 0.0
    %6292 = vmatprep.subr.mxu0 0.0
    %6293 = vmatpush1.xpose.msra.mxu0 0.0
    %6294 = vmatprep.subr.mxu0 0.0
    %6295 = vmatpush1.xpose.msra.mxu0 0.0
    %6296 = vmatprep.subr.mxu0 0.0
    %6297 = vmatpush1.xpose.msra.mxu0 0.0
    %6298 = vmatprep.subr.mxu0 0.0
    %6299 = vmatpush1.xpose.msra.mxu0 0.0
    %6300 = vmatprep.subr.mxu0 0.0
    %6301 = vmatpush1.xpose.msra.mxu0 0.0
    %6302 = vmatprep.subr.mxu0 0.0
    %6303 = vmatpush1.xpose.msra.mxu0 0.0
    %6304 = vmatprep.subr.mxu0 0.0
    %6305 = vmatpush1.xpose.msra.mxu0 0.0
    %6306 = vmatprep.subr.mxu0 0.0
    %6307 = vmatpush1.xpose.msra.mxu0 0.0
    %6308 = vmatprep.subr.mxu0 0.0
    %6309 = vmatpush1.xpose.msra.mxu0 0.0
    %6310 = vmatprep.subr.mxu0 0.0
    %6311 = vmatpush1.xpose.msra.mxu0 0.0
    %6312 = vmatprep.mubr.f32.mxu0 %v221
    %6313 = vmatmul.mubr.f32.gmra.mrb[0].mxu0 %v220
    %v6314 = vpop.f32.mrb[0].mxu0
    %v6315 = vadd.f32 %v6245, %v6314
    %v6316 = vpop.f32.mrb[0].mxu0
    %6317 = vdwg.mxu0
    %6318 = vmatprep.subr.mxu0 %v468
    %6319 = vmatpush1.xpose.msra.mxu0 %v467
    %6320 = vmatprep.subr.mxu0 %v713
    %6321 = vmatpush1.xpose.msra.mxu0 %v712
    %6322 = vmatprep.subr.mxu0 %v958
    %6323 = vmatpush1.xpose.msra.mxu0 %v957
    %6324 = vmatprep.subr.mxu0 %v1203
    %6325 = vmatpush1.xpose.msra.mxu0 %v1202
    %6326 = vmatprep.subr.mxu0 %v1448
    %6327 = vmatpush1.xpose.msra.mxu0 %v1447
    %6328 = vmatprep.subr.mxu0 %v1693
    %6329 = vmatpush1.xpose.msra.mxu0 %v1692
    %6330 = vmatprep.subr.mxu0 0.0
    %6331 = vmatpush1.xpose.msra.mxu0 0.0
    %6332 = vmatprep.subr.mxu0 0.0
    %6333 = vmatpush1.xpose.msra.mxu0 0.0
    %6334 = vmatprep.subr.mxu0 0.0
    %6335 = vmatpush1.xpose.msra.mxu0 0.0
    %6336 = vmatprep.subr.mxu0 0.0
    %6337 = vmatpush1.xpose.msra.mxu0 0.0
    %6338 = vmatprep.subr.mxu0 0.0
    %6339 = vmatpush1.xpose.msra.mxu0 0.0
    %6340 = vmatprep.subr.mxu0 0.0
    %6341 = vmatpush1.xpose.msra.mxu0 0.0
    %6342 = vmatprep.subr.mxu0 0.0
    %6343 = vmatpush1.xpose.msra.mxu0 0.0
    %6344 = vmatprep.subr.mxu0 0.0
    %6345 = vmatpush1.xpose.msra.mxu0 0.0
    %6346 = vmatprep.subr.mxu0 0.0
    %6347 = vmatpush1.xpose.msra.mxu0 0.0
    %6348 = vmatprep.subr.mxu0 0.0
    %6349 = vmatpush1.xpose.msra.mxu0 0.0
    %6350 = vmatprep.subr.mxu0 0.0
    %6351 = vmatpush1.xpose.msra.mxu0 0.0
    %6352 = vmatprep.subr.mxu0 0.0
    %6353 = vmatpush1.xpose.msra.mxu0 0.0
    %6354 = vmatprep.subr.mxu0 0.0
    %6355 = vmatpush1.xpose.msra.mxu0 0.0
    %6356 = vmatprep.subr.mxu0 0.0
    %6357 = vmatpush1.xpose.msra.mxu0 0.0
    %6358 = vmatprep.subr.mxu0 0.0
    %6359 = vmatpush1.xpose.msra.mxu0 0.0
    %6360 = vmatprep.subr.mxu0 0.0
    %6361 = vmatpush1.xpose.msra.mxu0 0.0
    %6362 = vmatprep.subr.mxu0 0.0
    %6363 = vmatpush1.xpose.msra.mxu0 0.0
    %6364 = vmatprep.subr.mxu0 0.0
    %6365 = vmatpush1.xpose.msra.mxu0 0.0
    %6366 = vmatprep.subr.mxu0 0.0
    %6367 = vmatpush1.xpose.msra.mxu0 0.0
    %6368 = vmatprep.subr.mxu0 0.0
    %6369 = vmatpush1.xpose.msra.mxu0 0.0
    %6370 = vmatprep.subr.mxu0 0.0
    %6371 = vmatpush1.xpose.msra.mxu0 0.0
    %6372 = vmatprep.subr.mxu0 0.0
    %6373 = vmatpush1.xpose.msra.mxu0 0.0
    %6374 = vmatprep.subr.mxu0 0.0
    %6375 = vmatpush1.xpose.msra.mxu0 0.0
    %6376 = vmatprep.subr.mxu0 0.0
    %6377 = vmatpush1.xpose.msra.mxu0 0.0
    %6378 = vmatprep.subr.mxu0 0.0
    %6379 = vmatpush1.xpose.msra.mxu0 0.0
    %6380 = vmatprep.subr.mxu0 0.0
    %6381 = vmatpush1.xpose.msra.mxu0 0.0
    %6382 = vmatprep.mubr.f32.mxu0 %v223
    %6383 = vmatmul.mubr.f32.gmra.mrb[0].mxu0 %v222
    %v6384 = vpop.f32.mrb[0].mxu0
    %v6385 = vadd.f32 %v6315, %v6384
    %v6386 = vpop.f32.mrb[0].mxu0
    %6387 = vdwg.mxu0
    %6388 = vmatprep.subr.mxu0 %v470
    %6389 = vmatpush1.xpose.msra.mxu0 %v469
    %6390 = vmatprep.subr.mxu0 %v715
    %6391 = vmatpush1.xpose.msra.mxu0 %v714
    %6392 = vmatprep.subr.mxu0 %v960
    %6393 = vmatpush1.xpose.msra.mxu0 %v959
    %6394 = vmatprep.subr.mxu0 %v1205
    %6395 = vmatpush1.xpose.msra.mxu0 %v1204
    %6396 = vmatprep.subr.mxu0 %v1450
    %6397 = vmatpush1.xpose.msra.mxu0 %v1449
    %6398 = vmatprep.subr.mxu0 %v1695
    %6399 = vmatpush1.xpose.msra.mxu0 %v1694
    %6400 = vmatprep.subr.mxu0 0.0
    %6401 = vmatpush1.xpose.msra.mxu0 0.0
    %6402 = vmatprep.subr.mxu0 0.0
    %6403 = vmatpush1.xpose.msra.mxu0 0.0
    %6404 = vmatprep.subr.mxu0 0.0
    %6405 = vmatpush1.xpose.msra.mxu0 0.0
    %6406 = vmatprep.subr.mxu0 0.0
    %6407 = vmatpush1.xpose.msra.mxu0 0.0
    %6408 = vmatprep.subr.mxu0 0.0
    %6409 = vmatpush1.xpose.msra.mxu0 0.0
    %6410 = vmatprep.subr.mxu0 0.0
    %6411 = vmatpush1.xpose.msra.mxu0 0.0
    %6412 = vmatprep.subr.mxu0 0.0
    %6413 = vmatpush1.xpose.msra.mxu0 0.0
    %6414 = vmatprep.subr.mxu0 0.0
    %6415 = vmatpush1.xpose.msra.mxu0 0.0
    %6416 = vmatprep.subr.mxu0 0.0
    %6417 = vmatpush1.xpose.msra.mxu0 0.0
    %6418 = vmatprep.subr.mxu0 0.0
    %6419 = vmatpush1.xpose.msra.mxu0 0.0
    %6420 = vmatprep.subr.mxu0 0.0
    %6421 = vmatpush1.xpose.msra.mxu0 0.0
    %6422 = vmatprep.subr.mxu0 0.0
    %6423 = vmatpush1.xpose.msra.mxu0 0.0
    %6424 = vmatprep.subr.mxu0 0.0
    %6425 = vmatpush1.xpose.msra.mxu0 0.0
    %6426 = vmatprep.subr.mxu0 0.0
    %6427 = vmatpush1.xpose.msra.mxu0 0.0
    %6428 = vmatprep.subr.mxu0 0.0
    %6429 = vmatpush1.xpose.msra.mxu0 0.0
    %6430 = vmatprep.subr.mxu0 0.0
    %6431 = vmatpush1.xpose.msra.mxu0 0.0
    %6432 = vmatprep.subr.mxu0 0.0
    %6433 = vmatpush1.xpose.msra.mxu0 0.0
    %6434 = vmatprep.subr.mxu0 0.0
    %6435 = vmatpush1.xpose.msra.mxu0 0.0
    %6436 = vmatprep.subr.mxu0 0.0
    %6437 = vmatpush1.xpose.msra.mxu0 0.0
    %6438 = vmatprep.subr.mxu0 0.0
    %6439 = vmatpush1.xpose.msra.mxu0 0.0
    %6440 = vmatprep.subr.mxu0 0.0
    %6441 = vmatpush1.xpose.msra.mxu0 0.0
    %6442 = vmatprep.subr.mxu0 0.0
    %6443 = vmatpush1.xpose.msra.mxu0 0.0
    %6444 = vmatprep.subr.mxu0 0.0
    %6445 = vmatpush1.xpose.msra.mxu0 0.0
    %6446 = vmatprep.subr.mxu0 0.0
    %6447 = vmatpush1.xpose.msra.mxu0 0.0
    %6448 = vmatprep.subr.mxu0 0.0
    %6449 = vmatpush1.xpose.msra.mxu0 0.0
    %6450 = vmatprep.subr.mxu0 0.0
    %6451 = vmatpush1.xpose.msra.mxu0 0.0
    %6452 = vmatprep.mubr.f32.mxu0 %v225
    %6453 = vmatmul.mubr.f32.gmra.mrb[0].mxu0 %v224
    %v6454 = vpop.f32.mrb[0].mxu0
    %v6455 = vadd.f32 %v6385, %v6454
    %v6456 = vpop.f32.mrb[0].mxu0
    %6457 = vdwg.mxu0
    %6458 = vmatprep.subr.mxu0 %v472
    %6459 = vmatpush1.xpose.msra.mxu0 %v471
    %6460 = vmatprep.subr.mxu0 %v717
    %6461 = vmatpush1.xpose.msra.mxu0 %v716
    %6462 = vmatprep.subr.mxu0 %v962
    %6463 = vmatpush1.xpose.msra.mxu0 %v961
    %6464 = vmatprep.subr.mxu0 %v1207
    %6465 = vmatpush1.xpose.msra.mxu0 %v1206
    %6466 = vmatprep.subr.mxu0 %v1452
    %6467 = vmatpush1.xpose.msra.mxu0 %v1451
    %6468 = vmatprep.subr.mxu0 %v1697
    %6469 = vmatpush1.xpose.msra.mxu0 %v1696
    %6470 = vmatprep.subr.mxu0 0.0
    %6471 = vmatpush1.xpose.msra.mxu0 0.0
    %6472 = vmatprep.subr.mxu0 0.0
    %6473 = vmatpush1.xpose.msra.mxu0 0.0
    %6474 = vmatprep.subr.mxu0 0.0
    %6475 = vmatpush1.xpose.msra.mxu0 0.0
    %6476 = vmatprep.subr.mxu0 0.0
    %6477 = vmatpush1.xpose.msra.mxu0 0.0
    %6478 = vmatprep.subr.mxu0 0.0
    %6479 = vmatpush1.xpose.msra.mxu0 0.0
    %6480 = vmatprep.subr.mxu0 0.0
    %6481 = vmatpush1.xpose.msra.mxu0 0.0
    %6482 = vmatprep.subr.mxu0 0.0
    %6483 = vmatpush1.xpose.msra.mxu0 0.0
    %6484 = vmatprep.subr.mxu0 0.0
    %6485 = vmatpush1.xpose.msra.mxu0 0.0
    %6486 = vmatprep.subr.mxu0 0.0
    %6487 = vmatpush1.xpose.msra.mxu0 0.0
    %6488 = vmatprep.subr.mxu0 0.0
    %6489 = vmatpush1.xpose.msra.mxu0 0.0
    %6490 = vmatprep.subr.mxu0 0.0
    %6491 = vmatpush1.xpose.msra.mxu0 0.0
    %6492 = vmatprep.subr.mxu0 0.0
    %6493 = vmatpush1.xpose.msra.mxu0 0.0
    %6494 = vmatprep.subr.mxu0 0.0
    %6495 = vmatpush1.xpose.msra.mxu0 0.0
    %6496 = vmatprep.subr.mxu0 0.0
    %6497 = vmatpush1.xpose.msra.mxu0 0.0
    %6498 = vmatprep.subr.mxu0 0.0
    %6499 = vmatpush1.xpose.msra.mxu0 0.0
    %6500 = vmatprep.subr.mxu0 0.0
    %6501 = vmatpush1.xpose.msra.mxu0 0.0
    %6502 = vmatprep.subr.mxu0 0.0
    %6503 = vmatpush1.xpose.msra.mxu0 0.0
    %6504 = vmatprep.subr.mxu0 0.0
    %6505 = vmatpush1.xpose.msra.mxu0 0.0
    %6506 = vmatprep.subr.mxu0 0.0
    %6507 = vmatpush1.xpose.msra.mxu0 0.0
    %6508 = vmatprep.subr.mxu0 0.0
    %6509 = vmatpush1.xpose.msra.mxu0 0.0
    %6510 = vmatprep.subr.mxu0 0.0
    %6511 = vmatpush1.xpose.msra.mxu0 0.0
    %6512 = vmatprep.subr.mxu0 0.0
    %6513 = vmatpush1.xpose.msra.mxu0 0.0
    %6514 = vmatprep.subr.mxu0 0.0
    %6515 = vmatpush1.xpose.msra.mxu0 0.0
    %6516 = vmatprep.subr.mxu0 0.0
    %6517 = vmatpush1.xpose.msra.mxu0 0.0
    %6518 = vmatprep.subr.mxu0 0.0
    %6519 = vmatpush1.xpose.msra.mxu0 0.0
    %6520 = vmatprep.subr.mxu0 0.0
    %6521 = vmatpush1.xpose.msra.mxu0 0.0
    %6522 = vmatprep.mubr.f32.mxu0 %v227
    %6523 = vmatmul.mubr.f32.gmra.mrb[0].mxu0 %v226
    %v6524 = vpop.f32.mrb[0].mxu0
    %v6525 = vadd.f32 %v6455, %v6524
    %v6526 = vpop.f32.mrb[0].mxu0
    %6527 = vdwg.mxu0
    %6528 = vmatprep.subr.mxu0 %v474
    %6529 = vmatpush1.xpose.msra.mxu0 %v473
    %6530 = vmatprep.subr.mxu0 %v719
    %6531 = vmatpush1.xpose.msra.mxu0 %v718
    %6532 = vmatprep.subr.mxu0 %v964
    %6533 = vmatpush1.xpose.msra.mxu0 %v963
    %6534 = vmatprep.subr.mxu0 %v1209
    %6535 = vmatpush1.xpose.msra.mxu0 %v1208
    %6536 = vmatprep.subr.mxu0 %v1454
    %6537 = vmatpush1.xpose.msra.mxu0 %v1453
    %6538 = vmatprep.subr.mxu0 %v1699
    %6539 = vmatpush1.xpose.msra.mxu0 %v1698
    %6540 = vmatprep.subr.mxu0 0.0
    %6541 = vmatpush1.xpose.msra.mxu0 0.0
    %6542 = vmatprep.subr.mxu0 0.0
    %6543 = vmatpush1.xpose.msra.mxu0 0.0
    %6544 = vmatprep.subr.mxu0 0.0
    %6545 = vmatpush1.xpose.msra.mxu0 0.0
    %6546 = vmatprep.subr.mxu0 0.0
    %6547 = vmatpush1.xpose.msra.mxu0 0.0
    %6548 = vmatprep.subr.mxu0 0.0
    %6549 = vmatpush1.xpose.msra.mxu0 0.0
    %6550 = vmatprep.subr.mxu0 0.0
    %6551 = vmatpush1.xpose.msra.mxu0 0.0
    %6552 = vmatprep.subr.mxu0 0.0
    %6553 = vmatpush1.xpose.msra.mxu0 0.0
    %6554 = vmatprep.subr.mxu0 0.0
    %6555 = vmatpush1.xpose.msra.mxu0 0.0
    %6556 = vmatprep.subr.mxu0 0.0
    %6557 = vmatpush1.xpose.msra.mxu0 0.0
    %6558 = vmatprep.subr.mxu0 0.0
    %6559 = vmatpush1.xpose.msra.mxu0 0.0
    %6560 = vmatprep.subr.mxu0 0.0
    %6561 = vmatpush1.xpose.msra.mxu0 0.0
    %6562 = vmatprep.subr.mxu0 0.0
    %6563 = vmatpush1.xpose.msra.mxu0 0.0
    %6564 = vmatprep.subr.mxu0 0.0
    %6565 = vmatpush1.xpose.msra.mxu0 0.0
    %6566 = vmatprep.subr.mxu0 0.0
    %6567 = vmatpush1.xpose.msra.mxu0 0.0
    %6568 = vmatprep.subr.mxu0 0.0
    %6569 = vmatpush1.xpose.msra.mxu0 0.0
    %6570 = vmatprep.subr.mxu0 0.0
    %6571 = vmatpush1.xpose.msra.mxu0 0.0
    %6572 = vmatprep.subr.mxu0 0.0
    %6573 = vmatpush1.xpose.msra.mxu0 0.0
    %6574 = vmatprep.subr.mxu0 0.0
    %6575 = vmatpush1.xpose.msra.mxu0 0.0
    %6576 = vmatprep.subr.mxu0 0.0
    %6577 = vmatpush1.xpose.msra.mxu0 0.0
    %6578 = vmatprep.subr.mxu0 0.0
    %6579 = vmatpush1.xpose.msra.mxu0 0.0
    %6580 = vmatprep.subr.mxu0 0.0
    %6581 = vmatpush1.xpose.msra.mxu0 0.0
    %6582 = vmatprep.subr.mxu0 0.0
    %6583 = vmatpush1.xpose.msra.mxu0 0.0
    %6584 = vmatprep.subr.mxu0 0.0
    %6585 = vmatpush1.xpose.msra.mxu0 0.0
    %6586 = vmatprep.subr.mxu0 0.0
    %6587 = vmatpush1.xpose.msra.mxu0 0.0
    %6588 = vmatprep.subr.mxu0 0.0
    %6589 = vmatpush1.xpose.msra.mxu0 0.0
    %6590 = vmatprep.subr.mxu0 0.0
    %6591 = vmatpush1.xpose.msra.mxu0 0.0
    %6592 = vmatprep.mubr.f32.mxu0 %v229
    %6593 = vmatmul.mubr.f32.gmra.mrb[0].mxu0 %v228
    %v6594 = vpop.f32.mrb[0].mxu0
    %v6595 = vadd.f32 %v6525, %v6594
    %v6596 = vpop.f32.mrb[0].mxu0
    %6597 = vdwg.mxu0
    %6598 = vmatprep.subr.mxu0 %v476
    %6599 = vmatpush1.xpose.msra.mxu0 %v475
    %6600 = vmatprep.subr.mxu0 %v721
    %6601 = vmatpush1.xpose.msra.mxu0 %v720
    %6602 = vmatprep.subr.mxu0 %v966
    %6603 = vmatpush1.xpose.msra.mxu0 %v965
    %6604 = vmatprep.subr.mxu0 %v1211
    %6605 = vmatpush1.xpose.msra.mxu0 %v1210
    %6606 = vmatprep.subr.mxu0 %v1456
    %6607 = vmatpush1.xpose.msra.mxu0 %v1455
    %6608 = vmatprep.subr.mxu0 %v1701
    %6609 = vmatpush1.xpose.msra.mxu0 %v1700
    %6610 = vmatprep.subr.mxu0 0.0
    %6611 = vmatpush1.xpose.msra.mxu0 0.0
    %6612 = vmatprep.subr.mxu0 0.0
    %6613 = vmatpush1.xpose.msra.mxu0 0.0
    %6614 = vmatprep.subr.mxu0 0.0
    %6615 = vmatpush1.xpose.msra.mxu0 0.0
    %6616 = vmatprep.subr.mxu0 0.0
    %6617 = vmatpush1.xpose.msra.mxu0 0.0
    %6618 = vmatprep.subr.mxu0 0.0
    %6619 = vmatpush1.xpose.msra.mxu0 0.0
    %6620 = vmatprep.subr.mxu0 0.0
    %6621 = vmatpush1.xpose.msra.mxu0 0.0
    %6622 = vmatprep.subr.mxu0 0.0
    %6623 = vmatpush1.xpose.msra.mxu0 0.0
    %6624 = vmatprep.subr.mxu0 0.0
    %6625 = vmatpush1.xpose.msra.mxu0 0.0
    %6626 = vmatprep.subr.mxu0 0.0
    %6627 = vmatpush1.xpose.msra.mxu0 0.0
    %6628 = vmatprep.subr.mxu0 0.0
    %6629 = vmatpush1.xpose.msra.mxu0 0.0
    %6630 = vmatprep.subr.mxu0 0.0
    %6631 = vmatpush1.xpose.msra.mxu0 0.0
    %6632 = vmatprep.subr.mxu0 0.0
    %6633 = vmatpush1.xpose.msra.mxu0 0.0
    %6634 = vmatprep.subr.mxu0 0.0
    %6635 = vmatpush1.xpose.msra.mxu0 0.0
    %6636 = vmatprep.subr.mxu0 0.0
    %6637 = vmatpush1.xpose.msra.mxu0 0.0
    %6638 = vmatprep.subr.mxu0 0.0
    %6639 = vmatpush1.xpose.msra.mxu0 0.0
    %6640 = vmatprep.subr.mxu0 0.0
    %6641 = vmatpush1.xpose.msra.mxu0 0.0
    %6642 = vmatprep.subr.mxu0 0.0
    %6643 = vmatpush1.xpose.msra.mxu0 0.0
    %6644 = vmatprep.subr.mxu0 0.0
    %6645 = vmatpush1.xpose.msra.mxu0 0.0
    %6646 = vmatprep.subr.mxu0 0.0
    %6647 = vmatpush1.xpose.msra.mxu0 0.0
    %6648 = vmatprep.subr.mxu0 0.0
    %6649 = vmatpush1.xpose.msra.mxu0 0.0
    %6650 = vmatprep.subr.mxu0 0.0
    %6651 = vmatpush1.xpose.msra.mxu0 0.0
    %6652 = vmatprep.subr.mxu0 0.0
    %6653 = vmatpush1.xpose.msra.mxu0 0.0
    %6654 = vmatprep.subr.mxu0 0.0
    %6655 = vmatpush1.xpose.msra.mxu0 0.0
    %6656 = vmatprep.subr.mxu0 0.0
    %6657 = vmatpush1.xpose.msra.mxu0 0.0
    %6658 = vmatprep.subr.mxu0 0.0
    %6659 = vmatpush1.xpose.msra.mxu0 0.0
    %6660 = vmatprep.subr.mxu0 0.0
    %6661 = vmatpush1.xpose.msra.mxu0 0.0
    %6662 = vmatprep.mubr.f32.mxu0 %v231
    %6663 = vmatmul.mubr.f32.gmra.mrb[0].mxu0 %v230
    %v6664 = vpop.f32.mrb[0].mxu0
    %v6665 = vadd.f32 %v6595, %v6664
    %v6666 = vpop.f32.mrb[0].mxu0
    %6667 = vdwg.mxu0
    %6668 = vmatprep.subr.mxu0 %v478
    %6669 = vmatpush1.xpose.msra.mxu0 %v477
    %6670 = vmatprep.subr.mxu0 %v723
    %6671 = vmatpush1.xpose.msra.mxu0 %v722
    %6672 = vmatprep.subr.mxu0 %v968
    %6673 = vmatpush1.xpose.msra.mxu0 %v967
    %6674 = vmatprep.subr.mxu0 %v1213
    %6675 = vmatpush1.xpose.msra.mxu0 %v1212
    %6676 = vmatprep.subr.mxu0 %v1458
    %6677 = vmatpush1.xpose.msra.mxu0 %v1457
    %6678 = vmatprep.subr.mxu0 %v1703
    %6679 = vmatpush1.xpose.msra.mxu0 %v1702
    %6680 = vmatprep.subr.mxu0 0.0
    %6681 = vmatpush1.xpose.msra.mxu0 0.0
    %6682 = vmatprep.subr.mxu0 0.0
    %6683 = vmatpush1.xpose.msra.mxu0 0.0
    %6684 = vmatprep.subr.mxu0 0.0
    %6685 = vmatpush1.xpose.msra.mxu0 0.0
    %6686 = vmatprep.subr.mxu0 0.0
    %6687 = vmatpush1.xpose.msra.mxu0 0.0
    %6688 = vmatprep.subr.mxu0 0.0
    %6689 = vmatpush1.xpose.msra.mxu0 0.0
    %6690 = vmatprep.subr.mxu0 0.0
    %6691 = vmatpush1.xpose.msra.mxu0 0.0
    %6692 = vmatprep.subr.mxu0 0.0
    %6693 = vmatpush1.xpose.msra.mxu0 0.0
    %6694 = vmatprep.subr.mxu0 0.0
    %6695 = vmatpush1.xpose.msra.mxu0 0.0
    %6696 = vmatprep.subr.mxu0 0.0
    %6697 = vmatpush1.xpose.msra.mxu0 0.0
    %6698 = vmatprep.subr.mxu0 0.0
    %6699 = vmatpush1.xpose.msra.mxu0 0.0
    %6700 = vmatprep.subr.mxu0 0.0
    %6701 = vmatpush1.xpose.msra.mxu0 0.0
    %6702 = vmatprep.subr.mxu0 0.0
    %6703 = vmatpush1.xpose.msra.mxu0 0.0
    %6704 = vmatprep.subr.mxu0 0.0
    %6705 = vmatpush1.xpose.msra.mxu0 0.0
    %6706 = vmatprep.subr.mxu0 0.0
    %6707 = vmatpush1.xpose.msra.mxu0 0.0
    %6708 = vmatprep.subr.mxu0 0.0
    %6709 = vmatpush1.xpose.msra.mxu0 0.0
    %6710 = vmatprep.subr.mxu0 0.0
    %6711 = vmatpush1.xpose.msra.mxu0 0.0
    %6712 = vmatprep.subr.mxu0 0.0
    %6713 = vmatpush1.xpose.msra.mxu0 0.0
    %6714 = vmatprep.subr.mxu0 0.0
    %6715 = vmatpush1.xpose.msra.mxu0 0.0
    %6716 = vmatprep.subr.mxu0 0.0
    %6717 = vmatpush1.xpose.msra.mxu0 0.0
    %6718 = vmatprep.subr.mxu0 0.0
    %6719 = vmatpush1.xpose.msra.mxu0 0.0
    %6720 = vmatprep.subr.mxu0 0.0
    %6721 = vmatpush1.xpose.msra.mxu0 0.0
    %6722 = vmatprep.subr.mxu0 0.0
    %6723 = vmatpush1.xpose.msra.mxu0 0.0
    %6724 = vmatprep.subr.mxu0 0.0
    %6725 = vmatpush1.xpose.msra.mxu0 0.0
    %6726 = vmatprep.subr.mxu0 0.0
    %6727 = vmatpush1.xpose.msra.mxu0 0.0
    %6728 = vmatprep.subr.mxu0 0.0
    %6729 = vmatpush1.xpose.msra.mxu0 0.0
    %6730 = vmatprep.subr.mxu0 0.0
    %6731 = vmatpush1.xpose.msra.mxu0 0.0
    %6732 = vmatprep.mubr.f32.mxu0 %v233
    %6733 = vmatmul.mubr.f32.gmra.mrb[0].mxu0 %v232
    %v6734 = vpop.f32.mrb[0].mxu0
    %v6735 = vadd.f32 %v6665, %v6734
    %v6736 = vpop.f32.mrb[0].mxu0
    %6737 = vdwg.mxu0
    %6738 = vmatprep.subr.mxu0 %v480
    %6739 = vmatpush1.xpose.msra.mxu0 %v479
    %6740 = vmatprep.subr.mxu0 %v725
    %6741 = vmatpush1.xpose.msra.mxu0 %v724
    %6742 = vmatprep.subr.mxu0 %v970
    %6743 = vmatpush1.xpose.msra.mxu0 %v969
    %6744 = vmatprep.subr.mxu0 %v1215
    %6745 = vmatpush1.xpose.msra.mxu0 %v1214
    %6746 = vmatprep.subr.mxu0 %v1460
    %6747 = vmatpush1.xpose.msra.mxu0 %v1459
    %6748 = vmatprep.subr.mxu0 %v1705
    %6749 = vmatpush1.xpose.msra.mxu0 %v1704
    %6750 = vmatprep.subr.mxu0 0.0
    %6751 = vmatpush1.xpose.msra.mxu0 0.0
    %6752 = vmatprep.subr.mxu0 0.0
    %6753 = vmatpush1.xpose.msra.mxu0 0.0
    %6754 = vmatprep.subr.mxu0 0.0
    %6755 = vmatpush1.xpose.msra.mxu0 0.0
    %6756 = vmatprep.subr.mxu0 0.0
    %6757 = vmatpush1.xpose.msra.mxu0 0.0
    %6758 = vmatprep.subr.mxu0 0.0
    %6759 = vmatpush1.xpose.msra.mxu0 0.0
    %6760 = vmatprep.subr.mxu0 0.0
    %6761 = vmatpush1.xpose.msra.mxu0 0.0
    %6762 = vmatprep.subr.mxu0 0.0
    %6763 = vmatpush1.xpose.msra.mxu0 0.0
    %6764 = vmatprep.subr.mxu0 0.0
    %6765 = vmatpush1.xpose.msra.mxu0 0.0
    %6766 = vmatprep.subr.mxu0 0.0
    %6767 = vmatpush1.xpose.msra.mxu0 0.0
    %6768 = vmatprep.subr.mxu0 0.0
    %6769 = vmatpush1.xpose.msra.mxu0 0.0
    %6770 = vmatprep.subr.mxu0 0.0
    %6771 = vmatpush1.xpose.msra.mxu0 0.0
    %6772 = vmatprep.subr.mxu0 0.0
    %6773 = vmatpush1.xpose.msra.mxu0 0.0
    %6774 = vmatprep.subr.mxu0 0.0
    %6775 = vmatpush1.xpose.msra.mxu0 0.0
    %6776 = vmatprep.subr.mxu0 0.0
    %6777 = vmatpush1.xpose.msra.mxu0 0.0
    %6778 = vmatprep.subr.mxu0 0.0
    %6779 = vmatpush1.xpose.msra.mxu0 0.0
    %6780 = vmatprep.subr.mxu0 0.0
    %6781 = vmatpush1.xpose.msra.mxu0 0.0
    %6782 = vmatprep.subr.mxu0 0.0
    %6783 = vmatpush1.xpose.msra.mxu0 0.0
    %6784 = vmatprep.subr.mxu0 0.0
    %6785 = vmatpush1.xpose.msra.mxu0 0.0
    %6786 = vmatprep.subr.mxu0 0.0
    %6787 = vmatpush1.xpose.msra.mxu0 0.0
    %6788 = vmatprep.subr.mxu0 0.0
    %6789 = vmatpush1.xpose.msra.mxu0 0.0
    %6790 = vmatprep.subr.mxu0 0.0
    %6791 = vmatpush1.xpose.msra.mxu0 0.0
    %6792 = vmatprep.subr.mxu0 0.0
    %6793 = vmatpush1.xpose.msra.mxu0 0.0
    %6794 = vmatprep.subr.mxu0 0.0
    %6795 = vmatpush1.xpose.msra.mxu0 0.0
    %6796 = vmatprep.subr.mxu0 0.0
    %6797 = vmatpush1.xpose.msra.mxu0 0.0
    %6798 = vmatprep.subr.mxu0 0.0
    %6799 = vmatpush1.xpose.msra.mxu0 0.0
    %6800 = vmatprep.subr.mxu0 0.0
    %6801 = vmatpush1.xpose.msra.mxu0 0.0
    %6802 = vmatprep.mubr.f32.mxu0 %v235
    %6803 = vmatmul.mubr.f32.gmra.mrb[0].mxu0 %v234
    %v6804 = vpop.f32.mrb[0].mxu0
    %v6805 = vadd.f32 %v6735, %v6804
    %v6806 = vpop.f32.mrb[0].mxu0
    %6807 = vdwg.mxu0
    %6808 = vmatprep.subr.mxu0 %v482
    %6809 = vmatpush1.xpose.msra.mxu0 %v481
    %6810 = vmatprep.subr.mxu0 %v727
    %6811 = vmatpush1.xpose.msra.mxu0 %v726
    %6812 = vmatprep.subr.mxu0 %v972
    %6813 = vmatpush1.xpose.msra.mxu0 %v971
    %6814 = vmatprep.subr.mxu0 %v1217
    %6815 = vmatpush1.xpose.msra.mxu0 %v1216
    %6816 = vmatprep.subr.mxu0 %v1462
    %6817 = vmatpush1.xpose.msra.mxu0 %v1461
    %6818 = vmatprep.subr.mxu0 %v1707
    %6819 = vmatpush1.xpose.msra.mxu0 %v1706
    %6820 = vmatprep.subr.mxu0 0.0
    %6821 = vmatpush1.xpose.msra.mxu0 0.0
    %6822 = vmatprep.subr.mxu0 0.0
    %6823 = vmatpush1.xpose.msra.mxu0 0.0
    %6824 = vmatprep.subr.mxu0 0.0
    %6825 = vmatpush1.xpose.msra.mxu0 0.0
    %6826 = vmatprep.subr.mxu0 0.0
    %6827 = vmatpush1.xpose.msra.mxu0 0.0
    %6828 = vmatprep.subr.mxu0 0.0
    %6829 = vmatpush1.xpose.msra.mxu0 0.0
    %6830 = vmatprep.subr.mxu0 0.0
    %6831 = vmatpush1.xpose.msra.mxu0 0.0
    %6832 = vmatprep.subr.mxu0 0.0
    %6833 = vmatpush1.xpose.msra.mxu0 0.0
    %6834 = vmatprep.subr.mxu0 0.0
    %6835 = vmatpush1.xpose.msra.mxu0 0.0
    %6836 = vmatprep.subr.mxu0 0.0
    %6837 = vmatpush1.xpose.msra.mxu0 0.0
    %6838 = vmatprep.subr.mxu0 0.0
    %6839 = vmatpush1.xpose.msra.mxu0 0.0
    %6840 = vmatprep.subr.mxu0 0.0
    %6841 = vmatpush1.xpose.msra.mxu0 0.0
    %6842 = vmatprep.subr.mxu0 0.0
    %6843 = vmatpush1.xpose.msra.mxu0 0.0
    %6844 = vmatprep.subr.mxu0 0.0
    %6845 = vmatpush1.xpose.msra.mxu0 0.0
    %6846 = vmatprep.subr.mxu0 0.0
    %6847 = vmatpush1.xpose.msra.mxu0 0.0
    %6848 = vmatprep.subr.mxu0 0.0
    %6849 = vmatpush1.xpose.msra.mxu0 0.0
    %6850 = vmatprep.subr.mxu0 0.0
    %6851 = vmatpush1.xpose.msra.mxu0 0.0
    %6852 = vmatprep.subr.mxu0 0.0
    %6853 = vmatpush1.xpose.msra.mxu0 0.0
    %6854 = vmatprep.subr.mxu0 0.0
    %6855 = vmatpush1.xpose.msra.mxu0 0.0
    %6856 = vmatprep.subr.mxu0 0.0
    %6857 = vmatpush1.xpose.msra.mxu0 0.0
    %6858 = vmatprep.subr.mxu0 0.0
    %6859 = vmatpush1.xpose.msra.mxu0 0.0
    %6860 = vmatprep.subr.mxu0 0.0
    %6861 = vmatpush1.xpose.msra.mxu0 0.0
    %6862 = vmatprep.subr.mxu0 0.0
    %6863 = vmatpush1.xpose.msra.mxu0 0.0
    %6864 = vmatprep.subr.mxu0 0.0
    %6865 = vmatpush1.xpose.msra.mxu0 0.0
    %6866 = vmatprep.subr.mxu0 0.0
    %6867 = vmatpush1.xpose.msra.mxu0 0.0
    %6868 = vmatprep.subr.mxu0 0.0
    %6869 = vmatpush1.xpose.msra.mxu0 0.0
    %6870 = vmatprep.subr.mxu0 0.0
    %6871 = vmatpush1.xpose.msra.mxu0 0.0
    %6872 = vmatprep.mubr.f32.mxu0 %v237
    %6873 = vmatmul.mubr.f32.gmra.mrb[0].mxu0 %v236
    %v6874 = vpop.f32.mrb[0].mxu0
    %v6875 = vadd.f32 %v6805, %v6874
    %v6876 = vpop.f32.mrb[0].mxu0
    %6877 = vdwg.mxu0
    %6878 = vmatprep.subr.mxu0 %v484
    %6879 = vmatpush1.xpose.msra.mxu0 %v483
    %6880 = vmatprep.subr.mxu0 %v729
    %6881 = vmatpush1.xpose.msra.mxu0 %v728
    %6882 = vmatprep.subr.mxu0 %v974
    %6883 = vmatpush1.xpose.msra.mxu0 %v973
    %6884 = vmatprep.subr.mxu0 %v1219
    %6885 = vmatpush1.xpose.msra.mxu0 %v1218
    %6886 = vmatprep.subr.mxu0 %v1464
    %6887 = vmatpush1.xpose.msra.mxu0 %v1463
    %6888 = vmatprep.subr.mxu0 %v1709
    %6889 = vmatpush1.xpose.msra.mxu0 %v1708
    %6890 = vmatprep.subr.mxu0 0.0
    %6891 = vmatpush1.xpose.msra.mxu0 0.0
    %6892 = vmatprep.subr.mxu0 0.0
    %6893 = vmatpush1.xpose.msra.mxu0 0.0
    %6894 = vmatprep.subr.mxu0 0.0
    %6895 = vmatpush1.xpose.msra.mxu0 0.0
    %6896 = vmatprep.subr.mxu0 0.0
    %6897 = vmatpush1.xpose.msra.mxu0 0.0
    %6898 = vmatprep.subr.mxu0 0.0
    %6899 = vmatpush1.xpose.msra.mxu0 0.0
    %6900 = vmatprep.subr.mxu0 0.0
    %6901 = vmatpush1.xpose.msra.mxu0 0.0
    %6902 = vmatprep.subr.mxu0 0.0
    %6903 = vmatpush1.xpose.msra.mxu0 0.0
    %6904 = vmatprep.subr.mxu0 0.0
    %6905 = vmatpush1.xpose.msra.mxu0 0.0
    %6906 = vmatprep.subr.mxu0 0.0
    %6907 = vmatpush1.xpose.msra.mxu0 0.0
    %6908 = vmatprep.subr.mxu0 0.0
    %6909 = vmatpush1.xpose.msra.mxu0 0.0
    %6910 = vmatprep.subr.mxu0 0.0
    %6911 = vmatpush1.xpose.msra.mxu0 0.0
    %6912 = vmatprep.subr.mxu0 0.0
    %6913 = vmatpush1.xpose.msra.mxu0 0.0
    %6914 = vmatprep.subr.mxu0 0.0
    %6915 = vmatpush1.xpose.msra.mxu0 0.0
    %6916 = vmatprep.subr.mxu0 0.0
    %6917 = vmatpush1.xpose.msra.mxu0 0.0
    %6918 = vmatprep.subr.mxu0 0.0
    %6919 = vmatpush1.xpose.msra.mxu0 0.0
    %6920 = vmatprep.subr.mxu0 0.0
    %6921 = vmatpush1.xpose.msra.mxu0 0.0
    %6922 = vmatprep.subr.mxu0 0.0
    %6923 = vmatpush1.xpose.msra.mxu0 0.0
    %6924 = vmatprep.subr.mxu0 0.0
    %6925 = vmatpush1.xpose.msra.mxu0 0.0
    %6926 = vmatprep.subr.mxu0 0.0
    %6927 = vmatpush1.xpose.msra.mxu0 0.0
    %6928 = vmatprep.subr.mxu0 0.0
    %6929 = vmatpush1.xpose.msra.mxu0 0.0
    %6930 = vmatprep.subr.mxu0 0.0
    %6931 = vmatpush1.xpose.msra.mxu0 0.0
    %6932 = vmatprep.subr.mxu0 0.0
    %6933 = vmatpush1.xpose.msra.mxu0 0.0
    %6934 = vmatprep.subr.mxu0 0.0
    %6935 = vmatpush1.xpose.msra.mxu0 0.0
    %6936 = vmatprep.subr.mxu0 0.0
    %6937 = vmatpush1.xpose.msra.mxu0 0.0
    %6938 = vmatprep.subr.mxu0 0.0
    %6939 = vmatpush1.xpose.msra.mxu0 0.0
    %6940 = vmatprep.subr.mxu0 0.0
    %6941 = vmatpush1.xpose.msra.mxu0 0.0
    %6942 = vmatprep.mubr.f32.mxu0 %v239
    %6943 = vmatmul.mubr.f32.gmra.mrb[0].mxu0 %v238
    %v6944 = vpop.f32.mrb[0].mxu0
    %v6945 = vadd.f32 %v6875, %v6944
    %v6946 = vpop.f32.mrb[0].mxu0
    %6947 = vdwg.mxu0
    %6948 = vmatprep.subr.mxu0 %v486
    %6949 = vmatpush1.xpose.msra.mxu0 %v485
    %6950 = vmatprep.subr.mxu0 %v731
    %6951 = vmatpush1.xpose.msra.mxu0 %v730
    %6952 = vmatprep.subr.mxu0 %v976
    %6953 = vmatpush1.xpose.msra.mxu0 %v975
    %6954 = vmatprep.subr.mxu0 %v1221
    %6955 = vmatpush1.xpose.msra.mxu0 %v1220
    %6956 = vmatprep.subr.mxu0 %v1466
    %6957 = vmatpush1.xpose.msra.mxu0 %v1465
    %6958 = vmatprep.subr.mxu0 %v1711
    %6959 = vmatpush1.xpose.msra.mxu0 %v1710
    %6960 = vmatprep.subr.mxu0 0.0
    %6961 = vmatpush1.xpose.msra.mxu0 0.0
    %6962 = vmatprep.subr.mxu0 0.0
    %6963 = vmatpush1.xpose.msra.mxu0 0.0
    %6964 = vmatprep.subr.mxu0 0.0
    %6965 = vmatpush1.xpose.msra.mxu0 0.0
    %6966 = vmatprep.subr.mxu0 0.0
    %6967 = vmatpush1.xpose.msra.mxu0 0.0
    %6968 = vmatprep.subr.mxu0 0.0
    %6969 = vmatpush1.xpose.msra.mxu0 0.0
    %6970 = vmatprep.subr.mxu0 0.0
    %6971 = vmatpush1.xpose.msra.mxu0 0.0
    %6972 = vmatprep.subr.mxu0 0.0
    %6973 = vmatpush1.xpose.msra.mxu0 0.0
    %6974 = vmatprep.subr.mxu0 0.0
    %6975 = vmatpush1.xpose.msra.mxu0 0.0
    %6976 = vmatprep.subr.mxu0 0.0
    %6977 = vmatpush1.xpose.msra.mxu0 0.0
    %6978 = vmatprep.subr.mxu0 0.0
    %6979 = vmatpush1.xpose.msra.mxu0 0.0
    %6980 = vmatprep.subr.mxu0 0.0
    %6981 = vmatpush1.xpose.msra.mxu0 0.0
    %6982 = vmatprep.subr.mxu0 0.0
    %6983 = vmatpush1.xpose.msra.mxu0 0.0
    %6984 = vmatprep.subr.mxu0 0.0
    %6985 = vmatpush1.xpose.msra.mxu0 0.0
    %6986 = vmatprep.subr.mxu0 0.0
    %6987 = vmatpush1.xpose.msra.mxu0 0.0
    %6988 = vmatprep.subr.mxu0 0.0
    %6989 = vmatpush1.xpose.msra.mxu0 0.0
    %6990 = vmatprep.subr.mxu0 0.0
    %6991 = vmatpush1.xpose.msra.mxu0 0.0
    %6992 = vmatprep.subr.mxu0 0.0
    %6993 = vmatpush1.xpose.msra.mxu0 0.0
    %6994 = vmatprep.subr.mxu0 0.0
    %6995 = vmatpush1.xpose.msra.mxu0 0.0
    %6996 = vmatprep.subr.mxu0 0.0
    %6997 = vmatpush1.xpose.msra.mxu0 0.0
    %6998 = vmatprep.subr.mxu0 0.0
    %6999 = vmatpush1.xpose.msra.mxu0 0.0
    %7000 = vmatprep.subr.mxu0 0.0
    %7001 = vmatpush1.xpose.msra.mxu0 0.0
    %7002 = vmatprep.subr.mxu0 0.0
    %7003 = vmatpush1.xpose.msra.mxu0 0.0
    %7004 = vmatprep.subr.mxu0 0.0
    %7005 = vmatpush1.xpose.msra.mxu0 0.0
    %7006 = vmatprep.subr.mxu0 0.0
    %7007 = vmatpush1.xpose.msra.mxu0 0.0
    %7008 = vmatprep.subr.mxu0 0.0
    %7009 = vmatpush1.xpose.msra.mxu0 0.0
    %7010 = vmatprep.subr.mxu0 0.0
    %7011 = vmatpush1.xpose.msra.mxu0 0.0
    %7012 = vmatprep.mubr.f32.mxu0 %v241
    %7013 = vmatmul.mubr.f32.gmra.mrb[0].mxu0 %v240
    %v7014 = vpop.f32.mrb[0].mxu0
    %v7015 = vadd.f32 %v6945, %v7014
    %v7016 = vpop.f32.mrb[0].mxu0
    %7017 = vdwg.mxu0
    %7018 = vmatprep.subr.mxu0 %v488
    %7019 = vmatpush1.xpose.msra.mxu0 %v487
    %7020 = vmatprep.subr.mxu0 %v733
    %7021 = vmatpush1.xpose.msra.mxu0 %v732
    %7022 = vmatprep.subr.mxu0 %v978
    %7023 = vmatpush1.xpose.msra.mxu0 %v977
    %7024 = vmatprep.subr.mxu0 %v1223
    %7025 = vmatpush1.xpose.msra.mxu0 %v1222
    %7026 = vmatprep.subr.mxu0 %v1468
    %7027 = vmatpush1.xpose.msra.mxu0 %v1467
    %7028 = vmatprep.subr.mxu0 %v1713
    %7029 = vmatpush1.xpose.msra.mxu0 %v1712
    %7030 = vmatprep.subr.mxu0 0.0
    %7031 = vmatpush1.xpose.msra.mxu0 0.0
    %7032 = vmatprep.subr.mxu0 0.0
    %7033 = vmatpush1.xpose.msra.mxu0 0.0
    %7034 = vmatprep.subr.mxu0 0.0
    %7035 = vmatpush1.xpose.msra.mxu0 0.0
    %7036 = vmatprep.subr.mxu0 0.0
    %7037 = vmatpush1.xpose.msra.mxu0 0.0
    %7038 = vmatprep.subr.mxu0 0.0
    %7039 = vmatpush1.xpose.msra.mxu0 0.0
    %7040 = vmatprep.subr.mxu0 0.0
    %7041 = vmatpush1.xpose.msra.mxu0 0.0
    %7042 = vmatprep.subr.mxu0 0.0
    %7043 = vmatpush1.xpose.msra.mxu0 0.0
    %7044 = vmatprep.subr.mxu0 0.0
    %7045 = vmatpush1.xpose.msra.mxu0 0.0
    %7046 = vmatprep.subr.mxu0 0.0
    %7047 = vmatpush1.xpose.msra.mxu0 0.0
    %7048 = vmatprep.subr.mxu0 0.0
    %7049 = vmatpush1.xpose.msra.mxu0 0.0
    %7050 = vmatprep.subr.mxu0 0.0
    %7051 = vmatpush1.xpose.msra.mxu0 0.0
    %7052 = vmatprep.subr.mxu0 0.0
    %7053 = vmatpush1.xpose.msra.mxu0 0.0
    %7054 = vmatprep.subr.mxu0 0.0
    %7055 = vmatpush1.xpose.msra.mxu0 0.0
    %7056 = vmatprep.subr.mxu0 0.0
    %7057 = vmatpush1.xpose.msra.mxu0 0.0
    %7058 = vmatprep.subr.mxu0 0.0
    %7059 = vmatpush1.xpose.msra.mxu0 0.0
    %7060 = vmatprep.subr.mxu0 0.0
    %7061 = vmatpush1.xpose.msra.mxu0 0.0
    %7062 = vmatprep.subr.mxu0 0.0
    %7063 = vmatpush1.xpose.msra.mxu0 0.0
    %7064 = vmatprep.subr.mxu0 0.0
    %7065 = vmatpush1.xpose.msra.mxu0 0.0
    %7066 = vmatprep.subr.mxu0 0.0
    %7067 = vmatpush1.xpose.msra.mxu0 0.0
    %7068 = vmatprep.subr.mxu0 0.0
    %7069 = vmatpush1.xpose.msra.mxu0 0.0
    %7070 = vmatprep.subr.mxu0 0.0
    %7071 = vmatpush1.xpose.msra.mxu0 0.0
    %7072 = vmatprep.subr.mxu0 0.0
    %7073 = vmatpush1.xpose.msra.mxu0 0.0
    %7074 = vmatprep.subr.mxu0 0.0
    %7075 = vmatpush1.xpose.msra.mxu0 0.0
    %7076 = vmatprep.subr.mxu0 0.0
    %7077 = vmatpush1.xpose.msra.mxu0 0.0
    %7078 = vmatprep.subr.mxu0 0.0
    %7079 = vmatpush1.xpose.msra.mxu0 0.0
    %7080 = vmatprep.subr.mxu0 0.0
    %7081 = vmatpush1.xpose.msra.mxu0 0.0
    %7082 = vmatprep.mubr.f32.mxu0 %v243
    %7083 = vmatmul.mubr.f32.gmra.mrb[0].mxu0 %v242
    %v7084 = vpop.f32.mrb[0].mxu0
    %v7085 = vadd.f32 %v7015, %v7084
    %v7086 = vpop.f32.mrb[0].mxu0
    %7087 = vdwg.mxu0
    %7088 = vmatprep.subr.mxu0 %v490
    %7089 = vmatpush1.xpose.msra.mxu0 %v489
    %7090 = vmatprep.subr.mxu0 %v735
    %7091 = vmatpush1.xpose.msra.mxu0 %v734
    %7092 = vmatprep.subr.mxu0 %v980
    %7093 = vmatpush1.xpose.msra.mxu0 %v979
    %7094 = vmatprep.subr.mxu0 %v1225
    %7095 = vmatpush1.xpose.msra.mxu0 %v1224
    %7096 = vmatprep.subr.mxu0 %v1470
    %7097 = vmatpush1.xpose.msra.mxu0 %v1469
    %7098 = vmatprep.subr.mxu0 %v1715
    %7099 = vmatpush1.xpose.msra.mxu0 %v1714
    %7100 = vmatprep.subr.mxu0 0.0
    %7101 = vmatpush1.xpose.msra.mxu0 0.0
    %7102 = vmatprep.subr.mxu0 0.0
    %7103 = vmatpush1.xpose.msra.mxu0 0.0
    %7104 = vmatprep.subr.mxu0 0.0
    %7105 = vmatpush1.xpose.msra.mxu0 0.0
    %7106 = vmatprep.subr.mxu0 0.0
    %7107 = vmatpush1.xpose.msra.mxu0 0.0
    %7108 = vmatprep.subr.mxu0 0.0
    %7109 = vmatpush1.xpose.msra.mxu0 0.0
    %7110 = vmatprep.subr.mxu0 0.0
    %7111 = vmatpush1.xpose.msra.mxu0 0.0
    %7112 = vmatprep.subr.mxu0 0.0
    %7113 = vmatpush1.xpose.msra.mxu0 0.0
    %7114 = vmatprep.subr.mxu0 0.0
    %7115 = vmatpush1.xpose.msra.mxu0 0.0
    %7116 = vmatprep.subr.mxu0 0.0
    %7117 = vmatpush1.xpose.msra.mxu0 0.0
    %7118 = vmatprep.subr.mxu0 0.0
    %7119 = vmatpush1.xpose.msra.mxu0 0.0
    %7120 = vmatprep.subr.mxu0 0.0
    %7121 = vmatpush1.xpose.msra.mxu0 0.0
    %7122 = vmatprep.subr.mxu0 0.0
    %7123 = vmatpush1.xpose.msra.mxu0 0.0
    %7124 = vmatprep.subr.mxu0 0.0
    %7125 = vmatpush1.xpose.msra.mxu0 0.0
    %7126 = vmatprep.subr.mxu0 0.0
    %7127 = vmatpush1.xpose.msra.mxu0 0.0
    %7128 = vmatprep.subr.mxu0 0.0
    %7129 = vmatpush1.xpose.msra.mxu0 0.0
    %7130 = vmatprep.subr.mxu0 0.0
    %7131 = vmatpush1.xpose.msra.mxu0 0.0
    %7132 = vmatprep.subr.mxu0 0.0
    %7133 = vmatpush1.xpose.msra.mxu0 0.0
    %7134 = vmatprep.subr.mxu0 0.0
    %7135 = vmatpush1.xpose.msra.mxu0 0.0
    %7136 = vmatprep.subr.mxu0 0.0
    %7137 = vmatpush1.xpose.msra.mxu0 0.0
    %7138 = vmatprep.subr.mxu0 0.0
    %7139 = vmatpush1.xpose.msra.mxu0 0.0
    %7140 = vmatprep.subr.mxu0 0.0
    %7141 = vmatpush1.xpose.msra.mxu0 0.0
    %7142 = vmatprep.subr.mxu0 0.0
    %7143 = vmatpush1.xpose.msra.mxu0 0.0
    %7144 = vmatprep.subr.mxu0 0.0
    %7145 = vmatpush1.xpose.msra.mxu0 0.0
    %7146 = vmatprep.subr.mxu0 0.0
    %7147 = vmatpush1.xpose.msra.mxu0 0.0
    %7148 = vmatprep.subr.mxu0 0.0
    %7149 = vmatpush1.xpose.msra.mxu0 0.0
    %7150 = vmatprep.subr.mxu0 0.0
    %7151 = vmatpush1.xpose.msra.mxu0 0.0
    %7152 = vmatprep.mubr.f32.mxu0 %v245
    %7153 = vmatmul.mubr.f32.gmra.mrb[0].mxu0 %v244
    %v7154 = vpop.f32.mrb[0].mxu0
    %v7155 = vadd.f32 %v7085, %v7154
    %v7156 = vpop.f32.mrb[0].mxu0
    %7157 = vdwg.mxu0
    %7158 = vmatprep.subr.mxu0 %v492
    %7159 = vmatpush1.xpose.msra.mxu0 %v491
    %7160 = vmatprep.subr.mxu0 %v737
    %7161 = vmatpush1.xpose.msra.mxu0 %v736
    %7162 = vmatprep.subr.mxu0 %v982
    %7163 = vmatpush1.xpose.msra.mxu0 %v981
    %7164 = vmatprep.subr.mxu0 %v1227
    %7165 = vmatpush1.xpose.msra.mxu0 %v1226
    %7166 = vmatprep.subr.mxu0 %v1472
    %7167 = vmatpush1.xpose.msra.mxu0 %v1471
    %7168 = vmatprep.subr.mxu0 %v1717
    %7169 = vmatpush1.xpose.msra.mxu0 %v1716
    %7170 = vmatprep.subr.mxu0 0.0
    %7171 = vmatpush1.xpose.msra.mxu0 0.0
    %7172 = vmatprep.subr.mxu0 0.0
    %7173 = vmatpush1.xpose.msra.mxu0 0.0
    %7174 = vmatprep.subr.mxu0 0.0
    %7175 = vmatpush1.xpose.msra.mxu0 0.0
    %7176 = vmatprep.subr.mxu0 0.0
    %7177 = vmatpush1.xpose.msra.mxu0 0.0
    %7178 = vmatprep.subr.mxu0 0.0
    %7179 = vmatpush1.xpose.msra.mxu0 0.0
    %7180 = vmatprep.subr.mxu0 0.0
    %7181 = vmatpush1.xpose.msra.mxu0 0.0
    %7182 = vmatprep.subr.mxu0 0.0
    %7183 = vmatpush1.xpose.msra.mxu0 0.0
    %7184 = vmatprep.subr.mxu0 0.0
    %7185 = vmatpush1.xpose.msra.mxu0 0.0
    %7186 = vmatprep.subr.mxu0 0.0
    %7187 = vmatpush1.xpose.msra.mxu0 0.0
    %7188 = vmatprep.subr.mxu0 0.0
    %7189 = vmatpush1.xpose.msra.mxu0 0.0
    %7190 = vmatprep.subr.mxu0 0.0
    %7191 = vmatpush1.xpose.msra.mxu0 0.0
    %7192 = vmatprep.subr.mxu0 0.0
    %7193 = vmatpush1.xpose.msra.mxu0 0.0
    %7194 = vmatprep.subr.mxu0 0.0
    %7195 = vmatpush1.xpose.msra.mxu0 0.0
    %7196 = vmatprep.subr.mxu0 0.0
    %7197 = vmatpush1.xpose.msra.mxu0 0.0
    %7198 = vmatprep.subr.mxu0 0.0
    %7199 = vmatpush1.xpose.msra.mxu0 0.0
    %7200 = vmatprep.subr.mxu0 0.0
    %7201 = vmatpush1.xpose.msra.mxu0 0.0
    %7202 = vmatprep.subr.mxu0 0.0
    %7203 = vmatpush1.xpose.msra.mxu0 0.0
    %7204 = vmatprep.subr.mxu0 0.0
    %7205 = vmatpush1.xpose.msra.mxu0 0.0
    %7206 = vmatprep.subr.mxu0 0.0
    %7207 = vmatpush1.xpose.msra.mxu0 0.0
    %7208 = vmatprep.subr.mxu0 0.0
    %7209 = vmatpush1.xpose.msra.mxu0 0.0
    %7210 = vmatprep.subr.mxu0 0.0
    %7211 = vmatpush1.xpose.msra.mxu0 0.0
    %7212 = vmatprep.subr.mxu0 0.0
    %7213 = vmatpush1.xpose.msra.mxu0 0.0
    %7214 = vmatprep.subr.mxu0 0.0
    %7215 = vmatpush1.xpose.msra.mxu0 0.0
    %7216 = vmatprep.subr.mxu0 0.0
    %7217 = vmatpush1.xpose.msra.mxu0 0.0
    %7218 = vmatprep.subr.mxu0 0.0
    %7219 = vmatpush1.xpose.msra.mxu0 0.0
    %7220 = vmatprep.subr.mxu0 0.0
    %7221 = vmatpush1.xpose.msra.mxu0 0.0
    %7222 = vmatprep.mubr.f32.mxu0 %v247
    %7223 = vmatmul.mubr.f32.gmra.mrb[0].mxu0 %v246
    %v7224 = vpop.f32.mrb[0].mxu0
    %v7225 = vadd.f32 %v7155, %v7224
    %v7226 = vpop.f32.mrb[0].mxu0
    %7227 = vdwg.mxu0
    %7228 = vmatprep.subr.mxu0 %v494
    %7229 = vmatpush1.xpose.msra.mxu0 %v493
    %7230 = vmatprep.subr.mxu0 %v739
    %7231 = vmatpush1.xpose.msra.mxu0 %v738
    %7232 = vmatprep.subr.mxu0 %v984
    %7233 = vmatpush1.xpose.msra.mxu0 %v983
    %7234 = vmatprep.subr.mxu0 %v1229
    %7235 = vmatpush1.xpose.msra.mxu0 %v1228
    %7236 = vmatprep.subr.mxu0 %v1474
    %7237 = vmatpush1.xpose.msra.mxu0 %v1473
    %7238 = vmatprep.subr.mxu0 %v1719
    %7239 = vmatpush1.xpose.msra.mxu0 %v1718
    %7240 = vmatprep.subr.mxu0 0.0
    %7241 = vmatpush1.xpose.msra.mxu0 0.0
    %7242 = vmatprep.subr.mxu0 0.0
    %7243 = vmatpush1.xpose.msra.mxu0 0.0
    %7244 = vmatprep.subr.mxu0 0.0
    %7245 = vmatpush1.xpose.msra.mxu0 0.0
    %7246 = vmatprep.subr.mxu0 0.0
    %7247 = vmatpush1.xpose.msra.mxu0 0.0
    %7248 = vmatprep.subr.mxu0 0.0
    %7249 = vmatpush1.xpose.msra.mxu0 0.0
    %7250 = vmatprep.subr.mxu0 0.0
    %7251 = vmatpush1.xpose.msra.mxu0 0.0
    %7252 = vmatprep.subr.mxu0 0.0
    %7253 = vmatpush1.xpose.msra.mxu0 0.0
    %7254 = vmatprep.subr.mxu0 0.0
    %7255 = vmatpush1.xpose.msra.mxu0 0.0
    %7256 = vmatprep.subr.mxu0 0.0
    %7257 = vmatpush1.xpose.msra.mxu0 0.0
    %7258 = vmatprep.subr.mxu0 0.0
    %7259 = vmatpush1.xpose.msra.mxu0 0.0
    %7260 = vmatprep.subr.mxu0 0.0
    %7261 = vmatpush1.xpose.msra.mxu0 0.0
    %7262 = vmatprep.subr.mxu0 0.0
    %7263 = vmatpush1.xpose.msra.mxu0 0.0
    %7264 = vmatprep.subr.mxu0 0.0
    %7265 = vmatpush1.xpose.msra.mxu0 0.0
    %7266 = vmatprep.subr.mxu0 0.0
    %7267 = vmatpush1.xpose.msra.mxu0 0.0
    %7268 = vmatprep.subr.mxu0 0.0
    %7269 = vmatpush1.xpose.msra.mxu0 0.0
    %7270 = vmatprep.subr.mxu0 0.0
    %7271 = vmatpush1.xpose.msra.mxu0 0.0
    %7272 = vmatprep.subr.mxu0 0.0
    %7273 = vmatpush1.xpose.msra.mxu0 0.0
    %7274 = vmatprep.subr.mxu0 0.0
    %7275 = vmatpush1.xpose.msra.mxu0 0.0
    %7276 = vmatprep.subr.mxu0 0.0
    %7277 = vmatpush1.xpose.msra.mxu0 0.0
    %7278 = vmatprep.subr.mxu0 0.0
    %7279 = vmatpush1.xpose.msra.mxu0 0.0
    %7280 = vmatprep.subr.mxu0 0.0
    %7281 = vmatpush1.xpose.msra.mxu0 0.0
    %7282 = vmatprep.subr.mxu0 0.0
    %7283 = vmatpush1.xpose.msra.mxu0 0.0
    %7284 = vmatprep.subr.mxu0 0.0
    %7285 = vmatpush1.xpose.msra.mxu0 0.0
    %7286 = vmatprep.subr.mxu0 0.0
    %7287 = vmatpush1.xpose.msra.mxu0 0.0
    %7288 = vmatprep.subr.mxu0 0.0
    %7289 = vmatpush1.xpose.msra.mxu0 0.0
    %7290 = vmatprep.subr.mxu0 0.0
    %7291 = vmatpush1.xpose.msra.mxu0 0.0
    %7292 = vmatprep.mubr.f32.mxu0 %v249
    %7293 = vmatmul.mubr.f32.gmra.mrb[0].mxu0 %v248
    %v7294 = vpop.f32.mrb[0].mxu0
    %v7295 = vadd.f32 %v7225, %v7294
    %v7296 = vpop.f32.mrb[0].mxu0
    %7297 = vdwg.mxu0
    %7298 = vmatprep.subr.mxu0 %v496
    %7299 = vmatpush1.xpose.msra.mxu0 %v495
    %7300 = vmatprep.subr.mxu0 %v741
    %7301 = vmatpush1.xpose.msra.mxu0 %v740
    %7302 = vmatprep.subr.mxu0 %v986
    %7303 = vmatpush1.xpose.msra.mxu0 %v985
    %7304 = vmatprep.subr.mxu0 %v1231
    %7305 = vmatpush1.xpose.msra.mxu0 %v1230
    %7306 = vmatprep.subr.mxu0 %v1476
    %7307 = vmatpush1.xpose.msra.mxu0 %v1475
    %7308 = vmatprep.subr.mxu0 %v1721
    %7309 = vmatpush1.xpose.msra.mxu0 %v1720
    %7310 = vmatprep.subr.mxu0 0.0
    %7311 = vmatpush1.xpose.msra.mxu0 0.0
    %7312 = vmatprep.subr.mxu0 0.0
    %7313 = vmatpush1.xpose.msra.mxu0 0.0
    %7314 = vmatprep.subr.mxu0 0.0
    %7315 = vmatpush1.xpose.msra.mxu0 0.0
    %7316 = vmatprep.subr.mxu0 0.0
    %7317 = vmatpush1.xpose.msra.mxu0 0.0
    %7318 = vmatprep.subr.mxu0 0.0
    %7319 = vmatpush1.xpose.msra.mxu0 0.0
    %7320 = vmatprep.subr.mxu0 0.0
    %7321 = vmatpush1.xpose.msra.mxu0 0.0
    %7322 = vmatprep.subr.mxu0 0.0
    %7323 = vmatpush1.xpose.msra.mxu0 0.0
    %7324 = vmatprep.subr.mxu0 0.0
    %7325 = vmatpush1.xpose.msra.mxu0 0.0
    %7326 = vmatprep.subr.mxu0 0.0
    %7327 = vmatpush1.xpose.msra.mxu0 0.0
    %7328 = vmatprep.subr.mxu0 0.0
    %7329 = vmatpush1.xpose.msra.mxu0 0.0
    %7330 = vmatprep.subr.mxu0 0.0
    %7331 = vmatpush1.xpose.msra.mxu0 0.0
    %7332 = vmatprep.subr.mxu0 0.0
    %7333 = vmatpush1.xpose.msra.mxu0 0.0
    %7334 = vmatprep.subr.mxu0 0.0
    %7335 = vmatpush1.xpose.msra.mxu0 0.0
    %7336 = vmatprep.subr.mxu0 0.0
    %7337 = vmatpush1.xpose.msra.mxu0 0.0
    %7338 = vmatprep.subr.mxu0 0.0
    %7339 = vmatpush1.xpose.msra.mxu0 0.0
    %7340 = vmatprep.subr.mxu0 0.0
    %7341 = vmatpush1.xpose.msra.mxu0 0.0
    %7342 = vmatprep.subr.mxu0 0.0
    %7343 = vmatpush1.xpose.msra.mxu0 0.0
    %7344 = vmatprep.subr.mxu0 0.0
    %7345 = vmatpush1.xpose.msra.mxu0 0.0
    %7346 = vmatprep.subr.mxu0 0.0
    %7347 = vmatpush1.xpose.msra.mxu0 0.0
    %7348 = vmatprep.subr.mxu0 0.0
    %7349 = vmatpush1.xpose.msra.mxu0 0.0
    %7350 = vmatprep.subr.mxu0 0.0
    %7351 = vmatpush1.xpose.msra.mxu0 0.0
    %7352 = vmatprep.subr.mxu0 0.0
    %7353 = vmatpush1.xpose.msra.mxu0 0.0
    %7354 = vmatprep.subr.mxu0 0.0
    %7355 = vmatpush1.xpose.msra.mxu0 0.0
    %7356 = vmatprep.subr.mxu0 0.0
    %7357 = vmatpush1.xpose.msra.mxu0 0.0
    %7358 = vmatprep.subr.mxu0 0.0
    %7359 = vmatpush1.xpose.msra.mxu0 0.0
    %7360 = vmatprep.subr.mxu0 0.0
    %7361 = vmatpush1.xpose.msra.mxu0 0.0
    %7362 = vmatprep.mubr.f32.mxu0 %v251
    %7363 = vmatmul.mubr.f32.gmra.mrb[0].mxu0 %v250
    %v7364 = vpop.f32.mrb[0].mxu0
    %v7365 = vadd.f32 %v7295, %v7364
    %v7366 = vpop.f32.mrb[0].mxu0
    %7367 = vdwg.mxu0
    %7368 = vmatprep.subr.mxu0 %v498
    %7369 = vmatpush1.xpose.msra.mxu0 %v497
    %7370 = vmatprep.subr.mxu0 %v743
    %7371 = vmatpush1.xpose.msra.mxu0 %v742
    %7372 = vmatprep.subr.mxu0 %v988
    %7373 = vmatpush1.xpose.msra.mxu0 %v987
    %7374 = vmatprep.subr.mxu0 %v1233
    %7375 = vmatpush1.xpose.msra.mxu0 %v1232
    %7376 = vmatprep.subr.mxu0 %v1478
    %7377 = vmatpush1.xpose.msra.mxu0 %v1477
    %7378 = vmatprep.subr.mxu0 %v1723
    %7379 = vmatpush1.xpose.msra.mxu0 %v1722
    %7380 = vmatprep.subr.mxu0 0.0
    %7381 = vmatpush1.xpose.msra.mxu0 0.0
    %7382 = vmatprep.subr.mxu0 0.0
    %7383 = vmatpush1.xpose.msra.mxu0 0.0
    %7384 = vmatprep.subr.mxu0 0.0
    %7385 = vmatpush1.xpose.msra.mxu0 0.0
    %7386 = vmatprep.subr.mxu0 0.0
    %7387 = vmatpush1.xpose.msra.mxu0 0.0
    %7388 = vmatprep.subr.mxu0 0.0
    %7389 = vmatpush1.xpose.msra.mxu0 0.0
    %7390 = vmatprep.subr.mxu0 0.0
    %7391 = vmatpush1.xpose.msra.mxu0 0.0
    %7392 = vmatprep.subr.mxu0 0.0
    %7393 = vmatpush1.xpose.msra.mxu0 0.0
    %7394 = vmatprep.subr.mxu0 0.0
    %7395 = vmatpush1.xpose.msra.mxu0 0.0
    %7396 = vmatprep.subr.mxu0 0.0
    %7397 = vmatpush1.xpose.msra.mxu0 0.0
    %7398 = vmatprep.subr.mxu0 0.0
    %7399 = vmatpush1.xpose.msra.mxu0 0.0
    %7400 = vmatprep.subr.mxu0 0.0
    %7401 = vmatpush1.xpose.msra.mxu0 0.0
    %7402 = vmatprep.subr.mxu0 0.0
    %7403 = vmatpush1.xpose.msra.mxu0 0.0
    %7404 = vmatprep.subr.mxu0 0.0
    %7405 = vmatpush1.xpose.msra.mxu0 0.0
    %7406 = vmatprep.subr.mxu0 0.0
    %7407 = vmatpush1.xpose.msra.mxu0 0.0
    %7408 = vmatprep.subr.mxu0 0.0
    %7409 = vmatpush1.xpose.msra.mxu0 0.0
    %7410 = vmatprep.subr.mxu0 0.0
    %7411 = vmatpush1.xpose.msra.mxu0 0.0
    %7412 = vmatprep.subr.mxu0 0.0
    %7413 = vmatpush1.xpose.msra.mxu0 0.0
    %7414 = vmatprep.subr.mxu0 0.0
    %7415 = vmatpush1.xpose.msra.mxu0 0.0
    %7416 = vmatprep.subr.mxu0 0.0
    %7417 = vmatpush1.xpose.msra.mxu0 0.0
    %7418 = vmatprep.subr.mxu0 0.0
    %7419 = vmatpush1.xpose.msra.mxu0 0.0
    %7420 = vmatprep.subr.mxu0 0.0
    %7421 = vmatpush1.xpose.msra.mxu0 0.0
    %7422 = vmatprep.subr.mxu0 0.0
    %7423 = vmatpush1.xpose.msra.mxu0 0.0
    %7424 = vmatprep.subr.mxu0 0.0
    %7425 = vmatpush1.xpose.msra.mxu0 0.0
    %7426 = vmatprep.subr.mxu0 0.0
    %7427 = vmatpush1.xpose.msra.mxu0 0.0
    %7428 = vmatprep.subr.mxu0 0.0
    %7429 = vmatpush1.xpose.msra.mxu0 0.0
    %7430 = vmatprep.subr.mxu0 0.0
    %7431 = vmatpush1.xpose.msra.mxu0 0.0
    %7432 = vmatprep.mubr.f32.mxu0 %v253
    %7433 = vmatmul.mubr.f32.gmra.mrb[0].mxu0 %v252
    %v7434 = vpop.f32.mrb[0].mxu0
    %v7435 = vadd.f32 %v7365, %v7434
    %v7436 = vpop.f32.mrb[0].mxu0
    %7437 = vdwg.mxu0
    %7438 = vmatprep.subr.mxu0 %v500
    %7439 = vmatpush1.xpose.msra.mxu0 %v499
    %7440 = vmatprep.subr.mxu0 %v745
    %7441 = vmatpush1.xpose.msra.mxu0 %v744
    %7442 = vmatprep.subr.mxu0 %v990
    %7443 = vmatpush1.xpose.msra.mxu0 %v989
    %7444 = vmatprep.subr.mxu0 %v1235
    %7445 = vmatpush1.xpose.msra.mxu0 %v1234
    %7446 = vmatprep.subr.mxu0 %v1480
    %7447 = vmatpush1.xpose.msra.mxu0 %v1479
    %7448 = vmatprep.subr.mxu0 %v1725
    %7449 = vmatpush1.xpose.msra.mxu0 %v1724
    %7450 = vmatprep.subr.mxu0 0.0
    %7451 = vmatpush1.xpose.msra.mxu0 0.0
    %7452 = vmatprep.subr.mxu0 0.0
    %7453 = vmatpush1.xpose.msra.mxu0 0.0
    %7454 = vmatprep.subr.mxu0 0.0
    %7455 = vmatpush1.xpose.msra.mxu0 0.0
    %7456 = vmatprep.subr.mxu0 0.0
    %7457 = vmatpush1.xpose.msra.mxu0 0.0
    %7458 = vmatprep.subr.mxu0 0.0
    %7459 = vmatpush1.xpose.msra.mxu0 0.0
    %7460 = vmatprep.subr.mxu0 0.0
    %7461 = vmatpush1.xpose.msra.mxu0 0.0
    %7462 = vmatprep.subr.mxu0 0.0
    %7463 = vmatpush1.xpose.msra.mxu0 0.0
    %7464 = vmatprep.subr.mxu0 0.0
    %7465 = vmatpush1.xpose.msra.mxu0 0.0
    %7466 = vmatprep.subr.mxu0 0.0
    %7467 = vmatpush1.xpose.msra.mxu0 0.0
    %7468 = vmatprep.subr.mxu0 0.0
    %7469 = vmatpush1.xpose.msra.mxu0 0.0
    %7470 = vmatprep.subr.mxu0 0.0
    %7471 = vmatpush1.xpose.msra.mxu0 0.0
    %7472 = vmatprep.subr.mxu0 0.0
    %7473 = vmatpush1.xpose.msra.mxu0 0.0
    %7474 = vmatprep.subr.mxu0 0.0
    %7475 = vmatpush1.xpose.msra.mxu0 0.0
    %7476 = vmatprep.subr.mxu0 0.0
    %7477 = vmatpush1.xpose.msra.mxu0 0.0
    %7478 = vmatprep.subr.mxu0 0.0
    %7479 = vmatpush1.xpose.msra.mxu0 0.0
    %7480 = vmatprep.subr.mxu0 0.0
    %7481 = vmatpush1.xpose.msra.mxu0 0.0
    %7482 = vmatprep.subr.mxu0 0.0
    %7483 = vmatpush1.xpose.msra.mxu0 0.0
    %7484 = vmatprep.subr.mxu0 0.0
    %7485 = vmatpush1.xpose.msra.mxu0 0.0
    %7486 = vmatprep.subr.mxu0 0.0
    %7487 = vmatpush1.xpose.msra.mxu0 0.0
    %7488 = vmatprep.subr.mxu0 0.0
    %7489 = vmatpush1.xpose.msra.mxu0 0.0
    %7490 = vmatprep.subr.mxu0 0.0
    %7491 = vmatpush1.xpose.msra.mxu0 0.0
    %7492 = vmatprep.subr.mxu0 0.0
    %7493 = vmatpush1.xpose.msra.mxu0 0.0
    %7494 = vmatprep.subr.mxu0 0.0
    %7495 = vmatpush1.xpose.msra.mxu0 0.0
    %7496 = vmatprep.subr.mxu0 0.0
    %7497 = vmatpush1.xpose.msra.mxu0 0.0
    %7498 = vmatprep.subr.mxu0 0.0
    %7499 = vmatpush1.xpose.msra.mxu0 0.0
    %7500 = vmatprep.subr.mxu0 0.0
    %7501 = vmatpush1.xpose.msra.mxu0 0.0
    %7502 = vmatprep.mubr.f32.mxu0 %v255
    %7503 = vmatmul.mubr.f32.gmra.mrb[0].mxu0 %v254
    %v7504 = vpop.f32.mrb[0].mxu0
    %v7505 = vadd.f32 %v7435, %v7504
    %v7506 = vpop.f32.mrb[0].mxu0
    %7507 = vdwg.mxu0
    %7508 = vmatprep.subr.mxu0 %v502
    %7509 = vmatpush1.xpose.msra.mxu0 %v501
    %7510 = vmatprep.subr.mxu0 %v747
    %7511 = vmatpush1.xpose.msra.mxu0 %v746
    %7512 = vmatprep.subr.mxu0 %v992
    %7513 = vmatpush1.xpose.msra.mxu0 %v991
    %7514 = vmatprep.subr.mxu0 %v1237
    %7515 = vmatpush1.xpose.msra.mxu0 %v1236
    %7516 = vmatprep.subr.mxu0 %v1482
    %7517 = vmatpush1.xpose.msra.mxu0 %v1481
    %7518 = vmatprep.subr.mxu0 %v1727
    %7519 = vmatpush1.xpose.msra.mxu0 %v1726
    %7520 = vmatprep.subr.mxu0 0.0
    %7521 = vmatpush1.xpose.msra.mxu0 0.0
    %7522 = vmatprep.subr.mxu0 0.0
    %7523 = vmatpush1.xpose.msra.mxu0 0.0
    %7524 = vmatprep.subr.mxu0 0.0
    %7525 = vmatpush1.xpose.msra.mxu0 0.0
    %7526 = vmatprep.subr.mxu0 0.0
    %7527 = vmatpush1.xpose.msra.mxu0 0.0
    %7528 = vmatprep.subr.mxu0 0.0
    %7529 = vmatpush1.xpose.msra.mxu0 0.0
    %7530 = vmatprep.subr.mxu0 0.0
    %7531 = vmatpush1.xpose.msra.mxu0 0.0
    %7532 = vmatprep.subr.mxu0 0.0
    %7533 = vmatpush1.xpose.msra.mxu0 0.0
    %7534 = vmatprep.subr.mxu0 0.0
    %7535 = vmatpush1.xpose.msra.mxu0 0.0
    %7536 = vmatprep.subr.mxu0 0.0
    %7537 = vmatpush1.xpose.msra.mxu0 0.0
    %7538 = vmatprep.subr.mxu0 0.0
    %7539 = vmatpush1.xpose.msra.mxu0 0.0
    %7540 = vmatprep.subr.mxu0 0.0
    %7541 = vmatpush1.xpose.msra.mxu0 0.0
    %7542 = vmatprep.subr.mxu0 0.0
    %7543 = vmatpush1.xpose.msra.mxu0 0.0
    %7544 = vmatprep.subr.mxu0 0.0
    %7545 = vmatpush1.xpose.msra.mxu0 0.0
    %7546 = vmatprep.subr.mxu0 0.0
    %7547 = vmatpush1.xpose.msra.mxu0 0.0
    %7548 = vmatprep.subr.mxu0 0.0
    %7549 = vmatpush1.xpose.msra.mxu0 0.0
    %7550 = vmatprep.subr.mxu0 0.0
    %7551 = vmatpush1.xpose.msra.mxu0 0.0
    %7552 = vmatprep.subr.mxu0 0.0
    %7553 = vmatpush1.xpose.msra.mxu0 0.0
    %7554 = vmatprep.subr.mxu0 0.0
    %7555 = vmatpush1.xpose.msra.mxu0 0.0
    %7556 = vmatprep.subr.mxu0 0.0
    %7557 = vmatpush1.xpose.msra.mxu0 0.0
    %7558 = vmatprep.subr.mxu0 0.0
    %7559 = vmatpush1.xpose.msra.mxu0 0.0
    %7560 = vmatprep.subr.mxu0 0.0
    %7561 = vmatpush1.xpose.msra.mxu0 0.0
    %7562 = vmatprep.subr.mxu0 0.0
    %7563 = vmatpush1.xpose.msra.mxu0 0.0
    %7564 = vmatprep.subr.mxu0 0.0
    %7565 = vmatpush1.xpose.msra.mxu0 0.0
    %7566 = vmatprep.subr.mxu0 0.0
    %7567 = vmatpush1.xpose.msra.mxu0 0.0
    %7568 = vmatprep.subr.mxu0 0.0
    %7569 = vmatpush1.xpose.msra.mxu0 0.0
    %7570 = vmatprep.subr.mxu0 0.0
    %7571 = vmatpush1.xpose.msra.mxu0 0.0
    %7572 = vmatprep.mubr.f32.mxu0 %v257
    %7573 = vmatmul.mubr.f32.gmra.mrb[0].mxu0 %v256
    %v7574 = vpop.f32.mrb[0].mxu0
    %v7575 = vadd.f32 %v7505, %v7574
    %v7576 = vpop.f32.mrb[0].mxu0
    %7577 = vdwg.mxu0
    %7578 = vmatprep.subr.mxu0 %v504
    %7579 = vmatpush1.xpose.msra.mxu0 %v503
    %7580 = vmatprep.subr.mxu0 %v749
    %7581 = vmatpush1.xpose.msra.mxu0 %v748
    %7582 = vmatprep.subr.mxu0 %v994
    %7583 = vmatpush1.xpose.msra.mxu0 %v993
    %7584 = vmatprep.subr.mxu0 %v1239
    %7585 = vmatpush1.xpose.msra.mxu0 %v1238
    %7586 = vmatprep.subr.mxu0 %v1484
    %7587 = vmatpush1.xpose.msra.mxu0 %v1483
    %7588 = vmatprep.subr.mxu0 %v1729
    %7589 = vmatpush1.xpose.msra.mxu0 %v1728
    %7590 = vmatprep.subr.mxu0 0.0
    %7591 = vmatpush1.xpose.msra.mxu0 0.0
    %7592 = vmatprep.subr.mxu0 0.0
    %7593 = vmatpush1.xpose.msra.mxu0 0.0
    %7594 = vmatprep.subr.mxu0 0.0
    %7595 = vmatpush1.xpose.msra.mxu0 0.0
    %7596 = vmatprep.subr.mxu0 0.0
    %7597 = vmatpush1.xpose.msra.mxu0 0.0
    %7598 = vmatprep.subr.mxu0 0.0
    %7599 = vmatpush1.xpose.msra.mxu0 0.0
    %7600 = vmatprep.subr.mxu0 0.0
    %7601 = vmatpush1.xpose.msra.mxu0 0.0
    %7602 = vmatprep.subr.mxu0 0.0
    %7603 = vmatpush1.xpose.msra.mxu0 0.0
    %7604 = vmatprep.subr.mxu0 0.0
    %7605 = vmatpush1.xpose.msra.mxu0 0.0
    %7606 = vmatprep.subr.mxu0 0.0
    %7607 = vmatpush1.xpose.msra.mxu0 0.0
    %7608 = vmatprep.subr.mxu0 0.0
    %7609 = vmatpush1.xpose.msra.mxu0 0.0
    %7610 = vmatprep.subr.mxu0 0.0
    %7611 = vmatpush1.xpose.msra.mxu0 0.0
    %7612 = vmatprep.subr.mxu0 0.0
    %7613 = vmatpush1.xpose.msra.mxu0 0.0
    %7614 = vmatprep.subr.mxu0 0.0
    %7615 = vmatpush1.xpose.msra.mxu0 0.0
    %7616 = vmatprep.subr.mxu0 0.0
    %7617 = vmatpush1.xpose.msra.mxu0 0.0
    %7618 = vmatprep.subr.mxu0 0.0
    %7619 = vmatpush1.xpose.msra.mxu0 0.0
    %7620 = vmatprep.subr.mxu0 0.0
    %7621 = vmatpush1.xpose.msra.mxu0 0.0
    %7622 = vmatprep.subr.mxu0 0.0
    %7623 = vmatpush1.xpose.msra.mxu0 0.0
    %7624 = vmatprep.subr.mxu0 0.0
    %7625 = vmatpush1.xpose.msra.mxu0 0.0
    %7626 = vmatprep.subr.mxu0 0.0
    %7627 = vmatpush1.xpose.msra.mxu0 0.0
    %7628 = vmatprep.subr.mxu0 0.0
    %7629 = vmatpush1.xpose.msra.mxu0 0.0
    %7630 = vmatprep.subr.mxu0 0.0
    %7631 = vmatpush1.xpose.msra.mxu0 0.0
    %7632 = vmatprep.subr.mxu0 0.0
    %7633 = vmatpush1.xpose.msra.mxu0 0.0
    %7634 = vmatprep.subr.mxu0 0.0
    %7635 = vmatpush1.xpose.msra.mxu0 0.0
    %7636 = vmatprep.subr.mxu0 0.0
    %7637 = vmatpush1.xpose.msra.mxu0 0.0
    %7638 = vmatprep.subr.mxu0 0.0
    %7639 = vmatpush1.xpose.msra.mxu0 0.0
    %7640 = vmatprep.subr.mxu0 0.0
    %7641 = vmatpush1.xpose.msra.mxu0 0.0
    %7642 = vmatprep.mubr.f32.mxu0 %v259
    %7643 = vmatmul.mubr.f32.gmra.mrb[0].mxu0 %v258
    %v7644 = vpop.f32.mrb[0].mxu0
    %v7645 = vadd.f32 %v7575, %v7644
    %v7646 = vpop.f32.mrb[0].mxu0
    %7647 = vdwg.mxu0
    %7648 = vmatprep.subr.mxu0 %v506
    %7649 = vmatpush1.xpose.msra.mxu0 %v505
    %7650 = vmatprep.subr.mxu0 %v751
    %7651 = vmatpush1.xpose.msra.mxu0 %v750
    %7652 = vmatprep.subr.mxu0 %v996
    %7653 = vmatpush1.xpose.msra.mxu0 %v995
    %7654 = vmatprep.subr.mxu0 %v1241
    %7655 = vmatpush1.xpose.msra.mxu0 %v1240
    %7656 = vmatprep.subr.mxu0 %v1486
    %7657 = vmatpush1.xpose.msra.mxu0 %v1485
    %7658 = vmatprep.subr.mxu0 %v1731
    %7659 = vmatpush1.xpose.msra.mxu0 %v1730
    %7660 = vmatprep.subr.mxu0 0.0
    %7661 = vmatpush1.xpose.msra.mxu0 0.0
    %7662 = vmatprep.subr.mxu0 0.0
    %7663 = vmatpush1.xpose.msra.mxu0 0.0
    %7664 = vmatprep.subr.mxu0 0.0
    %7665 = vmatpush1.xpose.msra.mxu0 0.0
    %7666 = vmatprep.subr.mxu0 0.0
    %7667 = vmatpush1.xpose.msra.mxu0 0.0
    %7668 = vmatprep.subr.mxu0 0.0
    %7669 = vmatpush1.xpose.msra.mxu0 0.0
    %7670 = vmatprep.subr.mxu0 0.0
    %7671 = vmatpush1.xpose.msra.mxu0 0.0
    %7672 = vmatprep.subr.mxu0 0.0
    %7673 = vmatpush1.xpose.msra.mxu0 0.0
    %7674 = vmatprep.subr.mxu0 0.0
    %7675 = vmatpush1.xpose.msra.mxu0 0.0
    %7676 = vmatprep.subr.mxu0 0.0
    %7677 = vmatpush1.xpose.msra.mxu0 0.0
    %7678 = vmatprep.subr.mxu0 0.0
    %7679 = vmatpush1.xpose.msra.mxu0 0.0
    %7680 = vmatprep.subr.mxu0 0.0
    %7681 = vmatpush1.xpose.msra.mxu0 0.0
    %7682 = vmatprep.subr.mxu0 0.0
    %7683 = vmatpush1.xpose.msra.mxu0 0.0
    %7684 = vmatprep.subr.mxu0 0.0
    %7685 = vmatpush1.xpose.msra.mxu0 0.0
    %7686 = vmatprep.subr.mxu0 0.0
    %7687 = vmatpush1.xpose.msra.mxu0 0.0
    %7688 = vmatprep.subr.mxu0 0.0
    %7689 = vmatpush1.xpose.msra.mxu0 0.0
    %7690 = vmatprep.subr.mxu0 0.0
    %7691 = vmatpush1.xpose.msra.mxu0 0.0
    %7692 = vmatprep.subr.mxu0 0.0
    %7693 = vmatpush1.xpose.msra.mxu0 0.0
    %7694 = vmatprep.subr.mxu0 0.0
    %7695 = vmatpush1.xpose.msra.mxu0 0.0
    %7696 = vmatprep.subr.mxu0 0.0
    %7697 = vmatpush1.xpose.msra.mxu0 0.0
    %7698 = vmatprep.subr.mxu0 0.0
    %7699 = vmatpush1.xpose.msra.mxu0 0.0
    %7700 = vmatprep.subr.mxu0 0.0
    %7701 = vmatpush1.xpose.msra.mxu0 0.0
    %7702 = vmatprep.subr.mxu0 0.0
    %7703 = vmatpush1.xpose.msra.mxu0 0.0
    %7704 = vmatprep.subr.mxu0 0.0
    %7705 = vmatpush1.xpose.msra.mxu0 0.0
    %7706 = vmatprep.subr.mxu0 0.0
    %7707 = vmatpush1.xpose.msra.mxu0 0.0
    %7708 = vmatprep.subr.mxu0 0.0
    %7709 = vmatpush1.xpose.msra.mxu0 0.0
    %7710 = vmatprep.subr.mxu0 0.0
    %7711 = vmatpush1.xpose.msra.mxu0 0.0
    %7712 = vmatprep.mubr.f32.mxu0 %v261
    %7713 = vmatmul.mubr.f32.gmra.mrb[0].mxu0 %v260
    %v7714 = vpop.f32.mrb[0].mxu0
    %v7715 = vadd.f32 %v7645, %v7714
    %v7716 = vpop.f32.mrb[0].mxu0
    %7717 = vdwg.mxu0
    %7718 = vmatprep.subr.mxu0 %v508
    %7719 = vmatpush1.xpose.msra.mxu0 %v507
    %7720 = vmatprep.subr.mxu0 %v753
    %7721 = vmatpush1.xpose.msra.mxu0 %v752
    %7722 = vmatprep.subr.mxu0 %v998
    %7723 = vmatpush1.xpose.msra.mxu0 %v997
    %7724 = vmatprep.subr.mxu0 %v1243
    %7725 = vmatpush1.xpose.msra.mxu0 %v1242
    %7726 = vmatprep.subr.mxu0 %v1488
    %7727 = vmatpush1.xpose.msra.mxu0 %v1487
    %7728 = vmatprep.subr.mxu0 %v1733
    %7729 = vmatpush1.xpose.msra.mxu0 %v1732
    %7730 = vmatprep.subr.mxu0 0.0
    %7731 = vmatpush1.xpose.msra.mxu0 0.0
    %7732 = vmatprep.subr.mxu0 0.0
    %7733 = vmatpush1.xpose.msra.mxu0 0.0
    %7734 = vmatprep.subr.mxu0 0.0
    %7735 = vmatpush1.xpose.msra.mxu0 0.0
    %7736 = vmatprep.subr.mxu0 0.0
    %7737 = vmatpush1.xpose.msra.mxu0 0.0
    %7738 = vmatprep.subr.mxu0 0.0
    %7739 = vmatpush1.xpose.msra.mxu0 0.0
    %7740 = vmatprep.subr.mxu0 0.0
    %7741 = vmatpush1.xpose.msra.mxu0 0.0
    %7742 = vmatprep.subr.mxu0 0.0
    %7743 = vmatpush1.xpose.msra.mxu0 0.0
    %7744 = vmatprep.subr.mxu0 0.0
    %7745 = vmatpush1.xpose.msra.mxu0 0.0
    %7746 = vmatprep.subr.mxu0 0.0
    %7747 = vmatpush1.xpose.msra.mxu0 0.0
    %7748 = vmatprep.subr.mxu0 0.0
    %7749 = vmatpush1.xpose.msra.mxu0 0.0
    %7750 = vmatprep.subr.mxu0 0.0
    %7751 = vmatpush1.xpose.msra.mxu0 0.0
    %7752 = vmatprep.subr.mxu0 0.0
    %7753 = vmatpush1.xpose.msra.mxu0 0.0
    %7754 = vmatprep.subr.mxu0 0.0
    %7755 = vmatpush1.xpose.msra.mxu0 0.0
    %7756 = vmatprep.subr.mxu0 0.0
    %7757 = vmatpush1.xpose.msra.mxu0 0.0
    %7758 = vmatprep.subr.mxu0 0.0
    %7759 = vmatpush1.xpose.msra.mxu0 0.0
    %7760 = vmatprep.subr.mxu0 0.0
    %7761 = vmatpush1.xpose.msra.mxu0 0.0
    %7762 = vmatprep.subr.mxu0 0.0
    %7763 = vmatpush1.xpose.msra.mxu0 0.0
    %7764 = vmatprep.subr.mxu0 0.0
    %7765 = vmatpush1.xpose.msra.mxu0 0.0
    %7766 = vmatprep.subr.mxu0 0.0
    %7767 = vmatpush1.xpose.msra.mxu0 0.0
    %7768 = vmatprep.subr.mxu0 0.0
    %7769 = vmatpush1.xpose.msra.mxu0 0.0
    %7770 = vmatprep.subr.mxu0 0.0
    %7771 = vmatpush1.xpose.msra.mxu0 0.0
    %7772 = vmatprep.subr.mxu0 0.0
    %7773 = vmatpush1.xpose.msra.mxu0 0.0
    %7774 = vmatprep.subr.mxu0 0.0
    %7775 = vmatpush1.xpose.msra.mxu0 0.0
    %7776 = vmatprep.subr.mxu0 0.0
    %7777 = vmatpush1.xpose.msra.mxu0 0.0
    %7778 = vmatprep.subr.mxu0 0.0
    %7779 = vmatpush1.xpose.msra.mxu0 0.0
    %7780 = vmatprep.subr.mxu0 0.0
    %7781 = vmatpush1.xpose.msra.mxu0 0.0
    %7782 = vmatprep.mubr.f32.mxu0 %v263
    %7783 = vmatmul.mubr.f32.gmra.mrb[0].mxu0 %v262
    %v7784 = vpop.f32.mrb[0].mxu0
    %v7785 = vadd.f32 %v7715, %v7784
    %v7786 = vpop.f32.mrb[0].mxu0
    %7787 = vdwg.mxu0
    %7788 = vmatprep.subr.mxu0 %v510
    %7789 = vmatpush1.xpose.msra.mxu0 %v509
    %7790 = vmatprep.subr.mxu0 %v755
    %7791 = vmatpush1.xpose.msra.mxu0 %v754
    %7792 = vmatprep.subr.mxu0 %v1000
    %7793 = vmatpush1.xpose.msra.mxu0 %v999
    %7794 = vmatprep.subr.mxu0 %v1245
    %7795 = vmatpush1.xpose.msra.mxu0 %v1244
    %7796 = vmatprep.subr.mxu0 %v1490
    %7797 = vmatpush1.xpose.msra.mxu0 %v1489
    %7798 = vmatprep.subr.mxu0 %v1735
    %7799 = vmatpush1.xpose.msra.mxu0 %v1734
    %7800 = vmatprep.subr.mxu0 0.0
    %7801 = vmatpush1.xpose.msra.mxu0 0.0
    %7802 = vmatprep.subr.mxu0 0.0
    %7803 = vmatpush1.xpose.msra.mxu0 0.0
    %7804 = vmatprep.subr.mxu0 0.0
    %7805 = vmatpush1.xpose.msra.mxu0 0.0
    %7806 = vmatprep.subr.mxu0 0.0
    %7807 = vmatpush1.xpose.msra.mxu0 0.0
    %7808 = vmatprep.subr.mxu0 0.0
    %7809 = vmatpush1.xpose.msra.mxu0 0.0
    %7810 = vmatprep.subr.mxu0 0.0
    %7811 = vmatpush1.xpose.msra.mxu0 0.0
    %7812 = vmatprep.subr.mxu0 0.0
    %7813 = vmatpush1.xpose.msra.mxu0 0.0
    %7814 = vmatprep.subr.mxu0 0.0
    %7815 = vmatpush1.xpose.msra.mxu0 0.0
    %7816 = vmatprep.subr.mxu0 0.0
    %7817 = vmatpush1.xpose.msra.mxu0 0.0
    %7818 = vmatprep.subr.mxu0 0.0
    %7819 = vmatpush1.xpose.msra.mxu0 0.0
    %7820 = vmatprep.subr.mxu0 0.0
    %7821 = vmatpush1.xpose.msra.mxu0 0.0
    %7822 = vmatprep.subr.mxu0 0.0
    %7823 = vmatpush1.xpose.msra.mxu0 0.0
    %7824 = vmatprep.subr.mxu0 0.0
    %7825 = vmatpush1.xpose.msra.mxu0 0.0
    %7826 = vmatprep.subr.mxu0 0.0
    %7827 = vmatpush1.xpose.msra.mxu0 0.0
    %7828 = vmatprep.subr.mxu0 0.0
    %7829 = vmatpush1.xpose.msra.mxu0 0.0
    %7830 = vmatprep.subr.mxu0 0.0
    %7831 = vmatpush1.xpose.msra.mxu0 0.0
    %7832 = vmatprep.subr.mxu0 0.0
    %7833 = vmatpush1.xpose.msra.mxu0 0.0
    %7834 = vmatprep.subr.mxu0 0.0
    %7835 = vmatpush1.xpose.msra.mxu0 0.0
    %7836 = vmatprep.subr.mxu0 0.0
    %7837 = vmatpush1.xpose.msra.mxu0 0.0
    %7838 = vmatprep.subr.mxu0 0.0
    %7839 = vmatpush1.xpose.msra.mxu0 0.0
    %7840 = vmatprep.subr.mxu0 0.0
    %7841 = vmatpush1.xpose.msra.mxu0 0.0
    %7842 = vmatprep.subr.mxu0 0.0
    %7843 = vmatpush1.xpose.msra.mxu0 0.0
    %7844 = vmatprep.subr.mxu0 0.0
    %7845 = vmatpush1.xpose.msra.mxu0 0.0
    %7846 = vmatprep.subr.mxu0 0.0
    %7847 = vmatpush1.xpose.msra.mxu0 0.0
    %7848 = vmatprep.subr.mxu0 0.0
    %7849 = vmatpush1.xpose.msra.mxu0 0.0
    %7850 = vmatprep.subr.mxu0 0.0
    %7851 = vmatpush1.xpose.msra.mxu0 0.0
    %7852 = vmatprep.mubr.f32.mxu0 %v265
    %7853 = vmatmul.mubr.f32.gmra.mrb[0].mxu0 %v264
    %v7854 = vpop.f32.mrb[0].mxu0
    %v7855 = vadd.f32 %v7785, %v7854
    %v7856 = vpop.f32.mrb[0].mxu0
    %7857 = vdwg.mxu0
    %7858 = vmatprep.subr.mxu0 %v512
    %7859 = vmatpush1.xpose.msra.mxu0 %v511
    %7860 = vmatprep.subr.mxu0 %v757
    %7861 = vmatpush1.xpose.msra.mxu0 %v756
    %7862 = vmatprep.subr.mxu0 %v1002
    %7863 = vmatpush1.xpose.msra.mxu0 %v1001
    %7864 = vmatprep.subr.mxu0 %v1247
    %7865 = vmatpush1.xpose.msra.mxu0 %v1246
    %7866 = vmatprep.subr.mxu0 %v1492
    %7867 = vmatpush1.xpose.msra.mxu0 %v1491
    %7868 = vmatprep.subr.mxu0 %v1737
    %7869 = vmatpush1.xpose.msra.mxu0 %v1736
    %7870 = vmatprep.subr.mxu0 0.0
    %7871 = vmatpush1.xpose.msra.mxu0 0.0
    %7872 = vmatprep.subr.mxu0 0.0
    %7873 = vmatpush1.xpose.msra.mxu0 0.0
    %7874 = vmatprep.subr.mxu0 0.0
    %7875 = vmatpush1.xpose.msra.mxu0 0.0
    %7876 = vmatprep.subr.mxu0 0.0
    %7877 = vmatpush1.xpose.msra.mxu0 0.0
    %7878 = vmatprep.subr.mxu0 0.0
    %7879 = vmatpush1.xpose.msra.mxu0 0.0
    %7880 = vmatprep.subr.mxu0 0.0
    %7881 = vmatpush1.xpose.msra.mxu0 0.0
    %7882 = vmatprep.subr.mxu0 0.0
    %7883 = vmatpush1.xpose.msra.mxu0 0.0
    %7884 = vmatprep.subr.mxu0 0.0
    %7885 = vmatpush1.xpose.msra.mxu0 0.0
    %7886 = vmatprep.subr.mxu0 0.0
    %7887 = vmatpush1.xpose.msra.mxu0 0.0
    %7888 = vmatprep.subr.mxu0 0.0
    %7889 = vmatpush1.xpose.msra.mxu0 0.0
    %7890 = vmatprep.subr.mxu0 0.0
    %7891 = vmatpush1.xpose.msra.mxu0 0.0
    %7892 = vmatprep.subr.mxu0 0.0
    %7893 = vmatpush1.xpose.msra.mxu0 0.0
    %7894 = vmatprep.subr.mxu0 0.0
    %7895 = vmatpush1.xpose.msra.mxu0 0.0
    %7896 = vmatprep.subr.mxu0 0.0
    %7897 = vmatpush1.xpose.msra.mxu0 0.0
    %7898 = vmatprep.subr.mxu0 0.0
    %7899 = vmatpush1.xpose.msra.mxu0 0.0
    %7900 = vmatprep.subr.mxu0 0.0
    %7901 = vmatpush1.xpose.msra.mxu0 0.0
    %7902 = vmatprep.subr.mxu0 0.0
    %7903 = vmatpush1.xpose.msra.mxu0 0.0
    %7904 = vmatprep.subr.mxu0 0.0
    %7905 = vmatpush1.xpose.msra.mxu0 0.0
    %7906 = vmatprep.subr.mxu0 0.0
    %7907 = vmatpush1.xpose.msra.mxu0 0.0
    %7908 = vmatprep.subr.mxu0 0.0
    %7909 = vmatpush1.xpose.msra.mxu0 0.0
    %7910 = vmatprep.subr.mxu0 0.0
    %7911 = vmatpush1.xpose.msra.mxu0 0.0
    %7912 = vmatprep.subr.mxu0 0.0
    %7913 = vmatpush1.xpose.msra.mxu0 0.0
    %7914 = vmatprep.subr.mxu0 0.0
    %7915 = vmatpush1.xpose.msra.mxu0 0.0
    %7916 = vmatprep.subr.mxu0 0.0
    %7917 = vmatpush1.xpose.msra.mxu0 0.0
    %7918 = vmatprep.subr.mxu0 0.0
    %7919 = vmatpush1.xpose.msra.mxu0 0.0
    %7920 = vmatprep.subr.mxu0 0.0
    %7921 = vmatpush1.xpose.msra.mxu0 0.0
    %7922 = vmatprep.mubr.f32.mxu0 %v267
    %7923 = vmatmul.mubr.f32.gmra.mrb[0].mxu0 %v266
    %v7924 = vpop.f32.mrb[0].mxu0
    %v7925 = vadd.f32 %v7855, %v7924
    %v7926 = vpop.f32.mrb[0].mxu0
    %7927 = vdwg.mxu0
    %7928 = vmatprep.subr.mxu0 %v514
    %7929 = vmatpush1.xpose.msra.mxu0 %v513
    %7930 = vmatprep.subr.mxu0 %v759
    %7931 = vmatpush1.xpose.msra.mxu0 %v758
    %7932 = vmatprep.subr.mxu0 %v1004
    %7933 = vmatpush1.xpose.msra.mxu0 %v1003
    %7934 = vmatprep.subr.mxu0 %v1249
    %7935 = vmatpush1.xpose.msra.mxu0 %v1248
    %7936 = vmatprep.subr.mxu0 %v1494
    %7937 = vmatpush1.xpose.msra.mxu0 %v1493
    %7938 = vmatprep.subr.mxu0 %v1739
    %7939 = vmatpush1.xpose.msra.mxu0 %v1738
    %7940 = vmatprep.subr.mxu0 0.0
    %7941 = vmatpush1.xpose.msra.mxu0 0.0
    %7942 = vmatprep.subr.mxu0 0.0
    %7943 = vmatpush1.xpose.msra.mxu0 0.0
    %7944 = vmatprep.subr.mxu0 0.0
    %7945 = vmatpush1.xpose.msra.mxu0 0.0
    %7946 = vmatprep.subr.mxu0 0.0
    %7947 = vmatpush1.xpose.msra.mxu0 0.0
    %7948 = vmatprep.subr.mxu0 0.0
    %7949 = vmatpush1.xpose.msra.mxu0 0.0
    %7950 = vmatprep.subr.mxu0 0.0
    %7951 = vmatpush1.xpose.msra.mxu0 0.0
    %7952 = vmatprep.subr.mxu0 0.0
    %7953 = vmatpush1.xpose.msra.mxu0 0.0
    %7954 = vmatprep.subr.mxu0 0.0
    %7955 = vmatpush1.xpose.msra.mxu0 0.0
    %7956 = vmatprep.subr.mxu0 0.0
    %7957 = vmatpush1.xpose.msra.mxu0 0.0
    %7958 = vmatprep.subr.mxu0 0.0
    %7959 = vmatpush1.xpose.msra.mxu0 0.0
    %7960 = vmatprep.subr.mxu0 0.0
    %7961 = vmatpush1.xpose.msra.mxu0 0.0
    %7962 = vmatprep.subr.mxu0 0.0
    %7963 = vmatpush1.xpose.msra.mxu0 0.0
    %7964 = vmatprep.subr.mxu0 0.0
    %7965 = vmatpush1.xpose.msra.mxu0 0.0
    %7966 = vmatprep.subr.mxu0 0.0
    %7967 = vmatpush1.xpose.msra.mxu0 0.0
    %7968 = vmatprep.subr.mxu0 0.0
    %7969 = vmatpush1.xpose.msra.mxu0 0.0
    %7970 = vmatprep.subr.mxu0 0.0
    %7971 = vmatpush1.xpose.msra.mxu0 0.0
    %7972 = vmatprep.subr.mxu0 0.0
    %7973 = vmatpush1.xpose.msra.mxu0 0.0
    %7974 = vmatprep.subr.mxu0 0.0
    %7975 = vmatpush1.xpose.msra.mxu0 0.0
    %7976 = vmatprep.subr.mxu0 0.0
    %7977 = vmatpush1.xpose.msra.mxu0 0.0
    %7978 = vmatprep.subr.mxu0 0.0
    %7979 = vmatpush1.xpose.msra.mxu0 0.0
    %7980 = vmatprep.subr.mxu0 0.0
    %7981 = vmatpush1.xpose.msra.mxu0 0.0
    %7982 = vmatprep.subr.mxu0 0.0
    %7983 = vmatpush1.xpose.msra.mxu0 0.0
    %7984 = vmatprep.subr.mxu0 0.0
    %7985 = vmatpush1.xpose.msra.mxu0 0.0
    %7986 = vmatprep.subr.mxu0 0.0
    %7987 = vmatpush1.xpose.msra.mxu0 0.0
    %7988 = vmatprep.subr.mxu0 0.0
    %7989 = vmatpush1.xpose.msra.mxu0 0.0
    %7990 = vmatprep.subr.mxu0 0.0
    %7991 = vmatpush1.xpose.msra.mxu0 0.0
    %7992 = vmatprep.mubr.f32.mxu0 %v269
    %7993 = vmatmul.mubr.f32.gmra.mrb[0].mxu0 %v268
    %v7994 = vpop.f32.mrb[0].mxu0
    %v7995 = vadd.f32 %v7925, %v7994
    %v7996 = vpop.f32.mrb[0].mxu0
    %7997 = vdwg.mxu0
    %7998 = vmatprep.subr.mxu0 %v516
    %7999 = vmatpush1.xpose.msra.mxu0 %v515
    %8000 = vmatprep.subr.mxu0 %v761
    %8001 = vmatpush1.xpose.msra.mxu0 %v760
    %8002 = vmatprep.subr.mxu0 %v1006
    %8003 = vmatpush1.xpose.msra.mxu0 %v1005
    %8004 = vmatprep.subr.mxu0 %v1251
    %8005 = vmatpush1.xpose.msra.mxu0 %v1250
    %8006 = vmatprep.subr.mxu0 %v1496
    %8007 = vmatpush1.xpose.msra.mxu0 %v1495
    %8008 = vmatprep.subr.mxu0 %v1741
    %8009 = vmatpush1.xpose.msra.mxu0 %v1740
    %8010 = vmatprep.subr.mxu0 0.0
    %8011 = vmatpush1.xpose.msra.mxu0 0.0
    %8012 = vmatprep.subr.mxu0 0.0
    %8013 = vmatpush1.xpose.msra.mxu0 0.0
    %8014 = vmatprep.subr.mxu0 0.0
    %8015 = vmatpush1.xpose.msra.mxu0 0.0
    %8016 = vmatprep.subr.mxu0 0.0
    %8017 = vmatpush1.xpose.msra.mxu0 0.0
    %8018 = vmatprep.subr.mxu0 0.0
    %8019 = vmatpush1.xpose.msra.mxu0 0.0
    %8020 = vmatprep.subr.mxu0 0.0
    %8021 = vmatpush1.xpose.msra.mxu0 0.0
    %8022 = vmatprep.subr.mxu0 0.0
    %8023 = vmatpush1.xpose.msra.mxu0 0.0
    %8024 = vmatprep.subr.mxu0 0.0
    %8025 = vmatpush1.xpose.msra.mxu0 0.0
    %8026 = vmatprep.subr.mxu0 0.0
    %8027 = vmatpush1.xpose.msra.mxu0 0.0
    %8028 = vmatprep.subr.mxu0 0.0
    %8029 = vmatpush1.xpose.msra.mxu0 0.0
    %8030 = vmatprep.subr.mxu0 0.0
    %8031 = vmatpush1.xpose.msra.mxu0 0.0
    %8032 = vmatprep.subr.mxu0 0.0
    %8033 = vmatpush1.xpose.msra.mxu0 0.0
    %8034 = vmatprep.subr.mxu0 0.0
    %8035 = vmatpush1.xpose.msra.mxu0 0.0
    %8036 = vmatprep.subr.mxu0 0.0
    %8037 = vmatpush1.xpose.msra.mxu0 0.0
    %8038 = vmatprep.subr.mxu0 0.0
    %8039 = vmatpush1.xpose.msra.mxu0 0.0
    %8040 = vmatprep.subr.mxu0 0.0
    %8041 = vmatpush1.xpose.msra.mxu0 0.0
    %8042 = vmatprep.subr.mxu0 0.0
    %8043 = vmatpush1.xpose.msra.mxu0 0.0
    %8044 = vmatprep.subr.mxu0 0.0
    %8045 = vmatpush1.xpose.msra.mxu0 0.0
    %8046 = vmatprep.subr.mxu0 0.0
    %8047 = vmatpush1.xpose.msra.mxu0 0.0
    %8048 = vmatprep.subr.mxu0 0.0
    %8049 = vmatpush1.xpose.msra.mxu0 0.0
    %8050 = vmatprep.subr.mxu0 0.0
    %8051 = vmatpush1.xpose.msra.mxu0 0.0
    %8052 = vmatprep.subr.mxu0 0.0
    %8053 = vmatpush1.xpose.msra.mxu0 0.0
    %8054 = vmatprep.subr.mxu0 0.0
    %8055 = vmatpush1.xpose.msra.mxu0 0.0
    %8056 = vmatprep.subr.mxu0 0.0
    %8057 = vmatpush1.xpose.msra.mxu0 0.0
    %8058 = vmatprep.subr.mxu0 0.0
    %8059 = vmatpush1.xpose.msra.mxu0 0.0
    %8060 = vmatprep.subr.mxu0 0.0
    %8061 = vmatpush1.xpose.msra.mxu0 0.0
    %8062 = vmatprep.mubr.f32.mxu0 %v271
    %8063 = vmatmul.mubr.f32.gmra.mrb[0].mxu0 %v270
    %v8064 = vpop.f32.mrb[0].mxu0
    %v8065 = vadd.f32 %v7995, %v8064
    %v8066 = vpop.f32.mrb[0].mxu0
    %8067 = vdwg.mxu0
    %8068 = vmatprep.subr.mxu0 %v518
    %8069 = vmatpush1.xpose.msra.mxu0 %v517
    %8070 = vmatprep.subr.mxu0 %v763
    %8071 = vmatpush1.xpose.msra.mxu0 %v762
    %8072 = vmatprep.subr.mxu0 %v1008
    %8073 = vmatpush1.xpose.msra.mxu0 %v1007
    %8074 = vmatprep.subr.mxu0 %v1253
    %8075 = vmatpush1.xpose.msra.mxu0 %v1252
    %8076 = vmatprep.subr.mxu0 %v1498
    %8077 = vmatpush1.xpose.msra.mxu0 %v1497
    %8078 = vmatprep.subr.mxu0 %v1743
    %8079 = vmatpush1.xpose.msra.mxu0 %v1742
    %8080 = vmatprep.subr.mxu0 0.0
    %8081 = vmatpush1.xpose.msra.mxu0 0.0
    %8082 = vmatprep.subr.mxu0 0.0
    %8083 = vmatpush1.xpose.msra.mxu0 0.0
    %8084 = vmatprep.subr.mxu0 0.0
    %8085 = vmatpush1.xpose.msra.mxu0 0.0
    %8086 = vmatprep.subr.mxu0 0.0
    %8087 = vmatpush1.xpose.msra.mxu0 0.0
    %8088 = vmatprep.subr.mxu0 0.0
    %8089 = vmatpush1.xpose.msra.mxu0 0.0
    %8090 = vmatprep.subr.mxu0 0.0
    %8091 = vmatpush1.xpose.msra.mxu0 0.0
    %8092 = vmatprep.subr.mxu0 0.0
    %8093 = vmatpush1.xpose.msra.mxu0 0.0
    %8094 = vmatprep.subr.mxu0 0.0
    %8095 = vmatpush1.xpose.msra.mxu0 0.0
    %8096 = vmatprep.subr.mxu0 0.0
    %8097 = vmatpush1.xpose.msra.mxu0 0.0
    %8098 = vmatprep.subr.mxu0 0.0
    %8099 = vmatpush1.xpose.msra.mxu0 0.0
    %8100 = vmatprep.subr.mxu0 0.0
    %8101 = vmatpush1.xpose.msra.mxu0 0.0
    %8102 = vmatprep.subr.mxu0 0.0
    %8103 = vmatpush1.xpose.msra.mxu0 0.0
    %8104 = vmatprep.subr.mxu0 0.0
    %8105 = vmatpush1.xpose.msra.mxu0 0.0
    %8106 = vmatprep.subr.mxu0 0.0
    %8107 = vmatpush1.xpose.msra.mxu0 0.0
    %8108 = vmatprep.subr.mxu0 0.0
    %8109 = vmatpush1.xpose.msra.mxu0 0.0
    %8110 = vmatprep.subr.mxu0 0.0
    %8111 = vmatpush1.xpose.msra.mxu0 0.0
    %8112 = vmatprep.subr.mxu0 0.0
    %8113 = vmatpush1.xpose.msra.mxu0 0.0
    %8114 = vmatprep.subr.mxu0 0.0
    %8115 = vmatpush1.xpose.msra.mxu0 0.0
    %8116 = vmatprep.subr.mxu0 0.0
    %8117 = vmatpush1.xpose.msra.mxu0 0.0
    %8118 = vmatprep.subr.mxu0 0.0
    %8119 = vmatpush1.xpose.msra.mxu0 0.0
    %8120 = vmatprep.subr.mxu0 0.0
    %8121 = vmatpush1.xpose.msra.mxu0 0.0
    %8122 = vmatprep.subr.mxu0 0.0
    %8123 = vmatpush1.xpose.msra.mxu0 0.0
    %8124 = vmatprep.subr.mxu0 0.0
    %8125 = vmatpush1.xpose.msra.mxu0 0.0
    %8126 = vmatprep.subr.mxu0 0.0
    %8127 = vmatpush1.xpose.msra.mxu0 0.0
    %8128 = vmatprep.subr.mxu0 0.0
    %8129 = vmatpush1.xpose.msra.mxu0 0.0
    %8130 = vmatprep.subr.mxu0 0.0
    %8131 = vmatpush1.xpose.msra.mxu0 0.0
    %8132 = vmatprep.mubr.f32.mxu0 %v273
    %8133 = vmatmul.mubr.f32.gmra.mrb[0].mxu0 %v272
    %v8134 = vpop.f32.mrb[0].mxu0
    %v8135 = vadd.f32 %v8065, %v8134
    %v8136 = vpop.f32.mrb[0].mxu0
    %8137 = vdwg.mxu0
    %8138 = vmatprep.subr.mxu0 %v520
    %8139 = vmatpush1.xpose.msra.mxu0 %v519
    %8140 = vmatprep.subr.mxu0 %v765
    %8141 = vmatpush1.xpose.msra.mxu0 %v764
    %8142 = vmatprep.subr.mxu0 %v1010
    %8143 = vmatpush1.xpose.msra.mxu0 %v1009
    %8144 = vmatprep.subr.mxu0 %v1255
    %8145 = vmatpush1.xpose.msra.mxu0 %v1254
    %8146 = vmatprep.subr.mxu0 %v1500
    %8147 = vmatpush1.xpose.msra.mxu0 %v1499
    %8148 = vmatprep.subr.mxu0 %v1745
    %8149 = vmatpush1.xpose.msra.mxu0 %v1744
    %8150 = vmatprep.subr.mxu0 0.0
    %8151 = vmatpush1.xpose.msra.mxu0 0.0
    %8152 = vmatprep.subr.mxu0 0.0
    %8153 = vmatpush1.xpose.msra.mxu0 0.0
    %8154 = vmatprep.subr.mxu0 0.0
    %8155 = vmatpush1.xpose.msra.mxu0 0.0
    %8156 = vmatprep.subr.mxu0 0.0
    %8157 = vmatpush1.xpose.msra.mxu0 0.0
    %8158 = vmatprep.subr.mxu0 0.0
    %8159 = vmatpush1.xpose.msra.mxu0 0.0
    %8160 = vmatprep.subr.mxu0 0.0
    %8161 = vmatpush1.xpose.msra.mxu0 0.0
    %8162 = vmatprep.subr.mxu0 0.0
    %8163 = vmatpush1.xpose.msra.mxu0 0.0
    %8164 = vmatprep.subr.mxu0 0.0
    %8165 = vmatpush1.xpose.msra.mxu0 0.0
    %8166 = vmatprep.subr.mxu0 0.0
    %8167 = vmatpush1.xpose.msra.mxu0 0.0
    %8168 = vmatprep.subr.mxu0 0.0
    %8169 = vmatpush1.xpose.msra.mxu0 0.0
    %8170 = vmatprep.subr.mxu0 0.0
    %8171 = vmatpush1.xpose.msra.mxu0 0.0
    %8172 = vmatprep.subr.mxu0 0.0
    %8173 = vmatpush1.xpose.msra.mxu0 0.0
    %8174 = vmatprep.subr.mxu0 0.0
    %8175 = vmatpush1.xpose.msra.mxu0 0.0
    %8176 = vmatprep.subr.mxu0 0.0
    %8177 = vmatpush1.xpose.msra.mxu0 0.0
    %8178 = vmatprep.subr.mxu0 0.0
    %8179 = vmatpush1.xpose.msra.mxu0 0.0
    %8180 = vmatprep.subr.mxu0 0.0
    %8181 = vmatpush1.xpose.msra.mxu0 0.0
    %8182 = vmatprep.subr.mxu0 0.0
    %8183 = vmatpush1.xpose.msra.mxu0 0.0
    %8184 = vmatprep.subr.mxu0 0.0
    %8185 = vmatpush1.xpose.msra.mxu0 0.0
    %8186 = vmatprep.subr.mxu0 0.0
    %8187 = vmatpush1.xpose.msra.mxu0 0.0
    %8188 = vmatprep.subr.mxu0 0.0
    %8189 = vmatpush1.xpose.msra.mxu0 0.0
    %8190 = vmatprep.subr.mxu0 0.0
    %8191 = vmatpush1.xpose.msra.mxu0 0.0
    %8192 = vmatprep.subr.mxu0 0.0
    %8193 = vmatpush1.xpose.msra.mxu0 0.0
    %8194 = vmatprep.subr.mxu0 0.0
    %8195 = vmatpush1.xpose.msra.mxu0 0.0
    %8196 = vmatprep.subr.mxu0 0.0
    %8197 = vmatpush1.xpose.msra.mxu0 0.0
    %8198 = vmatprep.subr.mxu0 0.0
    %8199 = vmatpush1.xpose.msra.mxu0 0.0
    %8200 = vmatprep.subr.mxu0 0.0
    %8201 = vmatpush1.xpose.msra.mxu0 0.0
    %8202 = vmatprep.mubr.f32.mxu0 %v275
    %8203 = vmatmul.mubr.f32.gmra.mrb[0].mxu0 %v274
    %v8204 = vpop.f32.mrb[0].mxu0
    %v8205 = vadd.f32 %v8135, %v8204
    %v8206 = vpop.f32.mrb[0].mxu0
    %8207 = vdwg.mxu0
    %8208 = vmatprep.subr.mxu0 %v522
    %8209 = vmatpush1.xpose.msra.mxu0 %v521
    %8210 = vmatprep.subr.mxu0 %v767
    %8211 = vmatpush1.xpose.msra.mxu0 %v766
    %8212 = vmatprep.subr.mxu0 %v1012
    %8213 = vmatpush1.xpose.msra.mxu0 %v1011
    %8214 = vmatprep.subr.mxu0 %v1257
    %8215 = vmatpush1.xpose.msra.mxu0 %v1256
    %8216 = vmatprep.subr.mxu0 %v1502
    %8217 = vmatpush1.xpose.msra.mxu0 %v1501
    %8218 = vmatprep.subr.mxu0 %v1747
    %8219 = vmatpush1.xpose.msra.mxu0 %v1746
    %8220 = vmatprep.subr.mxu0 0.0
    %8221 = vmatpush1.xpose.msra.mxu0 0.0
    %8222 = vmatprep.subr.mxu0 0.0
    %8223 = vmatpush1.xpose.msra.mxu0 0.0
    %8224 = vmatprep.subr.mxu0 0.0
    %8225 = vmatpush1.xpose.msra.mxu0 0.0
    %8226 = vmatprep.subr.mxu0 0.0
    %8227 = vmatpush1.xpose.msra.mxu0 0.0
    %8228 = vmatprep.subr.mxu0 0.0
    %8229 = vmatpush1.xpose.msra.mxu0 0.0
    %8230 = vmatprep.subr.mxu0 0.0
    %8231 = vmatpush1.xpose.msra.mxu0 0.0
    %8232 = vmatprep.subr.mxu0 0.0
    %8233 = vmatpush1.xpose.msra.mxu0 0.0
    %8234 = vmatprep.subr.mxu0 0.0
    %8235 = vmatpush1.xpose.msra.mxu0 0.0
    %8236 = vmatprep.subr.mxu0 0.0
    %8237 = vmatpush1.xpose.msra.mxu0 0.0
    %8238 = vmatprep.subr.mxu0 0.0
    %8239 = vmatpush1.xpose.msra.mxu0 0.0
    %8240 = vmatprep.subr.mxu0 0.0
    %8241 = vmatpush1.xpose.msra.mxu0 0.0
    %8242 = vmatprep.subr.mxu0 0.0
    %8243 = vmatpush1.xpose.msra.mxu0 0.0
    %8244 = vmatprep.subr.mxu0 0.0
    %8245 = vmatpush1.xpose.msra.mxu0 0.0
    %8246 = vmatprep.subr.mxu0 0.0
    %8247 = vmatpush1.xpose.msra.mxu0 0.0
    %8248 = vmatprep.subr.mxu0 0.0
    %8249 = vmatpush1.xpose.msra.mxu0 0.0
    %8250 = vmatprep.subr.mxu0 0.0
    %8251 = vmatpush1.xpose.msra.mxu0 0.0
    %8252 = vmatprep.subr.mxu0 0.0
    %8253 = vmatpush1.xpose.msra.mxu0 0.0
    %8254 = vmatprep.subr.mxu0 0.0
    %8255 = vmatpush1.xpose.msra.mxu0 0.0
    %8256 = vmatprep.subr.mxu0 0.0
    %8257 = vmatpush1.xpose.msra.mxu0 0.0
    %8258 = vmatprep.subr.mxu0 0.0
    %8259 = vmatpush1.xpose.msra.mxu0 0.0
    %8260 = vmatprep.subr.mxu0 0.0
    %8261 = vmatpush1.xpose.msra.mxu0 0.0
    %8262 = vmatprep.subr.mxu0 0.0
    %8263 = vmatpush1.xpose.msra.mxu0 0.0
    %8264 = vmatprep.subr.mxu0 0.0
    %8265 = vmatpush1.xpose.msra.mxu0 0.0
    %8266 = vmatprep.subr.mxu0 0.0
    %8267 = vmatpush1.xpose.msra.mxu0 0.0
    %8268 = vmatprep.subr.mxu0 0.0
    %8269 = vmatpush1.xpose.msra.mxu0 0.0
    %8270 = vmatprep.subr.mxu0 0.0
    %8271 = vmatpush1.xpose.msra.mxu0 0.0
    %8272 = vmatprep.mubr.f32.mxu0 %v277
    %8273 = vmatmul.mubr.f32.gmra.mrb[0].mxu0 %v276
    %v8274 = vpop.f32.mrb[0].mxu0
    %v8275 = vadd.f32 %v8205, %v8274
    %v8276 = vpop.f32.mrb[0].mxu0
    %8277 = vdwg.mxu0
    %8278 = vmatprep.subr.mxu0 %v524
    %8279 = vmatpush1.xpose.msra.mxu0 %v523
    %8280 = vmatprep.subr.mxu0 %v769
    %8281 = vmatpush1.xpose.msra.mxu0 %v768
    %8282 = vmatprep.subr.mxu0 %v1014
    %8283 = vmatpush1.xpose.msra.mxu0 %v1013
    %8284 = vmatprep.subr.mxu0 %v1259
    %8285 = vmatpush1.xpose.msra.mxu0 %v1258
    %8286 = vmatprep.subr.mxu0 %v1504
    %8287 = vmatpush1.xpose.msra.mxu0 %v1503
    %8288 = vmatprep.subr.mxu0 %v1749
    %8289 = vmatpush1.xpose.msra.mxu0 %v1748
    %8290 = vmatprep.subr.mxu0 0.0
    %8291 = vmatpush1.xpose.msra.mxu0 0.0
    %8292 = vmatprep.subr.mxu0 0.0
    %8293 = vmatpush1.xpose.msra.mxu0 0.0
    %8294 = vmatprep.subr.mxu0 0.0
    %8295 = vmatpush1.xpose.msra.mxu0 0.0
    %8296 = vmatprep.subr.mxu0 0.0
    %8297 = vmatpush1.xpose.msra.mxu0 0.0
    %8298 = vmatprep.subr.mxu0 0.0
    %8299 = vmatpush1.xpose.msra.mxu0 0.0
    %8300 = vmatprep.subr.mxu0 0.0
    %8301 = vmatpush1.xpose.msra.mxu0 0.0
    %8302 = vmatprep.subr.mxu0 0.0
    %8303 = vmatpush1.xpose.msra.mxu0 0.0
    %8304 = vmatprep.subr.mxu0 0.0
    %8305 = vmatpush1.xpose.msra.mxu0 0.0
    %8306 = vmatprep.subr.mxu0 0.0
    %8307 = vmatpush1.xpose.msra.mxu0 0.0
    %8308 = vmatprep.subr.mxu0 0.0
    %8309 = vmatpush1.xpose.msra.mxu0 0.0
    %8310 = vmatprep.subr.mxu0 0.0
    %8311 = vmatpush1.xpose.msra.mxu0 0.0
    %8312 = vmatprep.subr.mxu0 0.0
    %8313 = vmatpush1.xpose.msra.mxu0 0.0
    %8314 = vmatprep.subr.mxu0 0.0
    %8315 = vmatpush1.xpose.msra.mxu0 0.0
    %8316 = vmatprep.subr.mxu0 0.0
    %8317 = vmatpush1.xpose.msra.mxu0 0.0
    %8318 = vmatprep.subr.mxu0 0.0
    %8319 = vmatpush1.xpose.msra.mxu0 0.0
    %8320 = vmatprep.subr.mxu0 0.0
    %8321 = vmatpush1.xpose.msra.mxu0 0.0
    %8322 = vmatprep.subr.mxu0 0.0
    %8323 = vmatpush1.xpose.msra.mxu0 0.0
    %8324 = vmatprep.subr.mxu0 0.0
    %8325 = vmatpush1.xpose.msra.mxu0 0.0
    %8326 = vmatprep.subr.mxu0 0.0
    %8327 = vmatpush1.xpose.msra.mxu0 0.0
    %8328 = vmatprep.subr.mxu0 0.0
    %8329 = vmatpush1.xpose.msra.mxu0 0.0
    %8330 = vmatprep.subr.mxu0 0.0
    %8331 = vmatpush1.xpose.msra.mxu0 0.0
    %8332 = vmatprep.subr.mxu0 0.0
    %8333 = vmatpush1.xpose.msra.mxu0 0.0
    %8334 = vmatprep.subr.mxu0 0.0
    %8335 = vmatpush1.xpose.msra.mxu0 0.0
    %8336 = vmatprep.subr.mxu0 0.0
    %8337 = vmatpush1.xpose.msra.mxu0 0.0
    %8338 = vmatprep.subr.mxu0 0.0
    %8339 = vmatpush1.xpose.msra.mxu0 0.0
    %8340 = vmatprep.subr.mxu0 0.0
    %8341 = vmatpush1.xpose.msra.mxu0 0.0
    %8342 = vmatprep.mubr.f32.mxu0 %v279
    %8343 = vmatmul.mubr.f32.gmra.mrb[0].mxu0 %v278
    %v8344 = vpop.f32.mrb[0].mxu0
    %v8345 = vadd.f32 %v8275, %v8344
    %v8346 = vpop.f32.mrb[0].mxu0
    %8347 = vdwg.mxu0
    %8348 = vmatprep.subr.mxu0 %v526
    %8349 = vmatpush1.xpose.msra.mxu0 %v525
    %8350 = vmatprep.subr.mxu0 %v771
    %8351 = vmatpush1.xpose.msra.mxu0 %v770
    %8352 = vmatprep.subr.mxu0 %v1016
    %8353 = vmatpush1.xpose.msra.mxu0 %v1015
    %8354 = vmatprep.subr.mxu0 %v1261
    %8355 = vmatpush1.xpose.msra.mxu0 %v1260
    %8356 = vmatprep.subr.mxu0 %v1506
    %8357 = vmatpush1.xpose.msra.mxu0 %v1505
    %8358 = vmatprep.subr.mxu0 %v1751
    %8359 = vmatpush1.xpose.msra.mxu0 %v1750
    %8360 = vmatprep.subr.mxu0 0.0
    %8361 = vmatpush1.xpose.msra.mxu0 0.0
    %8362 = vmatprep.subr.mxu0 0.0
    %8363 = vmatpush1.xpose.msra.mxu0 0.0
    %8364 = vmatprep.subr.mxu0 0.0
    %8365 = vmatpush1.xpose.msra.mxu0 0.0
    %8366 = vmatprep.subr.mxu0 0.0
    %8367 = vmatpush1.xpose.msra.mxu0 0.0
    %8368 = vmatprep.subr.mxu0 0.0
    %8369 = vmatpush1.xpose.msra.mxu0 0.0
    %8370 = vmatprep.subr.mxu0 0.0
    %8371 = vmatpush1.xpose.msra.mxu0 0.0
    %8372 = vmatprep.subr.mxu0 0.0
    %8373 = vmatpush1.xpose.msra.mxu0 0.0
    %8374 = vmatprep.subr.mxu0 0.0
    %8375 = vmatpush1.xpose.msra.mxu0 0.0
    %8376 = vmatprep.subr.mxu0 0.0
    %8377 = vmatpush1.xpose.msra.mxu0 0.0
    %8378 = vmatprep.subr.mxu0 0.0
    %8379 = vmatpush1.xpose.msra.mxu0 0.0
    %8380 = vmatprep.subr.mxu0 0.0
    %8381 = vmatpush1.xpose.msra.mxu0 0.0
    %8382 = vmatprep.subr.mxu0 0.0
    %8383 = vmatpush1.xpose.msra.mxu0 0.0
    %8384 = vmatprep.subr.mxu0 0.0
    %8385 = vmatpush1.xpose.msra.mxu0 0.0
    %8386 = vmatprep.subr.mxu0 0.0
    %8387 = vmatpush1.xpose.msra.mxu0 0.0
    %8388 = vmatprep.subr.mxu0 0.0
    %8389 = vmatpush1.xpose.msra.mxu0 0.0
    %8390 = vmatprep.subr.mxu0 0.0
    %8391 = vmatpush1.xpose.msra.mxu0 0.0
    %8392 = vmatprep.subr.mxu0 0.0
    %8393 = vmatpush1.xpose.msra.mxu0 0.0
    %8394 = vmatprep.subr.mxu0 0.0
    %8395 = vmatpush1.xpose.msra.mxu0 0.0
    %8396 = vmatprep.subr.mxu0 0.0
    %8397 = vmatpush1.xpose.msra.mxu0 0.0
    %8398 = vmatprep.subr.mxu0 0.0
    %8399 = vmatpush1.xpose.msra.mxu0 0.0
    %8400 = vmatprep.subr.mxu0 0.0
    %8401 = vmatpush1.xpose.msra.mxu0 0.0
    %8402 = vmatprep.subr.mxu0 0.0
    %8403 = vmatpush1.xpose.msra.mxu0 0.0
    %8404 = vmatprep.subr.mxu0 0.0
    %8405 = vmatpush1.xpose.msra.mxu0 0.0
    %8406 = vmatprep.subr.mxu0 0.0
    %8407 = vmatpush1.xpose.msra.mxu0 0.0
    %8408 = vmatprep.subr.mxu0 0.0
    %8409 = vmatpush1.xpose.msra.mxu0 0.0
    %8410 = vmatprep.subr.mxu0 0.0
    %8411 = vmatpush1.xpose.msra.mxu0 0.0
    %8412 = vmatprep.mubr.f32.mxu0 %v281
    %8413 = vmatmul.mubr.f32.gmra.mrb[0].mxu0 %v280
    %v8414 = vpop.f32.mrb[0].mxu0
    %v8415 = vadd.f32 %v8345, %v8414
    %v8416 = vpop.f32.mrb[0].mxu0
    %8417 = vdwg.mxu0
    %8418 = vmatprep.subr.mxu0 %v528
    %8419 = vmatpush1.xpose.msra.mxu0 %v527
    %8420 = vmatprep.subr.mxu0 %v773
    %8421 = vmatpush1.xpose.msra.mxu0 %v772
    %8422 = vmatprep.subr.mxu0 %v1018
    %8423 = vmatpush1.xpose.msra.mxu0 %v1017
    %8424 = vmatprep.subr.mxu0 %v1263
    %8425 = vmatpush1.xpose.msra.mxu0 %v1262
    %8426 = vmatprep.subr.mxu0 %v1508
    %8427 = vmatpush1.xpose.msra.mxu0 %v1507
    %8428 = vmatprep.subr.mxu0 %v1753
    %8429 = vmatpush1.xpose.msra.mxu0 %v1752
    %8430 = vmatprep.subr.mxu0 0.0
    %8431 = vmatpush1.xpose.msra.mxu0 0.0
    %8432 = vmatprep.subr.mxu0 0.0
    %8433 = vmatpush1.xpose.msra.mxu0 0.0
    %8434 = vmatprep.subr.mxu0 0.0
    %8435 = vmatpush1.xpose.msra.mxu0 0.0
    %8436 = vmatprep.subr.mxu0 0.0
    %8437 = vmatpush1.xpose.msra.mxu0 0.0
    %8438 = vmatprep.subr.mxu0 0.0
    %8439 = vmatpush1.xpose.msra.mxu0 0.0
    %8440 = vmatprep.subr.mxu0 0.0
    %8441 = vmatpush1.xpose.msra.mxu0 0.0
    %8442 = vmatprep.subr.mxu0 0.0
    %8443 = vmatpush1.xpose.msra.mxu0 0.0
    %8444 = vmatprep.subr.mxu0 0.0
    %8445 = vmatpush1.xpose.msra.mxu0 0.0
    %8446 = vmatprep.subr.mxu0 0.0
    %8447 = vmatpush1.xpose.msra.mxu0 0.0
    %8448 = vmatprep.subr.mxu0 0.0
    %8449 = vmatpush1.xpose.msra.mxu0 0.0
    %8450 = vmatprep.subr.mxu0 0.0
    %8451 = vmatpush1.xpose.msra.mxu0 0.0
    %8452 = vmatprep.subr.mxu0 0.0
    %8453 = vmatpush1.xpose.msra.mxu0 0.0
    %8454 = vmatprep.subr.mxu0 0.0
    %8455 = vmatpush1.xpose.msra.mxu0 0.0
    %8456 = vmatprep.subr.mxu0 0.0
    %8457 = vmatpush1.xpose.msra.mxu0 0.0
    %8458 = vmatprep.subr.mxu0 0.0
    %8459 = vmatpush1.xpose.msra.mxu0 0.0
    %8460 = vmatprep.subr.mxu0 0.0
    %8461 = vmatpush1.xpose.msra.mxu0 0.0
    %8462 = vmatprep.subr.mxu0 0.0
    %8463 = vmatpush1.xpose.msra.mxu0 0.0
    %8464 = vmatprep.subr.mxu0 0.0
    %8465 = vmatpush1.xpose.msra.mxu0 0.0
    %8466 = vmatprep.subr.mxu0 0.0
    %8467 = vmatpush1.xpose.msra.mxu0 0.0
    %8468 = vmatprep.subr.mxu0 0.0
    %8469 = vmatpush1.xpose.msra.mxu0 0.0
    %8470 = vmatprep.subr.mxu0 0.0
    %8471 = vmatpush1.xpose.msra.mxu0 0.0
    %8472 = vmatprep.subr.mxu0 0.0
    %8473 = vmatpush1.xpose.msra.mxu0 0.0
    %8474 = vmatprep.subr.mxu0 0.0
    %8475 = vmatpush1.xpose.msra.mxu0 0.0
    %8476 = vmatprep.subr.mxu0 0.0
    %8477 = vmatpush1.xpose.msra.mxu0 0.0
    %8478 = vmatprep.subr.mxu0 0.0
    %8479 = vmatpush1.xpose.msra.mxu0 0.0
    %8480 = vmatprep.subr.mxu0 0.0
    %8481 = vmatpush1.xpose.msra.mxu0 0.0
    %8482 = vmatprep.mubr.f32.mxu0 %v283
    %8483 = vmatmul.mubr.f32.gmra.mrb[0].mxu0 %v282
    %v8484 = vpop.f32.mrb[0].mxu0
    %v8485 = vadd.f32 %v8415, %v8484
    %v8486 = vpop.f32.mrb[0].mxu0
    %8487 = vdwg.mxu0
    %8488 = vmatprep.subr.mxu0 %v530
    %8489 = vmatpush1.xpose.msra.mxu0 %v529
    %8490 = vmatprep.subr.mxu0 %v775
    %8491 = vmatpush1.xpose.msra.mxu0 %v774
    %8492 = vmatprep.subr.mxu0 %v1020
    %8493 = vmatpush1.xpose.msra.mxu0 %v1019
    %8494 = vmatprep.subr.mxu0 %v1265
    %8495 = vmatpush1.xpose.msra.mxu0 %v1264
    %8496 = vmatprep.subr.mxu0 %v1510
    %8497 = vmatpush1.xpose.msra.mxu0 %v1509
    %8498 = vmatprep.subr.mxu0 %v1755
    %8499 = vmatpush1.xpose.msra.mxu0 %v1754
    %8500 = vmatprep.subr.mxu0 0.0
    %8501 = vmatpush1.xpose.msra.mxu0 0.0
    %8502 = vmatprep.subr.mxu0 0.0
    %8503 = vmatpush1.xpose.msra.mxu0 0.0
    %8504 = vmatprep.subr.mxu0 0.0
    %8505 = vmatpush1.xpose.msra.mxu0 0.0
    %8506 = vmatprep.subr.mxu0 0.0
    %8507 = vmatpush1.xpose.msra.mxu0 0.0
    %8508 = vmatprep.subr.mxu0 0.0
    %8509 = vmatpush1.xpose.msra.mxu0 0.0
    %8510 = vmatprep.subr.mxu0 0.0
    %8511 = vmatpush1.xpose.msra.mxu0 0.0
    %8512 = vmatprep.subr.mxu0 0.0
    %8513 = vmatpush1.xpose.msra.mxu0 0.0
    %8514 = vmatprep.subr.mxu0 0.0
    %8515 = vmatpush1.xpose.msra.mxu0 0.0
    %8516 = vmatprep.subr.mxu0 0.0
    %8517 = vmatpush1.xpose.msra.mxu0 0.0
    %8518 = vmatprep.subr.mxu0 0.0
    %8519 = vmatpush1.xpose.msra.mxu0 0.0
    %8520 = vmatprep.subr.mxu0 0.0
    %8521 = vmatpush1.xpose.msra.mxu0 0.0
    %8522 = vmatprep.subr.mxu0 0.0
    %8523 = vmatpush1.xpose.msra.mxu0 0.0
    %8524 = vmatprep.subr.mxu0 0.0
    %8525 = vmatpush1.xpose.msra.mxu0 0.0
    %8526 = vmatprep.subr.mxu0 0.0
    %8527 = vmatpush1.xpose.msra.mxu0 0.0
    %8528 = vmatprep.subr.mxu0 0.0
    %8529 = vmatpush1.xpose.msra.mxu0 0.0
    %8530 = vmatprep.subr.mxu0 0.0
    %8531 = vmatpush1.xpose.msra.mxu0 0.0
    %8532 = vmatprep.subr.mxu0 0.0
    %8533 = vmatpush1.xpose.msra.mxu0 0.0
    %8534 = vmatprep.subr.mxu0 0.0
    %8535 = vmatpush1.xpose.msra.mxu0 0.0
    %8536 = vmatprep.subr.mxu0 0.0
    %8537 = vmatpush1.xpose.msra.mxu0 0.0
    %8538 = vmatprep.subr.mxu0 0.0
    %8539 = vmatpush1.xpose.msra.mxu0 0.0
    %8540 = vmatprep.subr.mxu0 0.0
    %8541 = vmatpush1.xpose.msra.mxu0 0.0
    %8542 = vmatprep.subr.mxu0 0.0
    %8543 = vmatpush1.xpose.msra.mxu0 0.0
    %8544 = vmatprep.subr.mxu0 0.0
    %8545 = vmatpush1.xpose.msra.mxu0 0.0
    %8546 = vmatprep.subr.mxu0 0.0
    %8547 = vmatpush1.xpose.msra.mxu0 0.0
    %8548 = vmatprep.subr.mxu0 0.0
    %8549 = vmatpush1.xpose.msra.mxu0 0.0
    %8550 = vmatprep.subr.mxu0 0.0
    %8551 = vmatpush1.xpose.msra.mxu0 0.0
    %8552 = vmatprep.mubr.f32.mxu0 %v285
    %8553 = vmatmul.mubr.f32.gmra.mrb[0].mxu0 %v284
    %v8554 = vpop.f32.mrb[0].mxu0
    %v8555 = vadd.f32 %v8485, %v8554
    %v8556 = vpop.f32.mrb[0].mxu0
    %8557 = vdwg.mxu0
    %8558 = vmatprep.subr.mxu0 %v532
    %8559 = vmatpush1.xpose.msra.mxu0 %v531
    %8560 = vmatprep.subr.mxu0 %v777
    %8561 = vmatpush1.xpose.msra.mxu0 %v776
    %8562 = vmatprep.subr.mxu0 %v1022
    %8563 = vmatpush1.xpose.msra.mxu0 %v1021
    %8564 = vmatprep.subr.mxu0 %v1267
    %8565 = vmatpush1.xpose.msra.mxu0 %v1266
    %8566 = vmatprep.subr.mxu0 %v1512
    %8567 = vmatpush1.xpose.msra.mxu0 %v1511
    %8568 = vmatprep.subr.mxu0 %v1757
    %8569 = vmatpush1.xpose.msra.mxu0 %v1756
    %8570 = vmatprep.subr.mxu0 0.0
    %8571 = vmatpush1.xpose.msra.mxu0 0.0
    %8572 = vmatprep.subr.mxu0 0.0
    %8573 = vmatpush1.xpose.msra.mxu0 0.0
    %8574 = vmatprep.subr.mxu0 0.0
    %8575 = vmatpush1.xpose.msra.mxu0 0.0
    %8576 = vmatprep.subr.mxu0 0.0
    %8577 = vmatpush1.xpose.msra.mxu0 0.0
    %8578 = vmatprep.subr.mxu0 0.0
    %8579 = vmatpush1.xpose.msra.mxu0 0.0
    %8580 = vmatprep.subr.mxu0 0.0
    %8581 = vmatpush1.xpose.msra.mxu0 0.0
    %8582 = vmatprep.subr.mxu0 0.0
    %8583 = vmatpush1.xpose.msra.mxu0 0.0
    %8584 = vmatprep.subr.mxu0 0.0
    %8585 = vmatpush1.xpose.msra.mxu0 0.0
    %8586 = vmatprep.subr.mxu0 0.0
    %8587 = vmatpush1.xpose.msra.mxu0 0.0
    %8588 = vmatprep.subr.mxu0 0.0
    %8589 = vmatpush1.xpose.msra.mxu0 0.0
    %8590 = vmatprep.subr.mxu0 0.0
    %8591 = vmatpush1.xpose.msra.mxu0 0.0
    %8592 = vmatprep.subr.mxu0 0.0
    %8593 = vmatpush1.xpose.msra.mxu0 0.0
    %8594 = vmatprep.subr.mxu0 0.0
    %8595 = vmatpush1.xpose.msra.mxu0 0.0
    %8596 = vmatprep.subr.mxu0 0.0
    %8597 = vmatpush1.xpose.msra.mxu0 0.0
    %8598 = vmatprep.subr.mxu0 0.0
    %8599 = vmatpush1.xpose.msra.mxu0 0.0
    %8600 = vmatprep.subr.mxu0 0.0
    %8601 = vmatpush1.xpose.msra.mxu0 0.0
    %8602 = vmatprep.subr.mxu0 0.0
    %8603 = vmatpush1.xpose.msra.mxu0 0.0
    %8604 = vmatprep.subr.mxu0 0.0
    %8605 = vmatpush1.xpose.msra.mxu0 0.0
    %8606 = vmatprep.subr.mxu0 0.0
    %8607 = vmatpush1.xpose.msra.mxu0 0.0
    %8608 = vmatprep.subr.mxu0 0.0
    %8609 = vmatpush1.xpose.msra.mxu0 0.0
    %8610 = vmatprep.subr.mxu0 0.0
    %8611 = vmatpush1.xpose.msra.mxu0 0.0
    %8612 = vmatprep.subr.mxu0 0.0
    %8613 = vmatpush1.xpose.msra.mxu0 0.0
    %8614 = vmatprep.subr.mxu0 0.0
    %8615 = vmatpush1.xpose.msra.mxu0 0.0
    %8616 = vmatprep.subr.mxu0 0.0
    %8617 = vmatpush1.xpose.msra.mxu0 0.0
    %8618 = vmatprep.subr.mxu0 0.0
    %8619 = vmatpush1.xpose.msra.mxu0 0.0
    %8620 = vmatprep.subr.mxu0 0.0
    %8621 = vmatpush1.xpose.msra.mxu0 0.0
    %8622 = vmatprep.mubr.f32.mxu0 %v287
    %8623 = vmatmul.mubr.f32.gmra.mrb[0].mxu0 %v286
    %v8624 = vpop.f32.mrb[0].mxu0
    %v8625 = vadd.f32 %v8555, %v8624
    %v8626 = vpop.f32.mrb[0].mxu0
    %8627 = vdwg.mxu0
    %8628 = vmatprep.subr.mxu0 %v534
    %8629 = vmatpush1.xpose.msra.mxu0 %v533
    %8630 = vmatprep.subr.mxu0 %v779
    %8631 = vmatpush1.xpose.msra.mxu0 %v778
    %8632 = vmatprep.subr.mxu0 %v1024
    %8633 = vmatpush1.xpose.msra.mxu0 %v1023
    %8634 = vmatprep.subr.mxu0 %v1269
    %8635 = vmatpush1.xpose.msra.mxu0 %v1268
    %8636 = vmatprep.subr.mxu0 %v1514
    %8637 = vmatpush1.xpose.msra.mxu0 %v1513
    %8638 = vmatprep.subr.mxu0 %v1759
    %8639 = vmatpush1.xpose.msra.mxu0 %v1758
    %8640 = vmatprep.subr.mxu0 0.0
    %8641 = vmatpush1.xpose.msra.mxu0 0.0
    %8642 = vmatprep.subr.mxu0 0.0
    %8643 = vmatpush1.xpose.msra.mxu0 0.0
    %8644 = vmatprep.subr.mxu0 0.0
    %8645 = vmatpush1.xpose.msra.mxu0 0.0
    %8646 = vmatprep.subr.mxu0 0.0
    %8647 = vmatpush1.xpose.msra.mxu0 0.0
    %8648 = vmatprep.subr.mxu0 0.0
    %8649 = vmatpush1.xpose.msra.mxu0 0.0
    %8650 = vmatprep.subr.mxu0 0.0
    %8651 = vmatpush1.xpose.msra.mxu0 0.0
    %8652 = vmatprep.subr.mxu0 0.0
    %8653 = vmatpush1.xpose.msra.mxu0 0.0
    %8654 = vmatprep.subr.mxu0 0.0
    %8655 = vmatpush1.xpose.msra.mxu0 0.0
    %8656 = vmatprep.subr.mxu0 0.0
    %8657 = vmatpush1.xpose.msra.mxu0 0.0
    %8658 = vmatprep.subr.mxu0 0.0
    %8659 = vmatpush1.xpose.msra.mxu0 0.0
    %8660 = vmatprep.subr.mxu0 0.0
    %8661 = vmatpush1.xpose.msra.mxu0 0.0
    %8662 = vmatprep.subr.mxu0 0.0
    %8663 = vmatpush1.xpose.msra.mxu0 0.0
    %8664 = vmatprep.subr.mxu0 0.0
    %8665 = vmatpush1.xpose.msra.mxu0 0.0
    %8666 = vmatprep.subr.mxu0 0.0
    %8667 = vmatpush1.xpose.msra.mxu0 0.0
    %8668 = vmatprep.subr.mxu0 0.0
    %8669 = vmatpush1.xpose.msra.mxu0 0.0
    %8670 = vmatprep.subr.mxu0 0.0
    %8671 = vmatpush1.xpose.msra.mxu0 0.0
    %8672 = vmatprep.subr.mxu0 0.0
    %8673 = vmatpush1.xpose.msra.mxu0 0.0
    %8674 = vmatprep.subr.mxu0 0.0
    %8675 = vmatpush1.xpose.msra.mxu0 0.0
    %8676 = vmatprep.subr.mxu0 0.0
    %8677 = vmatpush1.xpose.msra.mxu0 0.0
    %8678 = vmatprep.subr.mxu0 0.0
    %8679 = vmatpush1.xpose.msra.mxu0 0.0
    %8680 = vmatprep.subr.mxu0 0.0
    %8681 = vmatpush1.xpose.msra.mxu0 0.0
    %8682 = vmatprep.subr.mxu0 0.0
    %8683 = vmatpush1.xpose.msra.mxu0 0.0
    %8684 = vmatprep.subr.mxu0 0.0
    %8685 = vmatpush1.xpose.msra.mxu0 0.0
    %8686 = vmatprep.subr.mxu0 0.0
    %8687 = vmatpush1.xpose.msra.mxu0 0.0
    %8688 = vmatprep.subr.mxu0 0.0
    %8689 = vmatpush1.xpose.msra.mxu0 0.0
    %8690 = vmatprep.subr.mxu0 0.0
    %8691 = vmatpush1.xpose.msra.mxu0 0.0
    %8692 = vmatprep.mubr.f32.mxu0 %v289
    %8693 = vmatmul.mubr.f32.gmra.mrb[0].mxu0 %v288
    %v8694 = vpop.f32.mrb[0].mxu0
    %v8695 = vadd.f32 %v8625, %v8694
    %v8696 = vpop.f32.mrb[0].mxu0
    %8697 = vdwg.mxu0
    %8698 = vmatprep.subr.mxu0 %v536
    %8699 = vmatpush1.xpose.msra.mxu0 %v535
    %8700 = vmatprep.subr.mxu0 %v781
    %8701 = vmatpush1.xpose.msra.mxu0 %v780
    %8702 = vmatprep.subr.mxu0 %v1026
    %8703 = vmatpush1.xpose.msra.mxu0 %v1025
    %8704 = vmatprep.subr.mxu0 %v1271
    %8705 = vmatpush1.xpose.msra.mxu0 %v1270
    %8706 = vmatprep.subr.mxu0 %v1516
    %8707 = vmatpush1.xpose.msra.mxu0 %v1515
    %8708 = vmatprep.subr.mxu0 %v1761
    %8709 = vmatpush1.xpose.msra.mxu0 %v1760
    %8710 = vmatprep.subr.mxu0 0.0
    %8711 = vmatpush1.xpose.msra.mxu0 0.0
    %8712 = vmatprep.subr.mxu0 0.0
    %8713 = vmatpush1.xpose.msra.mxu0 0.0
    %8714 = vmatprep.subr.mxu0 0.0
    %8715 = vmatpush1.xpose.msra.mxu0 0.0
    %8716 = vmatprep.subr.mxu0 0.0
    %8717 = vmatpush1.xpose.msra.mxu0 0.0
    %8718 = vmatprep.subr.mxu0 0.0
    %8719 = vmatpush1.xpose.msra.mxu0 0.0
    %8720 = vmatprep.subr.mxu0 0.0
    %8721 = vmatpush1.xpose.msra.mxu0 0.0
    %8722 = vmatprep.subr.mxu0 0.0
    %8723 = vmatpush1.xpose.msra.mxu0 0.0
    %8724 = vmatprep.subr.mxu0 0.0
    %8725 = vmatpush1.xpose.msra.mxu0 0.0
    %8726 = vmatprep.subr.mxu0 0.0
    %8727 = vmatpush1.xpose.msra.mxu0 0.0
    %8728 = vmatprep.subr.mxu0 0.0
    %8729 = vmatpush1.xpose.msra.mxu0 0.0
    %8730 = vmatprep.subr.mxu0 0.0
    %8731 = vmatpush1.xpose.msra.mxu0 0.0
    %8732 = vmatprep.subr.mxu0 0.0
    %8733 = vmatpush1.xpose.msra.mxu0 0.0
    %8734 = vmatprep.subr.mxu0 0.0
    %8735 = vmatpush1.xpose.msra.mxu0 0.0
    %8736 = vmatprep.subr.mxu0 0.0
    %8737 = vmatpush1.xpose.msra.mxu0 0.0
    %8738 = vmatprep.subr.mxu0 0.0
    %8739 = vmatpush1.xpose.msra.mxu0 0.0
    %8740 = vmatprep.subr.mxu0 0.0
    %8741 = vmatpush1.xpose.msra.mxu0 0.0
    %8742 = vmatprep.subr.mxu0 0.0
    %8743 = vmatpush1.xpose.msra.mxu0 0.0
    %8744 = vmatprep.subr.mxu0 0.0
    %8745 = vmatpush1.xpose.msra.mxu0 0.0
    %8746 = vmatprep.subr.mxu0 0.0
    %8747 = vmatpush1.xpose.msra.mxu0 0.0
    %8748 = vmatprep.subr.mxu0 0.0
    %8749 = vmatpush1.xpose.msra.mxu0 0.0
    %8750 = vmatprep.subr.mxu0 0.0
    %8751 = vmatpush1.xpose.msra.mxu0 0.0
    %8752 = vmatprep.subr.mxu0 0.0
    %8753 = vmatpush1.xpose.msra.mxu0 0.0
    %8754 = vmatprep.subr.mxu0 0.0
    %8755 = vmatpush1.xpose.msra.mxu0 0.0
    %8756 = vmatprep.subr.mxu0 0.0
    %8757 = vmatpush1.xpose.msra.mxu0 0.0
    %8758 = vmatprep.subr.mxu0 0.0
    %8759 = vmatpush1.xpose.msra.mxu0 0.0
    %8760 = vmatprep.subr.mxu0 0.0
    %8761 = vmatpush1.xpose.msra.mxu0 0.0
    %8762 = vmatprep.mubr.f32.mxu0 %v291
    %8763 = vmatmul.mubr.f32.gmra.mrb[0].mxu0 %v290
    %v8764 = vpop.f32.mrb[0].mxu0
    %v8765 = vadd.f32 %v8695, %v8764
    %v8766 = vpop.f32.mrb[0].mxu0
    %8767 = vdwg.mxu0
    %8768 = vmatprep.subr.mxu0 %v538
    %8769 = vmatpush1.xpose.msra.mxu0 %v537
    %8770 = vmatprep.subr.mxu0 %v783
    %8771 = vmatpush1.xpose.msra.mxu0 %v782
    %8772 = vmatprep.subr.mxu0 %v1028
    %8773 = vmatpush1.xpose.msra.mxu0 %v1027
    %8774 = vmatprep.subr.mxu0 %v1273
    %8775 = vmatpush1.xpose.msra.mxu0 %v1272
    %8776 = vmatprep.subr.mxu0 %v1518
    %8777 = vmatpush1.xpose.msra.mxu0 %v1517
    %8778 = vmatprep.subr.mxu0 %v1763
    %8779 = vmatpush1.xpose.msra.mxu0 %v1762
    %8780 = vmatprep.subr.mxu0 0.0
    %8781 = vmatpush1.xpose.msra.mxu0 0.0
    %8782 = vmatprep.subr.mxu0 0.0
    %8783 = vmatpush1.xpose.msra.mxu0 0.0
    %8784 = vmatprep.subr.mxu0 0.0
    %8785 = vmatpush1.xpose.msra.mxu0 0.0
    %8786 = vmatprep.subr.mxu0 0.0
    %8787 = vmatpush1.xpose.msra.mxu0 0.0
    %8788 = vmatprep.subr.mxu0 0.0
    %8789 = vmatpush1.xpose.msra.mxu0 0.0
    %8790 = vmatprep.subr.mxu0 0.0
    %8791 = vmatpush1.xpose.msra.mxu0 0.0
    %8792 = vmatprep.subr.mxu0 0.0
    %8793 = vmatpush1.xpose.msra.mxu0 0.0
    %8794 = vmatprep.subr.mxu0 0.0
    %8795 = vmatpush1.xpose.msra.mxu0 0.0
    %8796 = vmatprep.subr.mxu0 0.0
    %8797 = vmatpush1.xpose.msra.mxu0 0.0
    %8798 = vmatprep.subr.mxu0 0.0
    %8799 = vmatpush1.xpose.msra.mxu0 0.0
    %8800 = vmatprep.subr.mxu0 0.0
    %8801 = vmatpush1.xpose.msra.mxu0 0.0
    %8802 = vmatprep.subr.mxu0 0.0
    %8803 = vmatpush1.xpose.msra.mxu0 0.0
    %8804 = vmatprep.subr.mxu0 0.0
    %8805 = vmatpush1.xpose.msra.mxu0 0.0
    %8806 = vmatprep.subr.mxu0 0.0
    %8807 = vmatpush1.xpose.msra.mxu0 0.0
    %8808 = vmatprep.subr.mxu0 0.0
    %8809 = vmatpush1.xpose.msra.mxu0 0.0
    %8810 = vmatprep.subr.mxu0 0.0
    %8811 = vmatpush1.xpose.msra.mxu0 0.0
    %8812 = vmatprep.subr.mxu0 0.0
    %8813 = vmatpush1.xpose.msra.mxu0 0.0
    %8814 = vmatprep.subr.mxu0 0.0
    %8815 = vmatpush1.xpose.msra.mxu0 0.0
    %8816 = vmatprep.subr.mxu0 0.0
    %8817 = vmatpush1.xpose.msra.mxu0 0.0
    %8818 = vmatprep.subr.mxu0 0.0
    %8819 = vmatpush1.xpose.msra.mxu0 0.0
    %8820 = vmatprep.subr.mxu0 0.0
    %8821 = vmatpush1.xpose.msra.mxu0 0.0
    %8822 = vmatprep.subr.mxu0 0.0
    %8823 = vmatpush1.xpose.msra.mxu0 0.0
    %8824 = vmatprep.subr.mxu0 0.0
    %8825 = vmatpush1.xpose.msra.mxu0 0.0
    %8826 = vmatprep.subr.mxu0 0.0
    %8827 = vmatpush1.xpose.msra.mxu0 0.0
    %8828 = vmatprep.subr.mxu0 0.0
    %8829 = vmatpush1.xpose.msra.mxu0 0.0
    %8830 = vmatprep.subr.mxu0 0.0
    %8831 = vmatpush1.xpose.msra.mxu0 0.0
    %8832 = vmatprep.mubr.f32.mxu0 %v293
    %8833 = vmatmul.mubr.f32.gmra.mrb[0].mxu0 %v292
    %v8834 = vpop.f32.mrb[0].mxu0
    %v8835 = vadd.f32 %v8765, %v8834
    %v8836 = vpop.f32.mrb[0].mxu0
    %8837 = vdwg.mxu0
    %8838 = vmatprep.subr.mxu0 %v540
    %8839 = vmatpush1.xpose.msra.mxu0 %v539
    %8840 = vmatprep.subr.mxu0 %v785
    %8841 = vmatpush1.xpose.msra.mxu0 %v784
    %8842 = vmatprep.subr.mxu0 %v1030
    %8843 = vmatpush1.xpose.msra.mxu0 %v1029
    %8844 = vmatprep.subr.mxu0 %v1275
    %8845 = vmatpush1.xpose.msra.mxu0 %v1274
    %8846 = vmatprep.subr.mxu0 %v1520
    %8847 = vmatpush1.xpose.msra.mxu0 %v1519
    %8848 = vmatprep.subr.mxu0 %v1765
    %8849 = vmatpush1.xpose.msra.mxu0 %v1764
    %8850 = vmatprep.subr.mxu0 0.0
    %8851 = vmatpush1.xpose.msra.mxu0 0.0
    %8852 = vmatprep.subr.mxu0 0.0
    %8853 = vmatpush1.xpose.msra.mxu0 0.0
    %8854 = vmatprep.subr.mxu0 0.0
    %8855 = vmatpush1.xpose.msra.mxu0 0.0
    %8856 = vmatprep.subr.mxu0 0.0
    %8857 = vmatpush1.xpose.msra.mxu0 0.0
    %8858 = vmatprep.subr.mxu0 0.0
    %8859 = vmatpush1.xpose.msra.mxu0 0.0
    %8860 = vmatprep.subr.mxu0 0.0
    %8861 = vmatpush1.xpose.msra.mxu0 0.0
    %8862 = vmatprep.subr.mxu0 0.0
    %8863 = vmatpush1.xpose.msra.mxu0 0.0
    %8864 = vmatprep.subr.mxu0 0.0
    %8865 = vmatpush1.xpose.msra.mxu0 0.0
    %8866 = vmatprep.subr.mxu0 0.0
    %8867 = vmatpush1.xpose.msra.mxu0 0.0
    %8868 = vmatprep.subr.mxu0 0.0
    %8869 = vmatpush1.xpose.msra.mxu0 0.0
    %8870 = vmatprep.subr.mxu0 0.0
    %8871 = vmatpush1.xpose.msra.mxu0 0.0
    %8872 = vmatprep.subr.mxu0 0.0
    %8873 = vmatpush1.xpose.msra.mxu0 0.0
    %8874 = vmatprep.subr.mxu0 0.0
    %8875 = vmatpush1.xpose.msra.mxu0 0.0
    %8876 = vmatprep.subr.mxu0 0.0
    %8877 = vmatpush1.xpose.msra.mxu0 0.0
    %8878 = vmatprep.subr.mxu0 0.0
    %8879 = vmatpush1.xpose.msra.mxu0 0.0
    %8880 = vmatprep.subr.mxu0 0.0
    %8881 = vmatpush1.xpose.msra.mxu0 0.0
    %8882 = vmatprep.subr.mxu0 0.0
    %8883 = vmatpush1.xpose.msra.mxu0 0.0
    %8884 = vmatprep.subr.mxu0 0.0
    %8885 = vmatpush1.xpose.msra.mxu0 0.0
    %8886 = vmatprep.subr.mxu0 0.0
    %8887 = vmatpush1.xpose.msra.mxu0 0.0
    %8888 = vmatprep.subr.mxu0 0.0
    %8889 = vmatpush1.xpose.msra.mxu0 0.0
    %8890 = vmatprep.subr.mxu0 0.0
    %8891 = vmatpush1.xpose.msra.mxu0 0.0
    %8892 = vmatprep.subr.mxu0 0.0
    %8893 = vmatpush1.xpose.msra.mxu0 0.0
    %8894 = vmatprep.subr.mxu0 0.0
    %8895 = vmatpush1.xpose.msra.mxu0 0.0
    %8896 = vmatprep.subr.mxu0 0.0
    %8897 = vmatpush1.xpose.msra.mxu0 0.0
    %8898 = vmatprep.subr.mxu0 0.0
    %8899 = vmatpush1.xpose.msra.mxu0 0.0
    %8900 = vmatprep.subr.mxu0 0.0
    %8901 = vmatpush1.xpose.msra.mxu0 0.0
    %8902 = vmatprep.mubr.f32.mxu0 %v295
    %8903 = vmatmul.mubr.f32.gmra.mrb[0].mxu0 %v294
    %v8904 = vpop.f32.mrb[0].mxu0
    %v8905 = vadd.f32 %v8835, %v8904
    %v8906 = vpop.f32.mrb[0].mxu0
    %8907 = vdwg.mxu0
    %8908 = vmatprep.subr.mxu0 %v542
    %8909 = vmatpush1.xpose.msra.mxu0 %v541
    %8910 = vmatprep.subr.mxu0 %v787
    %8911 = vmatpush1.xpose.msra.mxu0 %v786
    %8912 = vmatprep.subr.mxu0 %v1032
    %8913 = vmatpush1.xpose.msra.mxu0 %v1031
    %8914 = vmatprep.subr.mxu0 %v1277
    %8915 = vmatpush1.xpose.msra.mxu0 %v1276
    %8916 = vmatprep.subr.mxu0 %v1522
    %8917 = vmatpush1.xpose.msra.mxu0 %v1521
    %8918 = vmatprep.subr.mxu0 %v1767
    %8919 = vmatpush1.xpose.msra.mxu0 %v1766
    %8920 = vmatprep.subr.mxu0 0.0
    %8921 = vmatpush1.xpose.msra.mxu0 0.0
    %8922 = vmatprep.subr.mxu0 0.0
    %8923 = vmatpush1.xpose.msra.mxu0 0.0
    %8924 = vmatprep.subr.mxu0 0.0
    %8925 = vmatpush1.xpose.msra.mxu0 0.0
    %8926 = vmatprep.subr.mxu0 0.0
    %8927 = vmatpush1.xpose.msra.mxu0 0.0
    %8928 = vmatprep.subr.mxu0 0.0
    %8929 = vmatpush1.xpose.msra.mxu0 0.0
    %8930 = vmatprep.subr.mxu0 0.0
    %8931 = vmatpush1.xpose.msra.mxu0 0.0
    %8932 = vmatprep.subr.mxu0 0.0
    %8933 = vmatpush1.xpose.msra.mxu0 0.0
    %8934 = vmatprep.subr.mxu0 0.0
    %8935 = vmatpush1.xpose.msra.mxu0 0.0
    %8936 = vmatprep.subr.mxu0 0.0
    %8937 = vmatpush1.xpose.msra.mxu0 0.0
    %8938 = vmatprep.subr.mxu0 0.0
    %8939 = vmatpush1.xpose.msra.mxu0 0.0
    %8940 = vmatprep.subr.mxu0 0.0
    %8941 = vmatpush1.xpose.msra.mxu0 0.0
    %8942 = vmatprep.subr.mxu0 0.0
    %8943 = vmatpush1.xpose.msra.mxu0 0.0
    %8944 = vmatprep.subr.mxu0 0.0
    %8945 = vmatpush1.xpose.msra.mxu0 0.0
    %8946 = vmatprep.subr.mxu0 0.0
    %8947 = vmatpush1.xpose.msra.mxu0 0.0
    %8948 = vmatprep.subr.mxu0 0.0
    %8949 = vmatpush1.xpose.msra.mxu0 0.0
    %8950 = vmatprep.subr.mxu0 0.0
    %8951 = vmatpush1.xpose.msra.mxu0 0.0
    %8952 = vmatprep.subr.mxu0 0.0
    %8953 = vmatpush1.xpose.msra.mxu0 0.0
    %8954 = vmatprep.subr.mxu0 0.0
    %8955 = vmatpush1.xpose.msra.mxu0 0.0
    %8956 = vmatprep.subr.mxu0 0.0
    %8957 = vmatpush1.xpose.msra.mxu0 0.0
    %8958 = vmatprep.subr.mxu0 0.0
    %8959 = vmatpush1.xpose.msra.mxu0 0.0
    %8960 = vmatprep.subr.mxu0 0.0
    %8961 = vmatpush1.xpose.msra.mxu0 0.0
    %8962 = vmatprep.subr.mxu0 0.0
    %8963 = vmatpush1.xpose.msra.mxu0 0.0
    %8964 = vmatprep.subr.mxu0 0.0
    %8965 = vmatpush1.xpose.msra.mxu0 0.0
    %8966 = vmatprep.subr.mxu0 0.0
    %8967 = vmatpush1.xpose.msra.mxu0 0.0
    %8968 = vmatprep.subr.mxu0 0.0
    %8969 = vmatpush1.xpose.msra.mxu0 0.0
    %8970 = vmatprep.subr.mxu0 0.0
    %8971 = vmatpush1.xpose.msra.mxu0 0.0
    %8972 = vmatprep.mubr.f32.mxu0 %v297
    %8973 = vmatmul.mubr.f32.gmra.mrb[0].mxu0 %v296
    %v8974 = vpop.f32.mrb[0].mxu0
    %v8975 = vadd.f32 %v8905, %v8974
    %v8976 = vpop.f32.mrb[0].mxu0
    %8977 = vdwg.mxu0
    %8978 = vmatprep.subr.mxu0 %v544
    %8979 = vmatpush1.xpose.msra.mxu0 %v543
    %8980 = vmatprep.subr.mxu0 %v789
    %8981 = vmatpush1.xpose.msra.mxu0 %v788
    %8982 = vmatprep.subr.mxu0 %v1034
    %8983 = vmatpush1.xpose.msra.mxu0 %v1033
    %8984 = vmatprep.subr.mxu0 %v1279
    %8985 = vmatpush1.xpose.msra.mxu0 %v1278
    %8986 = vmatprep.subr.mxu0 %v1524
    %8987 = vmatpush1.xpose.msra.mxu0 %v1523
    %8988 = vmatprep.subr.mxu0 %v1769
    %8989 = vmatpush1.xpose.msra.mxu0 %v1768
    %8990 = vmatprep.subr.mxu0 0.0
    %8991 = vmatpush1.xpose.msra.mxu0 0.0
    %8992 = vmatprep.subr.mxu0 0.0
    %8993 = vmatpush1.xpose.msra.mxu0 0.0
    %8994 = vmatprep.subr.mxu0 0.0
    %8995 = vmatpush1.xpose.msra.mxu0 0.0
    %8996 = vmatprep.subr.mxu0 0.0
    %8997 = vmatpush1.xpose.msra.mxu0 0.0
    %8998 = vmatprep.subr.mxu0 0.0
    %8999 = vmatpush1.xpose.msra.mxu0 0.0
    %9000 = vmatprep.subr.mxu0 0.0
    %9001 = vmatpush1.xpose.msra.mxu0 0.0
    %9002 = vmatprep.subr.mxu0 0.0
    %9003 = vmatpush1.xpose.msra.mxu0 0.0
    %9004 = vmatprep.subr.mxu0 0.0
    %9005 = vmatpush1.xpose.msra.mxu0 0.0
    %9006 = vmatprep.subr.mxu0 0.0
    %9007 = vmatpush1.xpose.msra.mxu0 0.0
    %9008 = vmatprep.subr.mxu0 0.0
    %9009 = vmatpush1.xpose.msra.mxu0 0.0
    %9010 = vmatprep.subr.mxu0 0.0
    %9011 = vmatpush1.xpose.msra.mxu0 0.0
    %9012 = vmatprep.subr.mxu0 0.0
    %9013 = vmatpush1.xpose.msra.mxu0 0.0
    %9014 = vmatprep.subr.mxu0 0.0
    %9015 = vmatpush1.xpose.msra.mxu0 0.0
    %9016 = vmatprep.subr.mxu0 0.0
    %9017 = vmatpush1.xpose.msra.mxu0 0.0
    %9018 = vmatprep.subr.mxu0 0.0
    %9019 = vmatpush1.xpose.msra.mxu0 0.0
    %9020 = vmatprep.subr.mxu0 0.0
    %9021 = vmatpush1.xpose.msra.mxu0 0.0
    %9022 = vmatprep.subr.mxu0 0.0
    %9023 = vmatpush1.xpose.msra.mxu0 0.0
    %9024 = vmatprep.subr.mxu0 0.0
    %9025 = vmatpush1.xpose.msra.mxu0 0.0
    %9026 = vmatprep.subr.mxu0 0.0
    %9027 = vmatpush1.xpose.msra.mxu0 0.0
    %9028 = vmatprep.subr.mxu0 0.0
    %9029 = vmatpush1.xpose.msra.mxu0 0.0
    %9030 = vmatprep.subr.mxu0 0.0
    %9031 = vmatpush1.xpose.msra.mxu0 0.0
    %9032 = vmatprep.subr.mxu0 0.0
    %9033 = vmatpush1.xpose.msra.mxu0 0.0
    %9034 = vmatprep.subr.mxu0 0.0
    %9035 = vmatpush1.xpose.msra.mxu0 0.0
    %9036 = vmatprep.subr.mxu0 0.0
    %9037 = vmatpush1.xpose.msra.mxu0 0.0
    %9038 = vmatprep.subr.mxu0 0.0
    %9039 = vmatpush1.xpose.msra.mxu0 0.0
    %9040 = vmatprep.subr.mxu0 0.0
    %9041 = vmatpush1.xpose.msra.mxu0 0.0
    %9042 = vmatprep.mubr.f32.mxu0 %v299
    %9043 = vmatmul.mubr.f32.gmra.mrb[0].mxu0 %v298
    %v9044 = vpop.f32.mrb[0].mxu0
    %v9045 = vadd.f32 %v8975, %v9044
    %v9046 = vpop.f32.mrb[0].mxu0
    %9047 = vdwg.mxu0
    %9048 = vmatprep.subr.mxu0 %v546
    %9049 = vmatpush1.xpose.msra.mxu0 %v545
    %9050 = vmatprep.subr.mxu0 %v791
    %9051 = vmatpush1.xpose.msra.mxu0 %v790
    %9052 = vmatprep.subr.mxu0 %v1036
    %9053 = vmatpush1.xpose.msra.mxu0 %v1035
    %9054 = vmatprep.subr.mxu0 %v1281
    %9055 = vmatpush1.xpose.msra.mxu0 %v1280
    %9056 = vmatprep.subr.mxu0 %v1526
    %9057 = vmatpush1.xpose.msra.mxu0 %v1525
    %9058 = vmatprep.subr.mxu0 %v1771
    %9059 = vmatpush1.xpose.msra.mxu0 %v1770
    %9060 = vmatprep.subr.mxu0 0.0
    %9061 = vmatpush1.xpose.msra.mxu0 0.0
    %9062 = vmatprep.subr.mxu0 0.0
    %9063 = vmatpush1.xpose.msra.mxu0 0.0
    %9064 = vmatprep.subr.mxu0 0.0
    %9065 = vmatpush1.xpose.msra.mxu0 0.0
    %9066 = vmatprep.subr.mxu0 0.0
    %9067 = vmatpush1.xpose.msra.mxu0 0.0
    %9068 = vmatprep.subr.mxu0 0.0
    %9069 = vmatpush1.xpose.msra.mxu0 0.0
    %9070 = vmatprep.subr.mxu0 0.0
    %9071 = vmatpush1.xpose.msra.mxu0 0.0
    %9072 = vmatprep.subr.mxu0 0.0
    %9073 = vmatpush1.xpose.msra.mxu0 0.0
    %9074 = vmatprep.subr.mxu0 0.0
    %9075 = vmatpush1.xpose.msra.mxu0 0.0
    %9076 = vmatprep.subr.mxu0 0.0
    %9077 = vmatpush1.xpose.msra.mxu0 0.0
    %9078 = vmatprep.subr.mxu0 0.0
    %9079 = vmatpush1.xpose.msra.mxu0 0.0
    %9080 = vmatprep.subr.mxu0 0.0
    %9081 = vmatpush1.xpose.msra.mxu0 0.0
    %9082 = vmatprep.subr.mxu0 0.0
    %9083 = vmatpush1.xpose.msra.mxu0 0.0
    %9084 = vmatprep.subr.mxu0 0.0
    %9085 = vmatpush1.xpose.msra.mxu0 0.0
    %9086 = vmatprep.subr.mxu0 0.0
    %9087 = vmatpush1.xpose.msra.mxu0 0.0
    %9088 = vmatprep.subr.mxu0 0.0
    %9089 = vmatpush1.xpose.msra.mxu0 0.0
    %9090 = vmatprep.subr.mxu0 0.0
    %9091 = vmatpush1.xpose.msra.mxu0 0.0
    %9092 = vmatprep.subr.mxu0 0.0
    %9093 = vmatpush1.xpose.msra.mxu0 0.0
    %9094 = vmatprep.subr.mxu0 0.0
    %9095 = vmatpush1.xpose.msra.mxu0 0.0
    %9096 = vmatprep.subr.mxu0 0.0
    %9097 = vmatpush1.xpose.msra.mxu0 0.0
    %9098 = vmatprep.subr.mxu0 0.0
    %9099 = vmatpush1.xpose.msra.mxu0 0.0
    %9100 = vmatprep.subr.mxu0 0.0
    %9101 = vmatpush1.xpose.msra.mxu0 0.0
    %9102 = vmatprep.subr.mxu0 0.0
    %9103 = vmatpush1.xpose.msra.mxu0 0.0
    %9104 = vmatprep.subr.mxu0 0.0
    %9105 = vmatpush1.xpose.msra.mxu0 0.0
    %9106 = vmatprep.subr.mxu0 0.0
    %9107 = vmatpush1.xpose.msra.mxu0 0.0
    %9108 = vmatprep.subr.mxu0 0.0
    %9109 = vmatpush1.xpose.msra.mxu0 0.0
    %9110 = vmatprep.subr.mxu0 0.0
    %9111 = vmatpush1.xpose.msra.mxu0 0.0
    %9112 = vmatprep.mubr.f32.mxu0 %v301
    %9113 = vmatmul.mubr.f32.gmra.mrb[0].mxu0 %v300
    %v9114 = vpop.f32.mrb[0].mxu0
    %v9115 = vadd.f32 %v9045, %v9114
    %v9116 = vpop.f32.mrb[0].mxu0
    %9117 = vdwg.mxu0
    %9118 = vmatprep.subr.mxu0 %v548
    %9119 = vmatpush1.xpose.msra.mxu0 %v547
    %9120 = vmatprep.subr.mxu0 %v793
    %9121 = vmatpush1.xpose.msra.mxu0 %v792
    %9122 = vmatprep.subr.mxu0 %v1038
    %9123 = vmatpush1.xpose.msra.mxu0 %v1037
    %9124 = vmatprep.subr.mxu0 %v1283
    %9125 = vmatpush1.xpose.msra.mxu0 %v1282
    %9126 = vmatprep.subr.mxu0 %v1528
    %9127 = vmatpush1.xpose.msra.mxu0 %v1527
    %9128 = vmatprep.subr.mxu0 %v1773
    %9129 = vmatpush1.xpose.msra.mxu0 %v1772
    %9130 = vmatprep.subr.mxu0 0.0
    %9131 = vmatpush1.xpose.msra.mxu0 0.0
    %9132 = vmatprep.subr.mxu0 0.0
    %9133 = vmatpush1.xpose.msra.mxu0 0.0
    %9134 = vmatprep.subr.mxu0 0.0
    %9135 = vmatpush1.xpose.msra.mxu0 0.0
    %9136 = vmatprep.subr.mxu0 0.0
    %9137 = vmatpush1.xpose.msra.mxu0 0.0
    %9138 = vmatprep.subr.mxu0 0.0
    %9139 = vmatpush1.xpose.msra.mxu0 0.0
    %9140 = vmatprep.subr.mxu0 0.0
    %9141 = vmatpush1.xpose.msra.mxu0 0.0
    %9142 = vmatprep.subr.mxu0 0.0
    %9143 = vmatpush1.xpose.msra.mxu0 0.0
    %9144 = vmatprep.subr.mxu0 0.0
    %9145 = vmatpush1.xpose.msra.mxu0 0.0
    %9146 = vmatprep.subr.mxu0 0.0
    %9147 = vmatpush1.xpose.msra.mxu0 0.0
    %9148 = vmatprep.subr.mxu0 0.0
    %9149 = vmatpush1.xpose.msra.mxu0 0.0
    %9150 = vmatprep.subr.mxu0 0.0
    %9151 = vmatpush1.xpose.msra.mxu0 0.0
    %9152 = vmatprep.subr.mxu0 0.0
    %9153 = vmatpush1.xpose.msra.mxu0 0.0
    %9154 = vmatprep.subr.mxu0 0.0
    %9155 = vmatpush1.xpose.msra.mxu0 0.0
    %9156 = vmatprep.subr.mxu0 0.0
    %9157 = vmatpush1.xpose.msra.mxu0 0.0
    %9158 = vmatprep.subr.mxu0 0.0
    %9159 = vmatpush1.xpose.msra.mxu0 0.0
    %9160 = vmatprep.subr.mxu0 0.0
    %9161 = vmatpush1.xpose.msra.mxu0 0.0
    %9162 = vmatprep.subr.mxu0 0.0
    %9163 = vmatpush1.xpose.msra.mxu0 0.0
    %9164 = vmatprep.subr.mxu0 0.0
    %9165 = vmatpush1.xpose.msra.mxu0 0.0
    %9166 = vmatprep.subr.mxu0 0.0
    %9167 = vmatpush1.xpose.msra.mxu0 0.0
    %9168 = vmatprep.subr.mxu0 0.0
    %9169 = vmatpush1.xpose.msra.mxu0 0.0
    %9170 = vmatprep.subr.mxu0 0.0
    %9171 = vmatpush1.xpose.msra.mxu0 0.0
    %9172 = vmatprep.subr.mxu0 0.0
    %9173 = vmatpush1.xpose.msra.mxu0 0.0
    %9174 = vmatprep.subr.mxu0 0.0
    %9175 = vmatpush1.xpose.msra.mxu0 0.0
    %9176 = vmatprep.subr.mxu0 0.0
    %9177 = vmatpush1.xpose.msra.mxu0 0.0
    %9178 = vmatprep.subr.mxu0 0.0
    %9179 = vmatpush1.xpose.msra.mxu0 0.0
    %9180 = vmatprep.subr.mxu0 0.0
    %9181 = vmatpush1.xpose.msra.mxu0 0.0
    %9182 = vmatprep.mubr.f32.mxu0 %v303
    %9183 = vmatmul.mubr.f32.gmra.mrb[0].mxu0 %v302
    %v9184 = vpop.f32.mrb[0].mxu0
    %v9185 = vadd.f32 %v9115, %v9184
    %v9186 = vpop.f32.mrb[0].mxu0
    %9187 = vdwg.mxu0
    %9188 = vmatprep.subr.mxu0 %v550
    %9189 = vmatpush1.xpose.msra.mxu0 %v549
    %9190 = vmatprep.subr.mxu0 %v795
    %9191 = vmatpush1.xpose.msra.mxu0 %v794
    %9192 = vmatprep.subr.mxu0 %v1040
    %9193 = vmatpush1.xpose.msra.mxu0 %v1039
    %9194 = vmatprep.subr.mxu0 %v1285
    %9195 = vmatpush1.xpose.msra.mxu0 %v1284
    %9196 = vmatprep.subr.mxu0 %v1530
    %9197 = vmatpush1.xpose.msra.mxu0 %v1529
    %9198 = vmatprep.subr.mxu0 %v1775
    %9199 = vmatpush1.xpose.msra.mxu0 %v1774
    %9200 = vmatprep.subr.mxu0 0.0
    %9201 = vmatpush1.xpose.msra.mxu0 0.0
    %9202 = vmatprep.subr.mxu0 0.0
    %9203 = vmatpush1.xpose.msra.mxu0 0.0
    %9204 = vmatprep.subr.mxu0 0.0
    %9205 = vmatpush1.xpose.msra.mxu0 0.0
    %9206 = vmatprep.subr.mxu0 0.0
    %9207 = vmatpush1.xpose.msra.mxu0 0.0
    %9208 = vmatprep.subr.mxu0 0.0
    %9209 = vmatpush1.xpose.msra.mxu0 0.0
    %9210 = vmatprep.subr.mxu0 0.0
    %9211 = vmatpush1.xpose.msra.mxu0 0.0
    %9212 = vmatprep.subr.mxu0 0.0
    %9213 = vmatpush1.xpose.msra.mxu0 0.0
    %9214 = vmatprep.subr.mxu0 0.0
    %9215 = vmatpush1.xpose.msra.mxu0 0.0
    %9216 = vmatprep.subr.mxu0 0.0
    %9217 = vmatpush1.xpose.msra.mxu0 0.0
    %9218 = vmatprep.subr.mxu0 0.0
    %9219 = vmatpush1.xpose.msra.mxu0 0.0
    %9220 = vmatprep.subr.mxu0 0.0
    %9221 = vmatpush1.xpose.msra.mxu0 0.0
    %9222 = vmatprep.subr.mxu0 0.0
    %9223 = vmatpush1.xpose.msra.mxu0 0.0
    %9224 = vmatprep.subr.mxu0 0.0
    %9225 = vmatpush1.xpose.msra.mxu0 0.0
    %9226 = vmatprep.subr.mxu0 0.0
    %9227 = vmatpush1.xpose.msra.mxu0 0.0
    %9228 = vmatprep.subr.mxu0 0.0
    %9229 = vmatpush1.xpose.msra.mxu0 0.0
    %9230 = vmatprep.subr.mxu0 0.0
    %9231 = vmatpush1.xpose.msra.mxu0 0.0
    %9232 = vmatprep.subr.mxu0 0.0
    %9233 = vmatpush1.xpose.msra.mxu0 0.0
    %9234 = vmatprep.subr.mxu0 0.0
    %9235 = vmatpush1.xpose.msra.mxu0 0.0
    %9236 = vmatprep.subr.mxu0 0.0
    %9237 = vmatpush1.xpose.msra.mxu0 0.0
    %9238 = vmatprep.subr.mxu0 0.0
    %9239 = vmatpush1.xpose.msra.mxu0 0.0
    %9240 = vmatprep.subr.mxu0 0.0
    %9241 = vmatpush1.xpose.msra.mxu0 0.0
    %9242 = vmatprep.subr.mxu0 0.0
    %9243 = vmatpush1.xpose.msra.mxu0 0.0
    %9244 = vmatprep.subr.mxu0 0.0
    %9245 = vmatpush1.xpose.msra.mxu0 0.0
    %9246 = vmatprep.subr.mxu0 0.0
    %9247 = vmatpush1.xpose.msra.mxu0 0.0
    %9248 = vmatprep.subr.mxu0 0.0
    %9249 = vmatpush1.xpose.msra.mxu0 0.0
    %9250 = vmatprep.subr.mxu0 0.0
    %9251 = vmatpush1.xpose.msra.mxu0 0.0
    %9252 = vmatprep.mubr.f32.mxu0 %v305
    %9253 = vmatmul.mubr.f32.gmra.mrb[0].mxu0 %v304
    %v9254 = vpop.f32.mrb[0].mxu0
    %v9255 = vadd.f32 %v9185, %v9254
    %v9256 = vpop.f32.mrb[0].mxu0
    %9257 = vdwg.mxu0
    %9258 = vmatprep.subr.mxu0 %v552
    %9259 = vmatpush1.xpose.msra.mxu0 %v551
    %9260 = vmatprep.subr.mxu0 %v797
    %9261 = vmatpush1.xpose.msra.mxu0 %v796
    %9262 = vmatprep.subr.mxu0 %v1042
    %9263 = vmatpush1.xpose.msra.mxu0 %v1041
    %9264 = vmatprep.subr.mxu0 %v1287
    %9265 = vmatpush1.xpose.msra.mxu0 %v1286
    %9266 = vmatprep.subr.mxu0 %v1532
    %9267 = vmatpush1.xpose.msra.mxu0 %v1531
    %9268 = vmatprep.subr.mxu0 %v1777
    %9269 = vmatpush1.xpose.msra.mxu0 %v1776
    %9270 = vmatprep.subr.mxu0 0.0
    %9271 = vmatpush1.xpose.msra.mxu0 0.0
    %9272 = vmatprep.subr.mxu0 0.0
    %9273 = vmatpush1.xpose.msra.mxu0 0.0
    %9274 = vmatprep.subr.mxu0 0.0
    %9275 = vmatpush1.xpose.msra.mxu0 0.0
    %9276 = vmatprep.subr.mxu0 0.0
    %9277 = vmatpush1.xpose.msra.mxu0 0.0
    %9278 = vmatprep.subr.mxu0 0.0
    %9279 = vmatpush1.xpose.msra.mxu0 0.0
    %9280 = vmatprep.subr.mxu0 0.0
    %9281 = vmatpush1.xpose.msra.mxu0 0.0
    %9282 = vmatprep.subr.mxu0 0.0
    %9283 = vmatpush1.xpose.msra.mxu0 0.0
    %9284 = vmatprep.subr.mxu0 0.0
    %9285 = vmatpush1.xpose.msra.mxu0 0.0
    %9286 = vmatprep.subr.mxu0 0.0
    %9287 = vmatpush1.xpose.msra.mxu0 0.0
    %9288 = vmatprep.subr.mxu0 0.0
    %9289 = vmatpush1.xpose.msra.mxu0 0.0
    %9290 = vmatprep.subr.mxu0 0.0
    %9291 = vmatpush1.xpose.msra.mxu0 0.0
    %9292 = vmatprep.subr.mxu0 0.0
    %9293 = vmatpush1.xpose.msra.mxu0 0.0
    %9294 = vmatprep.subr.mxu0 0.0
    %9295 = vmatpush1.xpose.msra.mxu0 0.0
    %9296 = vmatprep.subr.mxu0 0.0
    %9297 = vmatpush1.xpose.msra.mxu0 0.0
    %9298 = vmatprep.subr.mxu0 0.0
    %9299 = vmatpush1.xpose.msra.mxu0 0.0
    %9300 = vmatprep.subr.mxu0 0.0
    %9301 = vmatpush1.xpose.msra.mxu0 0.0
    %9302 = vmatprep.subr.mxu0 0.0
    %9303 = vmatpush1.xpose.msra.mxu0 0.0
    %9304 = vmatprep.subr.mxu0 0.0
    %9305 = vmatpush1.xpose.msra.mxu0 0.0
    %9306 = vmatprep.subr.mxu0 0.0
    %9307 = vmatpush1.xpose.msra.mxu0 0.0
    %9308 = vmatprep.subr.mxu0 0.0
    %9309 = vmatpush1.xpose.msra.mxu0 0.0
    %9310 = vmatprep.subr.mxu0 0.0
    %9311 = vmatpush1.xpose.msra.mxu0 0.0
    %9312 = vmatprep.subr.mxu0 0.0
    %9313 = vmatpush1.xpose.msra.mxu0 0.0
    %9314 = vmatprep.subr.mxu0 0.0
    %9315 = vmatpush1.xpose.msra.mxu0 0.0
    %9316 = vmatprep.subr.mxu0 0.0
    %9317 = vmatpush1.xpose.msra.mxu0 0.0
    %9318 = vmatprep.subr.mxu0 0.0
    %9319 = vmatpush1.xpose.msra.mxu0 0.0
    %9320 = vmatprep.subr.mxu0 0.0
    %9321 = vmatpush1.xpose.msra.mxu0 0.0
    %9322 = vmatprep.mubr.f32.mxu0 %v307
    %9323 = vmatmul.mubr.f32.gmra.mrb[0].mxu0 %v306
    %v9324 = vpop.f32.mrb[0].mxu0
    %v9325 = vadd.f32 %v9255, %v9324
    %v9326 = vpop.f32.mrb[0].mxu0
    %9327 = vdwg.mxu0
    %9328 = vmatprep.subr.mxu0 %v554
    %9329 = vmatpush1.xpose.msra.mxu0 %v553
    %9330 = vmatprep.subr.mxu0 %v799
    %9331 = vmatpush1.xpose.msra.mxu0 %v798
    %9332 = vmatprep.subr.mxu0 %v1044
    %9333 = vmatpush1.xpose.msra.mxu0 %v1043
    %9334 = vmatprep.subr.mxu0 %v1289
    %9335 = vmatpush1.xpose.msra.mxu0 %v1288
    %9336 = vmatprep.subr.mxu0 %v1534
    %9337 = vmatpush1.xpose.msra.mxu0 %v1533
    %9338 = vmatprep.subr.mxu0 %v1779
    %9339 = vmatpush1.xpose.msra.mxu0 %v1778
    %9340 = vmatprep.subr.mxu0 0.0
    %9341 = vmatpush1.xpose.msra.mxu0 0.0
    %9342 = vmatprep.subr.mxu0 0.0
    %9343 = vmatpush1.xpose.msra.mxu0 0.0
    %9344 = vmatprep.subr.mxu0 0.0
    %9345 = vmatpush1.xpose.msra.mxu0 0.0
    %9346 = vmatprep.subr.mxu0 0.0
    %9347 = vmatpush1.xpose.msra.mxu0 0.0
    %9348 = vmatprep.subr.mxu0 0.0
    %9349 = vmatpush1.xpose.msra.mxu0 0.0
    %9350 = vmatprep.subr.mxu0 0.0
    %9351 = vmatpush1.xpose.msra.mxu0 0.0
    %9352 = vmatprep.subr.mxu0 0.0
    %9353 = vmatpush1.xpose.msra.mxu0 0.0
    %9354 = vmatprep.subr.mxu0 0.0
    %9355 = vmatpush1.xpose.msra.mxu0 0.0
    %9356 = vmatprep.subr.mxu0 0.0
    %9357 = vmatpush1.xpose.msra.mxu0 0.0
    %9358 = vmatprep.subr.mxu0 0.0
    %9359 = vmatpush1.xpose.msra.mxu0 0.0
    %9360 = vmatprep.subr.mxu0 0.0
    %9361 = vmatpush1.xpose.msra.mxu0 0.0
    %9362 = vmatprep.subr.mxu0 0.0
    %9363 = vmatpush1.xpose.msra.mxu0 0.0
    %9364 = vmatprep.subr.mxu0 0.0
    %9365 = vmatpush1.xpose.msra.mxu0 0.0
    %9366 = vmatprep.subr.mxu0 0.0
    %9367 = vmatpush1.xpose.msra.mxu0 0.0
    %9368 = vmatprep.subr.mxu0 0.0
    %9369 = vmatpush1.xpose.msra.mxu0 0.0
    %9370 = vmatprep.subr.mxu0 0.0
    %9371 = vmatpush1.xpose.msra.mxu0 0.0
    %9372 = vmatprep.subr.mxu0 0.0
    %9373 = vmatpush1.xpose.msra.mxu0 0.0
    %9374 = vmatprep.subr.mxu0 0.0
    %9375 = vmatpush1.xpose.msra.mxu0 0.0
    %9376 = vmatprep.subr.mxu0 0.0
    %9377 = vmatpush1.xpose.msra.mxu0 0.0
    %9378 = vmatprep.subr.mxu0 0.0
    %9379 = vmatpush1.xpose.msra.mxu0 0.0
    %9380 = vmatprep.subr.mxu0 0.0
    %9381 = vmatpush1.xpose.msra.mxu0 0.0
    %9382 = vmatprep.subr.mxu0 0.0
    %9383 = vmatpush1.xpose.msra.mxu0 0.0
    %9384 = vmatprep.subr.mxu0 0.0
    %9385 = vmatpush1.xpose.msra.mxu0 0.0
    %9386 = vmatprep.subr.mxu0 0.0
    %9387 = vmatpush1.xpose.msra.mxu0 0.0
    %9388 = vmatprep.subr.mxu0 0.0
    %9389 = vmatpush1.xpose.msra.mxu0 0.0
    %9390 = vmatprep.subr.mxu0 0.0
    %9391 = vmatpush1.xpose.msra.mxu0 0.0
    %9392 = vmatprep.mubr.f32.mxu0 %v309
    %9393 = vmatmul.mubr.f32.gmra.mrb[0].mxu0 %v308
    %v9394 = vpop.f32.mrb[0].mxu0
    %v9395 = vadd.f32 %v9325, %v9394
    %v9396 = vpop.f32.mrb[0].mxu0
    %9397 = vdwg.mxu0
    %9398 = vmatprep.subr.mxu0 %v556
    %9399 = vmatpush1.xpose.msra.mxu0 %v555
    %9400 = vmatprep.subr.mxu0 %v801
    %9401 = vmatpush1.xpose.msra.mxu0 %v800
    %9402 = vmatprep.subr.mxu0 %v1046
    %9403 = vmatpush1.xpose.msra.mxu0 %v1045
    %9404 = vmatprep.subr.mxu0 %v1291
    %9405 = vmatpush1.xpose.msra.mxu0 %v1290
    %9406 = vmatprep.subr.mxu0 %v1536
    %9407 = vmatpush1.xpose.msra.mxu0 %v1535
    %9408 = vmatprep.subr.mxu0 %v1781
    %9409 = vmatpush1.xpose.msra.mxu0 %v1780
    %9410 = vmatprep.subr.mxu0 0.0
    %9411 = vmatpush1.xpose.msra.mxu0 0.0
    %9412 = vmatprep.subr.mxu0 0.0
    %9413 = vmatpush1.xpose.msra.mxu0 0.0
    %9414 = vmatprep.subr.mxu0 0.0
    %9415 = vmatpush1.xpose.msra.mxu0 0.0
    %9416 = vmatprep.subr.mxu0 0.0
    %9417 = vmatpush1.xpose.msra.mxu0 0.0
    %9418 = vmatprep.subr.mxu0 0.0
    %9419 = vmatpush1.xpose.msra.mxu0 0.0
    %9420 = vmatprep.subr.mxu0 0.0
    %9421 = vmatpush1.xpose.msra.mxu0 0.0
    %9422 = vmatprep.subr.mxu0 0.0
    %9423 = vmatpush1.xpose.msra.mxu0 0.0
    %9424 = vmatprep.subr.mxu0 0.0
    %9425 = vmatpush1.xpose.msra.mxu0 0.0
    %9426 = vmatprep.subr.mxu0 0.0
    %9427 = vmatpush1.xpose.msra.mxu0 0.0
    %9428 = vmatprep.subr.mxu0 0.0
    %9429 = vmatpush1.xpose.msra.mxu0 0.0
    %9430 = vmatprep.subr.mxu0 0.0
    %9431 = vmatpush1.xpose.msra.mxu0 0.0
    %9432 = vmatprep.subr.mxu0 0.0
    %9433 = vmatpush1.xpose.msra.mxu0 0.0
    %9434 = vmatprep.subr.mxu0 0.0
    %9435 = vmatpush1.xpose.msra.mxu0 0.0
    %9436 = vmatprep.subr.mxu0 0.0
    %9437 = vmatpush1.xpose.msra.mxu0 0.0
    %9438 = vmatprep.subr.mxu0 0.0
    %9439 = vmatpush1.xpose.msra.mxu0 0.0
    %9440 = vmatprep.subr.mxu0 0.0
    %9441 = vmatpush1.xpose.msra.mxu0 0.0
    %9442 = vmatprep.subr.mxu0 0.0
    %9443 = vmatpush1.xpose.msra.mxu0 0.0
    %9444 = vmatprep.subr.mxu0 0.0
    %9445 = vmatpush1.xpose.msra.mxu0 0.0
    %9446 = vmatprep.subr.mxu0 0.0
    %9447 = vmatpush1.xpose.msra.mxu0 0.0
    %9448 = vmatprep.subr.mxu0 0.0
    %9449 = vmatpush1.xpose.msra.mxu0 0.0
    %9450 = vmatprep.subr.mxu0 0.0
    %9451 = vmatpush1.xpose.msra.mxu0 0.0
    %9452 = vmatprep.subr.mxu0 0.0
    %9453 = vmatpush1.xpose.msra.mxu0 0.0
    %9454 = vmatprep.subr.mxu0 0.0
    %9455 = vmatpush1.xpose.msra.mxu0 0.0
    %9456 = vmatprep.subr.mxu0 0.0
    %9457 = vmatpush1.xpose.msra.mxu0 0.0
    %9458 = vmatprep.subr.mxu0 0.0
    %9459 = vmatpush1.xpose.msra.mxu0 0.0
    %9460 = vmatprep.subr.mxu0 0.0
    %9461 = vmatpush1.xpose.msra.mxu0 0.0
    %9462 = vmatprep.mubr.f32.mxu0 %v311
    %9463 = vmatmul.mubr.f32.gmra.mrb[0].mxu0 %v310
    %v9464 = vpop.f32.mrb[0].mxu0
    %v9465 = vadd.f32 %v9395, %v9464
    %v9466 = vpop.f32.mrb[0].mxu0
    %9467 = vdwg.mxu0
    %9468 = vmatprep.subr.mxu0 %v558
    %9469 = vmatpush1.xpose.msra.mxu0 %v557
    %9470 = vmatprep.subr.mxu0 %v803
    %9471 = vmatpush1.xpose.msra.mxu0 %v802
    %9472 = vmatprep.subr.mxu0 %v1048
    %9473 = vmatpush1.xpose.msra.mxu0 %v1047
    %9474 = vmatprep.subr.mxu0 %v1293
    %9475 = vmatpush1.xpose.msra.mxu0 %v1292
    %9476 = vmatprep.subr.mxu0 %v1538
    %9477 = vmatpush1.xpose.msra.mxu0 %v1537
    %9478 = vmatprep.subr.mxu0 %v1783
    %9479 = vmatpush1.xpose.msra.mxu0 %v1782
    %9480 = vmatprep.subr.mxu0 0.0
    %9481 = vmatpush1.xpose.msra.mxu0 0.0
    %9482 = vmatprep.subr.mxu0 0.0
    %9483 = vmatpush1.xpose.msra.mxu0 0.0
    %9484 = vmatprep.subr.mxu0 0.0
    %9485 = vmatpush1.xpose.msra.mxu0 0.0
    %9486 = vmatprep.subr.mxu0 0.0
    %9487 = vmatpush1.xpose.msra.mxu0 0.0
    %9488 = vmatprep.subr.mxu0 0.0
    %9489 = vmatpush1.xpose.msra.mxu0 0.0
    %9490 = vmatprep.subr.mxu0 0.0
    %9491 = vmatpush1.xpose.msra.mxu0 0.0
    %9492 = vmatprep.subr.mxu0 0.0
    %9493 = vmatpush1.xpose.msra.mxu0 0.0
    %9494 = vmatprep.subr.mxu0 0.0
    %9495 = vmatpush1.xpose.msra.mxu0 0.0
    %9496 = vmatprep.subr.mxu0 0.0
    %9497 = vmatpush1.xpose.msra.mxu0 0.0
    %9498 = vmatprep.subr.mxu0 0.0
    %9499 = vmatpush1.xpose.msra.mxu0 0.0
    %9500 = vmatprep.subr.mxu0 0.0
    %9501 = vmatpush1.xpose.msra.mxu0 0.0
    %9502 = vmatprep.subr.mxu0 0.0
    %9503 = vmatpush1.xpose.msra.mxu0 0.0
    %9504 = vmatprep.subr.mxu0 0.0
    %9505 = vmatpush1.xpose.msra.mxu0 0.0
    %9506 = vmatprep.subr.mxu0 0.0
    %9507 = vmatpush1.xpose.msra.mxu0 0.0
    %9508 = vmatprep.subr.mxu0 0.0
    %9509 = vmatpush1.xpose.msra.mxu0 0.0
    %9510 = vmatprep.subr.mxu0 0.0
    %9511 = vmatpush1.xpose.msra.mxu0 0.0
    %9512 = vmatprep.subr.mxu0 0.0
    %9513 = vmatpush1.xpose.msra.mxu0 0.0
    %9514 = vmatprep.subr.mxu0 0.0
    %9515 = vmatpush1.xpose.msra.mxu0 0.0
    %9516 = vmatprep.subr.mxu0 0.0
    %9517 = vmatpush1.xpose.msra.mxu0 0.0
    %9518 = vmatprep.subr.mxu0 0.0
    %9519 = vmatpush1.xpose.msra.mxu0 0.0
    %9520 = vmatprep.subr.mxu0 0.0
    %9521 = vmatpush1.xpose.msra.mxu0 0.0
    %9522 = vmatprep.subr.mxu0 0.0
    %9523 = vmatpush1.xpose.msra.mxu0 0.0
    %9524 = vmatprep.subr.mxu0 0.0
    %9525 = vmatpush1.xpose.msra.mxu0 0.0
    %9526 = vmatprep.subr.mxu0 0.0
    %9527 = vmatpush1.xpose.msra.mxu0 0.0
    %9528 = vmatprep.subr.mxu0 0.0
    %9529 = vmatpush1.xpose.msra.mxu0 0.0
    %9530 = vmatprep.subr.mxu0 0.0
    %9531 = vmatpush1.xpose.msra.mxu0 0.0
    %9532 = vmatprep.mubr.f32.mxu0 %v313
    %9533 = vmatmul.mubr.f32.gmra.mrb[0].mxu0 %v312
    %v9534 = vpop.f32.mrb[0].mxu0
    %v9535 = vadd.f32 %v9465, %v9534
    %v9536 = vpop.f32.mrb[0].mxu0
    %9537 = vdwg.mxu0
    %9538 = vmatprep.subr.mxu0 %v560
    %9539 = vmatpush1.xpose.msra.mxu0 %v559
    %9540 = vmatprep.subr.mxu0 %v805
    %9541 = vmatpush1.xpose.msra.mxu0 %v804
    %9542 = vmatprep.subr.mxu0 %v1050
    %9543 = vmatpush1.xpose.msra.mxu0 %v1049
    %9544 = vmatprep.subr.mxu0 %v1295
    %9545 = vmatpush1.xpose.msra.mxu0 %v1294
    %9546 = vmatprep.subr.mxu0 %v1540
    %9547 = vmatpush1.xpose.msra.mxu0 %v1539
    %9548 = vmatprep.subr.mxu0 %v1785
    %9549 = vmatpush1.xpose.msra.mxu0 %v1784
    %9550 = vmatprep.subr.mxu0 0.0
    %9551 = vmatpush1.xpose.msra.mxu0 0.0
    %9552 = vmatprep.subr.mxu0 0.0
    %9553 = vmatpush1.xpose.msra.mxu0 0.0
    %9554 = vmatprep.subr.mxu0 0.0
    %9555 = vmatpush1.xpose.msra.mxu0 0.0
    %9556 = vmatprep.subr.mxu0 0.0
    %9557 = vmatpush1.xpose.msra.mxu0 0.0
    %9558 = vmatprep.subr.mxu0 0.0
    %9559 = vmatpush1.xpose.msra.mxu0 0.0
    %9560 = vmatprep.subr.mxu0 0.0
    %9561 = vmatpush1.xpose.msra.mxu0 0.0
    %9562 = vmatprep.subr.mxu0 0.0
    %9563 = vmatpush1.xpose.msra.mxu0 0.0
    %9564 = vmatprep.subr.mxu0 0.0
    %9565 = vmatpush1.xpose.msra.mxu0 0.0
    %9566 = vmatprep.subr.mxu0 0.0
    %9567 = vmatpush1.xpose.msra.mxu0 0.0
    %9568 = vmatprep.subr.mxu0 0.0
    %9569 = vmatpush1.xpose.msra.mxu0 0.0
    %9570 = vmatprep.subr.mxu0 0.0
    %9571 = vmatpush1.xpose.msra.mxu0 0.0
    %9572 = vmatprep.subr.mxu0 0.0
    %9573 = vmatpush1.xpose.msra.mxu0 0.0
    %9574 = vmatprep.subr.mxu0 0.0
    %9575 = vmatpush1.xpose.msra.mxu0 0.0
    %9576 = vmatprep.subr.mxu0 0.0
    %9577 = vmatpush1.xpose.msra.mxu0 0.0
    %9578 = vmatprep.subr.mxu0 0.0
    %9579 = vmatpush1.xpose.msra.mxu0 0.0
    %9580 = vmatprep.subr.mxu0 0.0
    %9581 = vmatpush1.xpose.msra.mxu0 0.0
    %9582 = vmatprep.subr.mxu0 0.0
    %9583 = vmatpush1.xpose.msra.mxu0 0.0
    %9584 = vmatprep.subr.mxu0 0.0
    %9585 = vmatpush1.xpose.msra.mxu0 0.0
    %9586 = vmatprep.subr.mxu0 0.0
    %9587 = vmatpush1.xpose.msra.mxu0 0.0
    %9588 = vmatprep.subr.mxu0 0.0
    %9589 = vmatpush1.xpose.msra.mxu0 0.0
    %9590 = vmatprep.subr.mxu0 0.0
    %9591 = vmatpush1.xpose.msra.mxu0 0.0
    %9592 = vmatprep.subr.mxu0 0.0
    %9593 = vmatpush1.xpose.msra.mxu0 0.0
    %9594 = vmatprep.subr.mxu0 0.0
    %9595 = vmatpush1.xpose.msra.mxu0 0.0
    %9596 = vmatprep.subr.mxu0 0.0
    %9597 = vmatpush1.xpose.msra.mxu0 0.0
    %9598 = vmatprep.subr.mxu0 0.0
    %9599 = vmatpush1.xpose.msra.mxu0 0.0
    %9600 = vmatprep.subr.mxu0 0.0
    %9601 = vmatpush1.xpose.msra.mxu0 0.0
    %9602 = vmatprep.mubr.f32.mxu0 %v315
    %9603 = vmatmul.mubr.f32.gmra.mrb[0].mxu0 %v314
    %v9604 = vpop.f32.mrb[0].mxu0
    %v9605 = vadd.f32 %v9535, %v9604
    %v9606 = vpop.f32.mrb[0].mxu0
    %9607 = vdwg.mxu0
    %9608 = vmatprep.subr.mxu0 %v562
    %9609 = vmatpush1.xpose.msra.mxu0 %v561
    %9610 = vmatprep.subr.mxu0 %v807
    %9611 = vmatpush1.xpose.msra.mxu0 %v806
    %9612 = vmatprep.subr.mxu0 %v1052
    %9613 = vmatpush1.xpose.msra.mxu0 %v1051
    %9614 = vmatprep.subr.mxu0 %v1297
    %9615 = vmatpush1.xpose.msra.mxu0 %v1296
    %9616 = vmatprep.subr.mxu0 %v1542
    %9617 = vmatpush1.xpose.msra.mxu0 %v1541
    %9618 = vmatprep.subr.mxu0 %v1787
    %9619 = vmatpush1.xpose.msra.mxu0 %v1786
    %9620 = vmatprep.subr.mxu0 0.0
    %9621 = vmatpush1.xpose.msra.mxu0 0.0
    %9622 = vmatprep.subr.mxu0 0.0
    %9623 = vmatpush1.xpose.msra.mxu0 0.0
    %9624 = vmatprep.subr.mxu0 0.0
    %9625 = vmatpush1.xpose.msra.mxu0 0.0
    %9626 = vmatprep.subr.mxu0 0.0
    %9627 = vmatpush1.xpose.msra.mxu0 0.0
    %9628 = vmatprep.subr.mxu0 0.0
    %9629 = vmatpush1.xpose.msra.mxu0 0.0
    %9630 = vmatprep.subr.mxu0 0.0
    %9631 = vmatpush1.xpose.msra.mxu0 0.0
    %9632 = vmatprep.subr.mxu0 0.0
    %9633 = vmatpush1.xpose.msra.mxu0 0.0
    %9634 = vmatprep.subr.mxu0 0.0
    %9635 = vmatpush1.xpose.msra.mxu0 0.0
    %9636 = vmatprep.subr.mxu0 0.0
    %9637 = vmatpush1.xpose.msra.mxu0 0.0
    %9638 = vmatprep.subr.mxu0 0.0
    %9639 = vmatpush1.xpose.msra.mxu0 0.0
    %9640 = vmatprep.subr.mxu0 0.0
    %9641 = vmatpush1.xpose.msra.mxu0 0.0
    %9642 = vmatprep.subr.mxu0 0.0
    %9643 = vmatpush1.xpose.msra.mxu0 0.0
    %9644 = vmatprep.subr.mxu0 0.0
    %9645 = vmatpush1.xpose.msra.mxu0 0.0
    %9646 = vmatprep.subr.mxu0 0.0
    %9647 = vmatpush1.xpose.msra.mxu0 0.0
    %9648 = vmatprep.subr.mxu0 0.0
    %9649 = vmatpush1.xpose.msra.mxu0 0.0
    %9650 = vmatprep.subr.mxu0 0.0
    %9651 = vmatpush1.xpose.msra.mxu0 0.0
    %9652 = vmatprep.subr.mxu0 0.0
    %9653 = vmatpush1.xpose.msra.mxu0 0.0
    %9654 = vmatprep.subr.mxu0 0.0
    %9655 = vmatpush1.xpose.msra.mxu0 0.0
    %9656 = vmatprep.subr.mxu0 0.0
    %9657 = vmatpush1.xpose.msra.mxu0 0.0
    %9658 = vmatprep.subr.mxu0 0.0
    %9659 = vmatpush1.xpose.msra.mxu0 0.0
    %9660 = vmatprep.subr.mxu0 0.0
    %9661 = vmatpush1.xpose.msra.mxu0 0.0
    %9662 = vmatprep.subr.mxu0 0.0
    %9663 = vmatpush1.xpose.msra.mxu0 0.0
    %9664 = vmatprep.subr.mxu0 0.0
    %9665 = vmatpush1.xpose.msra.mxu0 0.0
    %9666 = vmatprep.subr.mxu0 0.0
    %9667 = vmatpush1.xpose.msra.mxu0 0.0
    %9668 = vmatprep.subr.mxu0 0.0
    %9669 = vmatpush1.xpose.msra.mxu0 0.0
    %9670 = vmatprep.subr.mxu0 0.0
    %9671 = vmatpush1.xpose.msra.mxu0 0.0
    %9672 = vmatprep.mubr.f32.mxu0 %v317
    %9673 = vmatmul.mubr.f32.gmra.mrb[0].mxu0 %v316
    %v9674 = vpop.f32.mrb[0].mxu0
    %v9675 = vadd.f32 %v9605, %v9674
    %v9676 = vpop.f32.mrb[0].mxu0
    %9677 = vdwg.mxu0
    %9678 = vmatprep.subr.mxu0 %v564
    %9679 = vmatpush1.xpose.msra.mxu0 %v563
    %9680 = vmatprep.subr.mxu0 %v809
    %9681 = vmatpush1.xpose.msra.mxu0 %v808
    %9682 = vmatprep.subr.mxu0 %v1054
    %9683 = vmatpush1.xpose.msra.mxu0 %v1053
    %9684 = vmatprep.subr.mxu0 %v1299
    %9685 = vmatpush1.xpose.msra.mxu0 %v1298
    %9686 = vmatprep.subr.mxu0 %v1544
    %9687 = vmatpush1.xpose.msra.mxu0 %v1543
    %9688 = vmatprep.subr.mxu0 %v1789
    %9689 = vmatpush1.xpose.msra.mxu0 %v1788
    %9690 = vmatprep.subr.mxu0 0.0
    %9691 = vmatpush1.xpose.msra.mxu0 0.0
    %9692 = vmatprep.subr.mxu0 0.0
    %9693 = vmatpush1.xpose.msra.mxu0 0.0
    %9694 = vmatprep.subr.mxu0 0.0
    %9695 = vmatpush1.xpose.msra.mxu0 0.0
    %9696 = vmatprep.subr.mxu0 0.0
    %9697 = vmatpush1.xpose.msra.mxu0 0.0
    %9698 = vmatprep.subr.mxu0 0.0
    %9699 = vmatpush1.xpose.msra.mxu0 0.0
    %9700 = vmatprep.subr.mxu0 0.0
    %9701 = vmatpush1.xpose.msra.mxu0 0.0
    %9702 = vmatprep.subr.mxu0 0.0
    %9703 = vmatpush1.xpose.msra.mxu0 0.0
    %9704 = vmatprep.subr.mxu0 0.0
    %9705 = vmatpush1.xpose.msra.mxu0 0.0
    %9706 = vmatprep.subr.mxu0 0.0
    %9707 = vmatpush1.xpose.msra.mxu0 0.0
    %9708 = vmatprep.subr.mxu0 0.0
    %9709 = vmatpush1.xpose.msra.mxu0 0.0
    %9710 = vmatprep.subr.mxu0 0.0
    %9711 = vmatpush1.xpose.msra.mxu0 0.0
    %9712 = vmatprep.subr.mxu0 0.0
    %9713 = vmatpush1.xpose.msra.mxu0 0.0
    %9714 = vmatprep.subr.mxu0 0.0
    %9715 = vmatpush1.xpose.msra.mxu0 0.0
    %9716 = vmatprep.subr.mxu0 0.0
    %9717 = vmatpush1.xpose.msra.mxu0 0.0
    %9718 = vmatprep.subr.mxu0 0.0
    %9719 = vmatpush1.xpose.msra.mxu0 0.0
    %9720 = vmatprep.subr.mxu0 0.0
    %9721 = vmatpush1.xpose.msra.mxu0 0.0
    %9722 = vmatprep.subr.mxu0 0.0
    %9723 = vmatpush1.xpose.msra.mxu0 0.0
    %9724 = vmatprep.subr.mxu0 0.0
    %9725 = vmatpush1.xpose.msra.mxu0 0.0
    %9726 = vmatprep.subr.mxu0 0.0
    %9727 = vmatpush1.xpose.msra.mxu0 0.0
    %9728 = vmatprep.subr.mxu0 0.0
    %9729 = vmatpush1.xpose.msra.mxu0 0.0
    %9730 = vmatprep.subr.mxu0 0.0
    %9731 = vmatpush1.xpose.msra.mxu0 0.0
    %9732 = vmatprep.subr.mxu0 0.0
    %9733 = vmatpush1.xpose.msra.mxu0 0.0
    %9734 = vmatprep.subr.mxu0 0.0
    %9735 = vmatpush1.xpose.msra.mxu0 0.0
    %9736 = vmatprep.subr.mxu0 0.0
    %9737 = vmatpush1.xpose.msra.mxu0 0.0
    %9738 = vmatprep.subr.mxu0 0.0
    %9739 = vmatpush1.xpose.msra.mxu0 0.0
    %9740 = vmatprep.subr.mxu0 0.0
    %9741 = vmatpush1.xpose.msra.mxu0 0.0
    %9742 = vmatprep.mubr.f32.mxu0 %v319
    %9743 = vmatmul.mubr.f32.gmra.mrb[0].mxu0 %v318
    %v9744 = vpop.f32.mrb[0].mxu0
    %v9745 = vadd.f32 %v9675, %v9744
    %v9746 = vpop.f32.mrb[0].mxu0
    %9747 = vdwg.mxu0
    %9748 = vmatprep.subr.mxu0 %v566
    %9749 = vmatpush1.xpose.msra.mxu0 %v565
    %9750 = vmatprep.subr.mxu0 %v811
    %9751 = vmatpush1.xpose.msra.mxu0 %v810
    %9752 = vmatprep.subr.mxu0 %v1056
    %9753 = vmatpush1.xpose.msra.mxu0 %v1055
    %9754 = vmatprep.subr.mxu0 %v1301
    %9755 = vmatpush1.xpose.msra.mxu0 %v1300
    %9756 = vmatprep.subr.mxu0 %v1546
    %9757 = vmatpush1.xpose.msra.mxu0 %v1545
    %9758 = vmatprep.subr.mxu0 %v1791
    %9759 = vmatpush1.xpose.msra.mxu0 %v1790
    %9760 = vmatprep.subr.mxu0 0.0
    %9761 = vmatpush1.xpose.msra.mxu0 0.0
    %9762 = vmatprep.subr.mxu0 0.0
    %9763 = vmatpush1.xpose.msra.mxu0 0.0
    %9764 = vmatprep.subr.mxu0 0.0
    %9765 = vmatpush1.xpose.msra.mxu0 0.0
    %9766 = vmatprep.subr.mxu0 0.0
    %9767 = vmatpush1.xpose.msra.mxu0 0.0
    %9768 = vmatprep.subr.mxu0 0.0
    %9769 = vmatpush1.xpose.msra.mxu0 0.0
    %9770 = vmatprep.subr.mxu0 0.0
    %9771 = vmatpush1.xpose.msra.mxu0 0.0
    %9772 = vmatprep.subr.mxu0 0.0
    %9773 = vmatpush1.xpose.msra.mxu0 0.0
    %9774 = vmatprep.subr.mxu0 0.0
    %9775 = vmatpush1.xpose.msra.mxu0 0.0
    %9776 = vmatprep.subr.mxu0 0.0
    %9777 = vmatpush1.xpose.msra.mxu0 0.0
    %9778 = vmatprep.subr.mxu0 0.0
    %9779 = vmatpush1.xpose.msra.mxu0 0.0
    %9780 = vmatprep.subr.mxu0 0.0
    %9781 = vmatpush1.xpose.msra.mxu0 0.0
    %9782 = vmatprep.subr.mxu0 0.0
    %9783 = vmatpush1.xpose.msra.mxu0 0.0
    %9784 = vmatprep.subr.mxu0 0.0
    %9785 = vmatpush1.xpose.msra.mxu0 0.0
    %9786 = vmatprep.subr.mxu0 0.0
    %9787 = vmatpush1.xpose.msra.mxu0 0.0
    %9788 = vmatprep.subr.mxu0 0.0
    %9789 = vmatpush1.xpose.msra.mxu0 0.0
    %9790 = vmatprep.subr.mxu0 0.0
    %9791 = vmatpush1.xpose.msra.mxu0 0.0
    %9792 = vmatprep.subr.mxu0 0.0
    %9793 = vmatpush1.xpose.msra.mxu0 0.0
    %9794 = vmatprep.subr.mxu0 0.0
    %9795 = vmatpush1.xpose.msra.mxu0 0.0
    %9796 = vmatprep.subr.mxu0 0.0
    %9797 = vmatpush1.xpose.msra.mxu0 0.0
    %9798 = vmatprep.subr.mxu0 0.0
    %9799 = vmatpush1.xpose.msra.mxu0 0.0
    %9800 = vmatprep.subr.mxu0 0.0
    %9801 = vmatpush1.xpose.msra.mxu0 0.0
    %9802 = vmatprep.subr.mxu0 0.0
    %9803 = vmatpush1.xpose.msra.mxu0 0.0
    %9804 = vmatprep.subr.mxu0 0.0
    %9805 = vmatpush1.xpose.msra.mxu0 0.0
    %9806 = vmatprep.subr.mxu0 0.0
    %9807 = vmatpush1.xpose.msra.mxu0 0.0
    %9808 = vmatprep.subr.mxu0 0.0
    %9809 = vmatpush1.xpose.msra.mxu0 0.0
    %9810 = vmatprep.subr.mxu0 0.0
    %9811 = vmatpush1.xpose.msra.mxu0 0.0
    %9812 = vmatprep.mubr.f32.mxu0 %v321
    %9813 = vmatmul.mubr.f32.gmra.mrb[0].mxu0 %v320
    %v9814 = vpop.f32.mrb[0].mxu0
    %v9815 = vadd.f32 %v9745, %v9814
    %v9816 = vpop.f32.mrb[0].mxu0
    %9817 = vdwg.mxu0
    %9818 = vmatprep.subr.mxu0 %v568
    %9819 = vmatpush1.xpose.msra.mxu0 %v567
    %9820 = vmatprep.subr.mxu0 %v813
    %9821 = vmatpush1.xpose.msra.mxu0 %v812
    %9822 = vmatprep.subr.mxu0 %v1058
    %9823 = vmatpush1.xpose.msra.mxu0 %v1057
    %9824 = vmatprep.subr.mxu0 %v1303
    %9825 = vmatpush1.xpose.msra.mxu0 %v1302
    %9826 = vmatprep.subr.mxu0 %v1548
    %9827 = vmatpush1.xpose.msra.mxu0 %v1547
    %9828 = vmatprep.subr.mxu0 %v1793
    %9829 = vmatpush1.xpose.msra.mxu0 %v1792
    %9830 = vmatprep.subr.mxu0 0.0
    %9831 = vmatpush1.xpose.msra.mxu0 0.0
    %9832 = vmatprep.subr.mxu0 0.0
    %9833 = vmatpush1.xpose.msra.mxu0 0.0
    %9834 = vmatprep.subr.mxu0 0.0
    %9835 = vmatpush1.xpose.msra.mxu0 0.0
    %9836 = vmatprep.subr.mxu0 0.0
    %9837 = vmatpush1.xpose.msra.mxu0 0.0
    %9838 = vmatprep.subr.mxu0 0.0
    %9839 = vmatpush1.xpose.msra.mxu0 0.0
    %9840 = vmatprep.subr.mxu0 0.0
    %9841 = vmatpush1.xpose.msra.mxu0 0.0
    %9842 = vmatprep.subr.mxu0 0.0
    %9843 = vmatpush1.xpose.msra.mxu0 0.0
    %9844 = vmatprep.subr.mxu0 0.0
    %9845 = vmatpush1.xpose.msra.mxu0 0.0
    %9846 = vmatprep.subr.mxu0 0.0
    %9847 = vmatpush1.xpose.msra.mxu0 0.0
    %9848 = vmatprep.subr.mxu0 0.0
    %9849 = vmatpush1.xpose.msra.mxu0 0.0
    %9850 = vmatprep.subr.mxu0 0.0
    %9851 = vmatpush1.xpose.msra.mxu0 0.0
    %9852 = vmatprep.subr.mxu0 0.0
    %9853 = vmatpush1.xpose.msra.mxu0 0.0
    %9854 = vmatprep.subr.mxu0 0.0
    %9855 = vmatpush1.xpose.msra.mxu0 0.0
    %9856 = vmatprep.subr.mxu0 0.0
    %9857 = vmatpush1.xpose.msra.mxu0 0.0
    %9858 = vmatprep.subr.mxu0 0.0
    %9859 = vmatpush1.xpose.msra.mxu0 0.0
    %9860 = vmatprep.subr.mxu0 0.0
    %9861 = vmatpush1.xpose.msra.mxu0 0.0
    %9862 = vmatprep.subr.mxu0 0.0
    %9863 = vmatpush1.xpose.msra.mxu0 0.0
    %9864 = vmatprep.subr.mxu0 0.0
    %9865 = vmatpush1.xpose.msra.mxu0 0.0
    %9866 = vmatprep.subr.mxu0 0.0
    %9867 = vmatpush1.xpose.msra.mxu0 0.0
    %9868 = vmatprep.subr.mxu0 0.0
    %9869 = vmatpush1.xpose.msra.mxu0 0.0
    %9870 = vmatprep.subr.mxu0 0.0
    %9871 = vmatpush1.xpose.msra.mxu0 0.0
    %9872 = vmatprep.subr.mxu0 0.0
    %9873 = vmatpush1.xpose.msra.mxu0 0.0
    %9874 = vmatprep.subr.mxu0 0.0
    %9875 = vmatpush1.xpose.msra.mxu0 0.0
    %9876 = vmatprep.subr.mxu0 0.0
    %9877 = vmatpush1.xpose.msra.mxu0 0.0
    %9878 = vmatprep.subr.mxu0 0.0
    %9879 = vmatpush1.xpose.msra.mxu0 0.0
    %9880 = vmatprep.subr.mxu0 0.0
    %9881 = vmatpush1.xpose.msra.mxu0 0.0
    %9882 = vmatprep.mubr.f32.mxu0 %v323
    %9883 = vmatmul.mubr.f32.gmra.mrb[0].mxu0 %v322
    %v9884 = vpop.f32.mrb[0].mxu0
    %v9885 = vadd.f32 %v9815, %v9884
    %v9886 = vpop.f32.mrb[0].mxu0
    %9887 = vdwg.mxu0
    %9888 = vmatprep.subr.mxu0 %v570
    %9889 = vmatpush1.xpose.msra.mxu0 %v569
    %9890 = vmatprep.subr.mxu0 %v815
    %9891 = vmatpush1.xpose.msra.mxu0 %v814
    %9892 = vmatprep.subr.mxu0 %v1060
    %9893 = vmatpush1.xpose.msra.mxu0 %v1059
    %9894 = vmatprep.subr.mxu0 %v1305
    %9895 = vmatpush1.xpose.msra.mxu0 %v1304
    %9896 = vmatprep.subr.mxu0 %v1550
    %9897 = vmatpush1.xpose.msra.mxu0 %v1549
    %9898 = vmatprep.subr.mxu0 %v1795
    %9899 = vmatpush1.xpose.msra.mxu0 %v1794
    %9900 = vmatprep.subr.mxu0 0.0
    %9901 = vmatpush1.xpose.msra.mxu0 0.0
    %9902 = vmatprep.subr.mxu0 0.0
    %9903 = vmatpush1.xpose.msra.mxu0 0.0
    %9904 = vmatprep.subr.mxu0 0.0
    %9905 = vmatpush1.xpose.msra.mxu0 0.0
    %9906 = vmatprep.subr.mxu0 0.0
    %9907 = vmatpush1.xpose.msra.mxu0 0.0
    %9908 = vmatprep.subr.mxu0 0.0
    %9909 = vmatpush1.xpose.msra.mxu0 0.0
    %9910 = vmatprep.subr.mxu0 0.0
    %9911 = vmatpush1.xpose.msra.mxu0 0.0
    %9912 = vmatprep.subr.mxu0 0.0
    %9913 = vmatpush1.xpose.msra.mxu0 0.0
    %9914 = vmatprep.subr.mxu0 0.0
    %9915 = vmatpush1.xpose.msra.mxu0 0.0
    %9916 = vmatprep.subr.mxu0 0.0
    %9917 = vmatpush1.xpose.msra.mxu0 0.0
    %9918 = vmatprep.subr.mxu0 0.0
    %9919 = vmatpush1.xpose.msra.mxu0 0.0
    %9920 = vmatprep.subr.mxu0 0.0
    %9921 = vmatpush1.xpose.msra.mxu0 0.0
    %9922 = vmatprep.subr.mxu0 0.0
    %9923 = vmatpush1.xpose.msra.mxu0 0.0
    %9924 = vmatprep.subr.mxu0 0.0
    %9925 = vmatpush1.xpose.msra.mxu0 0.0
    %9926 = vmatprep.subr.mxu0 0.0
    %9927 = vmatpush1.xpose.msra.mxu0 0.0
    %9928 = vmatprep.subr.mxu0 0.0
    %9929 = vmatpush1.xpose.msra.mxu0 0.0
    %9930 = vmatprep.subr.mxu0 0.0
    %9931 = vmatpush1.xpose.msra.mxu0 0.0
    %9932 = vmatprep.subr.mxu0 0.0
    %9933 = vmatpush1.xpose.msra.mxu0 0.0
    %9934 = vmatprep.subr.mxu0 0.0
    %9935 = vmatpush1.xpose.msra.mxu0 0.0
    %9936 = vmatprep.subr.mxu0 0.0
    %9937 = vmatpush1.xpose.msra.mxu0 0.0
    %9938 = vmatprep.subr.mxu0 0.0
    %9939 = vmatpush1.xpose.msra.mxu0 0.0
    %9940 = vmatprep.subr.mxu0 0.0
    %9941 = vmatpush1.xpose.msra.mxu0 0.0
    %9942 = vmatprep.subr.mxu0 0.0
    %9943 = vmatpush1.xpose.msra.mxu0 0.0
    %9944 = vmatprep.subr.mxu0 0.0
    %9945 = vmatpush1.xpose.msra.mxu0 0.0
    %9946 = vmatprep.subr.mxu0 0.0
    %9947 = vmatpush1.xpose.msra.mxu0 0.0
    %9948 = vmatprep.subr.mxu0 0.0
    %9949 = vmatpush1.xpose.msra.mxu0 0.0
    %9950 = vmatprep.subr.mxu0 0.0
    %9951 = vmatpush1.xpose.msra.mxu0 0.0
    %9952 = vmatprep.mubr.f32.mxu0 %v325
    %9953 = vmatmul.mubr.f32.gmra.mrb[0].mxu0 %v324
    %v9954 = vpop.f32.mrb[0].mxu0
    %v9955 = vadd.f32 %v9885, %v9954
    %v9956 = vpop.f32.mrb[0].mxu0
    %9957 = vdwg.mxu0
    %9958 = vmatprep.subr.mxu0 %v572
    %9959 = vmatpush1.xpose.msra.mxu0 %v571
    %9960 = vmatprep.subr.mxu0 %v817
    %9961 = vmatpush1.xpose.msra.mxu0 %v816
    %9962 = vmatprep.subr.mxu0 %v1062
    %9963 = vmatpush1.xpose.msra.mxu0 %v1061
    %9964 = vmatprep.subr.mxu0 %v1307
    %9965 = vmatpush1.xpose.msra.mxu0 %v1306
    %9966 = vmatprep.subr.mxu0 %v1552
    %9967 = vmatpush1.xpose.msra.mxu0 %v1551
    %9968 = vmatprep.subr.mxu0 %v1797
    %9969 = vmatpush1.xpose.msra.mxu0 %v1796
    %9970 = vmatprep.subr.mxu0 0.0
    %9971 = vmatpush1.xpose.msra.mxu0 0.0
    %9972 = vmatprep.subr.mxu0 0.0
    %9973 = vmatpush1.xpose.msra.mxu0 0.0
    %9974 = vmatprep.subr.mxu0 0.0
    %9975 = vmatpush1.xpose.msra.mxu0 0.0
    %9976 = vmatprep.subr.mxu0 0.0
    %9977 = vmatpush1.xpose.msra.mxu0 0.0
    %9978 = vmatprep.subr.mxu0 0.0
    %9979 = vmatpush1.xpose.msra.mxu0 0.0
    %9980 = vmatprep.subr.mxu0 0.0
    %9981 = vmatpush1.xpose.msra.mxu0 0.0
    %9982 = vmatprep.subr.mxu0 0.0
    %9983 = vmatpush1.xpose.msra.mxu0 0.0
    %9984 = vmatprep.subr.mxu0 0.0
    %9985 = vmatpush1.xpose.msra.mxu0 0.0
    %9986 = vmatprep.subr.mxu0 0.0
    %9987 = vmatpush1.xpose.msra.mxu0 0.0
    %9988 = vmatprep.subr.mxu0 0.0
    %9989 = vmatpush1.xpose.msra.mxu0 0.0
    %9990 = vmatprep.subr.mxu0 0.0
    %9991 = vmatpush1.xpose.msra.mxu0 0.0
    %9992 = vmatprep.subr.mxu0 0.0
    %9993 = vmatpush1.xpose.msra.mxu0 0.0
    %9994 = vmatprep.subr.mxu0 0.0
    %9995 = vmatpush1.xpose.msra.mxu0 0.0
    %9996 = vmatprep.subr.mxu0 0.0
    %9997 = vmatpush1.xpose.msra.mxu0 0.0
    %9998 = vmatprep.subr.mxu0 0.0
    %9999 = vmatpush1.xpose.msra.mxu0 0.0
    %10000 = vmatprep.subr.mxu0 0.0
    %10001 = vmatpush1.xpose.msra.mxu0 0.0
    %10002 = vmatprep.subr.mxu0 0.0
    %10003 = vmatpush1.xpose.msra.mxu0 0.0
    %10004 = vmatprep.subr.mxu0 0.0
    %10005 = vmatpush1.xpose.msra.mxu0 0.0
    %10006 = vmatprep.subr.mxu0 0.0
    %10007 = vmatpush1.xpose.msra.mxu0 0.0
    %10008 = vmatprep.subr.mxu0 0.0
    %10009 = vmatpush1.xpose.msra.mxu0 0.0
    %10010 = vmatprep.subr.mxu0 0.0
    %10011 = vmatpush1.xpose.msra.mxu0 0.0
    %10012 = vmatprep.subr.mxu0 0.0
    %10013 = vmatpush1.xpose.msra.mxu0 0.0
    %10014 = vmatprep.subr.mxu0 0.0
    %10015 = vmatpush1.xpose.msra.mxu0 0.0
    %10016 = vmatprep.subr.mxu0 0.0
    %10017 = vmatpush1.xpose.msra.mxu0 0.0
    %10018 = vmatprep.subr.mxu0 0.0
    %10019 = vmatpush1.xpose.msra.mxu0 0.0
    %10020 = vmatprep.subr.mxu0 0.0
    %10021 = vmatpush1.xpose.msra.mxu0 0.0
    %10022 = vmatprep.mubr.f32.mxu0 %v327
    %10023 = vmatmul.mubr.f32.gmra.mrb[0].mxu0 %v326
    %v10024 = vpop.f32.mrb[0].mxu0
    %v10025 = vadd.f32 %v9955, %v10024
    %v10026 = vpop.f32.mrb[0].mxu0
    %10027 = vdwg.mxu0
    %10028 = vmatprep.subr.mxu0 %v574
    %10029 = vmatpush1.xpose.msra.mxu0 %v573
    %10030 = vmatprep.subr.mxu0 %v819
    %10031 = vmatpush1.xpose.msra.mxu0 %v818
    %10032 = vmatprep.subr.mxu0 %v1064
    %10033 = vmatpush1.xpose.msra.mxu0 %v1063
    %10034 = vmatprep.subr.mxu0 %v1309
    %10035 = vmatpush1.xpose.msra.mxu0 %v1308
    %10036 = vmatprep.subr.mxu0 %v1554
    %10037 = vmatpush1.xpose.msra.mxu0 %v1553
    %10038 = vmatprep.subr.mxu0 %v1799
    %10039 = vmatpush1.xpose.msra.mxu0 %v1798
    %10040 = vmatprep.subr.mxu0 0.0
    %10041 = vmatpush1.xpose.msra.mxu0 0.0
    %10042 = vmatprep.subr.mxu0 0.0
    %10043 = vmatpush1.xpose.msra.mxu0 0.0
    %10044 = vmatprep.subr.mxu0 0.0
    %10045 = vmatpush1.xpose.msra.mxu0 0.0
    %10046 = vmatprep.subr.mxu0 0.0
    %10047 = vmatpush1.xpose.msra.mxu0 0.0
    %10048 = vmatprep.subr.mxu0 0.0
    %10049 = vmatpush1.xpose.msra.mxu0 0.0
    %10050 = vmatprep.subr.mxu0 0.0
    %10051 = vmatpush1.xpose.msra.mxu0 0.0
    %10052 = vmatprep.subr.mxu0 0.0
    %10053 = vmatpush1.xpose.msra.mxu0 0.0
    %10054 = vmatprep.subr.mxu0 0.0
    %10055 = vmatpush1.xpose.msra.mxu0 0.0
    %10056 = vmatprep.subr.mxu0 0.0
    %10057 = vmatpush1.xpose.msra.mxu0 0.0
    %10058 = vmatprep.subr.mxu0 0.0
    %10059 = vmatpush1.xpose.msra.mxu0 0.0
    %10060 = vmatprep.subr.mxu0 0.0
    %10061 = vmatpush1.xpose.msra.mxu0 0.0
    %10062 = vmatprep.subr.mxu0 0.0
    %10063 = vmatpush1.xpose.msra.mxu0 0.0
    %10064 = vmatprep.subr.mxu0 0.0
    %10065 = vmatpush1.xpose.msra.mxu0 0.0
    %10066 = vmatprep.subr.mxu0 0.0
    %10067 = vmatpush1.xpose.msra.mxu0 0.0
    %10068 = vmatprep.subr.mxu0 0.0
    %10069 = vmatpush1.xpose.msra.mxu0 0.0
    %10070 = vmatprep.subr.mxu0 0.0
    %10071 = vmatpush1.xpose.msra.mxu0 0.0
    %10072 = vmatprep.subr.mxu0 0.0
    %10073 = vmatpush1.xpose.msra.mxu0 0.0
    %10074 = vmatprep.subr.mxu0 0.0
    %10075 = vmatpush1.xpose.msra.mxu0 0.0
    %10076 = vmatprep.subr.mxu0 0.0
    %10077 = vmatpush1.xpose.msra.mxu0 0.0
    %10078 = vmatprep.subr.mxu0 0.0
    %10079 = vmatpush1.xpose.msra.mxu0 0.0
    %10080 = vmatprep.subr.mxu0 0.0
    %10081 = vmatpush1.xpose.msra.mxu0 0.0
    %10082 = vmatprep.subr.mxu0 0.0
    %10083 = vmatpush1.xpose.msra.mxu0 0.0
    %10084 = vmatprep.subr.mxu0 0.0
    %10085 = vmatpush1.xpose.msra.mxu0 0.0
    %10086 = vmatprep.subr.mxu0 0.0
    %10087 = vmatpush1.xpose.msra.mxu0 0.0
    %10088 = vmatprep.subr.mxu0 0.0
    %10089 = vmatpush1.xpose.msra.mxu0 0.0
    %10090 = vmatprep.subr.mxu0 0.0
    %10091 = vmatpush1.xpose.msra.mxu0 0.0
    %10092 = vmatprep.mubr.f32.mxu0 %v329
    %10093 = vmatmul.mubr.f32.gmra.mrb[0].mxu0 %v328
    %v10094 = vpop.f32.mrb[0].mxu0
    %v10095 = vadd.f32 %v10025, %v10094
    %v10096 = vpop.f32.mrb[0].mxu0
    %10097 = vdwg.mxu0
    %10098 = vmatprep.subr.mxu0 %v576
    %10099 = vmatpush1.xpose.msra.mxu0 %v575
    %10100 = vmatprep.subr.mxu0 %v821
    %10101 = vmatpush1.xpose.msra.mxu0 %v820
    %10102 = vmatprep.subr.mxu0 %v1066
    %10103 = vmatpush1.xpose.msra.mxu0 %v1065
    %10104 = vmatprep.subr.mxu0 %v1311
    %10105 = vmatpush1.xpose.msra.mxu0 %v1310
    %10106 = vmatprep.subr.mxu0 %v1556
    %10107 = vmatpush1.xpose.msra.mxu0 %v1555
    %10108 = vmatprep.subr.mxu0 %v1801
    %10109 = vmatpush1.xpose.msra.mxu0 %v1800
    %10110 = vmatprep.subr.mxu0 0.0
    %10111 = vmatpush1.xpose.msra.mxu0 0.0
    %10112 = vmatprep.subr.mxu0 0.0
    %10113 = vmatpush1.xpose.msra.mxu0 0.0
    %10114 = vmatprep.subr.mxu0 0.0
    %10115 = vmatpush1.xpose.msra.mxu0 0.0
    %10116 = vmatprep.subr.mxu0 0.0
    %10117 = vmatpush1.xpose.msra.mxu0 0.0
    %10118 = vmatprep.subr.mxu0 0.0
    %10119 = vmatpush1.xpose.msra.mxu0 0.0
    %10120 = vmatprep.subr.mxu0 0.0
    %10121 = vmatpush1.xpose.msra.mxu0 0.0
    %10122 = vmatprep.subr.mxu0 0.0
    %10123 = vmatpush1.xpose.msra.mxu0 0.0
    %10124 = vmatprep.subr.mxu0 0.0
    %10125 = vmatpush1.xpose.msra.mxu0 0.0
    %10126 = vmatprep.subr.mxu0 0.0
    %10127 = vmatpush1.xpose.msra.mxu0 0.0
    %10128 = vmatprep.subr.mxu0 0.0
    %10129 = vmatpush1.xpose.msra.mxu0 0.0
    %10130 = vmatprep.subr.mxu0 0.0
    %10131 = vmatpush1.xpose.msra.mxu0 0.0
    %10132 = vmatprep.subr.mxu0 0.0
    %10133 = vmatpush1.xpose.msra.mxu0 0.0
    %10134 = vmatprep.subr.mxu0 0.0
    %10135 = vmatpush1.xpose.msra.mxu0 0.0
    %10136 = vmatprep.subr.mxu0 0.0
    %10137 = vmatpush1.xpose.msra.mxu0 0.0
    %10138 = vmatprep.subr.mxu0 0.0
    %10139 = vmatpush1.xpose.msra.mxu0 0.0
    %10140 = vmatprep.subr.mxu0 0.0
    %10141 = vmatpush1.xpose.msra.mxu0 0.0
    %10142 = vmatprep.subr.mxu0 0.0
    %10143 = vmatpush1.xpose.msra.mxu0 0.0
    %10144 = vmatprep.subr.mxu0 0.0
    %10145 = vmatpush1.xpose.msra.mxu0 0.0
    %10146 = vmatprep.subr.mxu0 0.0
    %10147 = vmatpush1.xpose.msra.mxu0 0.0
    %10148 = vmatprep.subr.mxu0 0.0
    %10149 = vmatpush1.xpose.msra.mxu0 0.0
    %10150 = vmatprep.subr.mxu0 0.0
    %10151 = vmatpush1.xpose.msra.mxu0 0.0
    %10152 = vmatprep.subr.mxu0 0.0
    %10153 = vmatpush1.xpose.msra.mxu0 0.0
    %10154 = vmatprep.subr.mxu0 0.0
    %10155 = vmatpush1.xpose.msra.mxu0 0.0
    %10156 = vmatprep.subr.mxu0 0.0
    %10157 = vmatpush1.xpose.msra.mxu0 0.0
    %10158 = vmatprep.subr.mxu0 0.0
    %10159 = vmatpush1.xpose.msra.mxu0 0.0
    %10160 = vmatprep.subr.mxu0 0.0
    %10161 = vmatpush1.xpose.msra.mxu0 0.0
    %10162 = vmatprep.mubr.f32.mxu0 %v331
    %10163 = vmatmul.mubr.f32.gmra.mrb[0].mxu0 %v330
    %v10164 = vpop.f32.mrb[0].mxu0
    %v10165 = vadd.f32 %v10095, %v10164
    %v10166 = vpop.f32.mrb[0].mxu0
    %10167 = vdwg.mxu0
    %10168 = vmatprep.subr.mxu0 %v578
    %10169 = vmatpush1.xpose.msra.mxu0 %v577
    %10170 = vmatprep.subr.mxu0 %v823
    %10171 = vmatpush1.xpose.msra.mxu0 %v822
    %10172 = vmatprep.subr.mxu0 %v1068
    %10173 = vmatpush1.xpose.msra.mxu0 %v1067
    %10174 = vmatprep.subr.mxu0 %v1313
    %10175 = vmatpush1.xpose.msra.mxu0 %v1312
    %10176 = vmatprep.subr.mxu0 %v1558
    %10177 = vmatpush1.xpose.msra.mxu0 %v1557
    %10178 = vmatprep.subr.mxu0 %v1803
    %10179 = vmatpush1.xpose.msra.mxu0 %v1802
    %10180 = vmatprep.subr.mxu0 0.0
    %10181 = vmatpush1.xpose.msra.mxu0 0.0
    %10182 = vmatprep.subr.mxu0 0.0
    %10183 = vmatpush1.xpose.msra.mxu0 0.0
    %10184 = vmatprep.subr.mxu0 0.0
    %10185 = vmatpush1.xpose.msra.mxu0 0.0
    %10186 = vmatprep.subr.mxu0 0.0
    %10187 = vmatpush1.xpose.msra.mxu0 0.0
    %10188 = vmatprep.subr.mxu0 0.0
    %10189 = vmatpush1.xpose.msra.mxu0 0.0
    %10190 = vmatprep.subr.mxu0 0.0
    %10191 = vmatpush1.xpose.msra.mxu0 0.0
    %10192 = vmatprep.subr.mxu0 0.0
    %10193 = vmatpush1.xpose.msra.mxu0 0.0
    %10194 = vmatprep.subr.mxu0 0.0
    %10195 = vmatpush1.xpose.msra.mxu0 0.0
    %10196 = vmatprep.subr.mxu0 0.0
    %10197 = vmatpush1.xpose.msra.mxu0 0.0
    %10198 = vmatprep.subr.mxu0 0.0
    %10199 = vmatpush1.xpose.msra.mxu0 0.0
    %10200 = vmatprep.subr.mxu0 0.0
    %10201 = vmatpush1.xpose.msra.mxu0 0.0
    %10202 = vmatprep.subr.mxu0 0.0
    %10203 = vmatpush1.xpose.msra.mxu0 0.0
    %10204 = vmatprep.subr.mxu0 0.0
    %10205 = vmatpush1.xpose.msra.mxu0 0.0
    %10206 = vmatprep.subr.mxu0 0.0
    %10207 = vmatpush1.xpose.msra.mxu0 0.0
    %10208 = vmatprep.subr.mxu0 0.0
    %10209 = vmatpush1.xpose.msra.mxu0 0.0
    %10210 = vmatprep.subr.mxu0 0.0
    %10211 = vmatpush1.xpose.msra.mxu0 0.0
    %10212 = vmatprep.subr.mxu0 0.0
    %10213 = vmatpush1.xpose.msra.mxu0 0.0
    %10214 = vmatprep.subr.mxu0 0.0
    %10215 = vmatpush1.xpose.msra.mxu0 0.0
    %10216 = vmatprep.subr.mxu0 0.0
    %10217 = vmatpush1.xpose.msra.mxu0 0.0
    %10218 = vmatprep.subr.mxu0 0.0
    %10219 = vmatpush1.xpose.msra.mxu0 0.0
    %10220 = vmatprep.subr.mxu0 0.0
    %10221 = vmatpush1.xpose.msra.mxu0 0.0
    %10222 = vmatprep.subr.mxu0 0.0
    %10223 = vmatpush1.xpose.msra.mxu0 0.0
    %10224 = vmatprep.subr.mxu0 0.0
    %10225 = vmatpush1.xpose.msra.mxu0 0.0
    %10226 = vmatprep.subr.mxu0 0.0
    %10227 = vmatpush1.xpose.msra.mxu0 0.0
    %10228 = vmatprep.subr.mxu0 0.0
    %10229 = vmatpush1.xpose.msra.mxu0 0.0
    %10230 = vmatprep.subr.mxu0 0.0
    %10231 = vmatpush1.xpose.msra.mxu0 0.0
    %10232 = vmatprep.mubr.f32.mxu0 %v333
    %10233 = vmatmul.mubr.f32.gmra.mrb[0].mxu0 %v332
    %v10234 = vpop.f32.mrb[0].mxu0
    %v10235 = vadd.f32 %v10165, %v10234
    %v10236 = vpop.f32.mrb[0].mxu0
    %10237 = vdwg.mxu0
    %10238 = vmatprep.subr.mxu0 %v580
    %10239 = vmatpush1.xpose.msra.mxu0 %v579
    %10240 = vmatprep.subr.mxu0 %v825
    %10241 = vmatpush1.xpose.msra.mxu0 %v824
    %10242 = vmatprep.subr.mxu0 %v1070
    %10243 = vmatpush1.xpose.msra.mxu0 %v1069
    %10244 = vmatprep.subr.mxu0 %v1315
    %10245 = vmatpush1.xpose.msra.mxu0 %v1314
    %10246 = vmatprep.subr.mxu0 %v1560
    %10247 = vmatpush1.xpose.msra.mxu0 %v1559
    %10248 = vmatprep.subr.mxu0 %v1805
    %10249 = vmatpush1.xpose.msra.mxu0 %v1804
    %10250 = vmatprep.subr.mxu0 0.0
    %10251 = vmatpush1.xpose.msra.mxu0 0.0
    %10252 = vmatprep.subr.mxu0 0.0
    %10253 = vmatpush1.xpose.msra.mxu0 0.0
    %10254 = vmatprep.subr.mxu0 0.0
    %10255 = vmatpush1.xpose.msra.mxu0 0.0
    %10256 = vmatprep.subr.mxu0 0.0
    %10257 = vmatpush1.xpose.msra.mxu0 0.0
    %10258 = vmatprep.subr.mxu0 0.0
    %10259 = vmatpush1.xpose.msra.mxu0 0.0
    %10260 = vmatprep.subr.mxu0 0.0
    %10261 = vmatpush1.xpose.msra.mxu0 0.0
    %10262 = vmatprep.subr.mxu0 0.0
    %10263 = vmatpush1.xpose.msra.mxu0 0.0
    %10264 = vmatprep.subr.mxu0 0.0
    %10265 = vmatpush1.xpose.msra.mxu0 0.0
    %10266 = vmatprep.subr.mxu0 0.0
    %10267 = vmatpush1.xpose.msra.mxu0 0.0
    %10268 = vmatprep.subr.mxu0 0.0
    %10269 = vmatpush1.xpose.msra.mxu0 0.0
    %10270 = vmatprep.subr.mxu0 0.0
    %10271 = vmatpush1.xpose.msra.mxu0 0.0
    %10272 = vmatprep.subr.mxu0 0.0
    %10273 = vmatpush1.xpose.msra.mxu0 0.0
    %10274 = vmatprep.subr.mxu0 0.0
    %10275 = vmatpush1.xpose.msra.mxu0 0.0
    %10276 = vmatprep.subr.mxu0 0.0
    %10277 = vmatpush1.xpose.msra.mxu0 0.0
    %10278 = vmatprep.subr.mxu0 0.0
    %10279 = vmatpush1.xpose.msra.mxu0 0.0
    %10280 = vmatprep.subr.mxu0 0.0
    %10281 = vmatpush1.xpose.msra.mxu0 0.0
    %10282 = vmatprep.subr.mxu0 0.0
    %10283 = vmatpush1.xpose.msra.mxu0 0.0
    %10284 = vmatprep.subr.mxu0 0.0
    %10285 = vmatpush1.xpose.msra.mxu0 0.0
    %10286 = vmatprep.subr.mxu0 0.0
    %10287 = vmatpush1.xpose.msra.mxu0 0.0
    %10288 = vmatprep.subr.mxu0 0.0
    %10289 = vmatpush1.xpose.msra.mxu0 0.0
    %10290 = vmatprep.subr.mxu0 0.0
    %10291 = vmatpush1.xpose.msra.mxu0 0.0
    %10292 = vmatprep.subr.mxu0 0.0
    %10293 = vmatpush1.xpose.msra.mxu0 0.0
    %10294 = vmatprep.subr.mxu0 0.0
    %10295 = vmatpush1.xpose.msra.mxu0 0.0
    %10296 = vmatprep.subr.mxu0 0.0
    %10297 = vmatpush1.xpose.msra.mxu0 0.0
    %10298 = vmatprep.subr.mxu0 0.0
    %10299 = vmatpush1.xpose.msra.mxu0 0.0
    %10300 = vmatprep.subr.mxu0 0.0
    %10301 = vmatpush1.xpose.msra.mxu0 0.0
    %10302 = vmatprep.mubr.f32.mxu0 %v335
    %10303 = vmatmul.mubr.f32.gmra.mrb[0].mxu0 %v334
    %v10304 = vpop.f32.mrb[0].mxu0
    %v10305 = vadd.f32 %v10235, %v10304
    %v10306 = vpop.f32.mrb[0].mxu0
    %10307 = vdwg.mxu0
    %10308 = vmatprep.subr.mxu0 %v582
    %10309 = vmatpush1.xpose.msra.mxu0 %v581
    %10310 = vmatprep.subr.mxu0 %v827
    %10311 = vmatpush1.xpose.msra.mxu0 %v826
    %10312 = vmatprep.subr.mxu0 %v1072
    %10313 = vmatpush1.xpose.msra.mxu0 %v1071
    %10314 = vmatprep.subr.mxu0 %v1317
    %10315 = vmatpush1.xpose.msra.mxu0 %v1316
    %10316 = vmatprep.subr.mxu0 %v1562
    %10317 = vmatpush1.xpose.msra.mxu0 %v1561
    %10318 = vmatprep.subr.mxu0 %v1807
    %10319 = vmatpush1.xpose.msra.mxu0 %v1806
    %10320 = vmatprep.subr.mxu0 0.0
    %10321 = vmatpush1.xpose.msra.mxu0 0.0
    %10322 = vmatprep.subr.mxu0 0.0
    %10323 = vmatpush1.xpose.msra.mxu0 0.0
    %10324 = vmatprep.subr.mxu0 0.0
    %10325 = vmatpush1.xpose.msra.mxu0 0.0
    %10326 = vmatprep.subr.mxu0 0.0
    %10327 = vmatpush1.xpose.msra.mxu0 0.0
    %10328 = vmatprep.subr.mxu0 0.0
    %10329 = vmatpush1.xpose.msra.mxu0 0.0
    %10330 = vmatprep.subr.mxu0 0.0
    %10331 = vmatpush1.xpose.msra.mxu0 0.0
    %10332 = vmatprep.subr.mxu0 0.0
    %10333 = vmatpush1.xpose.msra.mxu0 0.0
    %10334 = vmatprep.subr.mxu0 0.0
    %10335 = vmatpush1.xpose.msra.mxu0 0.0
    %10336 = vmatprep.subr.mxu0 0.0
    %10337 = vmatpush1.xpose.msra.mxu0 0.0
    %10338 = vmatprep.subr.mxu0 0.0
    %10339 = vmatpush1.xpose.msra.mxu0 0.0
    %10340 = vmatprep.subr.mxu0 0.0
    %10341 = vmatpush1.xpose.msra.mxu0 0.0
    %10342 = vmatprep.subr.mxu0 0.0
    %10343 = vmatpush1.xpose.msra.mxu0 0.0
    %10344 = vmatprep.subr.mxu0 0.0
    %10345 = vmatpush1.xpose.msra.mxu0 0.0
    %10346 = vmatprep.subr.mxu0 0.0
    %10347 = vmatpush1.xpose.msra.mxu0 0.0
    %10348 = vmatprep.subr.mxu0 0.0
    %10349 = vmatpush1.xpose.msra.mxu0 0.0
    %10350 = vmatprep.subr.mxu0 0.0
    %10351 = vmatpush1.xpose.msra.mxu0 0.0
    %10352 = vmatprep.subr.mxu0 0.0
    %10353 = vmatpush1.xpose.msra.mxu0 0.0
    %10354 = vmatprep.subr.mxu0 0.0
    %10355 = vmatpush1.xpose.msra.mxu0 0.0
    %10356 = vmatprep.subr.mxu0 0.0
    %10357 = vmatpush1.xpose.msra.mxu0 0.0
    %10358 = vmatprep.subr.mxu0 0.0
    %10359 = vmatpush1.xpose.msra.mxu0 0.0
    %10360 = vmatprep.subr.mxu0 0.0
    %10361 = vmatpush1.xpose.msra.mxu0 0.0
    %10362 = vmatprep.subr.mxu0 0.0
    %10363 = vmatpush1.xpose.msra.mxu0 0.0
    %10364 = vmatprep.subr.mxu0 0.0
    %10365 = vmatpush1.xpose.msra.mxu0 0.0
    %10366 = vmatprep.subr.mxu0 0.0
    %10367 = vmatpush1.xpose.msra.mxu0 0.0
    %10368 = vmatprep.subr.mxu0 0.0
    %10369 = vmatpush1.xpose.msra.mxu0 0.0
    %10370 = vmatprep.subr.mxu0 0.0
    %10371 = vmatpush1.xpose.msra.mxu0 0.0
    %10372 = vmatprep.mubr.f32.mxu0 %v337
    %10373 = vmatmul.mubr.f32.gmra.mrb[0].mxu0 %v336
    %v10374 = vpop.f32.mrb[0].mxu0
    %v10375 = vadd.f32 %v10305, %v10374
    %v10376 = vpop.f32.mrb[0].mxu0
    %10377 = vdwg.mxu0
    %10378 = vmatprep.subr.mxu0 0.0
    %10379 = vmatpush1.xpose.msra.mxu0 %v1821
    %10380 = vmatprep.subr.mxu0 0.0
    %10381 = vmatpush1.xpose.msra.mxu0 %v1824
    %10382 = vmatprep.subr.mxu0 0.0
    %10383 = vmatpush1.xpose.msra.mxu0 %v1827
    %10384 = vmatprep.subr.mxu0 0.0
    %10385 = vmatpush1.xpose.msra.mxu0 %v1830
    %10386 = vmatprep.subr.mxu0 0.0
    %10387 = vmatpush1.xpose.msra.mxu0 %v1833
    %10388 = vmatprep.subr.mxu0 0.0
    %10389 = vmatpush1.xpose.msra.mxu0 %v1836
    %10390 = vmatprep.subr.mxu0 0.0
    %10391 = vmatpush1.xpose.msra.mxu0 0.0
    %10392 = vmatprep.subr.mxu0 0.0
    %10393 = vmatpush1.xpose.msra.mxu0 0.0
    %10394 = vmatprep.subr.mxu0 0.0
    %10395 = vmatpush1.xpose.msra.mxu0 0.0
    %10396 = vmatprep.subr.mxu0 0.0
    %10397 = vmatpush1.xpose.msra.mxu0 0.0
    %10398 = vmatprep.subr.mxu0 0.0
    %10399 = vmatpush1.xpose.msra.mxu0 0.0
    %10400 = vmatprep.subr.mxu0 0.0
    %10401 = vmatpush1.xpose.msra.mxu0 0.0
    %10402 = vmatprep.subr.mxu0 0.0
    %10403 = vmatpush1.xpose.msra.mxu0 0.0
    %10404 = vmatprep.subr.mxu0 0.0
    %10405 = vmatpush1.xpose.msra.mxu0 0.0
    %10406 = vmatprep.subr.mxu0 0.0
    %10407 = vmatpush1.xpose.msra.mxu0 0.0
    %10408 = vmatprep.subr.mxu0 0.0
    %10409 = vmatpush1.xpose.msra.mxu0 0.0
    %10410 = vmatprep.subr.mxu0 0.0
    %10411 = vmatpush1.xpose.msra.mxu0 0.0
    %10412 = vmatprep.subr.mxu0 0.0
    %10413 = vmatpush1.xpose.msra.mxu0 0.0
    %10414 = vmatprep.subr.mxu0 0.0
    %10415 = vmatpush1.xpose.msra.mxu0 0.0
    %10416 = vmatprep.subr.mxu0 0.0
    %10417 = vmatpush1.xpose.msra.mxu0 0.0
    %10418 = vmatprep.subr.mxu0 0.0
    %10419 = vmatpush1.xpose.msra.mxu0 0.0
    %10420 = vmatprep.subr.mxu0 0.0
    %10421 = vmatpush1.xpose.msra.mxu0 0.0
    %10422 = vmatprep.subr.mxu0 0.0
    %10423 = vmatpush1.xpose.msra.mxu0 0.0
    %10424 = vmatprep.subr.mxu0 0.0
    %10425 = vmatpush1.xpose.msra.mxu0 0.0
    %10426 = vmatprep.subr.mxu0 0.0
    %10427 = vmatpush1.xpose.msra.mxu0 0.0
    %10428 = vmatprep.subr.mxu0 0.0
    %10429 = vmatpush1.xpose.msra.mxu0 0.0
    %10430 = vmatprep.subr.mxu0 0.0
    %10431 = vmatpush1.xpose.msra.mxu0 0.0
    %10432 = vmatprep.subr.mxu0 0.0
    %10433 = vmatpush1.xpose.msra.mxu0 0.0
    %10434 = vmatprep.subr.mxu0 0.0
    %10435 = vmatpush1.xpose.msra.mxu0 0.0
    %10436 = vmatprep.subr.mxu0 0.0
    %10437 = vmatpush1.xpose.msra.mxu0 0.0
    %10438 = vmatprep.subr.mxu0 0.0
    %10439 = vmatpush1.xpose.msra.mxu0 0.0
    %10440 = vmatprep.subr.mxu0 0.0
    %10441 = vmatpush1.xpose.msra.mxu0 0.0
    %10442 = vmatprep.mubr.f32.mxu0 0.0
    %10443 = vmatmul.mubr.f32.gmra.mrb[0].mxu0 %v1818
    %v10444 = vpop.f32.mrb[0].mxu0
    %v10445 = vadd.f32 %v10375, %v10444
    %v10446 = vpop.f32.mrb[0].mxu0
    %10447 = vdwg.mxu0
    %v10448 = vmax.f32 %v10445, 0.0
    %v10449 = vld [vmem:[%s3] sm:$0xff]
    %v10450 = vld [vmem:[%s3 + $0x8] sm:$0xff]
    %v10451 = vld [vmem:[%s3 + $0x10] sm:$0xff]
    %v10452 = vld [vmem:[%s3 + $0x18] sm:$0xff]
    %v10453 = vld [vmem:[%s3 + $0x20] sm:$0xff]
    %v10454 = vld [vmem:[%s3 + $0x28] sm:$0x1f]
    %v10455 = vld [vmem:[#allocation8] sm:$0x1]
    %v10457 = vlaneseq
    %v10458 = vshrl.u32 %v10457, 7
    %v10459 = vsub.s32 0, %v10458
    %v10460 = vrot.slane %v10455, %v10459
    %vm10462 = vcmask 367616
    %v10464 = vsel %vm10462, %v10448, 0
    %vm10466 = vcmask 1044480
    %v10468 = vsel %vm10466, %v10454, 0
    %10470 = vmatprep.subr.mxu0 0.0
    %10471 = vmatpush1.msra.mxu0 %v10449
    %10472 = vmatprep.subr.mxu0 0.0
    %10473 = vmatpush1.msra.mxu0 %v10450
    %10474 = vmatprep.subr.mxu0 0.0
    %10475 = vmatpush1.msra.mxu0 %v10451
    %10476 = vmatprep.subr.mxu0 0.0
    %10477 = vmatpush1.msra.mxu0 %v10452
    %10478 = vmatprep.subr.mxu0 0.0
    %10479 = vmatpush1.msra.mxu0 %v10453
    %10480 = vmatprep.subr.mxu0 0.0
    %10481 = vmatpush1.msra.mxu0 %v10468
    %10482 = vmatprep.subr.mxu0 0.0
    %10483 = vmatpush1.msra.mxu0 0.0
    %10484 = vmatprep.subr.mxu0 0.0
    %10485 = vmatpush1.msra.mxu0 0.0
    %10486 = vmatprep.subr.mxu0 0.0
    %10487 = vmatpush1.msra.mxu0 0.0
    %10488 = vmatprep.subr.mxu0 0.0
    %10489 = vmatpush1.msra.mxu0 0.0
    %10490 = vmatprep.subr.mxu0 0.0
    %10491 = vmatpush1.msra.mxu0 0.0
    %10492 = vmatprep.subr.mxu0 0.0
    %10493 = vmatpush1.msra.mxu0 0.0
    %10494 = vmatprep.subr.mxu0 0.0
    %10495 = vmatpush1.msra.mxu0 0.0
    %10496 = vmatprep.subr.mxu0 0.0
    %10497 = vmatpush1.msra.mxu0 0.0
    %10498 = vmatprep.subr.mxu0 0.0
    %10499 = vmatpush1.msra.mxu0 0.0
    %10500 = vmatprep.subr.mxu0 0.0
    %10501 = vmatpush1.msra.mxu0 0.0
    %10502 = vmatprep.subr.mxu0 0.0
    %10503 = vmatpush1.msra.mxu0 0.0
    %10504 = vmatprep.subr.mxu0 0.0
    %10505 = vmatpush1.msra.mxu0 0.0
    %10506 = vmatprep.subr.mxu0 0.0
    %10507 = vmatpush1.msra.mxu0 0.0
    %10508 = vmatprep.subr.mxu0 0.0
    %10509 = vmatpush1.msra.mxu0 0.0
    %10510 = vmatprep.subr.mxu0 0.0
    %10511 = vmatpush1.msra.mxu0 0.0
    %10512 = vmatprep.subr.mxu0 0.0
    %10513 = vmatpush1.msra.mxu0 0.0
    %10514 = vmatprep.subr.mxu0 0.0
    %10515 = vmatpush1.msra.mxu0 0.0
    %10516 = vmatprep.subr.mxu0 0.0
    %10517 = vmatpush1.msra.mxu0 0.0
    %10518 = vmatprep.subr.mxu0 0.0
    %10519 = vmatpush1.msra.mxu0 0.0
    %10520 = vmatprep.subr.mxu0 0.0
    %10521 = vmatpush1.msra.mxu0 0.0
    %10522 = vmatprep.subr.mxu0 0.0
    %10523 = vmatpush1.msra.mxu0 0.0
    %10524 = vmatprep.subr.mxu0 0.0
    %10525 = vmatpush1.msra.mxu0 0.0
    %10526 = vmatprep.subr.mxu0 0.0
    %10527 = vmatpush1.msra.mxu0 0.0
    %10528 = vmatprep.subr.mxu0 0.0
    %10529 = vmatpush1.msra.mxu0 0.0
    %10530 = vmatprep.subr.mxu0 0.0
    %10531 = vmatpush1.msra.mxu0 0.0
    %10532 = vmatprep.subr.mxu0 0.0
    %10533 = vmatpush1.msra.mxu0 0.0
    %10534 = vmatprep.mubr.f32.mxu0 0.0
    %10535 = vmatmul.mubr.f32.gmra.mrb[0].mxu0 %v10464
    %v10536 = vpop.f32.mrb[0].mxu0
    %v10537 = vadd.f32 %v10460, %v10536
    %v10538 = vpop.f32.mrb[0].mxu0
    %10539 = vdwg.mxu0
    %v10540 = vmax.f32 %v10537, 0.0
    %v10541 = vld [vmem:[%s5] sm:$0xff]
    %v10542 = vld [vmem:[%s5 + $0x8] sm:$0xff]
    %v10543 = vld [vmem:[%s5 + $0x10] sm:$0x7f]
    %v10544 = vld [vmem:[#allocation10] sm:$0x1]
    %v10546 = vlaneseq
    %v10547 = vshrl.u32 %v10546, 7
    %v10548 = vsub.s32 0, %v10547
    %v10549 = vrot.slane %v10544, %v10548
    %vm10551 = vcmask 187392
    %v10553 = vsel %vm10551, %v10540, 0
    %vm10555 = vcmask 1046528
    %v10557 = vsel %vm10555, %v10543, 0
    %10559 = vmatprep.subr.mxu0 0.0
    %10560 = vmatpush1.msra.mxu0 %v10541
    %10561 = vmatprep.subr.mxu0 0.0
    %10562 = vmatpush1.msra.mxu0 %v10542
    %10563 = vmatprep.subr.mxu0 0.0
    %10564 = vmatpush1.msra.mxu0 %v10557
    %10565 = vmatprep.subr.mxu0 0.0
    %10566 = vmatpush1.msra.mxu0 0.0
    %10567 = vmatprep.subr.mxu0 0.0
    %10568 = vmatpush1.msra.mxu0 0.0
    %10569 = vmatprep.subr.mxu0 0.0
    %10570 = vmatpush1.msra.mxu0 0.0
    %10571 = vmatprep.subr.mxu0 0.0
    %10572 = vmatpush1.msra.mxu0 0.0
    %10573 = vmatprep.subr.mxu0 0.0
    %10574 = vmatpush1.msra.mxu0 0.0
    %10575 = vmatprep.subr.mxu0 0.0
    %10576 = vmatpush1.msra.mxu0 0.0
    %10577 = vmatprep.subr.mxu0 0.0
    %10578 = vmatpush1.msra.mxu0 0.0
    %10579 = vmatprep.subr.mxu0 0.0
    %10580 = vmatpush1.msra.mxu0 0.0
    %10581 = vmatprep.subr.mxu0 0.0
    %10582 = vmatpush1.msra.mxu0 0.0
    %10583 = vmatprep.subr.mxu0 0.0
    %10584 = vmatpush1.msra.mxu0 0.0
    %10585 = vmatprep.subr.mxu0 0.0
    %10586 = vmatpush1.msra.mxu0 0.0
    %10587 = vmatprep.subr.mxu0 0.0
    %10588 = vmatpush1.msra.mxu0 0.0
    %10589 = vmatprep.subr.mxu0 0.0
    %10590 = vmatpush1.msra.mxu0 0.0
    %10591 = vmatprep.subr.mxu0 0.0
    %10592 = vmatpush1.msra.mxu0 0.0
    %10593 = vmatprep.subr.mxu0 0.0
    %10594 = vmatpush1.msra.mxu0 0.0
    %10595 = vmatprep.subr.mxu0 0.0
    %10596 = vmatpush1.msra.mxu0 0.0
    %10597 = vmatprep.subr.mxu0 0.0
    %10598 = vmatpush1.msra.mxu0 0.0
    %10599 = vmatprep.subr.mxu0 0.0
    %10600 = vmatpush1.msra.mxu0 0.0
    %10601 = vmatprep.subr.mxu0 0.0
    %10602 = vmatpush1.msra.mxu0 0.0
    %10603 = vmatprep.subr.mxu0 0.0
    %10604 = vmatpush1.msra.mxu0 0.0
    %10605 = vmatprep.subr.mxu0 0.0
    %10606 = vmatpush1.msra.mxu0 0.0
    %10607 = vmatprep.subr.mxu0 0.0
    %10608 = vmatpush1.msra.mxu0 0.0
    %10609 = vmatprep.subr.mxu0 0.0
    %10610 = vmatpush1.msra.mxu0 0.0
    %10611 = vmatprep.subr.mxu0 0.0
    %10612 = vmatpush1.msra.mxu0 0.0
    %10613 = vmatprep.subr.mxu0 0.0
    %10614 = vmatpush1.msra.mxu0 0.0
    %10615 = vmatprep.subr.mxu0 0.0
    %10616 = vmatpush1.msra.mxu0 0.0
    %10617 = vmatprep.subr.mxu0 0.0
    %10618 = vmatpush1.msra.mxu0 0.0
    %10619 = vmatprep.subr.mxu0 0.0
    %10620 = vmatpush1.msra.mxu0 0.0
    %10621 = vmatprep.subr.mxu0 0.0
    %10622 = vmatpush1.msra.mxu0 0.0
    %10623 = vmatprep.mubr.f32.mxu0 0.0
    %10624 = vmatmul.mubr.f32.gmra.mrb[0].mxu0 %v10553
    %v10625 = vpop.f32.mrb[0].mxu0
    %v10626 = vadd.f32 %v10549, %v10625
    %v10627 = vpop.f32.mrb[0].mxu0
    %10628 = vdwg.mxu0
    %v10629 = vmax.f32 %v10626, 0.0
    %v10630 = vld [vmem:[%s7] sm:$0xff]
    %v10631 = vld [vmem:[%s7 + $0x8] sm:$0xf]
    %v10632 = vld [vmem:[#allocation2] sm:$0x1]
    %v10634 = vlaneseq
    %v10635 = vshrl.u32 %v10634, 7
    %v10636 = vsub.s32 0, %v10635
    %v10637 = vrot.slane %v10632, %v10636
    %vm10639 = vcmask 97280
    %v10641 = vsel %vm10639, %v10629, 0
    %vm10643 = vcmask 1043456
    %v10645 = vsel %vm10643, %v10631, 0
    %10647 = vmatprep.subr.mxu0 0.0
    %10648 = vmatpush1.msra.mxu0 %v10630
    %10649 = vmatprep.subr.mxu0 0.0
    %10650 = vmatpush1.msra.mxu0 %v10645
    %10651 = vmatprep.subr.mxu0 0.0
    %10652 = vmatpush1.msra.mxu0 0.0
    %10653 = vmatprep.subr.mxu0 0.0
    %10654 = vmatpush1.msra.mxu0 0.0
    %10655 = vmatprep.subr.mxu0 0.0
    %10656 = vmatpush1.msra.mxu0 0.0
    %10657 = vmatprep.subr.mxu0 0.0
    %10658 = vmatpush1.msra.mxu0 0.0
    %10659 = vmatprep.subr.mxu0 0.0
    %10660 = vmatpush1.msra.mxu0 0.0
    %10661 = vmatprep.subr.mxu0 0.0
    %10662 = vmatpush1.msra.mxu0 0.0
    %10663 = vmatprep.subr.mxu0 0.0
    %10664 = vmatpush1.msra.mxu0 0.0
    %10665 = vmatprep.subr.mxu0 0.0
    %10666 = vmatpush1.msra.mxu0 0.0
    %10667 = vmatprep.subr.mxu0 0.0
    %10668 = vmatpush1.msra.mxu0 0.0
    %10669 = vmatprep.subr.mxu0 0.0
    %10670 = vmatpush1.msra.mxu0 0.0
    %10671 = vmatprep.subr.mxu0 0.0
    %10672 = vmatpush1.msra.mxu0 0.0
    %10673 = vmatprep.subr.mxu0 0.0
    %10674 = vmatpush1.msra.mxu0 0.0
    %10675 = vmatprep.subr.mxu0 0.0
    %10676 = vmatpush1.msra.mxu0 0.0
    %10677 = vmatprep.subr.mxu0 0.0
    %10678 = vmatpush1.msra.mxu0 0.0
    %10679 = vmatprep.subr.mxu0 0.0
    %10680 = vmatpush1.msra.mxu0 0.0
    %10681 = vmatprep.subr.mxu0 0.0
    %10682 = vmatpush1.msra.mxu0 0.0
    %10683 = vmatprep.subr.mxu0 0.0
    %10684 = vmatpush1.msra.mxu0 0.0
    %10685 = vmatprep.subr.mxu0 0.0
    %10686 = vmatpush1.msra.mxu0 0.0
    %10687 = vmatprep.subr.mxu0 0.0
    %10688 = vmatpush1.msra.mxu0 0.0
    %10689 = vmatprep.subr.mxu0 0.0
    %10690 = vmatpush1.msra.mxu0 0.0
    %10691 = vmatprep.subr.mxu0 0.0
    %10692 = vmatpush1.msra.mxu0 0.0
    %10693 = vmatprep.subr.mxu0 0.0
    %10694 = vmatpush1.msra.mxu0 0.0
    %10695 = vmatprep.subr.mxu0 0.0
    %10696 = vmatpush1.msra.mxu0 0.0
    %10697 = vmatprep.subr.mxu0 0.0
    %10698 = vmatpush1.msra.mxu0 0.0
    %10699 = vmatprep.subr.mxu0 0.0
    %10700 = vmatpush1.msra.mxu0 0.0
    %10701 = vmatprep.subr.mxu0 0.0
    %10702 = vmatpush1.msra.mxu0 0.0
    %10703 = vmatprep.subr.mxu0 0.0
    %10704 = vmatpush1.msra.mxu0 0.0
    %10705 = vmatprep.subr.mxu0 0.0
    %10706 = vmatpush1.msra.mxu0 0.0
    %10707 = vmatprep.subr.mxu0 0.0
    %10708 = vmatpush1.msra.mxu0 0.0
    %10709 = vmatprep.subr.mxu0 0.0
    %10710 = vmatpush1.msra.mxu0 0.0
    %10711 = vmatprep.mubr.f32.mxu0 0.0
    %10712 = vmatmul.mubr.f32.gmra.mrb[0].mxu0 %v10641
    %v10713 = vpop.f32.mrb[0].mxu0
    %v10714 = vadd.f32 %v10637, %v10713
    %v10715 = vpop.f32.mrb[0].mxu0
    %10716 = vdwg.mxu0
    %v10717 = vmax.f32 %v10714, 0.0
    %vm10718 = vcmask 7168
    %10719 = vst.msk [vmem:[%s9] sm:$0xff] %vm10718, %v10717
    // Predicated region
    $region58: #{tpu_custom_call.1} parent=1 // pred_check
      _
    $region59: #{tpu_custom_call.1} parent=1 // pred_check_branch
      %10721 = sbr.rel (0) target = $region61
    $region60: #{tpu_custom_call.1} parent=1 // pred_region
      _
    $region61: #{tpu_custom_call.1} parent=1 // pred_fallthru
      _
    // Predicated region
    $region62: #{tpu_custom_call.1} parent=1 // pred_check
      _
    $region63: #{tpu_custom_call.1} parent=1 // pred_check_branch
      %10723 = sbr.rel (0) target = $region65
    $region64: #{tpu_custom_call.1} parent=1 // pred_region
      _
    $region65: #{tpu_custom_call.1} parent=1 // pred_fallthru
      _
    %10724 = vsyncpa [#allocation4], 1
    %10725 = vsyncpa [#allocation6], 1
    %10726 = vsyncpa [#allocation9], 1

</llo_original>
